<compile_context>
chip_gen: v5e
topology: v5e:2x2
jax: 0.10.0
libtpu: 0.0.40
codegen_flags: <defaults>
</compile_context>

<pallas_src>
import functools

import jax
import jax.numpy as jnp
from jax.experimental import pallas as pl
from jax.experimental.pallas import tpu as pltpu

LEAKY_SLOPE = 0.2
BN_EPS = 1e-5

_LANE = 128
_TM_CAP = 512                          # M-tile cap: big enough for DMA roofline
_VMEM_LIMIT_BYTES = 32 * 1024 * 1024   # safe on v5e / v6e / v7x


def _round_up(x, m):
    return (x + m - 1) // m * m


def _choose_tm(m, k, coutp):
    """Largest M-tile (multiple of 8, <= _TM_CAP) whose double-buffered bf16
    patch tiles + f32 y/out tiles + resident bf16 weights stay well under the
    scoped VMEM limit on all of v5e / v6e / v7x."""
    budget = 12 * 1024 * 1024
    fixed = 2 * k * coutp * 2                 # resident bf16 weights (x2 buffers)
    per_row = 2 * 2 * k + 4 * 4 * coutp       # bf16 patches x2 + f32 y/out tiles
    tm = (budget - fixed) // max(per_row, 1)
    tm = max(8, min(_TM_CAP, tm))
    tm = max(8, (tm // 8) * 8)
    m8 = _round_up(max(m, 1), 8)
    return m8 if m8 <= tm else tm


# ----------------------------- Pallas kernels -----------------------------

def _conv_fused_kernel(p_ref, w_ref, ss_ref, o_ref, *, use_act):
    """Non-BN layer: (patches @ W) * scale + shift, optional LeakyReLU.
    p_ref (TM,K) bf16, w_ref (K,Coutp) bf16, ss_ref (2,Coutp) f32."""
    y = jnp.dot(p_ref[...], w_ref[...], preferred_element_type=jnp.float32)
    y = y * ss_ref[0:1, :] + ss_ref[1:2, :]
    if use_act:
        y = jnp.maximum(y, LEAKY_SLOPE * y)
    o_ref[...] = y.astype(o_ref.dtype)


def _conv_stats_kernel(p_ref, w_ref, y_ref, stats_ref):
    """BN layer pass 1: y = patches @ W (f32 acc), plus global per-channel
    sum / sum-of-squares accumulated across the M grid axis."""
    @pl.when(pl.program_id(0) == 0)
    def _():
        stats_ref[...] = jnp.zeros_like(stats_ref)

    y = jnp.dot(p_ref[...], w_ref[...], preferred_element_type=jnp.float32)
    y_ref[...] = y
    stats_ref[0:1, :] += jnp.sum(y, axis=0, keepdims=True)
    stats_ref[1:2, :] += jnp.sum(y * y, axis=0, keepdims=True)


def _scale_shift_act_kernel(y_ref, ss_ref, o_ref, *, use_act):
    """BN layer pass 2: y * scale + shift (folded BN affine), LeakyReLU."""
    y = y_ref[...] * ss_ref[0:1, :] + ss_ref[1:2, :]
    if use_act:
        y = jnp.maximum(y, LEAKY_SLOPE * y)
    o_ref[...] = y.astype(o_ref.dtype)


# ------------------------------ layer wrapper ------------------------------

def conv_layer_pallas(x_nhwc, layer):
    """One Conv2d(+BN+LeakyReLU) layer. x_nhwc: (N,H,W,Cin); w: (KH,KW,Cin,Cout)."""
    w = layer["w"]
    kh, kw_, cin, cout = w.shape
    stride, padding = layer["stride"], layer["padding"]
    n, h, wdt, _ = x_nhwc.shape

    # --- glue (plain JAX): zero-pad + strided im2col, built directly in bf16 ---
    # TODO(synk): eliminate the kh*kw im2col HBM expansion entirely by doing the
    # shifted-window accumulation inside the kernel from the padded NHWC
    # activation (manual DMA); bf16 patches currently halve that traffic.
    xb = jnp.pad(x_nhwc.astype(jnp.bfloat16),
                 ((0, 0), (padding, padding), (padding, padding), (0, 0)))
    oh = (h + 2 * padding - kh) // stride + 1
    ow = (wdt + 2 * padding - kw_) // stride + 1
    patches = [xb[:, i:i + stride * oh:stride, j:j + stride * ow:stride, :]
               for i in range(kh) for j in range(kw_)]
    m = n * oh * ow
    k = kh * kw_ * cin
    pmat = jnp.stack(patches, axis=3).reshape(m, k)

    coutp = _round_up(cout, _LANE)
    wmat = jnp.pad(w.reshape(k, cout).astype(jnp.bfloat16),
                   ((0, 0), (0, coutp - cout)))

    tm = _choose_tm(m, k, coutp)
    m_p = _round_up(m, tm)
    if m_p > m:
        # zero rows: produce zero conv outputs, inert for the BN statistics
        pmat = jnp.pad(pmat, ((0, m_p - m), (0, 0)))
    grid = (m_p // tm,)

    cost = pl.CostEstimate(
        flops=2 * m_p * k * coutp, transcendentals=0,
        bytes_accessed=m_p * k * 2 + k * coutp * 2 + m_p * coutp * 4)
    out_dtype = jnp.bfloat16 if layer["use_act"] else jnp.float32

    if layer["use_bn"]:
        y, stats = pl.pallas_call(
            _conv_stats_kernel,
            out_shape=(jax.ShapeDtypeStruct((m_p, coutp), jnp.float32),
                       jax.ShapeDtypeStruct((2, coutp), jnp.float32)),
            grid=grid,
            in_specs=[pl.BlockSpec((tm, k), lambda i: (i, 0)),
                      pl.BlockSpec((k, coutp), lambda i: (0, 0))],
            out_specs=(pl.BlockSpec((tm, coutp), lambda i: (i, 0)),
                       pl.BlockSpec((2, coutp), lambda i: (0, 0))),
            compiler_params=pltpu.CompilerParams(
                dimension_semantics=("arbitrary",),
                vmem_limit_bytes=_VMEM_LIMIT_BYTES),
            cost_estimate=cost,
        )(pmat, wmat)

        # PyTorch BatchNorm2d training mode: biased variance over N*OH*OW rows.
        # Padded zero rows contribute nothing; divide by the true row count m.
        mean = stats[0] / m
        var = jnp.maximum(stats[1] / m - mean * mean, 0.0)
        inv = jax.lax.rsqrt(var + BN_EPS)
        gamma_p = jnp.pad(layer["gamma"], (0, coutp - cout))
        beta_p = jnp.pad(layer["beta"], (0, coutp - cout))
        scale = gamma_p * inv
        shift = beta_p - mean * scale
        ss = jnp.stack([scale, shift]).astype(jnp.float32)

        out = pl.pallas_call(
            functools.partial(_scale_shift_act_kernel, use_act=layer["use_act"]),
            out_shape=jax.ShapeDtypeStruct((m_p, coutp), out_dtype),
            grid=grid,
            in_specs=[pl.BlockSpec((tm, coutp), lambda i: (i, 0)),
                      pl.BlockSpec((2, coutp), lambda i: (0, 0))],
            out_specs=pl.BlockSpec((tm, coutp), lambda i: (i, 0)),
            compiler_params=pltpu.CompilerParams(
                dimension_semantics=("parallel",),
                vmem_limit_bytes=_VMEM_LIMIT_BYTES),
        )(y, ss)
    else:
        bias_p = jnp.pad(layer["b"], (0, coutp - cout))
        ss = jnp.stack([jnp.ones_like(bias_p), bias_p]).astype(jnp.float32)
        out = pl.pallas_call(
            functools.partial(_conv_fused_kernel, use_act=layer["use_act"]),
            out_shape=jax.ShapeDtypeStruct((m_p, coutp), out_dtype),
            grid=grid,
            in_specs=[pl.BlockSpec((tm, k), lambda i: (i, 0)),
                      pl.BlockSpec((k, coutp), lambda i: (0, 0)),
                      pl.BlockSpec((2, coutp), lambda i: (0, 0))],
            out_specs=pl.BlockSpec((tm, coutp), lambda i: (i, 0)),
            compiler_params=pltpu.CompilerParams(
                dimension_semantics=("parallel",),
                vmem_limit_bytes=_VMEM_LIMIT_BYTES),
            cost_estimate=cost,
        )(pmat, wmat, ss)

    return out[:m, :cout].reshape(n, oh, ow, cout)


# ------------------------- params & full forward ---------------------------

def init_nlayer_discriminator_params(key, *, input_nc=3, ndf=16, out_nc=1,
                                     n_layers=3, keep_shape=False):
    """Deterministic synthetic params; shapes mirror NLayerDiscriminator.__init__."""
    # (cin, cout, kernel, stride, use_bias, use_bn, use_act)
    specs = [(input_nc, ndf, 4, 2, True, False, True)]       # conv1 + LeakyReLU
    nf_mult = 1
    for n in range(1, n_layers):
        nf_mult_prev = nf_mult
        nf_mult = min(2 ** n, 8)
        specs.append((ndf * nf_mult_prev, ndf * nf_mult, 4, 2, False, True, True))
    kw_last = 3 if keep_shape else 4
    nf_mult_prev = nf_mult
    nf_mult = min(2 ** n_layers, 8)
    specs.append((ndf * nf_mult_prev, ndf * nf_mult, kw_last, 1, False, True, True))
    specs.append((ndf * nf_mult, out_nc, kw_last, 1, True, False, False))

    params = []
    for (cin, cout, kk, s, ub, ubn, ua) in specs:
        key, k1, k2, k3, k4 = jax.random.split(key, 5)
        scale = 1.0 / jnp.sqrt(jnp.float32(kk * kk * cin))
        w = jax.random.normal(k1, (kk, kk, cin, cout), jnp.float32) * scale
        b = (jax.random.normal(k2, (cout,), jnp.float32) * 0.1
             if ub else jnp.zeros((cout,), jnp.float32))
        gamma = (1.0 + 0.1 * jax.random.normal(k3, (cout,), jnp.float32)
                 if ubn else jnp.ones((cout,), jnp.float32))
        beta = (0.1 * jax.random.normal(k4, (cout,), jnp.float32)
                if ubn else jnp.zeros((cout,), jnp.float32))
        params.append(dict(w=w, b=b, gamma=gamma, beta=beta, stride=s, padding=1,
                           use_bias=ub, use_bn=ubn, use_act=ua))
    return params


def nlayer_discriminator_forward(x_nchw, params):
    """Forward pass. x_nchw: (N, C, H, W) float32 -> (N, out_nc, H', W') float32."""
    x = jnp.transpose(x_nchw, (0, 2, 3, 1))      # NCHW -> NHWC
    for layer in params:
        x = conv_layer_pallas(x, layer)
    return jnp.transpose(x, (0, 3, 1, 2)).astype(jnp.float32)   # NHWC -> NCHW


if __name__ == "__main__":
    key = jax.random.PRNGKey(0)
    key, pkey, xkey = jax.random.split(key, 3)

    # spatial 96 keeps the stride-1 k=4 tail positive (96->48->24->12->11->10)
    # and is large enough to exercise multi-tile grids + the BN accumulator.
    params = init_nlayer_discriminator_params(pkey, input_nc=3, ndf=16,
                                              out_nc=1, n_layers=3)
    x = jax.random.normal(xkey, (2, 3, 96, 96), jnp.float32)

    fwd = jax.jit(lambda xx: nlayer_discriminator_forward(xx, params))
    out = jax.block_until_ready(fwd(x))
    assert out.shape == (2, 1, 10, 10), out.shape
    assert bool(jnp.all(jnp.isfinite(out)))
    print("KERNEL_OK")
</pallas_src>

<mosaic_0001>
module attributes {stable_mosaic.version = 11 : i64} {
  func.func @_conv_fused_kernel(%arg0: i32, %arg1: memref<512x48xbf16, #tpu.memory_space<vmem>>, %arg2: memref<48x128xbf16, #tpu.memory_space<vmem>>, %arg3: memref<2x128xf32, #tpu.memory_space<vmem>>, %arg4: memref<512x128xbf16, #tpu.memory_space<vmem>>) attributes {dimension_semantics = [#tpu.dimension_semantics<parallel>], iteration_bounds = array<i64: 9>, scalar_prefetch = 0 : i64, scratch_operands = 0 : i64, tpu.core_type = #tpu.core_type<tc>, window_params = [{transform_indices = @transform_0, window_bounds = array<i64: 512, 48>}, {pipeline_mode = #tpu.pipeline_mode<synchronous>, transform_indices = @transform_1, window_bounds = array<i64: 48, 128>}, {pipeline_mode = #tpu.pipeline_mode<synchronous>, transform_indices = @transform_2, window_bounds = array<i64: 2, 128>}, {transform_indices = @transform_3, window_bounds = array<i64: 512, 128>}]} {
    %c0 = arith.constant 0 : index
    %c0_0 = arith.constant 0 : index
    %0 = vector.load %arg1[%c0, %c0_0] : memref<512x48xbf16, #tpu.memory_space<vmem>>, vector<512x48xbf16>
    %c0_1 = arith.constant 0 : index
    %c0_2 = arith.constant 0 : index
    %1 = vector.load %arg2[%c0_1, %c0_2] : memref<48x128xbf16, #tpu.memory_space<vmem>>, vector<48x128xbf16>
    %cst = arith.constant dense<0.000000e+00> : vector<512x128xf32>
    %2 = tpu.matmul %0, %1, %cst {dimension_numbers = #tpu.dot_dimension_numbers<[1], [0], [0], [1], [0, 0, 1, 1], [], []>} : vector<512x48xbf16>, vector<48x128xbf16>, vector<512x128xf32> -> vector<512x128xf32>
    %c0_3 = arith.constant 0 : index
    %c0_4 = arith.constant 0 : index
    %3 = vector.load %arg3[%c0_3, %c0_4] : memref<2x128xf32, #tpu.memory_space<vmem>>, vector<1x128xf32>
    %4 = vector.broadcast %3 : vector<1x128xf32> to vector<512x128xf32>
    %5 = arith.mulf %2, %4 : vector<512x128xf32>
    %c1 = arith.constant 1 : index
    %c0_5 = arith.constant 0 : index
    %6 = vector.load %arg3[%c1, %c0_5] : memref<2x128xf32, #tpu.memory_space<vmem>>, vector<1x128xf32>
    %7 = vector.broadcast %6 : vector<1x128xf32> to vector<512x128xf32>
    %8 = arith.addf %5, %7 : vector<512x128xf32>
    %cst_6 = arith.constant 2.000000e-01 : f32
    %9 = vector.broadcast %cst_6 : f32 to vector<512x128xf32>
    %10 = arith.mulf %9, %8 : vector<512x128xf32>
    %11 = arith.maximumf %8, %10 : vector<512x128xf32>
    %12 = arith.truncf %11 : vector<512x128xf32> to vector<512x128xbf16>
    %c0_7 = arith.constant 0 : index
    %c0_8 = arith.constant 0 : index
    %13 = vector.load %arg4[%c0_7, %c0_8] : memref<512x128xbf16, #tpu.memory_space<vmem>>, vector<512x128xbf16>
    tpu.vector_store %arg4[%c0_7, %c0_8], %12 {strides = array<i32>} : memref<512x128xbf16, #tpu.memory_space<vmem>>, vector<512x128xbf16>,
    return
  }
  func.func @transform_0(%arg0: i32) -> (i32, i32) {
    %c0_i32 = arith.constant 0 : i32
    %c0_i32_0 = arith.constant 0 : i32
    return %arg0, %c0_i32 : i32, i32
  }
  func.func @transform_1(%arg0: i32) -> (i32, i32) {
    %c0_i32 = arith.constant 0 : i32
    %c0_i32_0 = arith.constant 0 : i32
    %c0_i32_1 = arith.constant 0 : i32
    return %c0_i32, %c0_i32_0 : i32, i32
  }
  func.func @transform_2(%arg0: i32) -> (i32, i32) {
    %c0_i32 = arith.constant 0 : i32
    %c0_i32_0 = arith.constant 0 : i32
    %c0_i32_1 = arith.constant 0 : i32
    return %c0_i32, %c0_i32_0 : i32, i32
  }
  func.func @transform_3(%arg0: i32) -> (i32, i32) {
    %c0_i32 = arith.constant 0 : i32
    %c0_i32_0 = arith.constant 0 : i32
    return %arg0, %c0_i32 : i32, i32
  }
}

module attributes {stable_mosaic.version = 11 : i64} {
  func.func @_conv_stats_kernel(%arg0: i32, %arg1: memref<512x256xbf16, #tpu.memory_space<vmem>>, %arg2: memref<256x128xbf16, #tpu.memory_space<vmem>>, %arg3: memref<512x128xf32, #tpu.memory_space<vmem>>, %arg4: memref<2x128xf32, #tpu.memory_space<vmem>>) attributes {dimension_semantics = [#tpu.dimension_semantics<arbitrary>], iteration_bounds = array<i64: 3>, scalar_prefetch = 0 : i64, scratch_operands = 0 : i64, tpu.core_type = #tpu.core_type<tc>, window_params = [{transform_indices = @transform_0, window_bounds = array<i64: 512, 256>}, {pipeline_mode = #tpu.pipeline_mode<synchronous>, transform_indices = @transform_1, window_bounds = array<i64: 256, 128>}, {transform_indices = @transform_2, window_bounds = array<i64: 512, 128>}, {pipeline_mode = #tpu.pipeline_mode<synchronous>, transform_indices = @transform_3, window_bounds = array<i64: 2, 128>}]} {
    %c0_i32 = arith.constant 0 : i32
    %0 = arith.cmpi eq, %arg0, %c0_i32 : i32
    %1 = arith.extui %0 : i1 to i32
    %c0_i32_0 = arith.constant 0 : i32
    %2 = arith.cmpi ne, %1, %c0_i32_0 : i32
    scf.if %2 {
      %cst_15 = arith.constant 0.000000e+00 : f32
      %18 = vector.broadcast %cst_15 : f32 to vector<2x128xf32>
      %c0_16 = arith.constant 0 : index
      %c0_17 = arith.constant 0 : index
      %19 = vector.load %arg4[%c0_16, %c0_17] : memref<2x128xf32, #tpu.memory_space<vmem>>, vector<2x128xf32>
      tpu.vector_store %arg4[%c0_16, %c0_17], %18 {strides = array<i32>} : memref<2x128xf32, #tpu.memory_space<vmem>>, vector<2x128xf32>,
    } else {
    }
    %c0 = arith.constant 0 : index
    %c0_1 = arith.constant 0 : index
    %3 = vector.load %arg1[%c0, %c0_1] : memref<512x256xbf16, #tpu.memory_space<vmem>>, vector<512x256xbf16>
    %c0_2 = arith.constant 0 : index
    %c0_3 = arith.constant 0 : index
    %4 = vector.load %arg2[%c0_2, %c0_3] : memref<256x128xbf16, #tpu.memory_space<vmem>>, vector<256x128xbf16>
    %cst = arith.constant dense<0.000000e+00> : vector<512x128xf32>
    %5 = tpu.matmul %3, %4, %cst {dimension_numbers = #tpu.dot_dimension_numbers<[1], [0], [0], [1], [0, 0, 1, 1], [], []>} : vector<512x256xbf16>, vector<256x128xbf16>, vector<512x128xf32> -> vector<512x128xf32>
    %c0_4 = arith.constant 0 : index
    %c0_5 = arith.constant 0 : index
    %6 = vector.load %arg3[%c0_4, %c0_5] : memref<512x128xf32, #tpu.memory_space<vmem>>, vector<512x128xf32>
    tpu.vector_store %arg3[%c0_4, %c0_5], %5 {strides = array<i32>} : memref<512x128xf32, #tpu.memory_space<vmem>>, vector<512x128xf32>,
    %c0_6 = arith.constant 0 : index
    %c0_7 = arith.constant 0 : index
    %7 = vector.load %arg4[%c0_6, %c0_7] : memref<2x128xf32, #tpu.memory_space<vmem>>, vector<1x128xf32>
    %cst_8 = arith.constant dense<0.000000e+00> : vector<128xf32>
    %8 = vector.multi_reduction <add>, %5, %cst_8 [0] : vector<512x128xf32> to vector<128xf32>
    %9 = vector.shape_cast %8 : vector<128xf32> to vector<1x128xf32>
    %10 = arith.addf %7, %9 : vector<1x128xf32>
    %c0_9 = arith.constant 0 : index
    %c0_10 = arith.constant 0 : index
    %11 = vector.load %arg4[%c0_9, %c0_10] : memref<2x128xf32, #tpu.memory_space<vmem>>, vector<1x128xf32>
    tpu.vector_store %arg4[%c0_9, %c0_10], %10 {strides = array<i32>} : memref<2x128xf32, #tpu.memory_space<vmem>>, vector<1x128xf32>,
    %c1 = arith.constant 1 : index
    %c0_11 = arith.constant 0 : index
    %12 = vector.load %arg4[%c1, %c0_11] : memref<2x128xf32, #tpu.memory_space<vmem>>, vector<1x128xf32>
    %13 = arith.mulf %5, %5 : vector<512x128xf32>
    %cst_12 = arith.constant dense<0.000000e+00> : vector<128xf32>
    %14 = vector.multi_reduction <add>, %13, %cst_12 [0] : vector<512x128xf32> to vector<128xf32>
    %15 = vector.shape_cast %14 : vector<128xf32> to vector<1x128xf32>
    %16 = arith.addf %12, %15 : vector<1x128xf32>
    %c1_13 = arith.constant 1 : index
    %c0_14 = arith.constant 0 : index
    %17 = vector.load %arg4[%c1_13, %c0_14] : memref<2x128xf32, #tpu.memory_space<vmem>>, vector<1x128xf32>
    tpu.vector_store %arg4[%c1_13, %c0_14], %16 {strides = array<i32>} : memref<2x128xf32, #tpu.memory_space<vmem>>, vector<1x128xf32>,
    return
  }
  func.func @transform_0(%arg0: i32) -> (i32, i32) {
    %c0_i32 = arith.constant 0 : i32
    %c0_i32_0 = arith.constant 0 : i32
    return %arg0, %c0_i32 : i32, i32
  }
  func.func @transform_1(%arg0: i32) -> (i32, i32) {
    %c0_i32 = arith.constant 0 : i32
    %c0_i32_0 = arith.constant 0 : i32
    %c0_i32_1 = arith.constant 0 : i32
    return %c0_i32, %c0_i32_0 : i32, i32
  }
  func.func @transform_2(%arg0: i32) -> (i32, i32) {
    %c0_i32 = arith.constant 0 : i32
    %c0_i32_0 = arith.constant 0 : i32
    return %arg0, %c0_i32 : i32, i32
  }
  func.func @transform_3(%arg0: i32) -> (i32, i32) {
    %c0_i32 = arith.constant 0 : i32
    %c0_i32_0 = arith.constant 0 : i32
    %c0_i32_1 = arith.constant 0 : i32
    return %c0_i32, %c0_i32_0 : i32, i32
  }
}

module attributes {stable_mosaic.version = 11 : i64} {
  func.func @_scale_shift_act_kernel(%arg0: i32, %arg1: memref<512x128xf32, #tpu.memory_space<vmem>>, %arg2: memref<2x128xf32, #tpu.memory_space<vmem>>, %arg3: memref<512x128xbf16, #tpu.memory_space<vmem>>) attributes {dimension_semantics = [#tpu.dimension_semantics<parallel>], iteration_bounds = array<i64: 3>, scalar_prefetch = 0 : i64, scratch_operands = 0 : i64, tpu.core_type = #tpu.core_type<tc>, window_params = [{transform_indices = @transform_0, window_bounds = array<i64: 512, 128>}, {pipeline_mode = #tpu.pipeline_mode<synchronous>, transform_indices = @transform_1, window_bounds = array<i64: 2, 128>}, {transform_indices = @transform_2, window_bounds = array<i64: 512, 128>}]} {
    %c0 = arith.constant 0 : index
    %c0_0 = arith.constant 0 : index
    %0 = vector.load %arg1[%c0, %c0_0] : memref<512x128xf32, #tpu.memory_space<vmem>>, vector<512x128xf32>
    %c0_1 = arith.constant 0 : index
    %c0_2 = arith.constant 0 : index
    %1 = vector.load %arg2[%c0_1, %c0_2] : memref<2x128xf32, #tpu.memory_space<vmem>>, vector<1x128xf32>
    %2 = vector.broadcast %1 : vector<1x128xf32> to vector<512x128xf32>
    %3 = arith.mulf %0, %2 : vector<512x128xf32>
    %c1 = arith.constant 1 : index
    %c0_3 = arith.constant 0 : index
    %4 = vector.load %arg2[%c1, %c0_3] : memref<2x128xf32, #tpu.memory_space<vmem>>, vector<1x128xf32>
    %5 = vector.broadcast %4 : vector<1x128xf32> to vector<512x128xf32>
    %6 = arith.addf %3, %5 : vector<512x128xf32>
    %cst = arith.constant 2.000000e-01 : f32
    %7 = vector.broadcast %cst : f32 to vector<512x128xf32>
    %8 = arith.mulf %7, %6 : vector<512x128xf32>
    %9 = arith.maximumf %6, %8 : vector<512x128xf32>
    %10 = arith.truncf %9 : vector<512x128xf32> to vector<512x128xbf16>
    %c0_4 = arith.constant 0 : index
    %c0_5 = arith.constant 0 : index
    %11 = vector.load %arg3[%c0_4, %c0_5] : memref<512x128xbf16, #tpu.memory_space<vmem>>, vector<512x128xbf16>
    tpu.vector_store %arg3[%c0_4, %c0_5], %10 {strides = array<i32>} : memref<512x128xbf16, #tpu.memory_space<vmem>>, vector<512x128xbf16>,
    return
  }
  func.func @transform_0(%arg0: i32) -> (i32, i32) {
    %c0_i32 = arith.constant 0 : i32
    %c0_i32_0 = arith.constant 0 : i32
    return %arg0, %c0_i32 : i32, i32
  }
  func.func @transform_1(%arg0: i32) -> (i32, i32) {
    %c0_i32 = arith.constant 0 : i32
    %c0_i32_0 = arith.constant 0 : i32
    %c0_i32_1 = arith.constant 0 : i32
    return %c0_i32, %c0_i32_0 : i32, i32
  }
  func.func @transform_2(%arg0: i32) -> (i32, i32) {
    %c0_i32 = arith.constant 0 : i32
    %c0_i32_0 = arith.constant 0 : i32
    return %arg0, %c0_i32 : i32, i32
  }
}

module attributes {stable_mosaic.version = 11 : i64} {
  func.func @_conv_stats_kernel(%arg0: i32, %arg1: memref<288x512xbf16, #tpu.memory_space<vmem>>, %arg2: memref<512x128xbf16, #tpu.memory_space<vmem>>, %arg3: memref<288x128xf32, #tpu.memory_space<vmem>>, %arg4: memref<2x128xf32, #tpu.memory_space<vmem>>) attributes {dimension_semantics = [#tpu.dimension_semantics<arbitrary>], iteration_bounds = array<i64: 1>, scalar_prefetch = 0 : i64, scratch_operands = 0 : i64, tpu.core_type = #tpu.core_type<tc>, window_params = [{transform_indices = @transform_0, window_bounds = array<i64: 288, 512>}, {pipeline_mode = #tpu.pipeline_mode<synchronous>, transform_indices = @transform_1, window_bounds = array<i64: 512, 128>}, {transform_indices = @transform_2, window_bounds = array<i64: 288, 128>}, {pipeline_mode = #tpu.pipeline_mode<synchronous>, transform_indices = @transform_3, window_bounds = array<i64: 2, 128>}]} {
    %c0_i32 = arith.constant 0 : i32
    %0 = arith.cmpi eq, %arg0, %c0_i32 : i32
    %1 = arith.extui %0 : i1 to i32
    %c0_i32_0 = arith.constant 0 : i32
    %2 = arith.cmpi ne, %1, %c0_i32_0 : i32
    scf.if %2 {
      %cst_15 = arith.constant 0.000000e+00 : f32
      %18 = vector.broadcast %cst_15 : f32 to vector<2x128xf32>
      %c0_16 = arith.constant 0 : index
      %c0_17 = arith.constant 0 : index
      %19 = vector.load %arg4[%c0_16, %c0_17] : memref<2x128xf32, #tpu.memory_space<vmem>>, vector<2x128xf32>
      tpu.vector_store %arg4[%c0_16, %c0_17], %18 {strides = array<i32>} : memref<2x128xf32, #tpu.memory_space<vmem>>, vector<2x128xf32>,
    } else {
    }
    %c0 = arith.constant 0 : index
    %c0_1 = arith.constant 0 : index
    %3 = vector.load %arg1[%c0, %c0_1] : memref<288x512xbf16, #tpu.memory_space<vmem>>, vector<288x512xbf16>
    %c0_2 = arith.constant 0 : index
    %c0_3 = arith.constant 0 : index
    %4 = vector.load %arg2[%c0_2, %c0_3] : memref<512x128xbf16, #tpu.memory_space<vmem>>, vector<512x128xbf16>
    %cst = arith.constant dense<0.000000e+00> : vector<288x128xf32>
    %5 = tpu.matmul %3, %4, %cst {dimension_numbers = #tpu.dot_dimension_numbers<[1], [0], [0], [1], [0, 0, 1, 1], [], []>} : vector<288x512xbf16>, vector<512x128xbf16>, vector<288x128xf32> -> vector<288x128xf32>
    %c0_4 = arith.constant 0 : index
    %c0_5 = arith.constant 0 : index
    %6 = vector.load %arg3[%c0_4, %c0_5] : memref<288x128xf32, #tpu.memory_space<vmem>>, vector<288x128xf32>
    tpu.vector_store %arg3[%c0_4, %c0_5], %5 {strides = array<i32>} : memref<288x128xf32, #tpu.memory_space<vmem>>, vector<288x128xf32>,
    %c0_6 = arith.constant 0 : index
    %c0_7 = arith.constant 0 : index
    %7 = vector.load %arg4[%c0_6, %c0_7] : memref<2x128xf32, #tpu.memory_space<vmem>>, vector<1x128xf32>
    %cst_8 = arith.constant dense<0.000000e+00> : vector<128xf32>
    %8 = vector.multi_reduction <add>, %5, %cst_8 [0] : vector<288x128xf32> to vector<128xf32>
    %9 = vector.shape_cast %8 : vector<128xf32> to vector<1x128xf32>
    %10 = arith.addf %7, %9 : vector<1x128xf32>
    %c0_9 = arith.constant 0 : index
    %c0_10 = arith.constant 0 : index
    %11 = vector.load %arg4[%c0_9, %c0_10] : memref<2x128xf32, #tpu.memory_space<vmem>>, vector<1x128xf32>
    tpu.vector_store %arg4[%c0_9, %c0_10], %10 {strides = array<i32>} : memref<2x128xf32, #tpu.memory_space<vmem>>, vector<1x128xf32>,
    %c1 = arith.constant 1 : index
    %c0_11 = arith.constant 0 : index
    %12 = vector.load %arg4[%c1, %c0_11] : memref<2x128xf32, #tpu.memory_space<vmem>>, vector<1x128xf32>
    %13 = arith.mulf %5, %5 : vector<288x128xf32>
    %cst_12 = arith.constant dense<0.000000e+00> : vector<128xf32>
    %14 = vector.multi_reduction <add>, %13, %cst_12 [0] : vector<288x128xf32> to vector<128xf32>
    %15 = vector.shape_cast %14 : vector<128xf32> to vector<1x128xf32>
    %16 = arith.addf %12, %15 : vector<1x128xf32>
    %c1_13 = arith.constant 1 : index
    %c0_14 = arith.constant 0 : index
    %17 = vector.load %arg4[%c1_13, %c0_14] : memref<2x128xf32, #tpu.memory_space<vmem>>, vector<1x128xf32>
    tpu.vector_store %arg4[%c1_13, %c0_14], %16 {strides = array<i32>} : memref<2x128xf32, #tpu.memory_space<vmem>>, vector<1x128xf32>,
    return
  }
  func.func @transform_0(%arg0: i32) -> (i32, i32) {
    %c0_i32 = arith.constant 0 : i32
    %c0_i32_0 = arith.constant 0 : i32
    return %arg0, %c0_i32 : i32, i32
  }
  func.func @transform_1(%arg0: i32) -> (i32, i32) {
    %c0_i32 = arith.constant 0 : i32
    %c0_i32_0 = arith.constant 0 : i32
    %c0_i32_1 = arith.constant 0 : i32
    return %c0_i32, %c0_i32_0 : i32, i32
  }
  func.func @transform_2(%arg0: i32) -> (i32, i32) {
    %c0_i32 = arith.constant 0 : i32
    %c0_i32_0 = arith.constant 0 : i32
    return %arg0, %c0_i32 : i32, i32
  }
  func.func @transform_3(%arg0: i32) -> (i32, i32) {
    %c0_i32 = arith.constant 0 : i32
    %c0_i32_0 = arith.constant 0 : i32
    %c0_i32_1 = arith.constant 0 : i32
    return %c0_i32, %c0_i32_0 : i32, i32
  }
}

module attributes {stable_mosaic.version = 11 : i64} {
  func.func @_scale_shift_act_kernel(%arg0: i32, %arg1: memref<288x128xf32, #tpu.memory_space<vmem>>, %arg2: memref<2x128xf32, #tpu.memory_space<vmem>>, %arg3: memref<288x128xbf16, #tpu.memory_space<vmem>>) attributes {dimension_semantics = [#tpu.dimension_semantics<parallel>], iteration_bounds = array<i64: 1>, scalar_prefetch = 0 : i64, scratch_operands = 0 : i64, tpu.core_type = #tpu.core_type<tc>, window_params = [{transform_indices = @transform_0, window_bounds = array<i64: 288, 128>}, {pipeline_mode = #tpu.pipeline_mode<synchronous>, transform_indices = @transform_1, window_bounds = array<i64: 2, 128>}, {transform_indices = @transform_2, window_bounds = array<i64: 288, 128>}]} {
    %c0 = arith.constant 0 : index
    %c0_0 = arith.constant 0 : index
    %0 = vector.load %arg1[%c0, %c0_0] : memref<288x128xf32, #tpu.memory_space<vmem>>, vector<288x128xf32>
    %c0_1 = arith.constant 0 : index
    %c0_2 = arith.constant 0 : index
    %1 = vector.load %arg2[%c0_1, %c0_2] : memref<2x128xf32, #tpu.memory_space<vmem>>, vector<1x128xf32>
    %2 = vector.broadcast %1 : vector<1x128xf32> to vector<288x128xf32>
    %3 = arith.mulf %0, %2 : vector<288x128xf32>
    %c1 = arith.constant 1 : index
    %c0_3 = arith.constant 0 : index
    %4 = vector.load %arg2[%c1, %c0_3] : memref<2x128xf32, #tpu.memory_space<vmem>>, vector<1x128xf32>
    %5 = vector.broadcast %4 : vector<1x128xf32> to vector<288x128xf32>
    %6 = arith.addf %3, %5 : vector<288x128xf32>
    %cst = arith.constant 2.000000e-01 : f32
    %7 = vector.broadcast %cst : f32 to vector<288x128xf32>
    %8 = arith.mulf %7, %6 : vector<288x128xf32>
    %9 = arith.maximumf %6, %8 : vector<288x128xf32>
    %10 = arith.truncf %9 : vector<288x128xf32> to vector<288x128xbf16>
    %c0_4 = arith.constant 0 : index
    %c0_5 = arith.constant 0 : index
    %11 = vector.load %arg3[%c0_4, %c0_5] : memref<288x128xbf16, #tpu.memory_space<vmem>>, vector<288x128xbf16>
    tpu.vector_store %arg3[%c0_4, %c0_5], %10 {strides = array<i32>} : memref<288x128xbf16, #tpu.memory_space<vmem>>, vector<288x128xbf16>,
    return
  }
  func.func @transform_0(%arg0: i32) -> (i32, i32) {
    %c0_i32 = arith.constant 0 : i32
    %c0_i32_0 = arith.constant 0 : i32
    return %arg0, %c0_i32 : i32, i32
  }
  func.func @transform_1(%arg0: i32) -> (i32, i32) {
    %c0_i32 = arith.constant 0 : i32
    %c0_i32_0 = arith.constant 0 : i32
    %c0_i32_1 = arith.constant 0 : i32
    return %c0_i32, %c0_i32_0 : i32, i32
  }
  func.func @transform_2(%arg0: i32) -> (i32, i32) {
    %c0_i32 = arith.constant 0 : i32
    %c0_i32_0 = arith.constant 0 : i32
    return %arg0, %c0_i32 : i32, i32
  }
}

module attributes {stable_mosaic.version = 11 : i64} {
  func.func @_conv_stats_kernel(%arg0: i32, %arg1: memref<248x1024xbf16, #tpu.memory_space<vmem>>, %arg2: memref<1024x128xbf16, #tpu.memory_space<vmem>>, %arg3: memref<248x128xf32, #tpu.memory_space<vmem>>, %arg4: memref<2x128xf32, #tpu.memory_space<vmem>>) attributes {dimension_semantics = [#tpu.dimension_semantics<arbitrary>], iteration_bounds = array<i64: 1>, scalar_prefetch = 0 : i64, scratch_operands = 0 : i64, tpu.core_type = #tpu.core_type<tc>, window_params = [{transform_indices = @transform_0, window_bounds = array<i64: 248, 1024>}, {pipeline_mode = #tpu.pipeline_mode<synchronous>, transform_indices = @transform_1, window_bounds = array<i64: 1024, 128>}, {transform_indices = @transform_2, window_bounds = array<i64: 248, 128>}, {pipeline_mode = #tpu.pipeline_mode<synchronous>, transform_indices = @transform_3, window_bounds = array<i64: 2, 128>}]} {
    %c0_i32 = arith.constant 0 : i32
    %0 = arith.cmpi eq, %arg0, %c0_i32 : i32
    %1 = arith.extui %0 : i1 to i32
    %c0_i32_0 = arith.constant 0 : i32
    %2 = arith.cmpi ne, %1, %c0_i32_0 : i32
    scf.if %2 {
      %cst_15 = arith.constant 0.000000e+00 : f32
      %18 = vector.broadcast %cst_15 : f32 to vector<2x128xf32>
      %c0_16 = arith.constant 0 : index
      %c0_17 = arith.constant 0 : index
      %19 = vector.load %arg4[%c0_16, %c0_17] : memref<2x128xf32, #tpu.memory_space<vmem>>, vector<2x128xf32>
      tpu.vector_store %arg4[%c0_16, %c0_17], %18 {strides = array<i32>} : memref<2x128xf32, #tpu.memory_space<vmem>>, vector<2x128xf32>,
    } else {
    }
    %c0 = arith.constant 0 : index
    %c0_1 = arith.constant 0 : index
    %3 = vector.load %arg1[%c0, %c0_1] : memref<248x1024xbf16, #tpu.memory_space<vmem>>, vector<248x1024xbf16>
    %c0_2 = arith.constant 0 : index
    %c0_3 = arith.constant 0 : index
    %4 = vector.load %arg2[%c0_2, %c0_3] : memref<1024x128xbf16, #tpu.memory_space<vmem>>, vector<1024x128xbf16>
    %cst = arith.constant dense<0.000000e+00> : vector<248x128xf32>
    %5 = tpu.matmul %3, %4, %cst {dimension_numbers = #tpu.dot_dimension_numbers<[1], [0], [0], [1], [0, 0, 1, 1], [], []>} : vector<248x1024xbf16>, vector<1024x128xbf16>, vector<248x128xf32> -> vector<248x128xf32>
    %c0_4 = arith.constant 0 : index
    %c0_5 = arith.constant 0 : index
    %6 = vector.load %arg3[%c0_4, %c0_5] : memref<248x128xf32, #tpu.memory_space<vmem>>, vector<248x128xf32>
    tpu.vector_store %arg3[%c0_4, %c0_5], %5 {strides = array<i32>} : memref<248x128xf32, #tpu.memory_space<vmem>>, vector<248x128xf32>,
    %c0_6 = arith.constant 0 : index
    %c0_7 = arith.constant 0 : index
    %7 = vector.load %arg4[%c0_6, %c0_7] : memref<2x128xf32, #tpu.memory_space<vmem>>, vector<1x128xf32>
    %cst_8 = arith.constant dense<0.000000e+00> : vector<128xf32>
    %8 = vector.multi_reduction <add>, %5, %cst_8 [0] : vector<248x128xf32> to vector<128xf32>
    %9 = vector.shape_cast %8 : vector<128xf32> to vector<1x128xf32>
    %10 = arith.addf %7, %9 : vector<1x128xf32>
    %c0_9 = arith.constant 0 : index
    %c0_10 = arith.constant 0 : index
    %11 = vector.load %arg4[%c0_9, %c0_10] : memref<2x128xf32, #tpu.memory_space<vmem>>, vector<1x128xf32>
    tpu.vector_store %arg4[%c0_9, %c0_10], %10 {strides = array<i32>} : memref<2x128xf32, #tpu.memory_space<vmem>>, vector<1x128xf32>,
    %c1 = arith.constant 1 : index
    %c0_11 = arith.constant 0 : index
    %12 = vector.load %arg4[%c1, %c0_11] : memref<2x128xf32, #tpu.memory_space<vmem>>, vector<1x128xf32>
    %13 = arith.mulf %5, %5 : vector<248x128xf32>
    %cst_12 = arith.constant dense<0.000000e+00> : vector<128xf32>
    %14 = vector.multi_reduction <add>, %13, %cst_12 [0] : vector<248x128xf32> to vector<128xf32>
    %15 = vector.shape_cast %14 : vector<128xf32> to vector<1x128xf32>
    %16 = arith.addf %12, %15 : vector<1x128xf32>
    %c1_13 = arith.constant 1 : index
    %c0_14 = arith.constant 0 : index
    %17 = vector.load %arg4[%c1_13, %c0_14] : memref<2x128xf32, #tpu.memory_space<vmem>>, vector<1x128xf32>
    tpu.vector_store %arg4[%c1_13, %c0_14], %16 {strides = array<i32>} : memref<2x128xf32, #tpu.memory_space<vmem>>, vector<1x128xf32>,
    return
  }
  func.func @transform_0(%arg0: i32) -> (i32, i32) {
    %c0_i32 = arith.constant 0 : i32
    %c0_i32_0 = arith.constant 0 : i32
    return %arg0, %c0_i32 : i32, i32
  }
  func.func @transform_1(%arg0: i32) -> (i32, i32) {
    %c0_i32 = arith.constant 0 : i32
    %c0_i32_0 = arith.constant 0 : i32
    %c0_i32_1 = arith.constant 0 : i32
    return %c0_i32, %c0_i32_0 : i32, i32
  }
  func.func @transform_2(%arg0: i32) -> (i32, i32) {
    %c0_i32 = arith.constant 0 : i32
    %c0_i32_0 = arith.constant 0 : i32
    return %arg0, %c0_i32 : i32, i32
  }
  func.func @transform_3(%arg0: i32) -> (i32, i32) {
    %c0_i32 = arith.constant 0 : i32
    %c0_i32_0 = arith.constant 0 : i32
    %c0_i32_1 = arith.constant 0 : i32
    return %c0_i32, %c0_i32_0 : i32, i32
  }
}

module attributes {stable_mosaic.version = 11 : i64} {
  func.func @_scale_shift_act_kernel(%arg0: i32, %arg1: memref<248x128xf32, #tpu.memory_space<vmem>>, %arg2: memref<2x128xf32, #tpu.memory_space<vmem>>, %arg3: memref<248x128xbf16, #tpu.memory_space<vmem>>) attributes {dimension_semantics = [#tpu.dimension_semantics<parallel>], iteration_bounds = array<i64: 1>, scalar_prefetch = 0 : i64, scratch_operands = 0 : i64, tpu.core_type = #tpu.core_type<tc>, window_params = [{transform_indices = @transform_0, window_bounds = array<i64: 248, 128>}, {pipeline_mode = #tpu.pipeline_mode<synchronous>, transform_indices = @transform_1, window_bounds = array<i64: 2, 128>}, {transform_indices = @transform_2, window_bounds = array<i64: 248, 128>}]} {
    %c0 = arith.constant 0 : index
    %c0_0 = arith.constant 0 : index
    %0 = vector.load %arg1[%c0, %c0_0] : memref<248x128xf32, #tpu.memory_space<vmem>>, vector<248x128xf32>
    %c0_1 = arith.constant 0 : index
    %c0_2 = arith.constant 0 : index
    %1 = vector.load %arg2[%c0_1, %c0_2] : memref<2x128xf32, #tpu.memory_space<vmem>>, vector<1x128xf32>
    %2 = vector.broadcast %1 : vector<1x128xf32> to vector<248x128xf32>
    %3 = arith.mulf %0, %2 : vector<248x128xf32>
    %c1 = arith.constant 1 : index
    %c0_3 = arith.constant 0 : index
    %4 = vector.load %arg2[%c1, %c0_3] : memref<2x128xf32, #tpu.memory_space<vmem>>, vector<1x128xf32>
    %5 = vector.broadcast %4 : vector<1x128xf32> to vector<248x128xf32>
    %6 = arith.addf %3, %5 : vector<248x128xf32>
    %cst = arith.constant 2.000000e-01 : f32
    %7 = vector.broadcast %cst : f32 to vector<248x128xf32>
    %8 = arith.mulf %7, %6 : vector<248x128xf32>
    %9 = arith.maximumf %6, %8 : vector<248x128xf32>
    %10 = arith.truncf %9 : vector<248x128xf32> to vector<248x128xbf16>
    %c0_4 = arith.constant 0 : index
    %c0_5 = arith.constant 0 : index
    %11 = vector.load %arg3[%c0_4, %c0_5] : memref<248x128xbf16, #tpu.memory_space<vmem>>, vector<248x128xbf16>
    tpu.vector_store %arg3[%c0_4, %c0_5], %10 {strides = array<i32>} : memref<248x128xbf16, #tpu.memory_space<vmem>>, vector<248x128xbf16>,
    return
  }
  func.func @transform_0(%arg0: i32) -> (i32, i32) {
    %c0_i32 = arith.constant 0 : i32
    %c0_i32_0 = arith.constant 0 : i32
    return %arg0, %c0_i32 : i32, i32
  }
  func.func @transform_1(%arg0: i32) -> (i32, i32) {
    %c0_i32 = arith.constant 0 : i32
    %c0_i32_0 = arith.constant 0 : i32
    %c0_i32_1 = arith.constant 0 : i32
    return %c0_i32, %c0_i32_0 : i32, i32
  }
  func.func @transform_2(%arg0: i32) -> (i32, i32) {
    %c0_i32 = arith.constant 0 : i32
    %c0_i32_0 = arith.constant 0 : i32
    return %arg0, %c0_i32 : i32, i32
  }
}

module attributes {stable_mosaic.version = 11 : i64} {
  func.func @_conv_fused_kernel(%arg0: i32, %arg1: memref<200x2048xbf16, #tpu.memory_space<vmem>>, %arg2: memref<2048x128xbf16, #tpu.memory_space<vmem>>, %arg3: memref<2x128xf32, #tpu.memory_space<vmem>>, %arg4: memref<200x128xf32, #tpu.memory_space<vmem>>) attributes {dimension_semantics = [#tpu.dimension_semantics<parallel>], iteration_bounds = array<i64: 1>, scalar_prefetch = 0 : i64, scratch_operands = 0 : i64, tpu.core_type = #tpu.core_type<tc>, window_params = [{transform_indices = @transform_0, window_bounds = array<i64: 200, 2048>}, {pipeline_mode = #tpu.pipeline_mode<synchronous>, transform_indices = @transform_1, window_bounds = array<i64: 2048, 128>}, {pipeline_mode = #tpu.pipeline_mode<synchronous>, transform_indices = @transform_2, window_bounds = array<i64: 2, 128>}, {transform_indices = @transform_3, window_bounds = array<i64: 200, 128>}]} {
    %c0 = arith.constant 0 : index
    %c0_0 = arith.constant 0 : index
    %0 = vector.load %arg1[%c0, %c0_0] : memref<200x2048xbf16, #tpu.memory_space<vmem>>, vector<200x2048xbf16>
    %c0_1 = arith.constant 0 : index
    %c0_2 = arith.constant 0 : index
    %1 = vector.load %arg2[%c0_1, %c0_2] : memref<2048x128xbf16, #tpu.memory_space<vmem>>, vector<2048x128xbf16>
    %cst = arith.constant dense<0.000000e+00> : vector<200x128xf32>
    %2 = tpu.matmul %0, %1, %cst {dimension_numbers = #tpu.dot_dimension_numbers<[1], [0], [0], [1], [0, 0, 1, 1], [], []>} : vector<200x2048xbf16>, vector<2048x128xbf16>, vector<200x128xf32> -> vector<200x128xf32>
    %c0_3 = arith.constant 0 : index
    %c0_4 = arith.constant 0 : index
    %3 = vector.load %arg3[%c0_3, %c0_4] : memref<2x128xf32, #tpu.memory_space<vmem>>, vector<1x128xf32>
    %4 = vector.broadcast %3 : vector<1x128xf32> to vector<200x128xf32>
    %5 = arith.mulf %2, %4 : vector<200x128xf32>
    %c1 = arith.constant 1 : index
    %c0_5 = arith.constant 0 : index
    %6 = vector.load %arg3[%c1, %c0_5] : memref<2x128xf32, #tpu.memory_space<vmem>>, vector<1x128xf32>
    %7 = vector.broadcast %6 : vector<1x128xf32> to vector<200x128xf32>
    %8 = arith.addf %5, %7 : vector<200x128xf32>
    %c0_6 = arith.constant 0 : index
    %c0_7 = arith.constant 0 : index
    %9 = vector.load %arg4[%c0_6, %c0_7] : memref<200x128xf32, #tpu.memory_space<vmem>>, vector<200x128xf32>
    tpu.vector_store %arg4[%c0_6, %c0_7], %8 {strides = array<i32>} : memref<200x128xf32, #tpu.memory_space<vmem>>, vector<200x128xf32>,
    return
  }
  func.func @transform_0(%arg0: i32) -> (i32, i32) {
    %c0_i32 = arith.constant 0 : i32
    %c0_i32_0 = arith.constant 0 : i32
    return %arg0, %c0_i32 : i32, i32
  }
  func.func @transform_1(%arg0: i32) -> (i32, i32) {
    %c0_i32 = arith.constant 0 : i32
    %c0_i32_0 = arith.constant 0 : i32
    %c0_i32_1 = arith.constant 0 : i32
    return %c0_i32, %c0_i32_0 : i32, i32
  }
  func.func @transform_2(%arg0: i32) -> (i32, i32) {
    %c0_i32 = arith.constant 0 : i32
    %c0_i32_0 = arith.constant 0 : i32
    %c0_i32_1 = arith.constant 0 : i32
    return %c0_i32, %c0_i32_0 : i32, i32
  }
  func.func @transform_3(%arg0: i32) -> (i32, i32) {
    %c0_i32 = arith.constant 0 : i32
    %c0_i32_0 = arith.constant 0 : i32
    return %arg0, %c0_i32 : i32, i32
  }
}

</mosaic_0001>

<llo_original>
// kernel: _lambda_.8
$region0: #{_lambda_.8}
  #allocation0 [shape = 'u32[]', space=smem, size = 0x4, offset = 0x4, fixed_abs, tag = 'smem constant byte address 0x4 - core index']
  #allocation1 [shape = 'u32[72,128]{1,0:T(1,128)}', space=vmem, size = 0x9000, scoped, tag = 'internal scratch']
  %s0 = inlined_call_operand.vmem [shape: bf16[4608,48], index: 0, kind: input, shape index: {}]
  %s1 = inlined_call_operand.vmem [shape: bf16[48,128], index: 1, kind: input, shape index: {}]
  %s2 = inlined_call_operand.vmem [shape: f32[2,128], index: 2, kind: input, shape index: {}]
  %s3 = inlined_call_operand.vmem [shape: bf16[4608,128], index: 3, kind: output, shape index: {}]
  %s4 = sld [smem:[#allocation0]]
  $region45: #{_lambda_.8} parent=0
    _
  %s6 = ssub.s32 1, %s4
  %s7 = scalar_select 0, %s6, %s4
  loop: start=0, step=1, limit=11
  $region2: #{_lambda_.8} parent=0 // loop_pre_header
    _
  $region3: #{_lambda_.8} parent=0 // loop_header
    %s9 = sphi 0, %s13
    %p10 = scmp.ge.s32.totalorder %s9, 11
    %s19 = sphi 0, %s21
    %s22 = sphi 0, %s19
    %s23 = sphi 0, %s22
    %s39 = sphi 0, %s23
    %s43 = sphi 0, %s43
    %s45 = sphi 0, %s43
    %s46 = sphi 0, %s45
    %s60 = sphi 0, %s46
    %s64 = sphi 0, %s64
    %s66 = sphi 0, %s64
    %s67 = sphi 0, %s66
    %s81 = sphi 0, %s67
    %s87 = sphi 0, %s89
    %s90 = sphi 0, %s87
    %s91 = sphi 0, %s90
    %s107 = sphi 0, %s91
  $region4: #{_lambda_.8} parent=0 // loop_header_branch
    %12 = sbr.rel (%p10) target = $region8
  $region5: #{_lambda_.8} parent=0 // loop_body
    %s14 = ssub.s32 %s9, 1
    %s15 = ssub.s32 %s9, 2
    %s16 = sadd.s32 %s9, 1
    %s17 = ssub.s32 %s9, %s16
    %p18 = scmp.eq.s32.totalorder %s17, 0
    %s20 = sadd.s32 %s19, 1
    %s21 = scalar_select %p18, %s19, %s20
    %p24 = pneg %p18
    %p25 = scmp.eq.s32.totalorder %s9, 8
    %p26 = por %p24, %p25
    %p27 = scmp.ne.s32.totalorder %s19, %s22
    %p28 = scmp.eq.s32.totalorder %s9, 0
    %p29 = por %p27, %p28
    %p30 = scmp.ne.s32.totalorder %s19, %s22
    %p31 = scmp.eq.s32.totalorder %s14, 8
    %p32 = por %p30, %p31
    %p33 = scmp.ne.s32.totalorder %s22, %s23
    %p34 = scmp.eq.s32.totalorder %s14, 0
    %p35 = por %p33, %p34
    %p36 = scmp.ne.s32.totalorder %s22, %s23
    %p37 = scmp.eq.s32.totalorder %s15, 8
    %p38 = por %p36, %p37
    %p40 = scmp.ne.s32.totalorder %s23, %s39
    %p41 = scmp.eq.s32.totalorder %s15, 0
    %p42 = por %p40, %p41
    %s44 = sadd.s32 %s43, 1
    %p47 = scmp.eq.s32.totalorder %s9, 8
    %p48 = scmp.ne.s32.totalorder %s43, %s45
    %p49 = scmp.eq.s32.totalorder %s9, 0
    %p50 = por %p48, %p49
    %p51 = scmp.ne.s32.totalorder %s43, %s45
    %p52 = scmp.eq.s32.totalorder %s14, 8
    %p53 = por %p51, %p52
    %p54 = scmp.ne.s32.totalorder %s45, %s46
    %p55 = scmp.eq.s32.totalorder %s14, 0
    %p56 = por %p54, %p55
    %p57 = scmp.ne.s32.totalorder %s45, %s46
    %p58 = scmp.eq.s32.totalorder %s15, 8
    %p59 = por %p57, %p58
    %p61 = scmp.ne.s32.totalorder %s46, %s60
    %p62 = scmp.eq.s32.totalorder %s15, 0
    %p63 = por %p61, %p62
    %s65 = sadd.s32 %s64, 1
    %p68 = scmp.eq.s32.totalorder %s9, 8
    %p69 = scmp.ne.s32.totalorder %s64, %s66
    %p70 = scmp.eq.s32.totalorder %s9, 0
    %p71 = por %p69, %p70
    %p72 = scmp.ne.s32.totalorder %s64, %s66
    %p73 = scmp.eq.s32.totalorder %s14, 8
    %p74 = por %p72, %p73
    %p75 = scmp.ne.s32.totalorder %s66, %s67
    %p76 = scmp.eq.s32.totalorder %s14, 0
    %p77 = por %p75, %p76
    %p78 = scmp.ne.s32.totalorder %s66, %s67
    %p79 = scmp.eq.s32.totalorder %s15, 8
    %p80 = por %p78, %p79
    %p82 = scmp.ne.s32.totalorder %s67, %s81
    %p83 = scmp.eq.s32.totalorder %s15, 0
    %p84 = por %p82, %p83
    %s85 = ssub.s32 %s9, %s16
    %p86 = scmp.eq.s32.totalorder %s85, 0
    %s88 = sadd.s32 %s87, 1
    %s89 = scalar_select %p86, %s87, %s88
    %p92 = pneg %p86
    %p93 = scmp.eq.s32.totalorder %s9, 8
    %p94 = por %p92, %p93
    %p95 = scmp.ne.s32.totalorder %s87, %s90
    %p96 = scmp.eq.s32.totalorder %s9, 0
    %p97 = por %p95, %p96
    %p98 = scmp.ne.s32.totalorder %s87, %s90
    %p99 = scmp.eq.s32.totalorder %s14, 8
    %p100 = por %p98, %p99
    %p101 = scmp.ne.s32.totalorder %s90, %s91
    %p102 = scmp.eq.s32.totalorder %s14, 0
    %p103 = por %p101, %p102
    %p104 = scmp.ne.s32.totalorder %s90, %s91
    %p105 = scmp.eq.s32.totalorder %s15, 8
    %p106 = por %p104, %p105
    %p108 = scmp.ne.s32.totalorder %s91, %s107
    %p109 = scmp.eq.s32.totalorder %s15, 0
    %p110 = por %p108, %p109
    %p111 = scmp.le.s32.totalorder 1, %s9
    %p112 = scmp.lt.s32.totalorder %s9, 10
    %p113 = pnand %p111, %p112
    %p114 = pneg %p113
    // Predicated region
    $region9: #{_lambda_.8} parent=5 // pred_check
      _
    $region10: #{_lambda_.8} parent=5 // pred_check_branch
      %116 = sbr.rel (%p113) target = $region12
    $region11: #{_lambda_.8} parent=5 // pred_region
      %s117 = ssub.s32 %s9, 1
      // Predicated region
      $region13: #{_lambda_.8} parent=11 // pred_check
        %p118 = pneg %p56
      $region14: #{_lambda_.8} parent=11 // pred_check_branch
        %120 = sbr.rel (%p118) target = $region16
      $region15: #{_lambda_.8} parent=11 // pred_region
        _
      $region16: #{_lambda_.8} parent=11 // pred_fallthru
        _
      // Predicated region
      $region17: #{_lambda_.8} parent=11 // pred_check
        %p121 = pneg %p77
      $region18: #{_lambda_.8} parent=11 // pred_check_branch
        %123 = sbr.rel (%p121) target = $region20
      $region19: #{_lambda_.8} parent=11 // pred_region
        _
      $region20: #{_lambda_.8} parent=11 // pred_fallthru
        _
    $region12: #{_lambda_.8} parent=5 // pred_fallthru
      _
    %p124 = scmp.lt.s32.totalorder %s9, 9
    // Predicated region
    $region21: #{_lambda_.8} parent=5 // pred_check
      %p125 = pneg %p124
    $region22: #{_lambda_.8} parent=5 // pred_check_branch
      %127 = sbr.rel (%p125) target = $region24
    $region23: #{_lambda_.8} parent=5 // pred_region
      // Predicated region
      $region25: #{_lambda_.8} parent=23 // pred_check
        %p128 = pneg %p29
      $region26: #{_lambda_.8} parent=23 // pred_check_branch
        %130 = sbr.rel (%p128) target = $region28
      $region27: #{_lambda_.8} parent=23 // pred_region
        %s131 = smul.u32 64, %s9
        %p132 = scmp.lt.s32.totalorder %s131, 575
        %s133 = scalar_select %p132, %s131, 575
        %s134 = smul.addr %s133, 4
        %s135 = scalar_lea.vmem %s0, %s134
        %s136 = smul.u32 64, %s9
      $region28: #{_lambda_.8} parent=23 // pred_fallthru
        _
    $region24: #{_lambda_.8} parent=5 // pred_fallthru
      _
    %p137 = scmp.le.s32.totalorder 1, %s9
    %p138 = scmp.lt.s32.totalorder %s9, 10
    %p139 = pnand %p137, %p138
    %p140 = pneg %p139
    // Predicated region
    $region29: #{_lambda_.8} parent=5 // pred_check
      _
    $region30: #{_lambda_.8} parent=5 // pred_check_branch
      %142 = sbr.rel (%p139) target = $region32
    $region31: #{_lambda_.8} parent=5 // pred_region
      %s143 = ssub.s32 %s9, 1
      %s144 = smul.u32 64, %s14
      %p145 = scmp.lt.s32.totalorder %s144, 575
      %s146 = scalar_select %p145, %s144, 575
      %s147 = smul.addr %s146, 4
      %s148 = scalar_lea.vmem %s0, %s147
      %p149 = pneg %p35
      %p150 = pneg %p32
      %p151 = pneg %p56
      %p152 = pneg %p53
      %p153 = pneg %p77
      %p154 = pneg %p74
      %p155 = pneg %p103
      %p156 = pneg %p100
      %s157 = smul.u32 64, %s14
      %p158 = scmp.lt.s32.totalorder %s157, 575
      %s159 = scalar_select %p158, %s157, 575
      %s160 = smul.addr %s159, 4
      %s161 = scalar_lea.vmem %s3, %s160
      %s162 = smul.u32 64, %s14
      %p163 = scmp.lt.s32.totalorder %s162, 575
      %s164 = scalar_select %p163, %s162, 575
      %s165 = smul.addr %s164, 4
      %s166 = scalar_lea.vmem %s0, %s165
      %s167 = smul.u32 64, %s14
      %s168 = smul.u32 64, %s14
      %p169 = scmp.lt.s32.totalorder %s168, 575
      %s170 = scalar_select %p169, %s168, 575
      %s171 = smul.addr %s170, 4
      %s172 = scalar_lea.vmem %s3, %s171
      %s173 = smul.u32 64, %s14
      %v175 = vld [vmem:[%s166] sm:$0xf]
      %v176 = vld [vmem:[%s166 + $0x4] sm:$0xf]
      %v177 = vld [vmem:[%s166 + $0x8] sm:$0xf]
      %v178 = vld [vmem:[%s166 + $0xc] sm:$0xf]
      %v179 = vld [vmem:[%s166 + $0x10] sm:$0xf]
      %v180 = vld [vmem:[%s166 + $0x14] sm:$0xf]
      %v181 = vld [vmem:[%s166 + $0x18] sm:$0xf]
      %v182 = vld [vmem:[%s166 + $0x1c] sm:$0xf]
      %v183 = vld [vmem:[%s166 + $0x20] sm:$0xf]
      %v184 = vld [vmem:[%s166 + $0x24] sm:$0xf]
      %v185 = vld [vmem:[%s166 + $0x28] sm:$0xf]
      %v186 = vld [vmem:[%s166 + $0x2c] sm:$0xf]
      %v187 = vld [vmem:[%s166 + $0x30] sm:$0xf]
      %v188 = vld [vmem:[%s166 + $0x34] sm:$0xf]
      %v189 = vld [vmem:[%s166 + $0x38] sm:$0xf]
      %v190 = vld [vmem:[%s166 + $0x3c] sm:$0xf]
      %v191 = vld [vmem:[%s166 + $0x40] sm:$0xf]
      %v192 = vld [vmem:[%s166 + $0x44] sm:$0xf]
      %v193 = vld [vmem:[%s166 + $0x48] sm:$0xf]
      %v194 = vld [vmem:[%s166 + $0x4c] sm:$0xf]
      %v195 = vld [vmem:[%s166 + $0x50] sm:$0xf]
      %v196 = vld [vmem:[%s166 + $0x54] sm:$0xf]
      %v197 = vld [vmem:[%s166 + $0x58] sm:$0xf]
      %v198 = vld [vmem:[%s166 + $0x5c] sm:$0xf]
      %v199 = vld [vmem:[%s166 + $0x60] sm:$0xf]
      %v200 = vld [vmem:[%s166 + $0x64] sm:$0xf]
      %v201 = vld [vmem:[%s166 + $0x68] sm:$0xf]
      %v202 = vld [vmem:[%s166 + $0x6c] sm:$0xf]
      %v203 = vld [vmem:[%s166 + $0x70] sm:$0xf]
      %v204 = vld [vmem:[%s166 + $0x74] sm:$0xf]
      %v205 = vld [vmem:[%s166 + $0x78] sm:$0xf]
      %v206 = vld [vmem:[%s166 + $0x7c] sm:$0xf]
      %v207 = vld [vmem:[%s166 + $0x80] sm:$0xf]
      %v208 = vld [vmem:[%s166 + $0x84] sm:$0xf]
      %v209 = vld [vmem:[%s166 + $0x88] sm:$0xf]
      %v210 = vld [vmem:[%s166 + $0x8c] sm:$0xf]
      %v211 = vld [vmem:[%s166 + $0x90] sm:$0xf]
      %v212 = vld [vmem:[%s166 + $0x94] sm:$0xf]
      %v213 = vld [vmem:[%s166 + $0x98] sm:$0xf]
      %v214 = vld [vmem:[%s166 + $0x9c] sm:$0xf]
      %v215 = vld [vmem:[%s166 + $0xa0] sm:$0xf]
      %v216 = vld [vmem:[%s166 + $0xa4] sm:$0xf]
      %v217 = vld [vmem:[%s166 + $0xa8] sm:$0xf]
      %v218 = vld [vmem:[%s166 + $0xac] sm:$0xf]
      %v219 = vld [vmem:[%s166 + $0xb0] sm:$0xf]
      %v220 = vld [vmem:[%s166 + $0xb4] sm:$0xf]
      %v221 = vld [vmem:[%s166 + $0xb8] sm:$0xf]
      %v222 = vld [vmem:[%s166 + $0xbc] sm:$0xf]
      %v223 = vld [vmem:[%s166 + $0xc0] sm:$0xf]
      %v224 = vld [vmem:[%s166 + $0xc4] sm:$0xf]
      %v225 = vld [vmem:[%s166 + $0xc8] sm:$0xf]
      %v226 = vld [vmem:[%s166 + $0xcc] sm:$0xf]
      %v227 = vld [vmem:[%s166 + $0xd0] sm:$0xf]
      %v228 = vld [vmem:[%s166 + $0xd4] sm:$0xf]
      %v229 = vld [vmem:[%s166 + $0xd8] sm:$0xf]
      %v230 = vld [vmem:[%s166 + $0xdc] sm:$0xf]
      %v231 = vld [vmem:[%s166 + $0xe0] sm:$0xf]
      %v232 = vld [vmem:[%s166 + $0xe4] sm:$0xf]
      %v233 = vld [vmem:[%s166 + $0xe8] sm:$0xf]
      %v234 = vld [vmem:[%s166 + $0xec] sm:$0xf]
      %v235 = vld [vmem:[%s166 + $0xf0] sm:$0xf]
      %v236 = vld [vmem:[%s166 + $0xf4] sm:$0xf]
      %v237 = vld [vmem:[%s166 + $0xf8] sm:$0xf]
      %v238 = vld [vmem:[%s166 + $0xfc] sm:$0xf]
      %v239 = vld [vmem:[%s1] sm:$0xf]
      %v240 = vld [vmem:[%s1 + $0x4] sm:$0xf]
      %v241 = vld [vmem:[%s1 + $0x8] sm:$0xf]
      %v242 = vld [vmem:[%s1 + $0xc] sm:$0xf]
      %v243 = vld [vmem:[%s1 + $0x10] sm:$0xf]
      %v244 = vld [vmem:[%s1 + $0x14] sm:$0xf]
      %v309 = vunpack.c.l.b16 %v175
      %v310 = vunpack.c.l.b16 %v176
      %v311 = vunpack.c.l.b16 %v177
      %v312 = vunpack.c.l.b16 %v178
      %v313 = vunpack.c.l.b16 %v179
      %v314 = vunpack.c.l.b16 %v180
      %v315 = vunpack.c.l.b16 %v181
      %v316 = vunpack.c.l.b16 %v182
      %v317 = vunpack.c.l.b16 %v183
      %v318 = vunpack.c.l.b16 %v184
      %v319 = vunpack.c.l.b16 %v185
      %v320 = vunpack.c.l.b16 %v186
      %v321 = vunpack.c.l.b16 %v187
      %v322 = vunpack.c.l.b16 %v188
      %v323 = vunpack.c.l.b16 %v189
      %v324 = vunpack.c.l.b16 %v190
      %v325 = vunpack.c.l.b16 %v191
      %v326 = vunpack.c.l.b16 %v192
      %v327 = vunpack.c.l.b16 %v193
      %v328 = vunpack.c.l.b16 %v194
      %v329 = vunpack.c.l.b16 %v195
      %v330 = vunpack.c.l.b16 %v196
      %v331 = vunpack.c.l.b16 %v197
      %v332 = vunpack.c.l.b16 %v198
      %v333 = vunpack.c.l.b16 %v199
      %v334 = vunpack.c.l.b16 %v200
      %v335 = vunpack.c.l.b16 %v201
      %v336 = vunpack.c.l.b16 %v202
      %v337 = vunpack.c.l.b16 %v203
      %v338 = vunpack.c.l.b16 %v204
      %v339 = vunpack.c.l.b16 %v205
      %v340 = vunpack.c.l.b16 %v206
      %v341 = vunpack.c.l.b16 %v207
      %v342 = vunpack.c.l.b16 %v208
      %v343 = vunpack.c.l.b16 %v209
      %v344 = vunpack.c.l.b16 %v210
      %v345 = vunpack.c.l.b16 %v211
      %v346 = vunpack.c.l.b16 %v212
      %v347 = vunpack.c.l.b16 %v213
      %v348 = vunpack.c.l.b16 %v214
      %v349 = vunpack.c.l.b16 %v215
      %v350 = vunpack.c.l.b16 %v216
      %v351 = vunpack.c.l.b16 %v217
      %v352 = vunpack.c.l.b16 %v218
      %v353 = vunpack.c.l.b16 %v219
      %v354 = vunpack.c.l.b16 %v220
      %v355 = vunpack.c.l.b16 %v221
      %v356 = vunpack.c.l.b16 %v222
      %v357 = vunpack.c.l.b16 %v223
      %v358 = vunpack.c.l.b16 %v224
      %v359 = vunpack.c.l.b16 %v225
      %v360 = vunpack.c.l.b16 %v226
      %v361 = vunpack.c.l.b16 %v227
      %v362 = vunpack.c.l.b16 %v228
      %v363 = vunpack.c.l.b16 %v229
      %v364 = vunpack.c.l.b16 %v230
      %v365 = vunpack.c.l.b16 %v231
      %v366 = vunpack.c.l.b16 %v232
      %v367 = vunpack.c.l.b16 %v233
      %v368 = vunpack.c.l.b16 %v234
      %v369 = vunpack.c.l.b16 %v235
      %v370 = vunpack.c.l.b16 %v236
      %v371 = vunpack.c.l.b16 %v237
      %v372 = vunpack.c.l.b16 %v238
      %v373 = vpack.c.b16 %v310, %v309
      %v374 = vpack.c.b16 %v312, %v311
      %v375 = vpack.c.b16 %v314, %v313
      %v376 = vpack.c.b16 %v316, %v315
      %v377 = vpack.c.b16 %v318, %v317
      %v378 = vpack.c.b16 %v320, %v319
      %v379 = vpack.c.b16 %v322, %v321
      %v380 = vpack.c.b16 %v324, %v323
      %v381 = vpack.c.b16 %v326, %v325
      %v382 = vpack.c.b16 %v328, %v327
      %v383 = vpack.c.b16 %v330, %v329
      %v384 = vpack.c.b16 %v332, %v331
      %v385 = vpack.c.b16 %v334, %v333
      %v386 = vpack.c.b16 %v336, %v335
      %v387 = vpack.c.b16 %v338, %v337
      %v388 = vpack.c.b16 %v340, %v339
      %v389 = vpack.c.b16 %v342, %v341
      %v390 = vpack.c.b16 %v344, %v343
      %v391 = vpack.c.b16 %v346, %v345
      %v392 = vpack.c.b16 %v348, %v347
      %v393 = vpack.c.b16 %v350, %v349
      %v394 = vpack.c.b16 %v352, %v351
      %v395 = vpack.c.b16 %v354, %v353
      %v396 = vpack.c.b16 %v356, %v355
      %v397 = vpack.c.b16 %v358, %v357
      %v398 = vpack.c.b16 %v360, %v359
      %v399 = vpack.c.b16 %v362, %v361
      %v400 = vpack.c.b16 %v364, %v363
      %v401 = vpack.c.b16 %v366, %v365
      %v402 = vpack.c.b16 %v368, %v367
      %v403 = vpack.c.b16 %v370, %v369
      %v404 = vpack.c.b16 %v372, %v371
      %v411 = vunpack.c.l.b16 %v239
      %v412 = vunpack.c.l.b16 %v240
      %v413 = vunpack.c.l.b16 %v241
      %v414 = vunpack.c.l.b16 %v242
      %v415 = vunpack.c.l.b16 %v243
      %v416 = vunpack.c.l.b16 %v244
      %v417 = vpack.c.b16 %v412, %v411
      %v418 = vpack.c.b16 %v414, %v413
      %v419 = vpack.c.b16 %v416, %v415
      %vm423 = vcmask 392192
      %v425 = vsel %vm423, %v373, 0
      %v428 = vsel %vm423, %v374, 0
      %v431 = vsel %vm423, %v375, 0
      %v434 = vsel %vm423, %v376, 0
      %v437 = vsel %vm423, %v377, 0
      %v440 = vsel %vm423, %v378, 0
      %v443 = vsel %vm423, %v379, 0
      %v446 = vsel %vm423, %v380, 0
      %v449 = vsel %vm423, %v381, 0
      %v452 = vsel %vm423, %v382, 0
      %v455 = vsel %vm423, %v383, 0
      %v458 = vsel %vm423, %v384, 0
      %v461 = vsel %vm423, %v385, 0
      %v464 = vsel %vm423, %v386, 0
      %v467 = vsel %vm423, %v387, 0
      %v470 = vsel %vm423, %v388, 0
      %v473 = vsel %vm423, %v389, 0
      %v476 = vsel %vm423, %v390, 0
      %v479 = vsel %vm423, %v391, 0
      %v482 = vsel %vm423, %v392, 0
      %v485 = vsel %vm423, %v393, 0
      %v488 = vsel %vm423, %v394, 0
      %v491 = vsel %vm423, %v395, 0
      %v494 = vsel %vm423, %v396, 0
      %v497 = vsel %vm423, %v397, 0
      %v500 = vsel %vm423, %v398, 0
      %v503 = vsel %vm423, %v399, 0
      %v506 = vsel %vm423, %v400, 0
      %v509 = vsel %vm423, %v401, 0
      %v512 = vsel %vm423, %v402, 0
      %v515 = vsel %vm423, %v403, 0
      %v518 = vsel %vm423, %v404, 0
      %520 = vmatpush.bf16.msra.mxu0 0
      %521 = vmatpush.bf16.msra.mxu0 0
      %522 = vmatpush.bf16.msra.mxu0 0
      %523 = vmatpush.bf16.msra.mxu0 0
      %524 = vmatpush.bf16.msra.mxu0 0
      %525 = vmatpush.bf16.msra.mxu0 %v419
      %526 = vmatpush.bf16.msra.mxu0 %v418
      %527 = vmatpush.bf16.msra.mxu0 %v417
      %528 = vmatmul.bf16.gmra.mxu0 %v425
      %v529 = vpop.f32.mrf.mxu0
      %v530 = vadd.f32 0.0, %v529
      %v531 = vpop.f32.mrf.mxu0
      %v532 = vadd.f32 0.0, %v531
      %533 = vmatmul.bf16.gmra.mxu0 %v428
      %v534 = vpop.f32.mrf.mxu0
      %v535 = vadd.f32 0.0, %v534
      %v536 = vpop.f32.mrf.mxu0
      %v537 = vadd.f32 0.0, %v536
      %538 = vmatmul.bf16.gmra.mxu0 %v431
      %v539 = vpop.f32.mrf.mxu0
      %v540 = vadd.f32 0.0, %v539
      %v541 = vpop.f32.mrf.mxu0
      %v542 = vadd.f32 0.0, %v541
      %543 = vmatmul.bf16.gmra.mxu0 %v434
      %v544 = vpop.f32.mrf.mxu0
      %v545 = vadd.f32 0.0, %v544
      %v546 = vpop.f32.mrf.mxu0
      %v547 = vadd.f32 0.0, %v546
      %548 = vmatmul.bf16.gmra.mxu0 %v437
      %v549 = vpop.f32.mrf.mxu0
      %v550 = vadd.f32 0.0, %v549
      %v551 = vpop.f32.mrf.mxu0
      %v552 = vadd.f32 0.0, %v551
      %553 = vmatmul.bf16.gmra.mxu0 %v440
      %v554 = vpop.f32.mrf.mxu0
      %v555 = vadd.f32 0.0, %v554
      %v556 = vpop.f32.mrf.mxu0
      %v557 = vadd.f32 0.0, %v556
      %558 = vmatmul.bf16.gmra.mxu0 %v443
      %v559 = vpop.f32.mrf.mxu0
      %v560 = vadd.f32 0.0, %v559
      %v561 = vpop.f32.mrf.mxu0
      %v562 = vadd.f32 0.0, %v561
      %563 = vmatmul.bf16.gmra.mxu0 %v446
      %v564 = vpop.f32.mrf.mxu0
      %v565 = vadd.f32 0.0, %v564
      %v566 = vpop.f32.mrf.mxu0
      %v567 = vadd.f32 0.0, %v566
      %568 = vmatmul.bf16.gmra.mxu0 %v449
      %v569 = vpop.f32.mrf.mxu0
      %v570 = vadd.f32 0.0, %v569
      %v571 = vpop.f32.mrf.mxu0
      %v572 = vadd.f32 0.0, %v571
      %573 = vmatmul.bf16.gmra.mxu0 %v452
      %v574 = vpop.f32.mrf.mxu0
      %v575 = vadd.f32 0.0, %v574
      %v576 = vpop.f32.mrf.mxu0
      %v577 = vadd.f32 0.0, %v576
      %578 = vmatmul.bf16.gmra.mxu0 %v455
      %v579 = vpop.f32.mrf.mxu0
      %v580 = vadd.f32 0.0, %v579
      %v581 = vpop.f32.mrf.mxu0
      %v582 = vadd.f32 0.0, %v581
      %583 = vmatmul.bf16.gmra.mxu0 %v458
      %v584 = vpop.f32.mrf.mxu0
      %v585 = vadd.f32 0.0, %v584
      %v586 = vpop.f32.mrf.mxu0
      %v587 = vadd.f32 0.0, %v586
      %588 = vmatmul.bf16.gmra.mxu0 %v461
      %v589 = vpop.f32.mrf.mxu0
      %v590 = vadd.f32 0.0, %v589
      %v591 = vpop.f32.mrf.mxu0
      %v592 = vadd.f32 0.0, %v591
      %593 = vmatmul.bf16.gmra.mxu0 %v464
      %v594 = vpop.f32.mrf.mxu0
      %v595 = vadd.f32 0.0, %v594
      %v596 = vpop.f32.mrf.mxu0
      %v597 = vadd.f32 0.0, %v596
      %598 = vmatmul.bf16.gmra.mxu0 %v467
      %v599 = vpop.f32.mrf.mxu0
      %v600 = vadd.f32 0.0, %v599
      %v601 = vpop.f32.mrf.mxu0
      %v602 = vadd.f32 0.0, %v601
      %603 = vmatmul.bf16.gmra.mxu0 %v470
      %v604 = vpop.f32.mrf.mxu0
      %v605 = vadd.f32 0.0, %v604
      %v606 = vpop.f32.mrf.mxu0
      %v607 = vadd.f32 0.0, %v606
      %608 = vmatmul.bf16.gmra.mxu0 %v473
      %v609 = vpop.f32.mrf.mxu0
      %v610 = vadd.f32 0.0, %v609
      %v611 = vpop.f32.mrf.mxu0
      %v612 = vadd.f32 0.0, %v611
      %613 = vmatmul.bf16.gmra.mxu0 %v476
      %v614 = vpop.f32.mrf.mxu0
      %v615 = vadd.f32 0.0, %v614
      %v616 = vpop.f32.mrf.mxu0
      %v617 = vadd.f32 0.0, %v616
      %618 = vmatmul.bf16.gmra.mxu0 %v479
      %v619 = vpop.f32.mrf.mxu0
      %v620 = vadd.f32 0.0, %v619
      %v621 = vpop.f32.mrf.mxu0
      %v622 = vadd.f32 0.0, %v621
      %623 = vmatmul.bf16.gmra.mxu0 %v482
      %v624 = vpop.f32.mrf.mxu0
      %v625 = vadd.f32 0.0, %v624
      %v626 = vpop.f32.mrf.mxu0
      %v627 = vadd.f32 0.0, %v626
      %628 = vmatmul.bf16.gmra.mxu0 %v485
      %v629 = vpop.f32.mrf.mxu0
      %v630 = vadd.f32 0.0, %v629
      %v631 = vpop.f32.mrf.mxu0
      %v632 = vadd.f32 0.0, %v631
      %633 = vmatmul.bf16.gmra.mxu0 %v488
      %v634 = vpop.f32.mrf.mxu0
      %v635 = vadd.f32 0.0, %v634
      %v636 = vpop.f32.mrf.mxu0
      %v637 = vadd.f32 0.0, %v636
      %638 = vmatmul.bf16.gmra.mxu0 %v491
      %v639 = vpop.f32.mrf.mxu0
      %v640 = vadd.f32 0.0, %v639
      %v641 = vpop.f32.mrf.mxu0
      %v642 = vadd.f32 0.0, %v641
      %643 = vmatmul.bf16.gmra.mxu0 %v494
      %v644 = vpop.f32.mrf.mxu0
      %v645 = vadd.f32 0.0, %v644
      %v646 = vpop.f32.mrf.mxu0
      %v647 = vadd.f32 0.0, %v646
      %648 = vmatmul.bf16.gmra.mxu0 %v497
      %v649 = vpop.f32.mrf.mxu0
      %v650 = vadd.f32 0.0, %v649
      %v651 = vpop.f32.mrf.mxu0
      %v652 = vadd.f32 0.0, %v651
      %653 = vmatmul.bf16.gmra.mxu0 %v500
      %v654 = vpop.f32.mrf.mxu0
      %v655 = vadd.f32 0.0, %v654
      %v656 = vpop.f32.mrf.mxu0
      %v657 = vadd.f32 0.0, %v656
      %658 = vmatmul.bf16.gmra.mxu0 %v503
      %v659 = vpop.f32.mrf.mxu0
      %v660 = vadd.f32 0.0, %v659
      %v661 = vpop.f32.mrf.mxu0
      %v662 = vadd.f32 0.0, %v661
      %663 = vmatmul.bf16.gmra.mxu0 %v506
      %v664 = vpop.f32.mrf.mxu0
      %v665 = vadd.f32 0.0, %v664
      %v666 = vpop.f32.mrf.mxu0
      %v667 = vadd.f32 0.0, %v666
      %668 = vmatmul.bf16.gmra.mxu0 %v509
      %v669 = vpop.f32.mrf.mxu0
      %v670 = vadd.f32 0.0, %v669
      %v671 = vpop.f32.mrf.mxu0
      %v672 = vadd.f32 0.0, %v671
      %673 = vmatmul.bf16.gmra.mxu0 %v512
      %v674 = vpop.f32.mrf.mxu0
      %v675 = vadd.f32 0.0, %v674
      %v676 = vpop.f32.mrf.mxu0
      %v677 = vadd.f32 0.0, %v676
      %678 = vmatmul.bf16.gmra.mxu0 %v515
      %v679 = vpop.f32.mrf.mxu0
      %v680 = vadd.f32 0.0, %v679
      %v681 = vpop.f32.mrf.mxu0
      %v682 = vadd.f32 0.0, %v681
      %683 = vmatmul.bf16.gmra.mxu0 %v518
      %v684 = vpop.f32.mrf.mxu0
      %v685 = vadd.f32 0.0, %v684
      %v686 = vpop.f32.mrf.mxu0
      %v687 = vadd.f32 0.0, %v686
      %688 = vdwg.mxu0
      %v689 = vld [vmem:[%s2] sm:$0x1]
      %v690 = vperm.slane %v689, 0
      %v691 = vmul.f32 %v530, %v690
      %v692 = vmul.f32 %v532, %v690
      %v693 = vmul.f32 %v535, %v690
      %v694 = vmul.f32 %v537, %v690
      %v695 = vmul.f32 %v540, %v690
      %v696 = vmul.f32 %v542, %v690
      %v697 = vmul.f32 %v545, %v690
      %v698 = vmul.f32 %v547, %v690
      %v699 = vmul.f32 %v550, %v690
      %v700 = vmul.f32 %v552, %v690
      %v701 = vmul.f32 %v555, %v690
      %v702 = vmul.f32 %v557, %v690
      %v703 = vmul.f32 %v560, %v690
      %v704 = vmul.f32 %v562, %v690
      %v705 = vmul.f32 %v565, %v690
      %v706 = vmul.f32 %v567, %v690
      %v707 = vmul.f32 %v570, %v690
      %v708 = vmul.f32 %v572, %v690
      %v709 = vmul.f32 %v575, %v690
      %v710 = vmul.f32 %v577, %v690
      %v711 = vmul.f32 %v580, %v690
      %v712 = vmul.f32 %v582, %v690
      %v713 = vmul.f32 %v585, %v690
      %v714 = vmul.f32 %v587, %v690
      %v715 = vmul.f32 %v590, %v690
      %v716 = vmul.f32 %v592, %v690
      %v717 = vmul.f32 %v595, %v690
      %v718 = vmul.f32 %v597, %v690
      %v719 = vmul.f32 %v600, %v690
      %v720 = vmul.f32 %v602, %v690
      %v721 = vmul.f32 %v605, %v690
      %v722 = vmul.f32 %v607, %v690
      %v723 = vmul.f32 %v610, %v690
      %v724 = vmul.f32 %v612, %v690
      %v725 = vmul.f32 %v615, %v690
      %v726 = vmul.f32 %v617, %v690
      %v727 = vmul.f32 %v620, %v690
      %v728 = vmul.f32 %v622, %v690
      %v729 = vmul.f32 %v625, %v690
      %v730 = vmul.f32 %v627, %v690
      %v731 = vmul.f32 %v630, %v690
      %v732 = vmul.f32 %v632, %v690
      %v733 = vmul.f32 %v635, %v690
      %v734 = vmul.f32 %v637, %v690
      %v735 = vmul.f32 %v640, %v690
      %v736 = vmul.f32 %v642, %v690
      %v737 = vmul.f32 %v645, %v690
      %v738 = vmul.f32 %v647, %v690
      %v739 = vmul.f32 %v650, %v690
      %v740 = vmul.f32 %v652, %v690
      %v741 = vmul.f32 %v655, %v690
      %v742 = vmul.f32 %v657, %v690
      %v743 = vmul.f32 %v660, %v690
      %v744 = vmul.f32 %v662, %v690
      %v745 = vmul.f32 %v665, %v690
      %v746 = vmul.f32 %v667, %v690
      %v747 = vmul.f32 %v670, %v690
      %v748 = vmul.f32 %v672, %v690
      %v749 = vmul.f32 %v675, %v690
      %v750 = vmul.f32 %v677, %v690
      %v751 = vmul.f32 %v680, %v690
      %v752 = vmul.f32 %v682, %v690
      %v753 = vmul.f32 %v685, %v690
      %v754 = vmul.f32 %v687, %v690
      %v755 = vld [vmem:[%s2 + $0x1] sm:$0x1]
      %v756 = vperm.slane %v755, 0
      %v757 = vadd.f32 %v691, %v756
      %v758 = vadd.f32 %v692, %v756
      %v759 = vadd.f32 %v693, %v756
      %v760 = vadd.f32 %v694, %v756
      %v761 = vadd.f32 %v695, %v756
      %v762 = vadd.f32 %v696, %v756
      %v763 = vadd.f32 %v697, %v756
      %v764 = vadd.f32 %v698, %v756
      %v765 = vadd.f32 %v699, %v756
      %v766 = vadd.f32 %v700, %v756
      %v767 = vadd.f32 %v701, %v756
      %v768 = vadd.f32 %v702, %v756
      %v769 = vadd.f32 %v703, %v756
      %v770 = vadd.f32 %v704, %v756
      %v771 = vadd.f32 %v705, %v756
      %v772 = vadd.f32 %v706, %v756
      %v773 = vadd.f32 %v707, %v756
      %v774 = vadd.f32 %v708, %v756
      %v775 = vadd.f32 %v709, %v756
      %v776 = vadd.f32 %v710, %v756
      %v777 = vadd.f32 %v711, %v756
      %v778 = vadd.f32 %v712, %v756
      %v779 = vadd.f32 %v713, %v756
      %v780 = vadd.f32 %v714, %v756
      %v781 = vadd.f32 %v715, %v756
      %v782 = vadd.f32 %v716, %v756
      %v783 = vadd.f32 %v717, %v756
      %v784 = vadd.f32 %v718, %v756
      %v785 = vadd.f32 %v719, %v756
      %v786 = vadd.f32 %v720, %v756
      %v787 = vadd.f32 %v721, %v756
      %v788 = vadd.f32 %v722, %v756
      %v789 = vadd.f32 %v723, %v756
      %v790 = vadd.f32 %v724, %v756
      %v791 = vadd.f32 %v725, %v756
      %v792 = vadd.f32 %v726, %v756
      %v793 = vadd.f32 %v727, %v756
      %v794 = vadd.f32 %v728, %v756
      %v795 = vadd.f32 %v729, %v756
      %v796 = vadd.f32 %v730, %v756
      %v797 = vadd.f32 %v731, %v756
      %v798 = vadd.f32 %v732, %v756
      %v799 = vadd.f32 %v733, %v756
      %v800 = vadd.f32 %v734, %v756
      %v801 = vadd.f32 %v735, %v756
      %v802 = vadd.f32 %v736, %v756
      %v803 = vadd.f32 %v737, %v756
      %v804 = vadd.f32 %v738, %v756
      %v805 = vadd.f32 %v739, %v756
      %v806 = vadd.f32 %v740, %v756
      %v807 = vadd.f32 %v741, %v756
      %v808 = vadd.f32 %v742, %v756
      %v809 = vadd.f32 %v743, %v756
      %v810 = vadd.f32 %v744, %v756
      %v811 = vadd.f32 %v745, %v756
      %v812 = vadd.f32 %v746, %v756
      %v813 = vadd.f32 %v747, %v756
      %v814 = vadd.f32 %v748, %v756
      %v815 = vadd.f32 %v749, %v756
      %v816 = vadd.f32 %v750, %v756
      %v817 = vadd.f32 %v751, %v756
      %v818 = vadd.f32 %v752, %v756
      %v819 = vadd.f32 %v753, %v756
      %v820 = vadd.f32 %v754, %v756
      %v821 = vmul.f32 %v757, 0.2
      %v822 = vmul.f32 %v758, 0.2
      %v823 = vmul.f32 %v759, 0.2
      %v824 = vmul.f32 %v760, 0.2
      %v825 = vmul.f32 %v761, 0.2
      %v826 = vmul.f32 %v762, 0.2
      %v827 = vmul.f32 %v763, 0.2
      %v828 = vmul.f32 %v764, 0.2
      %v829 = vmul.f32 %v765, 0.2
      %v830 = vmul.f32 %v766, 0.2
      %v831 = vmul.f32 %v767, 0.2
      %v832 = vmul.f32 %v768, 0.2
      %v833 = vmul.f32 %v769, 0.2
      %v834 = vmul.f32 %v770, 0.2
      %v835 = vmul.f32 %v771, 0.2
      %v836 = vmul.f32 %v772, 0.2
      %v837 = vmul.f32 %v773, 0.2
      %v838 = vmul.f32 %v774, 0.2
      %v839 = vmul.f32 %v775, 0.2
      %v840 = vmul.f32 %v776, 0.2
      %v841 = vmul.f32 %v777, 0.2
      %v842 = vmul.f32 %v778, 0.2
      %v843 = vmul.f32 %v779, 0.2
      %v844 = vmul.f32 %v780, 0.2
      %v845 = vmul.f32 %v781, 0.2
      %v846 = vmul.f32 %v782, 0.2
      %v847 = vmul.f32 %v783, 0.2
      %v848 = vmul.f32 %v784, 0.2
      %v849 = vmul.f32 %v785, 0.2
      %v850 = vmul.f32 %v786, 0.2
      %v851 = vmul.f32 %v787, 0.2
      %v852 = vmul.f32 %v788, 0.2
      %v853 = vmul.f32 %v789, 0.2
      %v854 = vmul.f32 %v790, 0.2
      %v855 = vmul.f32 %v791, 0.2
      %v856 = vmul.f32 %v792, 0.2
      %v857 = vmul.f32 %v793, 0.2
      %v858 = vmul.f32 %v794, 0.2
      %v859 = vmul.f32 %v795, 0.2
      %v860 = vmul.f32 %v796, 0.2
      %v861 = vmul.f32 %v797, 0.2
      %v862 = vmul.f32 %v798, 0.2
      %v863 = vmul.f32 %v799, 0.2
      %v864 = vmul.f32 %v800, 0.2
      %v865 = vmul.f32 %v801, 0.2
      %v866 = vmul.f32 %v802, 0.2
      %v867 = vmul.f32 %v803, 0.2
      %v868 = vmul.f32 %v804, 0.2
      %v869 = vmul.f32 %v805, 0.2
      %v870 = vmul.f32 %v806, 0.2
      %v871 = vmul.f32 %v807, 0.2
      %v872 = vmul.f32 %v808, 0.2
      %v873 = vmul.f32 %v809, 0.2
      %v874 = vmul.f32 %v810, 0.2
      %v875 = vmul.f32 %v811, 0.2
      %v876 = vmul.f32 %v812, 0.2
      %v877 = vmul.f32 %v813, 0.2
      %v878 = vmul.f32 %v814, 0.2
      %v879 = vmul.f32 %v815, 0.2
      %v880 = vmul.f32 %v816, 0.2
      %v881 = vmul.f32 %v817, 0.2
      %v882 = vmul.f32 %v818, 0.2
      %v883 = vmul.f32 %v819, 0.2
      %v884 = vmul.f32 %v820, 0.2
      %v885 = vmax.f32 %v757, %v821
      %v886 = vmax.f32 %v758, %v822
      %v887 = vmax.f32 %v759, %v823
      %v888 = vmax.f32 %v760, %v824
      %v889 = vmax.f32 %v761, %v825
      %v890 = vmax.f32 %v762, %v826
      %v891 = vmax.f32 %v763, %v827
      %v892 = vmax.f32 %v764, %v828
      %v893 = vmax.f32 %v765, %v829
      %v894 = vmax.f32 %v766, %v830
      %v895 = vmax.f32 %v767, %v831
      %v896 = vmax.f32 %v768, %v832
      %v897 = vmax.f32 %v769, %v833
      %v898 = vmax.f32 %v770, %v834
      %v899 = vmax.f32 %v771, %v835
      %v900 = vmax.f32 %v772, %v836
      %v901 = vmax.f32 %v773, %v837
      %v902 = vmax.f32 %v774, %v838
      %v903 = vmax.f32 %v775, %v839
      %v904 = vmax.f32 %v776, %v840
      %v905 = vmax.f32 %v777, %v841
      %v906 = vmax.f32 %v778, %v842
      %v907 = vmax.f32 %v779, %v843
      %v908 = vmax.f32 %v780, %v844
      %v909 = vmax.f32 %v781, %v845
      %v910 = vmax.f32 %v782, %v846
      %v911 = vmax.f32 %v783, %v847
      %v912 = vmax.f32 %v784, %v848
      %v913 = vmax.f32 %v785, %v849
      %v914 = vmax.f32 %v786, %v850
      %v915 = vmax.f32 %v787, %v851
      %v916 = vmax.f32 %v788, %v852
      %v917 = vmax.f32 %v789, %v853
      %v918 = vmax.f32 %v790, %v854
      %v919 = vmax.f32 %v791, %v855
      %v920 = vmax.f32 %v792, %v856
      %v921 = vmax.f32 %v793, %v857
      %v922 = vmax.f32 %v794, %v858
      %v923 = vmax.f32 %v795, %v859
      %v924 = vmax.f32 %v796, %v860
      %v925 = vmax.f32 %v797, %v861
      %v926 = vmax.f32 %v798, %v862
      %v927 = vmax.f32 %v799, %v863
      %v928 = vmax.f32 %v800, %v864
      %v929 = vmax.f32 %v801, %v865
      %v930 = vmax.f32 %v802, %v866
      %v931 = vmax.f32 %v803, %v867
      %v932 = vmax.f32 %v804, %v868
      %v933 = vmax.f32 %v805, %v869
      %v934 = vmax.f32 %v806, %v870
      %v935 = vmax.f32 %v807, %v871
      %v936 = vmax.f32 %v808, %v872
      %v937 = vmax.f32 %v809, %v873
      %v938 = vmax.f32 %v810, %v874
      %v939 = vmax.f32 %v811, %v875
      %v940 = vmax.f32 %v812, %v876
      %v941 = vmax.f32 %v813, %v877
      %v942 = vmax.f32 %v814, %v878
      %v943 = vmax.f32 %v815, %v879
      %v944 = vmax.f32 %v816, %v880
      %v945 = vmax.f32 %v817, %v881
      %v946 = vmax.f32 %v818, %v882
      %v947 = vmax.f32 %v819, %v883
      %v948 = vmax.f32 %v820, %v884
      %v949 = vpack.c.bf16 %v885, %v885
      %v950 = vpack.c.bf16 %v886, %v886
      %v951 = vpack.c.bf16 %v887, %v887
      %v952 = vpack.c.bf16 %v888, %v888
      %v953 = vpack.c.bf16 %v889, %v889
      %v954 = vpack.c.bf16 %v890, %v890
      %v955 = vpack.c.bf16 %v891, %v891
      %v956 = vpack.c.bf16 %v892, %v892
      %v957 = vpack.c.bf16 %v893, %v893
      %v958 = vpack.c.bf16 %v894, %v894
      %v959 = vpack.c.bf16 %v895, %v895
      %v960 = vpack.c.bf16 %v896, %v896
      %v961 = vpack.c.bf16 %v897, %v897
      %v962 = vpack.c.bf16 %v898, %v898
      %v963 = vpack.c.bf16 %v899, %v899
      %v964 = vpack.c.bf16 %v900, %v900
      %v965 = vpack.c.bf16 %v901, %v901
      %v966 = vpack.c.bf16 %v902, %v902
      %v967 = vpack.c.bf16 %v903, %v903
      %v968 = vpack.c.bf16 %v904, %v904
      %v969 = vpack.c.bf16 %v905, %v905
      %v970 = vpack.c.bf16 %v906, %v906
      %v971 = vpack.c.bf16 %v907, %v907
      %v972 = vpack.c.bf16 %v908, %v908
      %v973 = vpack.c.bf16 %v909, %v909
      %v974 = vpack.c.bf16 %v910, %v910
      %v975 = vpack.c.bf16 %v911, %v911
      %v976 = vpack.c.bf16 %v912, %v912
      %v977 = vpack.c.bf16 %v913, %v913
      %v978 = vpack.c.bf16 %v914, %v914
      %v979 = vpack.c.bf16 %v915, %v915
      %v980 = vpack.c.bf16 %v916, %v916
      %v981 = vpack.c.bf16 %v917, %v917
      %v982 = vpack.c.bf16 %v918, %v918
      %v983 = vpack.c.bf16 %v919, %v919
      %v984 = vpack.c.bf16 %v920, %v920
      %v985 = vpack.c.bf16 %v921, %v921
      %v986 = vpack.c.bf16 %v922, %v922
      %v987 = vpack.c.bf16 %v923, %v923
      %v988 = vpack.c.bf16 %v924, %v924
      %v989 = vpack.c.bf16 %v925, %v925
      %v990 = vpack.c.bf16 %v926, %v926
      %v991 = vpack.c.bf16 %v927, %v927
      %v992 = vpack.c.bf16 %v928, %v928
      %v993 = vpack.c.bf16 %v929, %v929
      %v994 = vpack.c.bf16 %v930, %v930
      %v995 = vpack.c.bf16 %v931, %v931
      %v996 = vpack.c.bf16 %v932, %v932
      %v997 = vpack.c.bf16 %v933, %v933
      %v998 = vpack.c.bf16 %v934, %v934
      %v999 = vpack.c.bf16 %v935, %v935
      %v1000 = vpack.c.bf16 %v936, %v936
      %v1001 = vpack.c.bf16 %v937, %v937
      %v1002 = vpack.c.bf16 %v938, %v938
      %v1003 = vpack.c.bf16 %v939, %v939
      %v1004 = vpack.c.bf16 %v940, %v940
      %v1005 = vpack.c.bf16 %v941, %v941
      %v1006 = vpack.c.bf16 %v942, %v942
      %v1007 = vpack.c.bf16 %v943, %v943
      %v1008 = vpack.c.bf16 %v944, %v944
      %v1009 = vpack.c.bf16 %v945, %v945
      %v1010 = vpack.c.bf16 %v946, %v946
      %v1011 = vpack.c.bf16 %v947, %v947
      %v1012 = vpack.c.bf16 %v948, %v948
      %1013 = vst [vmem:[%s172] sm:$0xf] %v949
      %1014 = vst [vmem:[%s172 + $0x4] sm:$0xf] %v950
      %1015 = vst [vmem:[%s172 + $0x8] sm:$0xf] %v951
      %1016 = vst [vmem:[%s172 + $0xc] sm:$0xf] %v952
      %1017 = vst [vmem:[%s172 + $0x10] sm:$0xf] %v953
      %1018 = vst [vmem:[%s172 + $0x14] sm:$0xf] %v954
      %1019 = vst [vmem:[%s172 + $0x18] sm:$0xf] %v955
      %1020 = vst [vmem:[%s172 + $0x1c] sm:$0xf] %v956
      %1021 = vst [vmem:[%s172 + $0x20] sm:$0xf] %v957
      %1022 = vst [vmem:[%s172 + $0x24] sm:$0xf] %v958
      %1023 = vst [vmem:[%s172 + $0x28] sm:$0xf] %v959
      %1024 = vst [vmem:[%s172 + $0x2c] sm:$0xf] %v960
      %1025 = vst [vmem:[%s172 + $0x30] sm:$0xf] %v961
      %1026 = vst [vmem:[%s172 + $0x34] sm:$0xf] %v962
      %1027 = vst [vmem:[%s172 + $0x38] sm:$0xf] %v963
      %1028 = vst [vmem:[%s172 + $0x3c] sm:$0xf] %v964
      %1029 = vst [vmem:[%s172 + $0x40] sm:$0xf] %v965
      %1030 = vst [vmem:[%s172 + $0x44] sm:$0xf] %v966
      %1031 = vst [vmem:[%s172 + $0x48] sm:$0xf] %v967
      %1032 = vst [vmem:[%s172 + $0x4c] sm:$0xf] %v968
      %1033 = vst [vmem:[%s172 + $0x50] sm:$0xf] %v969
      %1034 = vst [vmem:[%s172 + $0x54] sm:$0xf] %v970
      %1035 = vst [vmem:[%s172 + $0x58] sm:$0xf] %v971
      %1036 = vst [vmem:[%s172 + $0x5c] sm:$0xf] %v972
      %1037 = vst [vmem:[%s172 + $0x60] sm:$0xf] %v973
      %1038 = vst [vmem:[%s172 + $0x64] sm:$0xf] %v974
      %1039 = vst [vmem:[%s172 + $0x68] sm:$0xf] %v975
      %1040 = vst [vmem:[%s172 + $0x6c] sm:$0xf] %v976
      %1041 = vst [vmem:[%s172 + $0x70] sm:$0xf] %v977
      %1042 = vst [vmem:[%s172 + $0x74] sm:$0xf] %v978
      %1043 = vst [vmem:[%s172 + $0x78] sm:$0xf] %v979
      %1044 = vst [vmem:[%s172 + $0x7c] sm:$0xf] %v980
      %1045 = vst [vmem:[%s172 + $0x80] sm:$0xf] %v981
      %1046 = vst [vmem:[%s172 + $0x84] sm:$0xf] %v982
      %1047 = vst [vmem:[%s172 + $0x88] sm:$0xf] %v983
      %1048 = vst [vmem:[%s172 + $0x8c] sm:$0xf] %v984
      %1049 = vst [vmem:[%s172 + $0x90] sm:$0xf] %v985
      %1050 = vst [vmem:[%s172 + $0x94] sm:$0xf] %v986
      %1051 = vst [vmem:[%s172 + $0x98] sm:$0xf] %v987
      %1052 = vst [vmem:[%s172 + $0x9c] sm:$0xf] %v988
      %1053 = vst [vmem:[%s172 + $0xa0] sm:$0xf] %v989
      %1054 = vst [vmem:[%s172 + $0xa4] sm:$0xf] %v990
      %1055 = vst [vmem:[%s172 + $0xa8] sm:$0xf] %v991
      %1056 = vst [vmem:[%s172 + $0xac] sm:$0xf] %v992
      %1057 = vst [vmem:[%s172 + $0xb0] sm:$0xf] %v993
      %1058 = vst [vmem:[%s172 + $0xb4] sm:$0xf] %v994
      %1059 = vst [vmem:[%s172 + $0xb8] sm:$0xf] %v995
      %1060 = vst [vmem:[%s172 + $0xbc] sm:$0xf] %v996
      %1061 = vst [vmem:[%s172 + $0xc0] sm:$0xf] %v997
      %1062 = vst [vmem:[%s172 + $0xc4] sm:$0xf] %v998
      %1063 = vst [vmem:[%s172 + $0xc8] sm:$0xf] %v999
      %1064 = vst [vmem:[%s172 + $0xcc] sm:$0xf] %v1000
      %1065 = vst [vmem:[%s172 + $0xd0] sm:$0xf] %v1001
      %1066 = vst [vmem:[%s172 + $0xd4] sm:$0xf] %v1002
      %1067 = vst [vmem:[%s172 + $0xd8] sm:$0xf] %v1003
      %1068 = vst [vmem:[%s172 + $0xdc] sm:$0xf] %v1004
      %1069 = vst [vmem:[%s172 + $0xe0] sm:$0xf] %v1005
      %1070 = vst [vmem:[%s172 + $0xe4] sm:$0xf] %v1006
      %1071 = vst [vmem:[%s172 + $0xe8] sm:$0xf] %v1007
      %1072 = vst [vmem:[%s172 + $0xec] sm:$0xf] %v1008
      %1073 = vst [vmem:[%s172 + $0xf0] sm:$0xf] %v1009
      %1074 = vst [vmem:[%s172 + $0xf4] sm:$0xf] %v1010
      %1075 = vst [vmem:[%s172 + $0xf8] sm:$0xf] %v1011
      %1076 = vst [vmem:[%s172 + $0xfc] sm:$0xf] %v1012
      %s1077 = smul.u32 64, %s14
      %p1078 = scmp.lt.s32.totalorder %s1077, 575
      %s1079 = scalar_select %p1078, %s1077, 575
      %s1080 = smul.addr %s1079, 4
      %s1081 = scalar_lea.vmem %s3, %s1080
      // Predicated region
      $region33: #{_lambda_.8} parent=31 // pred_check
        %p1082 = pneg %p100
      $region34: #{_lambda_.8} parent=31 // pred_check_branch
        %1084 = sbr.rel (%p1082) target = $region36
      $region35: #{_lambda_.8} parent=31 // pred_region
        %s1085 = smul.u32 64, %s14
      $region36: #{_lambda_.8} parent=31 // pred_fallthru
        _
    $region32: #{_lambda_.8} parent=5 // pred_fallthru
      _
    %p1086 = scmp.le.s32.totalorder 2, %s9
    // Predicated region
    $region37: #{_lambda_.8} parent=5 // pred_check
      %p1087 = pneg %p1086
    $region38: #{_lambda_.8} parent=5 // pred_check_branch
      %1089 = sbr.rel (%p1087) target = $region40
    $region39: #{_lambda_.8} parent=5 // pred_region
      %s1090 = ssub.s32 %s9, 2
      // Predicated region
      $region41: #{_lambda_.8} parent=39 // pred_check
        %p1091 = pneg %p106
      $region42: #{_lambda_.8} parent=39 // pred_check_branch
        %1093 = sbr.rel (%p1091) target = $region44
      $region43: #{_lambda_.8} parent=39 // pred_region
        %s1094 = smul.u32 64, %s15
        %p1095 = scmp.lt.s32.totalorder %s1094, 575
        %s1096 = scalar_select %p1095, %s1094, 575
        %s1097 = smul.addr %s1096, 4
        %s1098 = scalar_lea.vmem %s3, %s1097
      $region44: #{_lambda_.8} parent=39 // pred_fallthru
        _
    $region40: #{_lambda_.8} parent=5 // pred_fallthru
      _
  $region6: #{_lambda_.8} parent=0 // loop_footer
    %s13 = sadd.s32 1, %s9
  $region7: #{_lambda_.8} parent=0 // loop_footer_branch
    %8 = sbr.rel target = $region3
  $region8: #{_lambda_.8} parent=0 // loop_exit
    _

// kernel: _lambda_.9
$region0: #{_lambda_.9}
  #allocation0 [shape = 'u32[]', space=smem, size = 0x4, offset = 0x4, fixed_abs, tag = 'smem constant byte address 0x4 - core index']
  #allocation1 [shape = 'u32[72,128]{1,0:T(1,128)}', space=vmem, size = 0x9000, scoped, tag = 'internal scratch']
  %s0 = inlined_call_operand.vmem [shape: bf16[1536,256], index: 0, kind: input, shape index: {}]
  %s1 = inlined_call_operand.vmem [shape: bf16[256,128], index: 1, kind: input, shape index: {}]
  %s2 = inlined_call_operand.vmem [shape: f32[1536,128], index: 2, kind: output, shape index: {0}]
  %s3 = inlined_call_operand.vmem [shape: f32[2,128], index: 3, kind: output, shape index: {1}]
  %4 = xla_tuple %s2, %s3
  %s5 = sld [smem:[#allocation0]]
  $region53: #{_lambda_.9} parent=0
    _
  %s7 = ssub.s32 1, %s5
  %s8 = scalar_select 0, %s7, %s5
  loop: start=0, step=1, limit=5
  $region2: #{_lambda_.9} parent=0 // loop_pre_header
    _
  $region3: #{_lambda_.9} parent=0 // loop_header
    %s10 = sphi 0, %s14
    %p11 = scmp.ge.s32.totalorder %s10, 5
    %s20 = sphi 0, %s22
    %s23 = sphi 0, %s20
    %s24 = sphi 0, %s23
    %s40 = sphi 0, %s24
    %s44 = sphi 0, %s44
    %s46 = sphi 0, %s44
    %s47 = sphi 0, %s46
    %s61 = sphi 0, %s47
    %s67 = sphi 0, %s69
    %s70 = sphi 0, %s67
    %s71 = sphi 0, %s70
    %s87 = sphi 0, %s71
    %s91 = sphi 0, %s91
    %s93 = sphi 0, %s91
    %s94 = sphi 0, %s93
    %s108 = sphi 0, %s94
  $region4: #{_lambda_.9} parent=0 // loop_header_branch
    %13 = sbr.rel (%p11) target = $region8
  $region5: #{_lambda_.9} parent=0 // loop_body
    %s15 = ssub.s32 %s10, 1
    %s16 = ssub.s32 %s10, 2
    %s17 = sadd.s32 %s10, 1
    %s18 = ssub.s32 %s10, %s17
    %p19 = scmp.eq.s32.totalorder %s18, 0
    %s21 = sadd.s32 %s20, 1
    %s22 = scalar_select %p19, %s20, %s21
    %p25 = pneg %p19
    %p26 = scmp.eq.s32.totalorder %s10, 2
    %p27 = por %p25, %p26
    %p28 = scmp.ne.s32.totalorder %s20, %s23
    %p29 = scmp.eq.s32.totalorder %s10, 0
    %p30 = por %p28, %p29
    %p31 = scmp.ne.s32.totalorder %s20, %s23
    %p32 = scmp.eq.s32.totalorder %s15, 2
    %p33 = por %p31, %p32
    %p34 = scmp.ne.s32.totalorder %s23, %s24
    %p35 = scmp.eq.s32.totalorder %s15, 0
    %p36 = por %p34, %p35
    %p37 = scmp.ne.s32.totalorder %s23, %s24
    %p38 = scmp.eq.s32.totalorder %s16, 2
    %p39 = por %p37, %p38
    %p41 = scmp.ne.s32.totalorder %s24, %s40
    %p42 = scmp.eq.s32.totalorder %s16, 0
    %p43 = por %p41, %p42
    %s45 = sadd.s32 %s44, 1
    %p48 = scmp.eq.s32.totalorder %s10, 2
    %p49 = scmp.ne.s32.totalorder %s44, %s46
    %p50 = scmp.eq.s32.totalorder %s10, 0
    %p51 = por %p49, %p50
    %p52 = scmp.ne.s32.totalorder %s44, %s46
    %p53 = scmp.eq.s32.totalorder %s15, 2
    %p54 = por %p52, %p53
    %p55 = scmp.ne.s32.totalorder %s46, %s47
    %p56 = scmp.eq.s32.totalorder %s15, 0
    %p57 = por %p55, %p56
    %p58 = scmp.ne.s32.totalorder %s46, %s47
    %p59 = scmp.eq.s32.totalorder %s16, 2
    %p60 = por %p58, %p59
    %p62 = scmp.ne.s32.totalorder %s47, %s61
    %p63 = scmp.eq.s32.totalorder %s16, 0
    %p64 = por %p62, %p63
    %s65 = ssub.s32 %s10, %s17
    %p66 = scmp.eq.s32.totalorder %s65, 0
    %s68 = sadd.s32 %s67, 1
    %s69 = scalar_select %p66, %s67, %s68
    %p72 = pneg %p66
    %p73 = scmp.eq.s32.totalorder %s10, 2
    %p74 = por %p72, %p73
    %p75 = scmp.ne.s32.totalorder %s67, %s70
    %p76 = scmp.eq.s32.totalorder %s10, 0
    %p77 = por %p75, %p76
    %p78 = scmp.ne.s32.totalorder %s67, %s70
    %p79 = scmp.eq.s32.totalorder %s15, 2
    %p80 = por %p78, %p79
    %p81 = scmp.ne.s32.totalorder %s70, %s71
    %p82 = scmp.eq.s32.totalorder %s15, 0
    %p83 = por %p81, %p82
    %p84 = scmp.ne.s32.totalorder %s70, %s71
    %p85 = scmp.eq.s32.totalorder %s16, 2
    %p86 = por %p84, %p85
    %p88 = scmp.ne.s32.totalorder %s71, %s87
    %p89 = scmp.eq.s32.totalorder %s16, 0
    %p90 = por %p88, %p89
    %s92 = sadd.s32 %s91, 1
    %p95 = scmp.eq.s32.totalorder %s10, 2
    %p96 = scmp.ne.s32.totalorder %s91, %s93
    %p97 = scmp.eq.s32.totalorder %s10, 0
    %p98 = por %p96, %p97
    %p99 = scmp.ne.s32.totalorder %s91, %s93
    %p100 = scmp.eq.s32.totalorder %s15, 2
    %p101 = por %p99, %p100
    %p102 = scmp.ne.s32.totalorder %s93, %s94
    %p103 = scmp.eq.s32.totalorder %s15, 0
    %p104 = por %p102, %p103
    %p105 = scmp.ne.s32.totalorder %s93, %s94
    %p106 = scmp.eq.s32.totalorder %s16, 2
    %p107 = por %p105, %p106
    %p109 = scmp.ne.s32.totalorder %s94, %s108
    %p110 = scmp.eq.s32.totalorder %s16, 0
    %p111 = por %p109, %p110
    %p112 = scmp.le.s32.totalorder 1, %s10
    %p113 = scmp.lt.s32.totalorder %s10, 4
    %p114 = pnand %p112, %p113
    %p115 = pneg %p114
    // Predicated region
    $region9: #{_lambda_.9} parent=5 // pred_check
      _
    $region10: #{_lambda_.9} parent=5 // pred_check_branch
      %117 = sbr.rel (%p114) target = $region12
    $region11: #{_lambda_.9} parent=5 // pred_region
      %s118 = ssub.s32 %s10, 1
      // Predicated region
      $region13: #{_lambda_.9} parent=11 // pred_check
        %p119 = pneg %p57
      $region14: #{_lambda_.9} parent=11 // pred_check_branch
        %121 = sbr.rel (%p119) target = $region16
      $region15: #{_lambda_.9} parent=11 // pred_region
        _
      $region16: #{_lambda_.9} parent=11 // pred_fallthru
        _
    $region12: #{_lambda_.9} parent=5 // pred_fallthru
      _
    %p122 = scmp.lt.s32.totalorder %s10, 3
    // Predicated region
    $region17: #{_lambda_.9} parent=5 // pred_check
      %p123 = pneg %p122
    $region18: #{_lambda_.9} parent=5 // pred_check_branch
      %125 = sbr.rel (%p123) target = $region20
    $region19: #{_lambda_.9} parent=5 // pred_region
      // Predicated region
      $region21: #{_lambda_.9} parent=19 // pred_check
        %p126 = pneg %p30
      $region22: #{_lambda_.9} parent=19 // pred_check_branch
        %128 = sbr.rel (%p126) target = $region24
      $region23: #{_lambda_.9} parent=19 // pred_region
        %s129 = smul.u32 64, %s10
        %p130 = scmp.lt.s32.totalorder %s129, 191
        %s131 = scalar_select %p130, %s129, 191
        %s132 = smul.addr %s131, 2
        %s133 = smul.addr %s132, 4
        %s134 = scalar_lea.vmem %s0, %s133
        %s135 = smul.u32 64, %s10
      $region24: #{_lambda_.9} parent=19 // pred_fallthru
        _
    $region20: #{_lambda_.9} parent=5 // pred_fallthru
      _
    %p136 = scmp.le.s32.totalorder 1, %s10
    %p137 = scmp.lt.s32.totalorder %s10, 4
    %p138 = pnand %p136, %p137
    %p139 = pneg %p138
    // Predicated region
    $region25: #{_lambda_.9} parent=5 // pred_check
      _
    $region26: #{_lambda_.9} parent=5 // pred_check_branch
      %141 = sbr.rel (%p138) target = $region28
    $region27: #{_lambda_.9} parent=5 // pred_region
      %s142 = ssub.s32 %s10, 1
      %s143 = smul.u32 64, %s15
      %p144 = scmp.lt.s32.totalorder %s143, 191
      %s145 = scalar_select %p144, %s143, 191
      %s146 = smul.addr %s145, 2
      %s147 = smul.addr %s146, 4
      %s148 = scalar_lea.vmem %s0, %s147
      %p149 = pneg %p36
      %p150 = pneg %p33
      %p151 = pneg %p57
      %p152 = pneg %p54
      %p153 = pneg %p83
      %p154 = pneg %p80
      %s155 = smul.u32 64, %s15
      %p156 = scmp.lt.s32.totalorder %s155, 191
      %s157 = scalar_select %p156, %s155, 191
      %s158 = smul.addr %s157, 8
      %s159 = scalar_lea.vmem %s2, %s158
      %p160 = pneg %p104
      %p161 = pneg %p101
      %s162 = smul.u32 64, %s15
      %p163 = scmp.lt.s32.totalorder %s162, 191
      %s164 = scalar_select %p163, %s162, 191
      %s165 = smul.addr %s164, 2
      %s166 = smul.addr %s165, 4
      %s167 = scalar_lea.vmem %s0, %s166
      %s168 = smul.u32 64, %s15
      %s169 = smul.u32 64, %s15
      %p170 = scmp.lt.s32.totalorder %s169, 191
      %s171 = scalar_select %p170, %s169, 191
      %s172 = smul.addr %s171, 8
      %s173 = scalar_lea.vmem %s2, %s172
      %s174 = smul.u32 64, %s15
      %p175 = scmp.eq.s32.totalorder %s15, 0
      // Predicated region
      $region29: #{_lambda_.9} parent=27 // pred_check
        %p176 = pneg %p175
      $region30: #{_lambda_.9} parent=27 // pred_check_branch
        %178 = sbr.rel (%p176) target = $region32
      $region31: #{_lambda_.9} parent=27 // pred_region
        %179 = vst [vmem:[%s3] sm:$0x3] 0.0
      $region32: #{_lambda_.9} parent=27 // pred_fallthru
        _
      %v180 = vld [vmem:[%s167] sm:$0xff]
      %v181 = vld [vmem:[%s167 + $0x8] sm:$0xff]
      %v182 = vld [vmem:[%s167 + $0x10] sm:$0xff]
      %v183 = vld [vmem:[%s167 + $0x18] sm:$0xff]
      %v184 = vld [vmem:[%s167 + $0x20] sm:$0xff]
      %v185 = vld [vmem:[%s167 + $0x28] sm:$0xff]
      %v186 = vld [vmem:[%s167 + $0x30] sm:$0xff]
      %v187 = vld [vmem:[%s167 + $0x38] sm:$0xff]
      %v188 = vld [vmem:[%s167 + $0x40] sm:$0xff]
      %v189 = vld [vmem:[%s167 + $0x48] sm:$0xff]
      %v190 = vld [vmem:[%s167 + $0x50] sm:$0xff]
      %v191 = vld [vmem:[%s167 + $0x58] sm:$0xff]
      %v192 = vld [vmem:[%s167 + $0x60] sm:$0xff]
      %v193 = vld [vmem:[%s167 + $0x68] sm:$0xff]
      %v194 = vld [vmem:[%s167 + $0x70] sm:$0xff]
      %v195 = vld [vmem:[%s167 + $0x78] sm:$0xff]
      %v196 = vld [vmem:[%s167 + $0x80] sm:$0xff]
      %v197 = vld [vmem:[%s167 + $0x88] sm:$0xff]
      %v198 = vld [vmem:[%s167 + $0x90] sm:$0xff]
      %v199 = vld [vmem:[%s167 + $0x98] sm:$0xff]
      %v200 = vld [vmem:[%s167 + $0xa0] sm:$0xff]
      %v201 = vld [vmem:[%s167 + $0xa8] sm:$0xff]
      %v202 = vld [vmem:[%s167 + $0xb0] sm:$0xff]
      %v203 = vld [vmem:[%s167 + $0xb8] sm:$0xff]
      %v204 = vld [vmem:[%s167 + $0xc0] sm:$0xff]
      %v205 = vld [vmem:[%s167 + $0xc8] sm:$0xff]
      %v206 = vld [vmem:[%s167 + $0xd0] sm:$0xff]
      %v207 = vld [vmem:[%s167 + $0xd8] sm:$0xff]
      %v208 = vld [vmem:[%s167 + $0xe0] sm:$0xff]
      %v209 = vld [vmem:[%s167 + $0xe8] sm:$0xff]
      %v210 = vld [vmem:[%s167 + $0xf0] sm:$0xff]
      %v211 = vld [vmem:[%s167 + $0xf8] sm:$0xff]
      %v212 = vld [vmem:[%s167 + $0x100] sm:$0xff]
      %v213 = vld [vmem:[%s167 + $0x108] sm:$0xff]
      %v214 = vld [vmem:[%s167 + $0x110] sm:$0xff]
      %v215 = vld [vmem:[%s167 + $0x118] sm:$0xff]
      %v216 = vld [vmem:[%s167 + $0x120] sm:$0xff]
      %v217 = vld [vmem:[%s167 + $0x128] sm:$0xff]
      %v218 = vld [vmem:[%s167 + $0x130] sm:$0xff]
      %v219 = vld [vmem:[%s167 + $0x138] sm:$0xff]
      %v220 = vld [vmem:[%s167 + $0x140] sm:$0xff]
      %v221 = vld [vmem:[%s167 + $0x148] sm:$0xff]
      %v222 = vld [vmem:[%s167 + $0x150] sm:$0xff]
      %v223 = vld [vmem:[%s167 + $0x158] sm:$0xff]
      %v224 = vld [vmem:[%s167 + $0x160] sm:$0xff]
      %v225 = vld [vmem:[%s167 + $0x168] sm:$0xff]
      %v226 = vld [vmem:[%s167 + $0x170] sm:$0xff]
      %v227 = vld [vmem:[%s167 + $0x178] sm:$0xff]
      %v228 = vld [vmem:[%s167 + $0x180] sm:$0xff]
      %v229 = vld [vmem:[%s167 + $0x188] sm:$0xff]
      %v230 = vld [vmem:[%s167 + $0x190] sm:$0xff]
      %v231 = vld [vmem:[%s167 + $0x198] sm:$0xff]
      %v232 = vld [vmem:[%s167 + $0x1a0] sm:$0xff]
      %v233 = vld [vmem:[%s167 + $0x1a8] sm:$0xff]
      %v234 = vld [vmem:[%s167 + $0x1b0] sm:$0xff]
      %v235 = vld [vmem:[%s167 + $0x1b8] sm:$0xff]
      %v236 = vld [vmem:[%s167 + $0x1c0] sm:$0xff]
      %v237 = vld [vmem:[%s167 + $0x1c8] sm:$0xff]
      %v238 = vld [vmem:[%s167 + $0x1d0] sm:$0xff]
      %v239 = vld [vmem:[%s167 + $0x1d8] sm:$0xff]
      %v240 = vld [vmem:[%s167 + $0x1e0] sm:$0xff]
      %v241 = vld [vmem:[%s167 + $0x1e8] sm:$0xff]
      %v242 = vld [vmem:[%s167 + $0x1f0] sm:$0xff]
      %v243 = vld [vmem:[%s167 + $0x1f8] sm:$0xff]
      %v244 = vld [vmem:[%s1] sm:$0xf]
      %v245 = vld [vmem:[%s1 + $0x4] sm:$0xf]
      %v246 = vld [vmem:[%s1 + $0x8] sm:$0xf]
      %v247 = vld [vmem:[%s1 + $0xc] sm:$0xf]
      %v248 = vld [vmem:[%s1 + $0x10] sm:$0xf]
      %v249 = vld [vmem:[%s1 + $0x14] sm:$0xf]
      %v250 = vld [vmem:[%s1 + $0x18] sm:$0xf]
      %v251 = vld [vmem:[%s1 + $0x1c] sm:$0xf]
      %v252 = vld [vmem:[%s1 + $0x20] sm:$0xf]
      %v253 = vld [vmem:[%s1 + $0x24] sm:$0xf]
      %v254 = vld [vmem:[%s1 + $0x28] sm:$0xf]
      %v255 = vld [vmem:[%s1 + $0x2c] sm:$0xf]
      %v256 = vld [vmem:[%s1 + $0x30] sm:$0xf]
      %v257 = vld [vmem:[%s1 + $0x34] sm:$0xf]
      %v258 = vld [vmem:[%s1 + $0x38] sm:$0xf]
      %v259 = vld [vmem:[%s1 + $0x3c] sm:$0xf]
      %v260 = vld [vmem:[%s1 + $0x40] sm:$0xf]
      %v261 = vld [vmem:[%s1 + $0x44] sm:$0xf]
      %v262 = vld [vmem:[%s1 + $0x48] sm:$0xf]
      %v263 = vld [vmem:[%s1 + $0x4c] sm:$0xf]
      %v264 = vld [vmem:[%s1 + $0x50] sm:$0xf]
      %v265 = vld [vmem:[%s1 + $0x54] sm:$0xf]
      %v266 = vld [vmem:[%s1 + $0x58] sm:$0xf]
      %v267 = vld [vmem:[%s1 + $0x5c] sm:$0xf]
      %v268 = vld [vmem:[%s1 + $0x60] sm:$0xf]
      %v269 = vld [vmem:[%s1 + $0x64] sm:$0xf]
      %v270 = vld [vmem:[%s1 + $0x68] sm:$0xf]
      %v271 = vld [vmem:[%s1 + $0x6c] sm:$0xf]
      %v272 = vld [vmem:[%s1 + $0x70] sm:$0xf]
      %v273 = vld [vmem:[%s1 + $0x74] sm:$0xf]
      %v274 = vld [vmem:[%s1 + $0x78] sm:$0xf]
      %v275 = vld [vmem:[%s1 + $0x7c] sm:$0xf]
      %v340 = vunpack.c.l.b16 %v180
      %v341 = vunpack.c.h.b16 %v180
      %v342 = vunpack.c.l.b16 %v181
      %v343 = vunpack.c.h.b16 %v181
      %v344 = vunpack.c.l.b16 %v182
      %v345 = vunpack.c.h.b16 %v182
      %v346 = vunpack.c.l.b16 %v183
      %v347 = vunpack.c.h.b16 %v183
      %v348 = vunpack.c.l.b16 %v184
      %v349 = vunpack.c.h.b16 %v184
      %v350 = vunpack.c.l.b16 %v185
      %v351 = vunpack.c.h.b16 %v185
      %v352 = vunpack.c.l.b16 %v186
      %v353 = vunpack.c.h.b16 %v186
      %v354 = vunpack.c.l.b16 %v187
      %v355 = vunpack.c.h.b16 %v187
      %v356 = vunpack.c.l.b16 %v188
      %v357 = vunpack.c.h.b16 %v188
      %v358 = vunpack.c.l.b16 %v189
      %v359 = vunpack.c.h.b16 %v189
      %v360 = vunpack.c.l.b16 %v190
      %v361 = vunpack.c.h.b16 %v190
      %v362 = vunpack.c.l.b16 %v191
      %v363 = vunpack.c.h.b16 %v191
      %v364 = vunpack.c.l.b16 %v192
      %v365 = vunpack.c.h.b16 %v192
      %v366 = vunpack.c.l.b16 %v193
      %v367 = vunpack.c.h.b16 %v193
      %v368 = vunpack.c.l.b16 %v194
      %v369 = vunpack.c.h.b16 %v194
      %v370 = vunpack.c.l.b16 %v195
      %v371 = vunpack.c.h.b16 %v195
      %v372 = vunpack.c.l.b16 %v196
      %v373 = vunpack.c.h.b16 %v196
      %v374 = vunpack.c.l.b16 %v197
      %v375 = vunpack.c.h.b16 %v197
      %v376 = vunpack.c.l.b16 %v198
      %v377 = vunpack.c.h.b16 %v198
      %v378 = vunpack.c.l.b16 %v199
      %v379 = vunpack.c.h.b16 %v199
      %v380 = vunpack.c.l.b16 %v200
      %v381 = vunpack.c.h.b16 %v200
      %v382 = vunpack.c.l.b16 %v201
      %v383 = vunpack.c.h.b16 %v201
      %v384 = vunpack.c.l.b16 %v202
      %v385 = vunpack.c.h.b16 %v202
      %v386 = vunpack.c.l.b16 %v203
      %v387 = vunpack.c.h.b16 %v203
      %v388 = vunpack.c.l.b16 %v204
      %v389 = vunpack.c.h.b16 %v204
      %v390 = vunpack.c.l.b16 %v205
      %v391 = vunpack.c.h.b16 %v205
      %v392 = vunpack.c.l.b16 %v206
      %v393 = vunpack.c.h.b16 %v206
      %v394 = vunpack.c.l.b16 %v207
      %v395 = vunpack.c.h.b16 %v207
      %v396 = vunpack.c.l.b16 %v208
      %v397 = vunpack.c.h.b16 %v208
      %v398 = vunpack.c.l.b16 %v209
      %v399 = vunpack.c.h.b16 %v209
      %v400 = vunpack.c.l.b16 %v210
      %v401 = vunpack.c.h.b16 %v210
      %v402 = vunpack.c.l.b16 %v211
      %v403 = vunpack.c.h.b16 %v211
      %v404 = vunpack.c.l.b16 %v212
      %v405 = vunpack.c.h.b16 %v212
      %v406 = vunpack.c.l.b16 %v213
      %v407 = vunpack.c.h.b16 %v213
      %v408 = vunpack.c.l.b16 %v214
      %v409 = vunpack.c.h.b16 %v214
      %v410 = vunpack.c.l.b16 %v215
      %v411 = vunpack.c.h.b16 %v215
      %v412 = vunpack.c.l.b16 %v216
      %v413 = vunpack.c.h.b16 %v216
      %v414 = vunpack.c.l.b16 %v217
      %v415 = vunpack.c.h.b16 %v217
      %v416 = vunpack.c.l.b16 %v218
      %v417 = vunpack.c.h.b16 %v218
      %v418 = vunpack.c.l.b16 %v219
      %v419 = vunpack.c.h.b16 %v219
      %v420 = vunpack.c.l.b16 %v220
      %v421 = vunpack.c.h.b16 %v220
      %v422 = vunpack.c.l.b16 %v221
      %v423 = vunpack.c.h.b16 %v221
      %v424 = vunpack.c.l.b16 %v222
      %v425 = vunpack.c.h.b16 %v222
      %v426 = vunpack.c.l.b16 %v223
      %v427 = vunpack.c.h.b16 %v223
      %v428 = vunpack.c.l.b16 %v224
      %v429 = vunpack.c.h.b16 %v224
      %v430 = vunpack.c.l.b16 %v225
      %v431 = vunpack.c.h.b16 %v225
      %v432 = vunpack.c.l.b16 %v226
      %v433 = vunpack.c.h.b16 %v226
      %v434 = vunpack.c.l.b16 %v227
      %v435 = vunpack.c.h.b16 %v227
      %v436 = vunpack.c.l.b16 %v228
      %v437 = vunpack.c.h.b16 %v228
      %v438 = vunpack.c.l.b16 %v229
      %v439 = vunpack.c.h.b16 %v229
      %v440 = vunpack.c.l.b16 %v230
      %v441 = vunpack.c.h.b16 %v230
      %v442 = vunpack.c.l.b16 %v231
      %v443 = vunpack.c.h.b16 %v231
      %v444 = vunpack.c.l.b16 %v232
      %v445 = vunpack.c.h.b16 %v232
      %v446 = vunpack.c.l.b16 %v233
      %v447 = vunpack.c.h.b16 %v233
      %v448 = vunpack.c.l.b16 %v234
      %v449 = vunpack.c.h.b16 %v234
      %v450 = vunpack.c.l.b16 %v235
      %v451 = vunpack.c.h.b16 %v235
      %v452 = vunpack.c.l.b16 %v236
      %v453 = vunpack.c.h.b16 %v236
      %v454 = vunpack.c.l.b16 %v237
      %v455 = vunpack.c.h.b16 %v237
      %v456 = vunpack.c.l.b16 %v238
      %v457 = vunpack.c.h.b16 %v238
      %v458 = vunpack.c.l.b16 %v239
      %v459 = vunpack.c.h.b16 %v239
      %v460 = vunpack.c.l.b16 %v240
      %v461 = vunpack.c.h.b16 %v240
      %v462 = vunpack.c.l.b16 %v241
      %v463 = vunpack.c.h.b16 %v241
      %v464 = vunpack.c.l.b16 %v242
      %v465 = vunpack.c.h.b16 %v242
      %v466 = vunpack.c.l.b16 %v243
      %v467 = vunpack.c.h.b16 %v243
      %v468 = vpack.c.b16 %v342, %v340
      %v469 = vpack.c.b16 %v343, %v341
      %v470 = vpack.c.b16 %v346, %v344
      %v471 = vpack.c.b16 %v347, %v345
      %v472 = vpack.c.b16 %v350, %v348
      %v473 = vpack.c.b16 %v351, %v349
      %v474 = vpack.c.b16 %v354, %v352
      %v475 = vpack.c.b16 %v355, %v353
      %v476 = vpack.c.b16 %v358, %v356
      %v477 = vpack.c.b16 %v359, %v357
      %v478 = vpack.c.b16 %v362, %v360
      %v479 = vpack.c.b16 %v363, %v361
      %v480 = vpack.c.b16 %v366, %v364
      %v481 = vpack.c.b16 %v367, %v365
      %v482 = vpack.c.b16 %v370, %v368
      %v483 = vpack.c.b16 %v371, %v369
      %v484 = vpack.c.b16 %v374, %v372
      %v485 = vpack.c.b16 %v375, %v373
      %v486 = vpack.c.b16 %v378, %v376
      %v487 = vpack.c.b16 %v379, %v377
      %v488 = vpack.c.b16 %v382, %v380
      %v489 = vpack.c.b16 %v383, %v381
      %v490 = vpack.c.b16 %v386, %v384
      %v491 = vpack.c.b16 %v387, %v385
      %v492 = vpack.c.b16 %v390, %v388
      %v493 = vpack.c.b16 %v391, %v389
      %v494 = vpack.c.b16 %v394, %v392
      %v495 = vpack.c.b16 %v395, %v393
      %v496 = vpack.c.b16 %v398, %v396
      %v497 = vpack.c.b16 %v399, %v397
      %v498 = vpack.c.b16 %v402, %v400
      %v499 = vpack.c.b16 %v403, %v401
      %v500 = vpack.c.b16 %v406, %v404
      %v501 = vpack.c.b16 %v407, %v405
      %v502 = vpack.c.b16 %v410, %v408
      %v503 = vpack.c.b16 %v411, %v409
      %v504 = vpack.c.b16 %v414, %v412
      %v505 = vpack.c.b16 %v415, %v413
      %v506 = vpack.c.b16 %v418, %v416
      %v507 = vpack.c.b16 %v419, %v417
      %v508 = vpack.c.b16 %v422, %v420
      %v509 = vpack.c.b16 %v423, %v421
      %v510 = vpack.c.b16 %v426, %v424
      %v511 = vpack.c.b16 %v427, %v425
      %v512 = vpack.c.b16 %v430, %v428
      %v513 = vpack.c.b16 %v431, %v429
      %v514 = vpack.c.b16 %v434, %v432
      %v515 = vpack.c.b16 %v435, %v433
      %v516 = vpack.c.b16 %v438, %v436
      %v517 = vpack.c.b16 %v439, %v437
      %v518 = vpack.c.b16 %v442, %v440
      %v519 = vpack.c.b16 %v443, %v441
      %v520 = vpack.c.b16 %v446, %v444
      %v521 = vpack.c.b16 %v447, %v445
      %v522 = vpack.c.b16 %v450, %v448
      %v523 = vpack.c.b16 %v451, %v449
      %v524 = vpack.c.b16 %v454, %v452
      %v525 = vpack.c.b16 %v455, %v453
      %v526 = vpack.c.b16 %v458, %v456
      %v527 = vpack.c.b16 %v459, %v457
      %v528 = vpack.c.b16 %v462, %v460
      %v529 = vpack.c.b16 %v463, %v461
      %v530 = vpack.c.b16 %v466, %v464
      %v531 = vpack.c.b16 %v467, %v465
      %v628 = vunpack.c.l.b16 %v244
      %v629 = vunpack.c.l.b16 %v245
      %v630 = vunpack.c.l.b16 %v246
      %v631 = vunpack.c.l.b16 %v247
      %v632 = vunpack.c.l.b16 %v248
      %v633 = vunpack.c.l.b16 %v249
      %v634 = vunpack.c.l.b16 %v250
      %v635 = vunpack.c.l.b16 %v251
      %v636 = vunpack.c.l.b16 %v252
      %v637 = vunpack.c.l.b16 %v253
      %v638 = vunpack.c.l.b16 %v254
      %v639 = vunpack.c.l.b16 %v255
      %v640 = vunpack.c.l.b16 %v256
      %v641 = vunpack.c.l.b16 %v257
      %v642 = vunpack.c.l.b16 %v258
      %v643 = vunpack.c.l.b16 %v259
      %v644 = vunpack.c.l.b16 %v260
      %v645 = vunpack.c.l.b16 %v261
      %v646 = vunpack.c.l.b16 %v262
      %v647 = vunpack.c.l.b16 %v263
      %v648 = vunpack.c.l.b16 %v264
      %v649 = vunpack.c.l.b16 %v265
      %v650 = vunpack.c.l.b16 %v266
      %v651 = vunpack.c.l.b16 %v267
      %v652 = vunpack.c.l.b16 %v268
      %v653 = vunpack.c.l.b16 %v269
      %v654 = vunpack.c.l.b16 %v270
      %v655 = vunpack.c.l.b16 %v271
      %v656 = vunpack.c.l.b16 %v272
      %v657 = vunpack.c.l.b16 %v273
      %v658 = vunpack.c.l.b16 %v274
      %v659 = vunpack.c.l.b16 %v275
      %v660 = vpack.c.b16 %v629, %v628
      %v661 = vpack.c.b16 %v631, %v630
      %v662 = vpack.c.b16 %v633, %v632
      %v663 = vpack.c.b16 %v635, %v634
      %v664 = vpack.c.b16 %v637, %v636
      %v665 = vpack.c.b16 %v639, %v638
      %v666 = vpack.c.b16 %v641, %v640
      %v667 = vpack.c.b16 %v643, %v642
      %v668 = vpack.c.b16 %v645, %v644
      %v669 = vpack.c.b16 %v647, %v646
      %v670 = vpack.c.b16 %v649, %v648
      %v671 = vpack.c.b16 %v651, %v650
      %v672 = vpack.c.b16 %v653, %v652
      %v673 = vpack.c.b16 %v655, %v654
      %v674 = vpack.c.b16 %v657, %v656
      %v675 = vpack.c.b16 %v659, %v658
      %692 = vmatpush.bf16.msra.mxu0 %v667
      %693 = vmatpush.bf16.msra.mxu0 %v666
      %694 = vmatpush.bf16.msra.mxu0 %v665
      %695 = vmatpush.bf16.msra.mxu0 %v664
      %696 = vmatpush.bf16.msra.mxu0 %v663
      %697 = vmatpush.bf16.msra.mxu0 %v662
      %698 = vmatpush.bf16.msra.mxu0 %v661
      %699 = vmatpush.bf16.msra.mxu0 %v660
      %700 = vmatmul.bf16.gmra.mxu0 %v468
      %v701 = vpop.f32.mrf.mxu0
      %v702 = vadd.f32 0.0, %v701
      %v703 = vpop.f32.mrf.mxu0
      %v704 = vadd.f32 0.0, %v703
      %705 = vmatmul.bf16.gmra.mxu0 %v470
      %v706 = vpop.f32.mrf.mxu0
      %v707 = vadd.f32 0.0, %v706
      %v708 = vpop.f32.mrf.mxu0
      %v709 = vadd.f32 0.0, %v708
      %710 = vmatmul.bf16.gmra.mxu0 %v472
      %v711 = vpop.f32.mrf.mxu0
      %v712 = vadd.f32 0.0, %v711
      %v713 = vpop.f32.mrf.mxu0
      %v714 = vadd.f32 0.0, %v713
      %715 = vmatmul.bf16.gmra.mxu0 %v474
      %v716 = vpop.f32.mrf.mxu0
      %v717 = vadd.f32 0.0, %v716
      %v718 = vpop.f32.mrf.mxu0
      %v719 = vadd.f32 0.0, %v718
      %720 = vmatmul.bf16.gmra.mxu0 %v476
      %v721 = vpop.f32.mrf.mxu0
      %v722 = vadd.f32 0.0, %v721
      %v723 = vpop.f32.mrf.mxu0
      %v724 = vadd.f32 0.0, %v723
      %725 = vmatmul.bf16.gmra.mxu0 %v478
      %v726 = vpop.f32.mrf.mxu0
      %v727 = vadd.f32 0.0, %v726
      %v728 = vpop.f32.mrf.mxu0
      %v729 = vadd.f32 0.0, %v728
      %730 = vmatmul.bf16.gmra.mxu0 %v480
      %v731 = vpop.f32.mrf.mxu0
      %v732 = vadd.f32 0.0, %v731
      %v733 = vpop.f32.mrf.mxu0
      %v734 = vadd.f32 0.0, %v733
      %735 = vmatmul.bf16.gmra.mxu0 %v482
      %v736 = vpop.f32.mrf.mxu0
      %v737 = vadd.f32 0.0, %v736
      %v738 = vpop.f32.mrf.mxu0
      %v739 = vadd.f32 0.0, %v738
      %740 = vmatmul.bf16.gmra.mxu0 %v484
      %v741 = vpop.f32.mrf.mxu0
      %v742 = vadd.f32 0.0, %v741
      %v743 = vpop.f32.mrf.mxu0
      %v744 = vadd.f32 0.0, %v743
      %745 = vmatmul.bf16.gmra.mxu0 %v486
      %v746 = vpop.f32.mrf.mxu0
      %v747 = vadd.f32 0.0, %v746
      %v748 = vpop.f32.mrf.mxu0
      %v749 = vadd.f32 0.0, %v748
      %750 = vmatmul.bf16.gmra.mxu0 %v488
      %v751 = vpop.f32.mrf.mxu0
      %v752 = vadd.f32 0.0, %v751
      %v753 = vpop.f32.mrf.mxu0
      %v754 = vadd.f32 0.0, %v753
      %755 = vmatmul.bf16.gmra.mxu0 %v490
      %v756 = vpop.f32.mrf.mxu0
      %v757 = vadd.f32 0.0, %v756
      %v758 = vpop.f32.mrf.mxu0
      %v759 = vadd.f32 0.0, %v758
      %760 = vmatmul.bf16.gmra.mxu0 %v492
      %v761 = vpop.f32.mrf.mxu0
      %v762 = vadd.f32 0.0, %v761
      %v763 = vpop.f32.mrf.mxu0
      %v764 = vadd.f32 0.0, %v763
      %765 = vmatmul.bf16.gmra.mxu0 %v494
      %v766 = vpop.f32.mrf.mxu0
      %v767 = vadd.f32 0.0, %v766
      %v768 = vpop.f32.mrf.mxu0
      %v769 = vadd.f32 0.0, %v768
      %770 = vmatmul.bf16.gmra.mxu0 %v496
      %v771 = vpop.f32.mrf.mxu0
      %v772 = vadd.f32 0.0, %v771
      %v773 = vpop.f32.mrf.mxu0
      %v774 = vadd.f32 0.0, %v773
      %775 = vmatmul.bf16.gmra.mxu0 %v498
      %v776 = vpop.f32.mrf.mxu0
      %v777 = vadd.f32 0.0, %v776
      %v778 = vpop.f32.mrf.mxu0
      %v779 = vadd.f32 0.0, %v778
      %780 = vmatmul.bf16.gmra.mxu0 %v500
      %v781 = vpop.f32.mrf.mxu0
      %v782 = vadd.f32 0.0, %v781
      %v783 = vpop.f32.mrf.mxu0
      %v784 = vadd.f32 0.0, %v783
      %785 = vmatmul.bf16.gmra.mxu0 %v502
      %v786 = vpop.f32.mrf.mxu0
      %v787 = vadd.f32 0.0, %v786
      %v788 = vpop.f32.mrf.mxu0
      %v789 = vadd.f32 0.0, %v788
      %790 = vmatmul.bf16.gmra.mxu0 %v504
      %v791 = vpop.f32.mrf.mxu0
      %v792 = vadd.f32 0.0, %v791
      %v793 = vpop.f32.mrf.mxu0
      %v794 = vadd.f32 0.0, %v793
      %795 = vmatmul.bf16.gmra.mxu0 %v506
      %v796 = vpop.f32.mrf.mxu0
      %v797 = vadd.f32 0.0, %v796
      %v798 = vpop.f32.mrf.mxu0
      %v799 = vadd.f32 0.0, %v798
      %800 = vmatmul.bf16.gmra.mxu0 %v508
      %v801 = vpop.f32.mrf.mxu0
      %v802 = vadd.f32 0.0, %v801
      %v803 = vpop.f32.mrf.mxu0
      %v804 = vadd.f32 0.0, %v803
      %805 = vmatmul.bf16.gmra.mxu0 %v510
      %v806 = vpop.f32.mrf.mxu0
      %v807 = vadd.f32 0.0, %v806
      %v808 = vpop.f32.mrf.mxu0
      %v809 = vadd.f32 0.0, %v808
      %810 = vmatmul.bf16.gmra.mxu0 %v512
      %v811 = vpop.f32.mrf.mxu0
      %v812 = vadd.f32 0.0, %v811
      %v813 = vpop.f32.mrf.mxu0
      %v814 = vadd.f32 0.0, %v813
      %815 = vmatmul.bf16.gmra.mxu0 %v514
      %v816 = vpop.f32.mrf.mxu0
      %v817 = vadd.f32 0.0, %v816
      %v818 = vpop.f32.mrf.mxu0
      %v819 = vadd.f32 0.0, %v818
      %820 = vmatmul.bf16.gmra.mxu0 %v516
      %v821 = vpop.f32.mrf.mxu0
      %v822 = vadd.f32 0.0, %v821
      %v823 = vpop.f32.mrf.mxu0
      %v824 = vadd.f32 0.0, %v823
      %825 = vmatmul.bf16.gmra.mxu0 %v518
      %v826 = vpop.f32.mrf.mxu0
      %v827 = vadd.f32 0.0, %v826
      %v828 = vpop.f32.mrf.mxu0
      %v829 = vadd.f32 0.0, %v828
      %830 = vmatmul.bf16.gmra.mxu0 %v520
      %v831 = vpop.f32.mrf.mxu0
      %v832 = vadd.f32 0.0, %v831
      %v833 = vpop.f32.mrf.mxu0
      %v834 = vadd.f32 0.0, %v833
      %835 = vmatmul.bf16.gmra.mxu0 %v522
      %v836 = vpop.f32.mrf.mxu0
      %v837 = vadd.f32 0.0, %v836
      %v838 = vpop.f32.mrf.mxu0
      %v839 = vadd.f32 0.0, %v838
      %840 = vmatmul.bf16.gmra.mxu0 %v524
      %v841 = vpop.f32.mrf.mxu0
      %v842 = vadd.f32 0.0, %v841
      %v843 = vpop.f32.mrf.mxu0
      %v844 = vadd.f32 0.0, %v843
      %845 = vmatmul.bf16.gmra.mxu0 %v526
      %v846 = vpop.f32.mrf.mxu0
      %v847 = vadd.f32 0.0, %v846
      %v848 = vpop.f32.mrf.mxu0
      %v849 = vadd.f32 0.0, %v848
      %850 = vmatmul.bf16.gmra.mxu0 %v528
      %v851 = vpop.f32.mrf.mxu0
      %v852 = vadd.f32 0.0, %v851
      %v853 = vpop.f32.mrf.mxu0
      %v854 = vadd.f32 0.0, %v853
      %855 = vmatmul.bf16.gmra.mxu0 %v530
      %v856 = vpop.f32.mrf.mxu0
      %v857 = vadd.f32 0.0, %v856
      %v858 = vpop.f32.mrf.mxu0
      %v859 = vadd.f32 0.0, %v858
      %860 = vdwg.mxu0
      %861 = vmatpush.bf16.msra.mxu0 %v675
      %862 = vmatpush.bf16.msra.mxu0 %v674
      %863 = vmatpush.bf16.msra.mxu0 %v673
      %864 = vmatpush.bf16.msra.mxu0 %v672
      %865 = vmatpush.bf16.msra.mxu0 %v671
      %866 = vmatpush.bf16.msra.mxu0 %v670
      %867 = vmatpush.bf16.msra.mxu0 %v669
      %868 = vmatpush.bf16.msra.mxu0 %v668
      %869 = vmatmul.bf16.gmra.mxu0 %v469
      %v870 = vpop.f32.mrf.mxu0
      %v871 = vadd.f32 %v702, %v870
      %v872 = vpop.f32.mrf.mxu0
      %v873 = vadd.f32 %v704, %v872
      %874 = vmatmul.bf16.gmra.mxu0 %v471
      %v875 = vpop.f32.mrf.mxu0
      %v876 = vadd.f32 %v707, %v875
      %v877 = vpop.f32.mrf.mxu0
      %v878 = vadd.f32 %v709, %v877
      %879 = vmatmul.bf16.gmra.mxu0 %v473
      %v880 = vpop.f32.mrf.mxu0
      %v881 = vadd.f32 %v712, %v880
      %v882 = vpop.f32.mrf.mxu0
      %v883 = vadd.f32 %v714, %v882
      %884 = vmatmul.bf16.gmra.mxu0 %v475
      %v885 = vpop.f32.mrf.mxu0
      %v886 = vadd.f32 %v717, %v885
      %v887 = vpop.f32.mrf.mxu0
      %v888 = vadd.f32 %v719, %v887
      %889 = vmatmul.bf16.gmra.mxu0 %v477
      %v890 = vpop.f32.mrf.mxu0
      %v891 = vadd.f32 %v722, %v890
      %v892 = vpop.f32.mrf.mxu0
      %v893 = vadd.f32 %v724, %v892
      %894 = vmatmul.bf16.gmra.mxu0 %v479
      %v895 = vpop.f32.mrf.mxu0
      %v896 = vadd.f32 %v727, %v895
      %v897 = vpop.f32.mrf.mxu0
      %v898 = vadd.f32 %v729, %v897
      %899 = vmatmul.bf16.gmra.mxu0 %v481
      %v900 = vpop.f32.mrf.mxu0
      %v901 = vadd.f32 %v732, %v900
      %v902 = vpop.f32.mrf.mxu0
      %v903 = vadd.f32 %v734, %v902
      %904 = vmatmul.bf16.gmra.mxu0 %v483
      %v905 = vpop.f32.mrf.mxu0
      %v906 = vadd.f32 %v737, %v905
      %v907 = vpop.f32.mrf.mxu0
      %v908 = vadd.f32 %v739, %v907
      %909 = vmatmul.bf16.gmra.mxu0 %v485
      %v910 = vpop.f32.mrf.mxu0
      %v911 = vadd.f32 %v742, %v910
      %v912 = vpop.f32.mrf.mxu0
      %v913 = vadd.f32 %v744, %v912
      %914 = vmatmul.bf16.gmra.mxu0 %v487
      %v915 = vpop.f32.mrf.mxu0
      %v916 = vadd.f32 %v747, %v915
      %v917 = vpop.f32.mrf.mxu0
      %v918 = vadd.f32 %v749, %v917
      %919 = vmatmul.bf16.gmra.mxu0 %v489
      %v920 = vpop.f32.mrf.mxu0
      %v921 = vadd.f32 %v752, %v920
      %v922 = vpop.f32.mrf.mxu0
      %v923 = vadd.f32 %v754, %v922
      %924 = vmatmul.bf16.gmra.mxu0 %v491
      %v925 = vpop.f32.mrf.mxu0
      %v926 = vadd.f32 %v757, %v925
      %v927 = vpop.f32.mrf.mxu0
      %v928 = vadd.f32 %v759, %v927
      %929 = vmatmul.bf16.gmra.mxu0 %v493
      %v930 = vpop.f32.mrf.mxu0
      %v931 = vadd.f32 %v762, %v930
      %v932 = vpop.f32.mrf.mxu0
      %v933 = vadd.f32 %v764, %v932
      %934 = vmatmul.bf16.gmra.mxu0 %v495
      %v935 = vpop.f32.mrf.mxu0
      %v936 = vadd.f32 %v767, %v935
      %v937 = vpop.f32.mrf.mxu0
      %v938 = vadd.f32 %v769, %v937
      %939 = vmatmul.bf16.gmra.mxu0 %v497
      %v940 = vpop.f32.mrf.mxu0
      %v941 = vadd.f32 %v772, %v940
      %v942 = vpop.f32.mrf.mxu0
      %v943 = vadd.f32 %v774, %v942
      %944 = vmatmul.bf16.gmra.mxu0 %v499
      %v945 = vpop.f32.mrf.mxu0
      %v946 = vadd.f32 %v777, %v945
      %v947 = vpop.f32.mrf.mxu0
      %v948 = vadd.f32 %v779, %v947
      %949 = vmatmul.bf16.gmra.mxu0 %v501
      %v950 = vpop.f32.mrf.mxu0
      %v951 = vadd.f32 %v782, %v950
      %v952 = vpop.f32.mrf.mxu0
      %v953 = vadd.f32 %v784, %v952
      %954 = vmatmul.bf16.gmra.mxu0 %v503
      %v955 = vpop.f32.mrf.mxu0
      %v956 = vadd.f32 %v787, %v955
      %v957 = vpop.f32.mrf.mxu0
      %v958 = vadd.f32 %v789, %v957
      %959 = vmatmul.bf16.gmra.mxu0 %v505
      %v960 = vpop.f32.mrf.mxu0
      %v961 = vadd.f32 %v792, %v960
      %v962 = vpop.f32.mrf.mxu0
      %v963 = vadd.f32 %v794, %v962
      %964 = vmatmul.bf16.gmra.mxu0 %v507
      %v965 = vpop.f32.mrf.mxu0
      %v966 = vadd.f32 %v797, %v965
      %v967 = vpop.f32.mrf.mxu0
      %v968 = vadd.f32 %v799, %v967
      %969 = vmatmul.bf16.gmra.mxu0 %v509
      %v970 = vpop.f32.mrf.mxu0
      %v971 = vadd.f32 %v802, %v970
      %v972 = vpop.f32.mrf.mxu0
      %v973 = vadd.f32 %v804, %v972
      %974 = vmatmul.bf16.gmra.mxu0 %v511
      %v975 = vpop.f32.mrf.mxu0
      %v976 = vadd.f32 %v807, %v975
      %v977 = vpop.f32.mrf.mxu0
      %v978 = vadd.f32 %v809, %v977
      %979 = vmatmul.bf16.gmra.mxu0 %v513
      %v980 = vpop.f32.mrf.mxu0
      %v981 = vadd.f32 %v812, %v980
      %v982 = vpop.f32.mrf.mxu0
      %v983 = vadd.f32 %v814, %v982
      %984 = vmatmul.bf16.gmra.mxu0 %v515
      %v985 = vpop.f32.mrf.mxu0
      %v986 = vadd.f32 %v817, %v985
      %v987 = vpop.f32.mrf.mxu0
      %v988 = vadd.f32 %v819, %v987
      %989 = vmatmul.bf16.gmra.mxu0 %v517
      %v990 = vpop.f32.mrf.mxu0
      %v991 = vadd.f32 %v822, %v990
      %v992 = vpop.f32.mrf.mxu0
      %v993 = vadd.f32 %v824, %v992
      %994 = vmatmul.bf16.gmra.mxu0 %v519
      %v995 = vpop.f32.mrf.mxu0
      %v996 = vadd.f32 %v827, %v995
      %v997 = vpop.f32.mrf.mxu0
      %v998 = vadd.f32 %v829, %v997
      %999 = vmatmul.bf16.gmra.mxu0 %v521
      %v1000 = vpop.f32.mrf.mxu0
      %v1001 = vadd.f32 %v832, %v1000
      %v1002 = vpop.f32.mrf.mxu0
      %v1003 = vadd.f32 %v834, %v1002
      %1004 = vmatmul.bf16.gmra.mxu0 %v523
      %v1005 = vpop.f32.mrf.mxu0
      %v1006 = vadd.f32 %v837, %v1005
      %v1007 = vpop.f32.mrf.mxu0
      %v1008 = vadd.f32 %v839, %v1007
      %1009 = vmatmul.bf16.gmra.mxu0 %v525
      %v1010 = vpop.f32.mrf.mxu0
      %v1011 = vadd.f32 %v842, %v1010
      %v1012 = vpop.f32.mrf.mxu0
      %v1013 = vadd.f32 %v844, %v1012
      %1014 = vmatmul.bf16.gmra.mxu0 %v527
      %v1015 = vpop.f32.mrf.mxu0
      %v1016 = vadd.f32 %v847, %v1015
      %v1017 = vpop.f32.mrf.mxu0
      %v1018 = vadd.f32 %v849, %v1017
      %1019 = vmatmul.bf16.gmra.mxu0 %v529
      %v1020 = vpop.f32.mrf.mxu0
      %v1021 = vadd.f32 %v852, %v1020
      %v1022 = vpop.f32.mrf.mxu0
      %v1023 = vadd.f32 %v854, %v1022
      %1024 = vmatmul.bf16.gmra.mxu0 %v531
      %v1025 = vpop.f32.mrf.mxu0
      %v1026 = vadd.f32 %v857, %v1025
      %v1027 = vpop.f32.mrf.mxu0
      %v1028 = vadd.f32 %v859, %v1027
      %1029 = vdwg.mxu0
      %1030 = vst [vmem:[%s173] sm:$0xff] %v871
      %1031 = vst [vmem:[%s173 + $0x8] sm:$0xff] %v873
      %1032 = vst [vmem:[%s173 + $0x10] sm:$0xff] %v876
      %1033 = vst [vmem:[%s173 + $0x18] sm:$0xff] %v878
      %1034 = vst [vmem:[%s173 + $0x20] sm:$0xff] %v881
      %1035 = vst [vmem:[%s173 + $0x28] sm:$0xff] %v883
      %1036 = vst [vmem:[%s173 + $0x30] sm:$0xff] %v886
      %1037 = vst [vmem:[%s173 + $0x38] sm:$0xff] %v888
      %1038 = vst [vmem:[%s173 + $0x40] sm:$0xff] %v891
      %1039 = vst [vmem:[%s173 + $0x48] sm:$0xff] %v893
      %1040 = vst [vmem:[%s173 + $0x50] sm:$0xff] %v896
      %1041 = vst [vmem:[%s173 + $0x58] sm:$0xff] %v898
      %1042 = vst [vmem:[%s173 + $0x60] sm:$0xff] %v901
      %1043 = vst [vmem:[%s173 + $0x68] sm:$0xff] %v903
      %1044 = vst [vmem:[%s173 + $0x70] sm:$0xff] %v906
      %1045 = vst [vmem:[%s173 + $0x78] sm:$0xff] %v908
      %1046 = vst [vmem:[%s173 + $0x80] sm:$0xff] %v911
      %1047 = vst [vmem:[%s173 + $0x88] sm:$0xff] %v913
      %1048 = vst [vmem:[%s173 + $0x90] sm:$0xff] %v916
      %1049 = vst [vmem:[%s173 + $0x98] sm:$0xff] %v918
      %1050 = vst [vmem:[%s173 + $0xa0] sm:$0xff] %v921
      %1051 = vst [vmem:[%s173 + $0xa8] sm:$0xff] %v923
      %1052 = vst [vmem:[%s173 + $0xb0] sm:$0xff] %v926
      %1053 = vst [vmem:[%s173 + $0xb8] sm:$0xff] %v928
      %1054 = vst [vmem:[%s173 + $0xc0] sm:$0xff] %v931
      %1055 = vst [vmem:[%s173 + $0xc8] sm:$0xff] %v933
      %1056 = vst [vmem:[%s173 + $0xd0] sm:$0xff] %v936
      %1057 = vst [vmem:[%s173 + $0xd8] sm:$0xff] %v938
      %1058 = vst [vmem:[%s173 + $0xe0] sm:$0xff] %v941
      %1059 = vst [vmem:[%s173 + $0xe8] sm:$0xff] %v943
      %1060 = vst [vmem:[%s173 + $0xf0] sm:$0xff] %v946
      %1061 = vst [vmem:[%s173 + $0xf8] sm:$0xff] %v948
      %1062 = vst [vmem:[%s173 + $0x100] sm:$0xff] %v951
      %1063 = vst [vmem:[%s173 + $0x108] sm:$0xff] %v953
      %1064 = vst [vmem:[%s173 + $0x110] sm:$0xff] %v956
      %1065 = vst [vmem:[%s173 + $0x118] sm:$0xff] %v958
      %1066 = vst [vmem:[%s173 + $0x120] sm:$0xff] %v961
      %1067 = vst [vmem:[%s173 + $0x128] sm:$0xff] %v963
      %1068 = vst [vmem:[%s173 + $0x130] sm:$0xff] %v966
      %1069 = vst [vmem:[%s173 + $0x138] sm:$0xff] %v968
      %1070 = vst [vmem:[%s173 + $0x140] sm:$0xff] %v971
      %1071 = vst [vmem:[%s173 + $0x148] sm:$0xff] %v973
      %1072 = vst [vmem:[%s173 + $0x150] sm:$0xff] %v976
      %1073 = vst [vmem:[%s173 + $0x158] sm:$0xff] %v978
      %1074 = vst [vmem:[%s173 + $0x160] sm:$0xff] %v981
      %1075 = vst [vmem:[%s173 + $0x168] sm:$0xff] %v983
      %1076 = vst [vmem:[%s173 + $0x170] sm:$0xff] %v986
      %1077 = vst [vmem:[%s173 + $0x178] sm:$0xff] %v988
      %1078 = vst [vmem:[%s173 + $0x180] sm:$0xff] %v991
      %1079 = vst [vmem:[%s173 + $0x188] sm:$0xff] %v993
      %1080 = vst [vmem:[%s173 + $0x190] sm:$0xff] %v996
      %1081 = vst [vmem:[%s173 + $0x198] sm:$0xff] %v998
      %1082 = vst [vmem:[%s173 + $0x1a0] sm:$0xff] %v1001
      %1083 = vst [vmem:[%s173 + $0x1a8] sm:$0xff] %v1003
      %1084 = vst [vmem:[%s173 + $0x1b0] sm:$0xff] %v1006
      %1085 = vst [vmem:[%s173 + $0x1b8] sm:$0xff] %v1008
      %1086 = vst [vmem:[%s173 + $0x1c0] sm:$0xff] %v1011
      %1087 = vst [vmem:[%s173 + $0x1c8] sm:$0xff] %v1013
      %1088 = vst [vmem:[%s173 + $0x1d0] sm:$0xff] %v1016
      %1089 = vst [vmem:[%s173 + $0x1d8] sm:$0xff] %v1018
      %1090 = vst [vmem:[%s173 + $0x1e0] sm:$0xff] %v1021
      %1091 = vst [vmem:[%s173 + $0x1e8] sm:$0xff] %v1023
      %1092 = vst [vmem:[%s173 + $0x1f0] sm:$0xff] %v1026
      %1093 = vst [vmem:[%s173 + $0x1f8] sm:$0xff] %v1028
      %v1094 = vld [vmem:[%s3] sm:$0x1]
      %v1095 = vadd.f32 %v871, %v873
      %v1096 = vadd.f32 %v1095, %v876
      %v1097 = vadd.f32 %v1096, %v878
      %v1098 = vadd.f32 %v1097, %v881
      %v1099 = vadd.f32 %v1098, %v883
      %v1100 = vadd.f32 %v1099, %v886
      %v1101 = vadd.f32 %v1100, %v888
      %v1102 = vadd.f32 %v1101, %v891
      %v1103 = vadd.f32 %v1102, %v893
      %v1104 = vadd.f32 %v1103, %v896
      %v1105 = vadd.f32 %v1104, %v898
      %v1106 = vadd.f32 %v1105, %v901
      %v1107 = vadd.f32 %v1106, %v903
      %v1108 = vadd.f32 %v1107, %v906
      %v1109 = vadd.f32 %v1108, %v908
      %v1110 = vadd.f32 %v1109, %v911
      %v1111 = vadd.f32 %v1110, %v913
      %v1112 = vadd.f32 %v1111, %v916
      %v1113 = vadd.f32 %v1112, %v918
      %v1114 = vadd.f32 %v1113, %v921
      %v1115 = vadd.f32 %v1114, %v923
      %v1116 = vadd.f32 %v1115, %v926
      %v1117 = vadd.f32 %v1116, %v928
      %v1118 = vadd.f32 %v1117, %v931
      %v1119 = vadd.f32 %v1118, %v933
      %v1120 = vadd.f32 %v1119, %v936
      %v1121 = vadd.f32 %v1120, %v938
      %v1122 = vadd.f32 %v1121, %v941
      %v1123 = vadd.f32 %v1122, %v943
      %v1124 = vadd.f32 %v1123, %v946
      %v1125 = vadd.f32 %v1124, %v948
      %v1126 = vadd.f32 %v1125, %v951
      %v1127 = vadd.f32 %v1126, %v953
      %v1128 = vadd.f32 %v1127, %v956
      %v1129 = vadd.f32 %v1128, %v958
      %v1130 = vadd.f32 %v1129, %v961
      %v1131 = vadd.f32 %v1130, %v963
      %v1132 = vadd.f32 %v1131, %v966
      %v1133 = vadd.f32 %v1132, %v968
      %v1134 = vadd.f32 %v1133, %v971
      %v1135 = vadd.f32 %v1134, %v973
      %v1136 = vadd.f32 %v1135, %v976
      %v1137 = vadd.f32 %v1136, %v978
      %v1138 = vadd.f32 %v1137, %v981
      %v1139 = vadd.f32 %v1138, %v983
      %v1140 = vadd.f32 %v1139, %v986
      %v1141 = vadd.f32 %v1140, %v988
      %v1142 = vadd.f32 %v1141, %v991
      %v1143 = vadd.f32 %v1142, %v993
      %v1144 = vadd.f32 %v1143, %v996
      %v1145 = vadd.f32 %v1144, %v998
      %v1146 = vadd.f32 %v1145, %v1001
      %v1147 = vadd.f32 %v1146, %v1003
      %v1148 = vadd.f32 %v1147, %v1006
      %v1149 = vadd.f32 %v1148, %v1008
      %v1150 = vadd.f32 %v1149, %v1011
      %v1151 = vadd.f32 %v1150, %v1013
      %v1152 = vadd.f32 %v1151, %v1016
      %v1153 = vadd.f32 %v1152, %v1018
      %v1154 = vadd.f32 %v1153, %v1021
      %v1155 = vadd.f32 %v1154, %v1023
      %v1156 = vadd.f32 %v1155, %v1026
      %v1157 = vadd.f32 %v1156, %v1028
      %v1158 = vrot.slane %v1157, 4
      %v1159 = vadd.f32 %v1157, %v1158
      %v1160 = vrot.slane %v1159, 2
      %v1161 = vadd.f32 %v1159, %v1160
      %v1162 = vrot.slane %v1161, 1
      %v1163 = vadd.f32 %v1161, %v1162
      %v1164 = vadd.f32 %v1094, %v1163
      %1165 = vst [vmem:[%s3] sm:$0x1] %v1164
      %v1166 = vld [vmem:[%s3 + $0x1] sm:$0x1]
      %v1167 = vmul.f32 %v871, %v871
      %v1168 = vmul.f32 %v873, %v873
      %v1169 = vmul.f32 %v876, %v876
      %v1170 = vmul.f32 %v878, %v878
      %v1171 = vmul.f32 %v881, %v881
      %v1172 = vmul.f32 %v883, %v883
      %v1173 = vmul.f32 %v886, %v886
      %v1174 = vmul.f32 %v888, %v888
      %v1175 = vmul.f32 %v891, %v891
      %v1176 = vmul.f32 %v893, %v893
      %v1177 = vmul.f32 %v896, %v896
      %v1178 = vmul.f32 %v898, %v898
      %v1179 = vmul.f32 %v901, %v901
      %v1180 = vmul.f32 %v903, %v903
      %v1181 = vmul.f32 %v906, %v906
      %v1182 = vmul.f32 %v908, %v908
      %v1183 = vmul.f32 %v911, %v911
      %v1184 = vmul.f32 %v913, %v913
      %v1185 = vmul.f32 %v916, %v916
      %v1186 = vmul.f32 %v918, %v918
      %v1187 = vmul.f32 %v921, %v921
      %v1188 = vmul.f32 %v923, %v923
      %v1189 = vmul.f32 %v926, %v926
      %v1190 = vmul.f32 %v928, %v928
      %v1191 = vmul.f32 %v931, %v931
      %v1192 = vmul.f32 %v933, %v933
      %v1193 = vmul.f32 %v936, %v936
      %v1194 = vmul.f32 %v938, %v938
      %v1195 = vmul.f32 %v941, %v941
      %v1196 = vmul.f32 %v943, %v943
      %v1197 = vmul.f32 %v946, %v946
      %v1198 = vmul.f32 %v948, %v948
      %v1199 = vmul.f32 %v951, %v951
      %v1200 = vmul.f32 %v953, %v953
      %v1201 = vmul.f32 %v956, %v956
      %v1202 = vmul.f32 %v958, %v958
      %v1203 = vmul.f32 %v961, %v961
      %v1204 = vmul.f32 %v963, %v963
      %v1205 = vmul.f32 %v966, %v966
      %v1206 = vmul.f32 %v968, %v968
      %v1207 = vmul.f32 %v971, %v971
      %v1208 = vmul.f32 %v973, %v973
      %v1209 = vmul.f32 %v976, %v976
      %v1210 = vmul.f32 %v978, %v978
      %v1211 = vmul.f32 %v981, %v981
      %v1212 = vmul.f32 %v983, %v983
      %v1213 = vmul.f32 %v986, %v986
      %v1214 = vmul.f32 %v988, %v988
      %v1215 = vmul.f32 %v991, %v991
      %v1216 = vmul.f32 %v993, %v993
      %v1217 = vmul.f32 %v996, %v996
      %v1218 = vmul.f32 %v998, %v998
      %v1219 = vmul.f32 %v1001, %v1001
      %v1220 = vmul.f32 %v1003, %v1003
      %v1221 = vmul.f32 %v1006, %v1006
      %v1222 = vmul.f32 %v1008, %v1008
      %v1223 = vmul.f32 %v1011, %v1011
      %v1224 = vmul.f32 %v1013, %v1013
      %v1225 = vmul.f32 %v1016, %v1016
      %v1226 = vmul.f32 %v1018, %v1018
      %v1227 = vmul.f32 %v1021, %v1021
      %v1228 = vmul.f32 %v1023, %v1023
      %v1229 = vmul.f32 %v1026, %v1026
      %v1230 = vmul.f32 %v1028, %v1028
      %v1231 = vadd.f32 %v1167, %v1168
      %v1232 = vadd.f32 %v1231, %v1169
      %v1233 = vadd.f32 %v1232, %v1170
      %v1234 = vadd.f32 %v1233, %v1171
      %v1235 = vadd.f32 %v1234, %v1172
      %v1236 = vadd.f32 %v1235, %v1173
      %v1237 = vadd.f32 %v1236, %v1174
      %v1238 = vadd.f32 %v1237, %v1175
      %v1239 = vadd.f32 %v1238, %v1176
      %v1240 = vadd.f32 %v1239, %v1177
      %v1241 = vadd.f32 %v1240, %v1178
      %v1242 = vadd.f32 %v1241, %v1179
      %v1243 = vadd.f32 %v1242, %v1180
      %v1244 = vadd.f32 %v1243, %v1181
      %v1245 = vadd.f32 %v1244, %v1182
      %v1246 = vadd.f32 %v1245, %v1183
      %v1247 = vadd.f32 %v1246, %v1184
      %v1248 = vadd.f32 %v1247, %v1185
      %v1249 = vadd.f32 %v1248, %v1186
      %v1250 = vadd.f32 %v1249, %v1187
      %v1251 = vadd.f32 %v1250, %v1188
      %v1252 = vadd.f32 %v1251, %v1189
      %v1253 = vadd.f32 %v1252, %v1190
      %v1254 = vadd.f32 %v1253, %v1191
      %v1255 = vadd.f32 %v1254, %v1192
      %v1256 = vadd.f32 %v1255, %v1193
      %v1257 = vadd.f32 %v1256, %v1194
      %v1258 = vadd.f32 %v1257, %v1195
      %v1259 = vadd.f32 %v1258, %v1196
      %v1260 = vadd.f32 %v1259, %v1197
      %v1261 = vadd.f32 %v1260, %v1198
      %v1262 = vadd.f32 %v1261, %v1199
      %v1263 = vadd.f32 %v1262, %v1200
      %v1264 = vadd.f32 %v1263, %v1201
      %v1265 = vadd.f32 %v1264, %v1202
      %v1266 = vadd.f32 %v1265, %v1203
      %v1267 = vadd.f32 %v1266, %v1204
      %v1268 = vadd.f32 %v1267, %v1205
      %v1269 = vadd.f32 %v1268, %v1206
      %v1270 = vadd.f32 %v1269, %v1207
      %v1271 = vadd.f32 %v1270, %v1208
      %v1272 = vadd.f32 %v1271, %v1209
      %v1273 = vadd.f32 %v1272, %v1210
      %v1274 = vadd.f32 %v1273, %v1211
      %v1275 = vadd.f32 %v1274, %v1212
      %v1276 = vadd.f32 %v1275, %v1213
      %v1277 = vadd.f32 %v1276, %v1214
      %v1278 = vadd.f32 %v1277, %v1215
      %v1279 = vadd.f32 %v1278, %v1216
      %v1280 = vadd.f32 %v1279, %v1217
      %v1281 = vadd.f32 %v1280, %v1218
      %v1282 = vadd.f32 %v1281, %v1219
      %v1283 = vadd.f32 %v1282, %v1220
      %v1284 = vadd.f32 %v1283, %v1221
      %v1285 = vadd.f32 %v1284, %v1222
      %v1286 = vadd.f32 %v1285, %v1223
      %v1287 = vadd.f32 %v1286, %v1224
      %v1288 = vadd.f32 %v1287, %v1225
      %v1289 = vadd.f32 %v1288, %v1226
      %v1290 = vadd.f32 %v1289, %v1227
      %v1291 = vadd.f32 %v1290, %v1228
      %v1292 = vadd.f32 %v1291, %v1229
      %v1293 = vadd.f32 %v1292, %v1230
      %v1294 = vrot.slane %v1293, 4
      %v1295 = vadd.f32 %v1293, %v1294
      %v1296 = vrot.slane %v1295, 2
      %v1297 = vadd.f32 %v1295, %v1296
      %v1298 = vrot.slane %v1297, 1
      %v1299 = vadd.f32 %v1297, %v1298
      %v1300 = vadd.f32 %v1166, %v1299
      %1301 = vst [vmem:[%s3 + $0x1] sm:$0x1] %v1300
      %s1302 = smul.u32 64, %s15
      %p1303 = scmp.lt.s32.totalorder %s1302, 191
      %s1304 = scalar_select %p1303, %s1302, 191
      %s1305 = smul.addr %s1304, 8
      %s1306 = scalar_lea.vmem %s2, %s1305
      // Predicated region
      $region33: #{_lambda_.9} parent=27 // pred_check
        %p1307 = pneg %p80
      $region34: #{_lambda_.9} parent=27 // pred_check_branch
        %1309 = sbr.rel (%p1307) target = $region36
      $region35: #{_lambda_.9} parent=27 // pred_region
        %s1310 = smul.u32 64, %s15
      $region36: #{_lambda_.9} parent=27 // pred_fallthru
        _
      // Predicated region
      $region37: #{_lambda_.9} parent=27 // pred_check
        %p1311 = pneg %p101
      $region38: #{_lambda_.9} parent=27 // pred_check_branch
        %1313 = sbr.rel (%p1311) target = $region40
      $region39: #{_lambda_.9} parent=27 // pred_region
        _
      $region40: #{_lambda_.9} parent=27 // pred_fallthru
        _
      // Predicated region
      $region41: #{_lambda_.9} parent=27 // pred_check
        %p1314 = pneg %p101
      $region42: #{_lambda_.9} parent=27 // pred_check_branch
        %1316 = sbr.rel (%p1314) target = $region44
      $region43: #{_lambda_.9} parent=27 // pred_region
        _
      $region44: #{_lambda_.9} parent=27 // pred_fallthru
        _
    $region28: #{_lambda_.9} parent=5 // pred_fallthru
      _
    %p1317 = scmp.le.s32.totalorder 2, %s10
    // Predicated region
    $region45: #{_lambda_.9} parent=5 // pred_check
      %p1318 = pneg %p1317
    $region46: #{_lambda_.9} parent=5 // pred_check_branch
      %1320 = sbr.rel (%p1318) target = $region48
    $region47: #{_lambda_.9} parent=5 // pred_region
      %s1321 = ssub.s32 %s10, 2
      // Predicated region
      $region49: #{_lambda_.9} parent=47 // pred_check
        %p1322 = pneg %p86
      $region50: #{_lambda_.9} parent=47 // pred_check_branch
        %1324 = sbr.rel (%p1322) target = $region52
      $region51: #{_lambda_.9} parent=47 // pred_region
        %s1325 = smul.u32 64, %s16
        %p1326 = scmp.lt.s32.totalorder %s1325, 191
        %s1327 = scalar_select %p1326, %s1325, 191
        %s1328 = smul.addr %s1327, 8
        %s1329 = scalar_lea.vmem %s2, %s1328
      $region52: #{_lambda_.9} parent=47 // pred_fallthru
        _
    $region48: #{_lambda_.9} parent=5 // pred_fallthru
      _
  $region6: #{_lambda_.9} parent=0 // loop_footer
    %s14 = sadd.s32 1, %s10
  $region7: #{_lambda_.9} parent=0 // loop_footer_branch
    %9 = sbr.rel target = $region3
  $region8: #{_lambda_.9} parent=0 // loop_exit
    _

// kernel: _lambda_.10
$region0: #{_lambda_.10}
  #allocation0 [shape = 'u32[]', space=smem, size = 0x4, offset = 0x4, fixed_abs, tag = 'smem constant byte address 0x4 - core index']
  #allocation1 [shape = 'u32[72,128]{1,0:T(1,128)}', space=vmem, size = 0x9000, scoped, tag = 'internal scratch']
  %s0 = inlined_call_operand.vmem [shape: f32[1536,128], index: 0, kind: input, shape index: {}]
  %s1 = inlined_call_operand.vmem [shape: f32[2,128], index: 1, kind: input, shape index: {}]
  %s2 = inlined_call_operand.vmem [shape: bf16[1536,128], index: 2, kind: output, shape index: {}]
  %s3 = sld [smem:[#allocation0]]
  $region41: #{_lambda_.10} parent=0
    _
  %s5 = ssub.s32 1, %s3
  %s6 = scalar_select 0, %s5, %s3
  loop: start=0, step=1, limit=5
  $region2: #{_lambda_.10} parent=0 // loop_pre_header
    _
  $region3: #{_lambda_.10} parent=0 // loop_header
    %s8 = sphi 0, %s12
    %p9 = scmp.ge.s32.totalorder %s8, 5
    %s18 = sphi 0, %s20
    %s21 = sphi 0, %s18
    %s22 = sphi 0, %s21
    %s38 = sphi 0, %s22
    %s42 = sphi 0, %s42
    %s44 = sphi 0, %s42
    %s45 = sphi 0, %s44
    %s59 = sphi 0, %s45
    %s65 = sphi 0, %s67
    %s68 = sphi 0, %s65
    %s69 = sphi 0, %s68
    %s85 = sphi 0, %s69
  $region4: #{_lambda_.10} parent=0 // loop_header_branch
    %11 = sbr.rel (%p9) target = $region8
  $region5: #{_lambda_.10} parent=0 // loop_body
    %s13 = ssub.s32 %s8, 1
    %s14 = ssub.s32 %s8, 2
    %s15 = sadd.s32 %s8, 1
    %s16 = ssub.s32 %s8, %s15
    %p17 = scmp.eq.s32.totalorder %s16, 0
    %s19 = sadd.s32 %s18, 1
    %s20 = scalar_select %p17, %s18, %s19
    %p23 = pneg %p17
    %p24 = scmp.eq.s32.totalorder %s8, 2
    %p25 = por %p23, %p24
    %p26 = scmp.ne.s32.totalorder %s18, %s21
    %p27 = scmp.eq.s32.totalorder %s8, 0
    %p28 = por %p26, %p27
    %p29 = scmp.ne.s32.totalorder %s18, %s21
    %p30 = scmp.eq.s32.totalorder %s13, 2
    %p31 = por %p29, %p30
    %p32 = scmp.ne.s32.totalorder %s21, %s22
    %p33 = scmp.eq.s32.totalorder %s13, 0
    %p34 = por %p32, %p33
    %p35 = scmp.ne.s32.totalorder %s21, %s22
    %p36 = scmp.eq.s32.totalorder %s14, 2
    %p37 = por %p35, %p36
    %p39 = scmp.ne.s32.totalorder %s22, %s38
    %p40 = scmp.eq.s32.totalorder %s14, 0
    %p41 = por %p39, %p40
    %s43 = sadd.s32 %s42, 1
    %p46 = scmp.eq.s32.totalorder %s8, 2
    %p47 = scmp.ne.s32.totalorder %s42, %s44
    %p48 = scmp.eq.s32.totalorder %s8, 0
    %p49 = por %p47, %p48
    %p50 = scmp.ne.s32.totalorder %s42, %s44
    %p51 = scmp.eq.s32.totalorder %s13, 2
    %p52 = por %p50, %p51
    %p53 = scmp.ne.s32.totalorder %s44, %s45
    %p54 = scmp.eq.s32.totalorder %s13, 0
    %p55 = por %p53, %p54
    %p56 = scmp.ne.s32.totalorder %s44, %s45
    %p57 = scmp.eq.s32.totalorder %s14, 2
    %p58 = por %p56, %p57
    %p60 = scmp.ne.s32.totalorder %s45, %s59
    %p61 = scmp.eq.s32.totalorder %s14, 0
    %p62 = por %p60, %p61
    %s63 = ssub.s32 %s8, %s15
    %p64 = scmp.eq.s32.totalorder %s63, 0
    %s66 = sadd.s32 %s65, 1
    %s67 = scalar_select %p64, %s65, %s66
    %p70 = pneg %p64
    %p71 = scmp.eq.s32.totalorder %s8, 2
    %p72 = por %p70, %p71
    %p73 = scmp.ne.s32.totalorder %s65, %s68
    %p74 = scmp.eq.s32.totalorder %s8, 0
    %p75 = por %p73, %p74
    %p76 = scmp.ne.s32.totalorder %s65, %s68
    %p77 = scmp.eq.s32.totalorder %s13, 2
    %p78 = por %p76, %p77
    %p79 = scmp.ne.s32.totalorder %s68, %s69
    %p80 = scmp.eq.s32.totalorder %s13, 0
    %p81 = por %p79, %p80
    %p82 = scmp.ne.s32.totalorder %s68, %s69
    %p83 = scmp.eq.s32.totalorder %s14, 2
    %p84 = por %p82, %p83
    %p86 = scmp.ne.s32.totalorder %s69, %s85
    %p87 = scmp.eq.s32.totalorder %s14, 0
    %p88 = por %p86, %p87
    %p89 = scmp.le.s32.totalorder 1, %s8
    %p90 = scmp.lt.s32.totalorder %s8, 4
    %p91 = pnand %p89, %p90
    %p92 = pneg %p91
    // Predicated region
    $region9: #{_lambda_.10} parent=5 // pred_check
      _
    $region10: #{_lambda_.10} parent=5 // pred_check_branch
      %94 = sbr.rel (%p91) target = $region12
    $region11: #{_lambda_.10} parent=5 // pred_region
      %s95 = ssub.s32 %s8, 1
      // Predicated region
      $region13: #{_lambda_.10} parent=11 // pred_check
        %p96 = pneg %p55
      $region14: #{_lambda_.10} parent=11 // pred_check_branch
        %98 = sbr.rel (%p96) target = $region16
      $region15: #{_lambda_.10} parent=11 // pred_region
        _
      $region16: #{_lambda_.10} parent=11 // pred_fallthru
        _
    $region12: #{_lambda_.10} parent=5 // pred_fallthru
      _
    %p99 = scmp.lt.s32.totalorder %s8, 3
    // Predicated region
    $region17: #{_lambda_.10} parent=5 // pred_check
      %p100 = pneg %p99
    $region18: #{_lambda_.10} parent=5 // pred_check_branch
      %102 = sbr.rel (%p100) target = $region20
    $region19: #{_lambda_.10} parent=5 // pred_region
      // Predicated region
      $region21: #{_lambda_.10} parent=19 // pred_check
        %p103 = pneg %p28
      $region22: #{_lambda_.10} parent=19 // pred_check_branch
        %105 = sbr.rel (%p103) target = $region24
      $region23: #{_lambda_.10} parent=19 // pred_region
        %s106 = smul.u32 64, %s8
        %p107 = scmp.lt.s32.totalorder %s106, 191
        %s108 = scalar_select %p107, %s106, 191
        %s109 = smul.addr %s108, 8
        %s110 = scalar_lea.vmem %s0, %s109
        %s111 = smul.u32 64, %s8
      $region24: #{_lambda_.10} parent=19 // pred_fallthru
        _
    $region20: #{_lambda_.10} parent=5 // pred_fallthru
      _
    %p112 = scmp.le.s32.totalorder 1, %s8
    %p113 = scmp.lt.s32.totalorder %s8, 4
    %p114 = pnand %p112, %p113
    %p115 = pneg %p114
    // Predicated region
    $region25: #{_lambda_.10} parent=5 // pred_check
      _
    $region26: #{_lambda_.10} parent=5 // pred_check_branch
      %117 = sbr.rel (%p114) target = $region28
    $region27: #{_lambda_.10} parent=5 // pred_region
      %s118 = ssub.s32 %s8, 1
      %s119 = smul.u32 64, %s13
      %p120 = scmp.lt.s32.totalorder %s119, 191
      %s121 = scalar_select %p120, %s119, 191
      %s122 = smul.addr %s121, 8
      %s123 = scalar_lea.vmem %s0, %s122
      %p124 = pneg %p34
      %p125 = pneg %p31
      %p126 = pneg %p55
      %p127 = pneg %p52
      %p128 = pneg %p81
      %p129 = pneg %p78
      %s130 = smul.u32 64, %s13
      %p131 = scmp.lt.s32.totalorder %s130, 191
      %s132 = scalar_select %p131, %s130, 191
      %s133 = smul.addr %s132, 4
      %s134 = scalar_lea.vmem %s2, %s133
      %s135 = smul.u32 64, %s13
      %p136 = scmp.lt.s32.totalorder %s135, 191
      %s137 = scalar_select %p136, %s135, 191
      %s138 = smul.addr %s137, 8
      %s139 = scalar_lea.vmem %s0, %s138
      %s140 = smul.u32 64, %s13
      %s141 = smul.u32 64, %s13
      %p142 = scmp.lt.s32.totalorder %s141, 191
      %s143 = scalar_select %p142, %s141, 191
      %s144 = smul.addr %s143, 4
      %s145 = scalar_lea.vmem %s2, %s144
      %s146 = smul.u32 64, %s13
      %v147 = vld [vmem:[%s139] sm:$0xff]
      %v148 = vld [vmem:[%s139 + $0x8] sm:$0xff]
      %v149 = vld [vmem:[%s139 + $0x10] sm:$0xff]
      %v150 = vld [vmem:[%s139 + $0x18] sm:$0xff]
      %v151 = vld [vmem:[%s139 + $0x20] sm:$0xff]
      %v152 = vld [vmem:[%s139 + $0x28] sm:$0xff]
      %v153 = vld [vmem:[%s139 + $0x30] sm:$0xff]
      %v154 = vld [vmem:[%s139 + $0x38] sm:$0xff]
      %v155 = vld [vmem:[%s139 + $0x40] sm:$0xff]
      %v156 = vld [vmem:[%s139 + $0x48] sm:$0xff]
      %v157 = vld [vmem:[%s139 + $0x50] sm:$0xff]
      %v158 = vld [vmem:[%s139 + $0x58] sm:$0xff]
      %v159 = vld [vmem:[%s139 + $0x60] sm:$0xff]
      %v160 = vld [vmem:[%s139 + $0x68] sm:$0xff]
      %v161 = vld [vmem:[%s139 + $0x70] sm:$0xff]
      %v162 = vld [vmem:[%s139 + $0x78] sm:$0xff]
      %v163 = vld [vmem:[%s139 + $0x80] sm:$0xff]
      %v164 = vld [vmem:[%s139 + $0x88] sm:$0xff]
      %v165 = vld [vmem:[%s139 + $0x90] sm:$0xff]
      %v166 = vld [vmem:[%s139 + $0x98] sm:$0xff]
      %v167 = vld [vmem:[%s139 + $0xa0] sm:$0xff]
      %v168 = vld [vmem:[%s139 + $0xa8] sm:$0xff]
      %v169 = vld [vmem:[%s139 + $0xb0] sm:$0xff]
      %v170 = vld [vmem:[%s139 + $0xb8] sm:$0xff]
      %v171 = vld [vmem:[%s139 + $0xc0] sm:$0xff]
      %v172 = vld [vmem:[%s139 + $0xc8] sm:$0xff]
      %v173 = vld [vmem:[%s139 + $0xd0] sm:$0xff]
      %v174 = vld [vmem:[%s139 + $0xd8] sm:$0xff]
      %v175 = vld [vmem:[%s139 + $0xe0] sm:$0xff]
      %v176 = vld [vmem:[%s139 + $0xe8] sm:$0xff]
      %v177 = vld [vmem:[%s139 + $0xf0] sm:$0xff]
      %v178 = vld [vmem:[%s139 + $0xf8] sm:$0xff]
      %v179 = vld [vmem:[%s139 + $0x100] sm:$0xff]
      %v180 = vld [vmem:[%s139 + $0x108] sm:$0xff]
      %v181 = vld [vmem:[%s139 + $0x110] sm:$0xff]
      %v182 = vld [vmem:[%s139 + $0x118] sm:$0xff]
      %v183 = vld [vmem:[%s139 + $0x120] sm:$0xff]
      %v184 = vld [vmem:[%s139 + $0x128] sm:$0xff]
      %v185 = vld [vmem:[%s139 + $0x130] sm:$0xff]
      %v186 = vld [vmem:[%s139 + $0x138] sm:$0xff]
      %v187 = vld [vmem:[%s139 + $0x140] sm:$0xff]
      %v188 = vld [vmem:[%s139 + $0x148] sm:$0xff]
      %v189 = vld [vmem:[%s139 + $0x150] sm:$0xff]
      %v190 = vld [vmem:[%s139 + $0x158] sm:$0xff]
      %v191 = vld [vmem:[%s139 + $0x160] sm:$0xff]
      %v192 = vld [vmem:[%s139 + $0x168] sm:$0xff]
      %v193 = vld [vmem:[%s139 + $0x170] sm:$0xff]
      %v194 = vld [vmem:[%s139 + $0x178] sm:$0xff]
      %v195 = vld [vmem:[%s139 + $0x180] sm:$0xff]
      %v196 = vld [vmem:[%s139 + $0x188] sm:$0xff]
      %v197 = vld [vmem:[%s139 + $0x190] sm:$0xff]
      %v198 = vld [vmem:[%s139 + $0x198] sm:$0xff]
      %v199 = vld [vmem:[%s139 + $0x1a0] sm:$0xff]
      %v200 = vld [vmem:[%s139 + $0x1a8] sm:$0xff]
      %v201 = vld [vmem:[%s139 + $0x1b0] sm:$0xff]
      %v202 = vld [vmem:[%s139 + $0x1b8] sm:$0xff]
      %v203 = vld [vmem:[%s139 + $0x1c0] sm:$0xff]
      %v204 = vld [vmem:[%s139 + $0x1c8] sm:$0xff]
      %v205 = vld [vmem:[%s139 + $0x1d0] sm:$0xff]
      %v206 = vld [vmem:[%s139 + $0x1d8] sm:$0xff]
      %v207 = vld [vmem:[%s139 + $0x1e0] sm:$0xff]
      %v208 = vld [vmem:[%s139 + $0x1e8] sm:$0xff]
      %v209 = vld [vmem:[%s139 + $0x1f0] sm:$0xff]
      %v210 = vld [vmem:[%s139 + $0x1f8] sm:$0xff]
      %v211 = vld [vmem:[%s1] sm:$0x1]
      %v212 = vperm.slane %v211, 0
      %v213 = vmul.f32 %v147, %v212
      %v214 = vmul.f32 %v148, %v212
      %v215 = vmul.f32 %v149, %v212
      %v216 = vmul.f32 %v150, %v212
      %v217 = vmul.f32 %v151, %v212
      %v218 = vmul.f32 %v152, %v212
      %v219 = vmul.f32 %v153, %v212
      %v220 = vmul.f32 %v154, %v212
      %v221 = vmul.f32 %v155, %v212
      %v222 = vmul.f32 %v156, %v212
      %v223 = vmul.f32 %v157, %v212
      %v224 = vmul.f32 %v158, %v212
      %v225 = vmul.f32 %v159, %v212
      %v226 = vmul.f32 %v160, %v212
      %v227 = vmul.f32 %v161, %v212
      %v228 = vmul.f32 %v162, %v212
      %v229 = vmul.f32 %v163, %v212
      %v230 = vmul.f32 %v164, %v212
      %v231 = vmul.f32 %v165, %v212
      %v232 = vmul.f32 %v166, %v212
      %v233 = vmul.f32 %v167, %v212
      %v234 = vmul.f32 %v168, %v212
      %v235 = vmul.f32 %v169, %v212
      %v236 = vmul.f32 %v170, %v212
      %v237 = vmul.f32 %v171, %v212
      %v238 = vmul.f32 %v172, %v212
      %v239 = vmul.f32 %v173, %v212
      %v240 = vmul.f32 %v174, %v212
      %v241 = vmul.f32 %v175, %v212
      %v242 = vmul.f32 %v176, %v212
      %v243 = vmul.f32 %v177, %v212
      %v244 = vmul.f32 %v178, %v212
      %v245 = vmul.f32 %v179, %v212
      %v246 = vmul.f32 %v180, %v212
      %v247 = vmul.f32 %v181, %v212
      %v248 = vmul.f32 %v182, %v212
      %v249 = vmul.f32 %v183, %v212
      %v250 = vmul.f32 %v184, %v212
      %v251 = vmul.f32 %v185, %v212
      %v252 = vmul.f32 %v186, %v212
      %v253 = vmul.f32 %v187, %v212
      %v254 = vmul.f32 %v188, %v212
      %v255 = vmul.f32 %v189, %v212
      %v256 = vmul.f32 %v190, %v212
      %v257 = vmul.f32 %v191, %v212
      %v258 = vmul.f32 %v192, %v212
      %v259 = vmul.f32 %v193, %v212
      %v260 = vmul.f32 %v194, %v212
      %v261 = vmul.f32 %v195, %v212
      %v262 = vmul.f32 %v196, %v212
      %v263 = vmul.f32 %v197, %v212
      %v264 = vmul.f32 %v198, %v212
      %v265 = vmul.f32 %v199, %v212
      %v266 = vmul.f32 %v200, %v212
      %v267 = vmul.f32 %v201, %v212
      %v268 = vmul.f32 %v202, %v212
      %v269 = vmul.f32 %v203, %v212
      %v270 = vmul.f32 %v204, %v212
      %v271 = vmul.f32 %v205, %v212
      %v272 = vmul.f32 %v206, %v212
      %v273 = vmul.f32 %v207, %v212
      %v274 = vmul.f32 %v208, %v212
      %v275 = vmul.f32 %v209, %v212
      %v276 = vmul.f32 %v210, %v212
      %v277 = vld [vmem:[%s1 + $0x1] sm:$0x1]
      %v278 = vperm.slane %v277, 0
      %v279 = vadd.f32 %v213, %v278
      %v280 = vadd.f32 %v214, %v278
      %v281 = vadd.f32 %v215, %v278
      %v282 = vadd.f32 %v216, %v278
      %v283 = vadd.f32 %v217, %v278
      %v284 = vadd.f32 %v218, %v278
      %v285 = vadd.f32 %v219, %v278
      %v286 = vadd.f32 %v220, %v278
      %v287 = vadd.f32 %v221, %v278
      %v288 = vadd.f32 %v222, %v278
      %v289 = vadd.f32 %v223, %v278
      %v290 = vadd.f32 %v224, %v278
      %v291 = vadd.f32 %v225, %v278
      %v292 = vadd.f32 %v226, %v278
      %v293 = vadd.f32 %v227, %v278
      %v294 = vadd.f32 %v228, %v278
      %v295 = vadd.f32 %v229, %v278
      %v296 = vadd.f32 %v230, %v278
      %v297 = vadd.f32 %v231, %v278
      %v298 = vadd.f32 %v232, %v278
      %v299 = vadd.f32 %v233, %v278
      %v300 = vadd.f32 %v234, %v278
      %v301 = vadd.f32 %v235, %v278
      %v302 = vadd.f32 %v236, %v278
      %v303 = vadd.f32 %v237, %v278
      %v304 = vadd.f32 %v238, %v278
      %v305 = vadd.f32 %v239, %v278
      %v306 = vadd.f32 %v240, %v278
      %v307 = vadd.f32 %v241, %v278
      %v308 = vadd.f32 %v242, %v278
      %v309 = vadd.f32 %v243, %v278
      %v310 = vadd.f32 %v244, %v278
      %v311 = vadd.f32 %v245, %v278
      %v312 = vadd.f32 %v246, %v278
      %v313 = vadd.f32 %v247, %v278
      %v314 = vadd.f32 %v248, %v278
      %v315 = vadd.f32 %v249, %v278
      %v316 = vadd.f32 %v250, %v278
      %v317 = vadd.f32 %v251, %v278
      %v318 = vadd.f32 %v252, %v278
      %v319 = vadd.f32 %v253, %v278
      %v320 = vadd.f32 %v254, %v278
      %v321 = vadd.f32 %v255, %v278
      %v322 = vadd.f32 %v256, %v278
      %v323 = vadd.f32 %v257, %v278
      %v324 = vadd.f32 %v258, %v278
      %v325 = vadd.f32 %v259, %v278
      %v326 = vadd.f32 %v260, %v278
      %v327 = vadd.f32 %v261, %v278
      %v328 = vadd.f32 %v262, %v278
      %v329 = vadd.f32 %v263, %v278
      %v330 = vadd.f32 %v264, %v278
      %v331 = vadd.f32 %v265, %v278
      %v332 = vadd.f32 %v266, %v278
      %v333 = vadd.f32 %v267, %v278
      %v334 = vadd.f32 %v268, %v278
      %v335 = vadd.f32 %v269, %v278
      %v336 = vadd.f32 %v270, %v278
      %v337 = vadd.f32 %v271, %v278
      %v338 = vadd.f32 %v272, %v278
      %v339 = vadd.f32 %v273, %v278
      %v340 = vadd.f32 %v274, %v278
      %v341 = vadd.f32 %v275, %v278
      %v342 = vadd.f32 %v276, %v278
      %v343 = vmul.f32 %v279, 0.2
      %v344 = vmul.f32 %v280, 0.2
      %v345 = vmul.f32 %v281, 0.2
      %v346 = vmul.f32 %v282, 0.2
      %v347 = vmul.f32 %v283, 0.2
      %v348 = vmul.f32 %v284, 0.2
      %v349 = vmul.f32 %v285, 0.2
      %v350 = vmul.f32 %v286, 0.2
      %v351 = vmul.f32 %v287, 0.2
      %v352 = vmul.f32 %v288, 0.2
      %v353 = vmul.f32 %v289, 0.2
      %v354 = vmul.f32 %v290, 0.2
      %v355 = vmul.f32 %v291, 0.2
      %v356 = vmul.f32 %v292, 0.2
      %v357 = vmul.f32 %v293, 0.2
      %v358 = vmul.f32 %v294, 0.2
      %v359 = vmul.f32 %v295, 0.2
      %v360 = vmul.f32 %v296, 0.2
      %v361 = vmul.f32 %v297, 0.2
      %v362 = vmul.f32 %v298, 0.2
      %v363 = vmul.f32 %v299, 0.2
      %v364 = vmul.f32 %v300, 0.2
      %v365 = vmul.f32 %v301, 0.2
      %v366 = vmul.f32 %v302, 0.2
      %v367 = vmul.f32 %v303, 0.2
      %v368 = vmul.f32 %v304, 0.2
      %v369 = vmul.f32 %v305, 0.2
      %v370 = vmul.f32 %v306, 0.2
      %v371 = vmul.f32 %v307, 0.2
      %v372 = vmul.f32 %v308, 0.2
      %v373 = vmul.f32 %v309, 0.2
      %v374 = vmul.f32 %v310, 0.2
      %v375 = vmul.f32 %v311, 0.2
      %v376 = vmul.f32 %v312, 0.2
      %v377 = vmul.f32 %v313, 0.2
      %v378 = vmul.f32 %v314, 0.2
      %v379 = vmul.f32 %v315, 0.2
      %v380 = vmul.f32 %v316, 0.2
      %v381 = vmul.f32 %v317, 0.2
      %v382 = vmul.f32 %v318, 0.2
      %v383 = vmul.f32 %v319, 0.2
      %v384 = vmul.f32 %v320, 0.2
      %v385 = vmul.f32 %v321, 0.2
      %v386 = vmul.f32 %v322, 0.2
      %v387 = vmul.f32 %v323, 0.2
      %v388 = vmul.f32 %v324, 0.2
      %v389 = vmul.f32 %v325, 0.2
      %v390 = vmul.f32 %v326, 0.2
      %v391 = vmul.f32 %v327, 0.2
      %v392 = vmul.f32 %v328, 0.2
      %v393 = vmul.f32 %v329, 0.2
      %v394 = vmul.f32 %v330, 0.2
      %v395 = vmul.f32 %v331, 0.2
      %v396 = vmul.f32 %v332, 0.2
      %v397 = vmul.f32 %v333, 0.2
      %v398 = vmul.f32 %v334, 0.2
      %v399 = vmul.f32 %v335, 0.2
      %v400 = vmul.f32 %v336, 0.2
      %v401 = vmul.f32 %v337, 0.2
      %v402 = vmul.f32 %v338, 0.2
      %v403 = vmul.f32 %v339, 0.2
      %v404 = vmul.f32 %v340, 0.2
      %v405 = vmul.f32 %v341, 0.2
      %v406 = vmul.f32 %v342, 0.2
      %v407 = vmax.f32 %v279, %v343
      %v408 = vmax.f32 %v280, %v344
      %v409 = vmax.f32 %v281, %v345
      %v410 = vmax.f32 %v282, %v346
      %v411 = vmax.f32 %v283, %v347
      %v412 = vmax.f32 %v284, %v348
      %v413 = vmax.f32 %v285, %v349
      %v414 = vmax.f32 %v286, %v350
      %v415 = vmax.f32 %v287, %v351
      %v416 = vmax.f32 %v288, %v352
      %v417 = vmax.f32 %v289, %v353
      %v418 = vmax.f32 %v290, %v354
      %v419 = vmax.f32 %v291, %v355
      %v420 = vmax.f32 %v292, %v356
      %v421 = vmax.f32 %v293, %v357
      %v422 = vmax.f32 %v294, %v358
      %v423 = vmax.f32 %v295, %v359
      %v424 = vmax.f32 %v296, %v360
      %v425 = vmax.f32 %v297, %v361
      %v426 = vmax.f32 %v298, %v362
      %v427 = vmax.f32 %v299, %v363
      %v428 = vmax.f32 %v300, %v364
      %v429 = vmax.f32 %v301, %v365
      %v430 = vmax.f32 %v302, %v366
      %v431 = vmax.f32 %v303, %v367
      %v432 = vmax.f32 %v304, %v368
      %v433 = vmax.f32 %v305, %v369
      %v434 = vmax.f32 %v306, %v370
      %v435 = vmax.f32 %v307, %v371
      %v436 = vmax.f32 %v308, %v372
      %v437 = vmax.f32 %v309, %v373
      %v438 = vmax.f32 %v310, %v374
      %v439 = vmax.f32 %v311, %v375
      %v440 = vmax.f32 %v312, %v376
      %v441 = vmax.f32 %v313, %v377
      %v442 = vmax.f32 %v314, %v378
      %v443 = vmax.f32 %v315, %v379
      %v444 = vmax.f32 %v316, %v380
      %v445 = vmax.f32 %v317, %v381
      %v446 = vmax.f32 %v318, %v382
      %v447 = vmax.f32 %v319, %v383
      %v448 = vmax.f32 %v320, %v384
      %v449 = vmax.f32 %v321, %v385
      %v450 = vmax.f32 %v322, %v386
      %v451 = vmax.f32 %v323, %v387
      %v452 = vmax.f32 %v324, %v388
      %v453 = vmax.f32 %v325, %v389
      %v454 = vmax.f32 %v326, %v390
      %v455 = vmax.f32 %v327, %v391
      %v456 = vmax.f32 %v328, %v392
      %v457 = vmax.f32 %v329, %v393
      %v458 = vmax.f32 %v330, %v394
      %v459 = vmax.f32 %v331, %v395
      %v460 = vmax.f32 %v332, %v396
      %v461 = vmax.f32 %v333, %v397
      %v462 = vmax.f32 %v334, %v398
      %v463 = vmax.f32 %v335, %v399
      %v464 = vmax.f32 %v336, %v400
      %v465 = vmax.f32 %v337, %v401
      %v466 = vmax.f32 %v338, %v402
      %v467 = vmax.f32 %v339, %v403
      %v468 = vmax.f32 %v340, %v404
      %v469 = vmax.f32 %v341, %v405
      %v470 = vmax.f32 %v342, %v406
      %v471 = vpack.c.bf16 %v407, %v407
      %v472 = vpack.c.bf16 %v408, %v408
      %v473 = vpack.c.bf16 %v409, %v409
      %v474 = vpack.c.bf16 %v410, %v410
      %v475 = vpack.c.bf16 %v411, %v411
      %v476 = vpack.c.bf16 %v412, %v412
      %v477 = vpack.c.bf16 %v413, %v413
      %v478 = vpack.c.bf16 %v414, %v414
      %v479 = vpack.c.bf16 %v415, %v415
      %v480 = vpack.c.bf16 %v416, %v416
      %v481 = vpack.c.bf16 %v417, %v417
      %v482 = vpack.c.bf16 %v418, %v418
      %v483 = vpack.c.bf16 %v419, %v419
      %v484 = vpack.c.bf16 %v420, %v420
      %v485 = vpack.c.bf16 %v421, %v421
      %v486 = vpack.c.bf16 %v422, %v422
      %v487 = vpack.c.bf16 %v423, %v423
      %v488 = vpack.c.bf16 %v424, %v424
      %v489 = vpack.c.bf16 %v425, %v425
      %v490 = vpack.c.bf16 %v426, %v426
      %v491 = vpack.c.bf16 %v427, %v427
      %v492 = vpack.c.bf16 %v428, %v428
      %v493 = vpack.c.bf16 %v429, %v429
      %v494 = vpack.c.bf16 %v430, %v430
      %v495 = vpack.c.bf16 %v431, %v431
      %v496 = vpack.c.bf16 %v432, %v432
      %v497 = vpack.c.bf16 %v433, %v433
      %v498 = vpack.c.bf16 %v434, %v434
      %v499 = vpack.c.bf16 %v435, %v435
      %v500 = vpack.c.bf16 %v436, %v436
      %v501 = vpack.c.bf16 %v437, %v437
      %v502 = vpack.c.bf16 %v438, %v438
      %v503 = vpack.c.bf16 %v439, %v439
      %v504 = vpack.c.bf16 %v440, %v440
      %v505 = vpack.c.bf16 %v441, %v441
      %v506 = vpack.c.bf16 %v442, %v442
      %v507 = vpack.c.bf16 %v443, %v443
      %v508 = vpack.c.bf16 %v444, %v444
      %v509 = vpack.c.bf16 %v445, %v445
      %v510 = vpack.c.bf16 %v446, %v446
      %v511 = vpack.c.bf16 %v447, %v447
      %v512 = vpack.c.bf16 %v448, %v448
      %v513 = vpack.c.bf16 %v449, %v449
      %v514 = vpack.c.bf16 %v450, %v450
      %v515 = vpack.c.bf16 %v451, %v451
      %v516 = vpack.c.bf16 %v452, %v452
      %v517 = vpack.c.bf16 %v453, %v453
      %v518 = vpack.c.bf16 %v454, %v454
      %v519 = vpack.c.bf16 %v455, %v455
      %v520 = vpack.c.bf16 %v456, %v456
      %v521 = vpack.c.bf16 %v457, %v457
      %v522 = vpack.c.bf16 %v458, %v458
      %v523 = vpack.c.bf16 %v459, %v459
      %v524 = vpack.c.bf16 %v460, %v460
      %v525 = vpack.c.bf16 %v461, %v461
      %v526 = vpack.c.bf16 %v462, %v462
      %v527 = vpack.c.bf16 %v463, %v463
      %v528 = vpack.c.bf16 %v464, %v464
      %v529 = vpack.c.bf16 %v465, %v465
      %v530 = vpack.c.bf16 %v466, %v466
      %v531 = vpack.c.bf16 %v467, %v467
      %v532 = vpack.c.bf16 %v468, %v468
      %v533 = vpack.c.bf16 %v469, %v469
      %v534 = vpack.c.bf16 %v470, %v470
      %535 = vst [vmem:[%s145] sm:$0xf] %v471
      %536 = vst [vmem:[%s145 + $0x4] sm:$0xf] %v472
      %537 = vst [vmem:[%s145 + $0x8] sm:$0xf] %v473
      %538 = vst [vmem:[%s145 + $0xc] sm:$0xf] %v474
      %539 = vst [vmem:[%s145 + $0x10] sm:$0xf] %v475
      %540 = vst [vmem:[%s145 + $0x14] sm:$0xf] %v476
      %541 = vst [vmem:[%s145 + $0x18] sm:$0xf] %v477
      %542 = vst [vmem:[%s145 + $0x1c] sm:$0xf] %v478
      %543 = vst [vmem:[%s145 + $0x20] sm:$0xf] %v479
      %544 = vst [vmem:[%s145 + $0x24] sm:$0xf] %v480
      %545 = vst [vmem:[%s145 + $0x28] sm:$0xf] %v481
      %546 = vst [vmem:[%s145 + $0x2c] sm:$0xf] %v482
      %547 = vst [vmem:[%s145 + $0x30] sm:$0xf] %v483
      %548 = vst [vmem:[%s145 + $0x34] sm:$0xf] %v484
      %549 = vst [vmem:[%s145 + $0x38] sm:$0xf] %v485
      %550 = vst [vmem:[%s145 + $0x3c] sm:$0xf] %v486
      %551 = vst [vmem:[%s145 + $0x40] sm:$0xf] %v487
      %552 = vst [vmem:[%s145 + $0x44] sm:$0xf] %v488
      %553 = vst [vmem:[%s145 + $0x48] sm:$0xf] %v489
      %554 = vst [vmem:[%s145 + $0x4c] sm:$0xf] %v490
      %555 = vst [vmem:[%s145 + $0x50] sm:$0xf] %v491
      %556 = vst [vmem:[%s145 + $0x54] sm:$0xf] %v492
      %557 = vst [vmem:[%s145 + $0x58] sm:$0xf] %v493
      %558 = vst [vmem:[%s145 + $0x5c] sm:$0xf] %v494
      %559 = vst [vmem:[%s145 + $0x60] sm:$0xf] %v495
      %560 = vst [vmem:[%s145 + $0x64] sm:$0xf] %v496
      %561 = vst [vmem:[%s145 + $0x68] sm:$0xf] %v497
      %562 = vst [vmem:[%s145 + $0x6c] sm:$0xf] %v498
      %563 = vst [vmem:[%s145 + $0x70] sm:$0xf] %v499
      %564 = vst [vmem:[%s145 + $0x74] sm:$0xf] %v500
      %565 = vst [vmem:[%s145 + $0x78] sm:$0xf] %v501
      %566 = vst [vmem:[%s145 + $0x7c] sm:$0xf] %v502
      %567 = vst [vmem:[%s145 + $0x80] sm:$0xf] %v503
      %568 = vst [vmem:[%s145 + $0x84] sm:$0xf] %v504
      %569 = vst [vmem:[%s145 + $0x88] sm:$0xf] %v505
      %570 = vst [vmem:[%s145 + $0x8c] sm:$0xf] %v506
      %571 = vst [vmem:[%s145 + $0x90] sm:$0xf] %v507
      %572 = vst [vmem:[%s145 + $0x94] sm:$0xf] %v508
      %573 = vst [vmem:[%s145 + $0x98] sm:$0xf] %v509
      %574 = vst [vmem:[%s145 + $0x9c] sm:$0xf] %v510
      %575 = vst [vmem:[%s145 + $0xa0] sm:$0xf] %v511
      %576 = vst [vmem:[%s145 + $0xa4] sm:$0xf] %v512
      %577 = vst [vmem:[%s145 + $0xa8] sm:$0xf] %v513
      %578 = vst [vmem:[%s145 + $0xac] sm:$0xf] %v514
      %579 = vst [vmem:[%s145 + $0xb0] sm:$0xf] %v515
      %580 = vst [vmem:[%s145 + $0xb4] sm:$0xf] %v516
      %581 = vst [vmem:[%s145 + $0xb8] sm:$0xf] %v517
      %582 = vst [vmem:[%s145 + $0xbc] sm:$0xf] %v518
      %583 = vst [vmem:[%s145 + $0xc0] sm:$0xf] %v519
      %584 = vst [vmem:[%s145 + $0xc4] sm:$0xf] %v520
      %585 = vst [vmem:[%s145 + $0xc8] sm:$0xf] %v521
      %586 = vst [vmem:[%s145 + $0xcc] sm:$0xf] %v522
      %587 = vst [vmem:[%s145 + $0xd0] sm:$0xf] %v523
      %588 = vst [vmem:[%s145 + $0xd4] sm:$0xf] %v524
      %589 = vst [vmem:[%s145 + $0xd8] sm:$0xf] %v525
      %590 = vst [vmem:[%s145 + $0xdc] sm:$0xf] %v526
      %591 = vst [vmem:[%s145 + $0xe0] sm:$0xf] %v527
      %592 = vst [vmem:[%s145 + $0xe4] sm:$0xf] %v528
      %593 = vst [vmem:[%s145 + $0xe8] sm:$0xf] %v529
      %594 = vst [vmem:[%s145 + $0xec] sm:$0xf] %v530
      %595 = vst [vmem:[%s145 + $0xf0] sm:$0xf] %v531
      %596 = vst [vmem:[%s145 + $0xf4] sm:$0xf] %v532
      %597 = vst [vmem:[%s145 + $0xf8] sm:$0xf] %v533
      %598 = vst [vmem:[%s145 + $0xfc] sm:$0xf] %v534
      %s599 = smul.u32 64, %s13
      %p600 = scmp.lt.s32.totalorder %s599, 191
      %s601 = scalar_select %p600, %s599, 191
      %s602 = smul.addr %s601, 4
      %s603 = scalar_lea.vmem %s2, %s602
      // Predicated region
      $region29: #{_lambda_.10} parent=27 // pred_check
        %p604 = pneg %p78
      $region30: #{_lambda_.10} parent=27 // pred_check_branch
        %606 = sbr.rel (%p604) target = $region32
      $region31: #{_lambda_.10} parent=27 // pred_region
        %s607 = smul.u32 64, %s13
      $region32: #{_lambda_.10} parent=27 // pred_fallthru
        _
    $region28: #{_lambda_.10} parent=5 // pred_fallthru
      _
    %p608 = scmp.le.s32.totalorder 2, %s8
    // Predicated region
    $region33: #{_lambda_.10} parent=5 // pred_check
      %p609 = pneg %p608
    $region34: #{_lambda_.10} parent=5 // pred_check_branch
      %611 = sbr.rel (%p609) target = $region36
    $region35: #{_lambda_.10} parent=5 // pred_region
      %s612 = ssub.s32 %s8, 2
      // Predicated region
      $region37: #{_lambda_.10} parent=35 // pred_check
        %p613 = pneg %p84
      $region38: #{_lambda_.10} parent=35 // pred_check_branch
        %615 = sbr.rel (%p613) target = $region40
      $region39: #{_lambda_.10} parent=35 // pred_region
        %s616 = smul.u32 64, %s14
        %p617 = scmp.lt.s32.totalorder %s616, 191
        %s618 = scalar_select %p617, %s616, 191
        %s619 = smul.addr %s618, 4
        %s620 = scalar_lea.vmem %s2, %s619
      $region40: #{_lambda_.10} parent=35 // pred_fallthru
        _
    $region36: #{_lambda_.10} parent=5 // pred_fallthru
      _
  $region6: #{_lambda_.10} parent=0 // loop_footer
    %s12 = sadd.s32 1, %s8
  $region7: #{_lambda_.10} parent=0 // loop_footer_branch
    %7 = sbr.rel target = $region3
  $region8: #{_lambda_.10} parent=0 // loop_exit
    _

// kernel: _lambda_.11
$region0: #{_lambda_.11}
  #allocation0 [shape = 'u32[]', space=smem, size = 0x4, offset = 0x4, fixed_abs, tag = 'smem constant byte address 0x4 - core index']
  #allocation1 [shape = 'u32[72,128]{1,0:T(1,128)}', space=vmem, size = 0x9000, scoped, tag = 'internal scratch']
  %s0 = inlined_call_operand.vmem [shape: bf16[288,512], index: 0, kind: input, shape index: {}]
  %s1 = inlined_call_operand.vmem [shape: bf16[512,128], index: 1, kind: input, shape index: {}]
  %s2 = inlined_call_operand.vmem [shape: f32[288,128], index: 2, kind: output, shape index: {0}]
  %s3 = inlined_call_operand.vmem [shape: f32[2,128], index: 3, kind: output, shape index: {1}]
  %4 = xla_tuple %s2, %s3
  %s5 = sld [smem:[#allocation0]]
  $region30: #{_lambda_.11} parent=0
    _
  %s7 = ssub.s32 1, %s5
  %s8 = scalar_select 0, %s7, %s5
  // Predicated region
  $region2: #{_lambda_.11} parent=0 // pred_check
    _
  $region3: #{_lambda_.11} parent=0 // pred_check_branch
    %10 = sbr.rel (0) target = $region5
  $region4: #{_lambda_.11} parent=0 // pred_region
    _
  $region5: #{_lambda_.11} parent=0 // pred_fallthru
    _
  // Predicated region
  $region6: #{_lambda_.11} parent=0 // pred_check
    _
  $region7: #{_lambda_.11} parent=0 // pred_check_branch
    %12 = sbr.rel (0) target = $region9
  $region8: #{_lambda_.11} parent=0 // pred_region
    _
  $region9: #{_lambda_.11} parent=0 // pred_fallthru
    _
  %p13 = scmp.eq.s32.totalorder 0, 0
  // Predicated region
  $region10: #{_lambda_.11} parent=0 // pred_check
    %p14 = pneg %p13
  $region11: #{_lambda_.11} parent=0 // pred_check_branch
    %16 = sbr.rel (%p14) target = $region13
  $region12: #{_lambda_.11} parent=0 // pred_region
    %17 = vst [vmem:[%s3] sm:$0x3] 0.0
  $region13: #{_lambda_.11} parent=0 // pred_fallthru
    _
  %v18 = vld [vmem:[%s0] sm:$0xff]
  %v19 = vld [vmem:[%s0 + $0x8] sm:$0xff]
  %v20 = vld [vmem:[%s0 + $0x10] sm:$0xff]
  %v21 = vld [vmem:[%s0 + $0x18] sm:$0xff]
  %v22 = vld [vmem:[%s0 + $0x20] sm:$0xff]
  %v23 = vld [vmem:[%s0 + $0x28] sm:$0xff]
  %v24 = vld [vmem:[%s0 + $0x30] sm:$0xff]
  %v25 = vld [vmem:[%s0 + $0x38] sm:$0xff]
  %v26 = vld [vmem:[%s0 + $0x40] sm:$0xff]
  %v27 = vld [vmem:[%s0 + $0x48] sm:$0xff]
  %v28 = vld [vmem:[%s0 + $0x50] sm:$0xff]
  %v29 = vld [vmem:[%s0 + $0x58] sm:$0xff]
  %v30 = vld [vmem:[%s0 + $0x60] sm:$0xff]
  %v31 = vld [vmem:[%s0 + $0x68] sm:$0xff]
  %v32 = vld [vmem:[%s0 + $0x70] sm:$0xff]
  %v33 = vld [vmem:[%s0 + $0x78] sm:$0xff]
  %v34 = vld [vmem:[%s0 + $0x80] sm:$0xff]
  %v35 = vld [vmem:[%s0 + $0x88] sm:$0xff]
  %v36 = vld [vmem:[%s0 + $0x90] sm:$0xff]
  %v37 = vld [vmem:[%s0 + $0x98] sm:$0xff]
  %v38 = vld [vmem:[%s0 + $0xa0] sm:$0xff]
  %v39 = vld [vmem:[%s0 + $0xa8] sm:$0xff]
  %v40 = vld [vmem:[%s0 + $0xb0] sm:$0xff]
  %v41 = vld [vmem:[%s0 + $0xb8] sm:$0xff]
  %v42 = vld [vmem:[%s0 + $0xc0] sm:$0xff]
  %v43 = vld [vmem:[%s0 + $0xc8] sm:$0xff]
  %v44 = vld [vmem:[%s0 + $0xd0] sm:$0xff]
  %v45 = vld [vmem:[%s0 + $0xd8] sm:$0xff]
  %v46 = vld [vmem:[%s0 + $0xe0] sm:$0xff]
  %v47 = vld [vmem:[%s0 + $0xe8] sm:$0xff]
  %v48 = vld [vmem:[%s0 + $0xf0] sm:$0xff]
  %v49 = vld [vmem:[%s0 + $0xf8] sm:$0xff]
  %v50 = vld [vmem:[%s0 + $0x100] sm:$0xff]
  %v51 = vld [vmem:[%s0 + $0x108] sm:$0xff]
  %v52 = vld [vmem:[%s0 + $0x110] sm:$0xff]
  %v53 = vld [vmem:[%s0 + $0x118] sm:$0xff]
  %v54 = vld [vmem:[%s0 + $0x120] sm:$0xff]
  %v55 = vld [vmem:[%s0 + $0x128] sm:$0xff]
  %v56 = vld [vmem:[%s0 + $0x130] sm:$0xff]
  %v57 = vld [vmem:[%s0 + $0x138] sm:$0xff]
  %v58 = vld [vmem:[%s0 + $0x140] sm:$0xff]
  %v59 = vld [vmem:[%s0 + $0x148] sm:$0xff]
  %v60 = vld [vmem:[%s0 + $0x150] sm:$0xff]
  %v61 = vld [vmem:[%s0 + $0x158] sm:$0xff]
  %v62 = vld [vmem:[%s0 + $0x160] sm:$0xff]
  %v63 = vld [vmem:[%s0 + $0x168] sm:$0xff]
  %v64 = vld [vmem:[%s0 + $0x170] sm:$0xff]
  %v65 = vld [vmem:[%s0 + $0x178] sm:$0xff]
  %v66 = vld [vmem:[%s0 + $0x180] sm:$0xff]
  %v67 = vld [vmem:[%s0 + $0x188] sm:$0xff]
  %v68 = vld [vmem:[%s0 + $0x190] sm:$0xff]
  %v69 = vld [vmem:[%s0 + $0x198] sm:$0xff]
  %v70 = vld [vmem:[%s0 + $0x1a0] sm:$0xff]
  %v71 = vld [vmem:[%s0 + $0x1a8] sm:$0xff]
  %v72 = vld [vmem:[%s0 + $0x1b0] sm:$0xff]
  %v73 = vld [vmem:[%s0 + $0x1b8] sm:$0xff]
  %v74 = vld [vmem:[%s0 + $0x1c0] sm:$0xff]
  %v75 = vld [vmem:[%s0 + $0x1c8] sm:$0xff]
  %v76 = vld [vmem:[%s0 + $0x1d0] sm:$0xff]
  %v77 = vld [vmem:[%s0 + $0x1d8] sm:$0xff]
  %v78 = vld [vmem:[%s0 + $0x1e0] sm:$0xff]
  %v79 = vld [vmem:[%s0 + $0x1e8] sm:$0xff]
  %v80 = vld [vmem:[%s0 + $0x1f0] sm:$0xff]
  %v81 = vld [vmem:[%s0 + $0x1f8] sm:$0xff]
  %v82 = vld [vmem:[%s0 + $0x200] sm:$0xff]
  %v83 = vld [vmem:[%s0 + $0x208] sm:$0xff]
  %v84 = vld [vmem:[%s0 + $0x210] sm:$0xff]
  %v85 = vld [vmem:[%s0 + $0x218] sm:$0xff]
  %v86 = vld [vmem:[%s0 + $0x220] sm:$0xff]
  %v87 = vld [vmem:[%s0 + $0x228] sm:$0xff]
  %v88 = vld [vmem:[%s0 + $0x230] sm:$0xff]
  %v89 = vld [vmem:[%s0 + $0x238] sm:$0xff]
  %v90 = vld [vmem:[%s1] sm:$0xf]
  %v91 = vld [vmem:[%s1 + $0x4] sm:$0xf]
  %v92 = vld [vmem:[%s1 + $0x8] sm:$0xf]
  %v93 = vld [vmem:[%s1 + $0xc] sm:$0xf]
  %v94 = vld [vmem:[%s1 + $0x10] sm:$0xf]
  %v95 = vld [vmem:[%s1 + $0x14] sm:$0xf]
  %v96 = vld [vmem:[%s1 + $0x18] sm:$0xf]
  %v97 = vld [vmem:[%s1 + $0x1c] sm:$0xf]
  %v98 = vld [vmem:[%s1 + $0x20] sm:$0xf]
  %v99 = vld [vmem:[%s1 + $0x24] sm:$0xf]
  %v100 = vld [vmem:[%s1 + $0x28] sm:$0xf]
  %v101 = vld [vmem:[%s1 + $0x2c] sm:$0xf]
  %v102 = vld [vmem:[%s1 + $0x30] sm:$0xf]
  %v103 = vld [vmem:[%s1 + $0x34] sm:$0xf]
  %v104 = vld [vmem:[%s1 + $0x38] sm:$0xf]
  %v105 = vld [vmem:[%s1 + $0x3c] sm:$0xf]
  %v106 = vld [vmem:[%s1 + $0x40] sm:$0xf]
  %v107 = vld [vmem:[%s1 + $0x44] sm:$0xf]
  %v108 = vld [vmem:[%s1 + $0x48] sm:$0xf]
  %v109 = vld [vmem:[%s1 + $0x4c] sm:$0xf]
  %v110 = vld [vmem:[%s1 + $0x50] sm:$0xf]
  %v111 = vld [vmem:[%s1 + $0x54] sm:$0xf]
  %v112 = vld [vmem:[%s1 + $0x58] sm:$0xf]
  %v113 = vld [vmem:[%s1 + $0x5c] sm:$0xf]
  %v114 = vld [vmem:[%s1 + $0x60] sm:$0xf]
  %v115 = vld [vmem:[%s1 + $0x64] sm:$0xf]
  %v116 = vld [vmem:[%s1 + $0x68] sm:$0xf]
  %v117 = vld [vmem:[%s1 + $0x6c] sm:$0xf]
  %v118 = vld [vmem:[%s1 + $0x70] sm:$0xf]
  %v119 = vld [vmem:[%s1 + $0x74] sm:$0xf]
  %v120 = vld [vmem:[%s1 + $0x78] sm:$0xf]
  %v121 = vld [vmem:[%s1 + $0x7c] sm:$0xf]
  %v122 = vld [vmem:[%s1 + $0x80] sm:$0xf]
  %v123 = vld [vmem:[%s1 + $0x84] sm:$0xf]
  %v124 = vld [vmem:[%s1 + $0x88] sm:$0xf]
  %v125 = vld [vmem:[%s1 + $0x8c] sm:$0xf]
  %v126 = vld [vmem:[%s1 + $0x90] sm:$0xf]
  %v127 = vld [vmem:[%s1 + $0x94] sm:$0xf]
  %v128 = vld [vmem:[%s1 + $0x98] sm:$0xf]
  %v129 = vld [vmem:[%s1 + $0x9c] sm:$0xf]
  %v130 = vld [vmem:[%s1 + $0xa0] sm:$0xf]
  %v131 = vld [vmem:[%s1 + $0xa4] sm:$0xf]
  %v132 = vld [vmem:[%s1 + $0xa8] sm:$0xf]
  %v133 = vld [vmem:[%s1 + $0xac] sm:$0xf]
  %v134 = vld [vmem:[%s1 + $0xb0] sm:$0xf]
  %v135 = vld [vmem:[%s1 + $0xb4] sm:$0xf]
  %v136 = vld [vmem:[%s1 + $0xb8] sm:$0xf]
  %v137 = vld [vmem:[%s1 + $0xbc] sm:$0xf]
  %v138 = vld [vmem:[%s1 + $0xc0] sm:$0xf]
  %v139 = vld [vmem:[%s1 + $0xc4] sm:$0xf]
  %v140 = vld [vmem:[%s1 + $0xc8] sm:$0xf]
  %v141 = vld [vmem:[%s1 + $0xcc] sm:$0xf]
  %v142 = vld [vmem:[%s1 + $0xd0] sm:$0xf]
  %v143 = vld [vmem:[%s1 + $0xd4] sm:$0xf]
  %v144 = vld [vmem:[%s1 + $0xd8] sm:$0xf]
  %v145 = vld [vmem:[%s1 + $0xdc] sm:$0xf]
  %v146 = vld [vmem:[%s1 + $0xe0] sm:$0xf]
  %v147 = vld [vmem:[%s1 + $0xe4] sm:$0xf]
  %v148 = vld [vmem:[%s1 + $0xe8] sm:$0xf]
  %v149 = vld [vmem:[%s1 + $0xec] sm:$0xf]
  %v150 = vld [vmem:[%s1 + $0xf0] sm:$0xf]
  %v151 = vld [vmem:[%s1 + $0xf4] sm:$0xf]
  %v152 = vld [vmem:[%s1 + $0xf8] sm:$0xf]
  %v153 = vld [vmem:[%s1 + $0xfc] sm:$0xf]
  %v226 = vunpack.c.l.b16 %v18
  %v227 = vunpack.c.h.b16 %v18
  %v228 = vunpack.c.l.b16 %v19
  %v229 = vunpack.c.h.b16 %v19
  %v230 = vunpack.c.l.b16 %v20
  %v231 = vunpack.c.h.b16 %v20
  %v232 = vunpack.c.l.b16 %v21
  %v233 = vunpack.c.h.b16 %v21
  %v234 = vunpack.c.l.b16 %v22
  %v235 = vunpack.c.h.b16 %v22
  %v236 = vunpack.c.l.b16 %v23
  %v237 = vunpack.c.h.b16 %v23
  %v238 = vunpack.c.l.b16 %v24
  %v239 = vunpack.c.h.b16 %v24
  %v240 = vunpack.c.l.b16 %v25
  %v241 = vunpack.c.h.b16 %v25
  %v242 = vunpack.c.l.b16 %v26
  %v243 = vunpack.c.h.b16 %v26
  %v244 = vunpack.c.l.b16 %v27
  %v245 = vunpack.c.h.b16 %v27
  %v246 = vunpack.c.l.b16 %v28
  %v247 = vunpack.c.h.b16 %v28
  %v248 = vunpack.c.l.b16 %v29
  %v249 = vunpack.c.h.b16 %v29
  %v250 = vunpack.c.l.b16 %v30
  %v251 = vunpack.c.h.b16 %v30
  %v252 = vunpack.c.l.b16 %v31
  %v253 = vunpack.c.h.b16 %v31
  %v254 = vunpack.c.l.b16 %v32
  %v255 = vunpack.c.h.b16 %v32
  %v256 = vunpack.c.l.b16 %v33
  %v257 = vunpack.c.h.b16 %v33
  %v258 = vunpack.c.l.b16 %v34
  %v259 = vunpack.c.h.b16 %v34
  %v260 = vunpack.c.l.b16 %v35
  %v261 = vunpack.c.h.b16 %v35
  %v262 = vunpack.c.l.b16 %v36
  %v263 = vunpack.c.h.b16 %v36
  %v264 = vunpack.c.l.b16 %v37
  %v265 = vunpack.c.h.b16 %v37
  %v266 = vunpack.c.l.b16 %v38
  %v267 = vunpack.c.h.b16 %v38
  %v268 = vunpack.c.l.b16 %v39
  %v269 = vunpack.c.h.b16 %v39
  %v270 = vunpack.c.l.b16 %v40
  %v271 = vunpack.c.h.b16 %v40
  %v272 = vunpack.c.l.b16 %v41
  %v273 = vunpack.c.h.b16 %v41
  %v274 = vunpack.c.l.b16 %v42
  %v275 = vunpack.c.h.b16 %v42
  %v276 = vunpack.c.l.b16 %v43
  %v277 = vunpack.c.h.b16 %v43
  %v278 = vunpack.c.l.b16 %v44
  %v279 = vunpack.c.h.b16 %v44
  %v280 = vunpack.c.l.b16 %v45
  %v281 = vunpack.c.h.b16 %v45
  %v282 = vunpack.c.l.b16 %v46
  %v283 = vunpack.c.h.b16 %v46
  %v284 = vunpack.c.l.b16 %v47
  %v285 = vunpack.c.h.b16 %v47
  %v286 = vunpack.c.l.b16 %v48
  %v287 = vunpack.c.h.b16 %v48
  %v288 = vunpack.c.l.b16 %v49
  %v289 = vunpack.c.h.b16 %v49
  %v290 = vunpack.c.l.b16 %v50
  %v291 = vunpack.c.h.b16 %v50
  %v292 = vunpack.c.l.b16 %v51
  %v293 = vunpack.c.h.b16 %v51
  %v294 = vunpack.c.l.b16 %v52
  %v295 = vunpack.c.h.b16 %v52
  %v296 = vunpack.c.l.b16 %v53
  %v297 = vunpack.c.h.b16 %v53
  %v298 = vunpack.c.l.b16 %v54
  %v299 = vunpack.c.h.b16 %v54
  %v300 = vunpack.c.l.b16 %v55
  %v301 = vunpack.c.h.b16 %v55
  %v302 = vunpack.c.l.b16 %v56
  %v303 = vunpack.c.h.b16 %v56
  %v304 = vunpack.c.l.b16 %v57
  %v305 = vunpack.c.h.b16 %v57
  %v306 = vunpack.c.l.b16 %v58
  %v307 = vunpack.c.h.b16 %v58
  %v308 = vunpack.c.l.b16 %v59
  %v309 = vunpack.c.h.b16 %v59
  %v310 = vunpack.c.l.b16 %v60
  %v311 = vunpack.c.h.b16 %v60
  %v312 = vunpack.c.l.b16 %v61
  %v313 = vunpack.c.h.b16 %v61
  %v314 = vunpack.c.l.b16 %v62
  %v315 = vunpack.c.h.b16 %v62
  %v316 = vunpack.c.l.b16 %v63
  %v317 = vunpack.c.h.b16 %v63
  %v318 = vunpack.c.l.b16 %v64
  %v319 = vunpack.c.h.b16 %v64
  %v320 = vunpack.c.l.b16 %v65
  %v321 = vunpack.c.h.b16 %v65
  %v322 = vunpack.c.l.b16 %v66
  %v323 = vunpack.c.h.b16 %v66
  %v324 = vunpack.c.l.b16 %v67
  %v325 = vunpack.c.h.b16 %v67
  %v326 = vunpack.c.l.b16 %v68
  %v327 = vunpack.c.h.b16 %v68
  %v328 = vunpack.c.l.b16 %v69
  %v329 = vunpack.c.h.b16 %v69
  %v330 = vunpack.c.l.b16 %v70
  %v331 = vunpack.c.h.b16 %v70
  %v332 = vunpack.c.l.b16 %v71
  %v333 = vunpack.c.h.b16 %v71
  %v334 = vunpack.c.l.b16 %v72
  %v335 = vunpack.c.h.b16 %v72
  %v336 = vunpack.c.l.b16 %v73
  %v337 = vunpack.c.h.b16 %v73
  %v338 = vunpack.c.l.b16 %v74
  %v339 = vunpack.c.h.b16 %v74
  %v340 = vunpack.c.l.b16 %v75
  %v341 = vunpack.c.h.b16 %v75
  %v342 = vunpack.c.l.b16 %v76
  %v343 = vunpack.c.h.b16 %v76
  %v344 = vunpack.c.l.b16 %v77
  %v345 = vunpack.c.h.b16 %v77
  %v346 = vunpack.c.l.b16 %v78
  %v347 = vunpack.c.h.b16 %v78
  %v348 = vunpack.c.l.b16 %v79
  %v349 = vunpack.c.h.b16 %v79
  %v350 = vunpack.c.l.b16 %v80
  %v351 = vunpack.c.h.b16 %v80
  %v352 = vunpack.c.l.b16 %v81
  %v353 = vunpack.c.h.b16 %v81
  %v354 = vunpack.c.l.b16 %v82
  %v355 = vunpack.c.h.b16 %v82
  %v356 = vunpack.c.l.b16 %v83
  %v357 = vunpack.c.h.b16 %v83
  %v358 = vunpack.c.l.b16 %v84
  %v359 = vunpack.c.h.b16 %v84
  %v360 = vunpack.c.l.b16 %v85
  %v361 = vunpack.c.h.b16 %v85
  %v362 = vunpack.c.l.b16 %v86
  %v363 = vunpack.c.h.b16 %v86
  %v364 = vunpack.c.l.b16 %v87
  %v365 = vunpack.c.h.b16 %v87
  %v366 = vunpack.c.l.b16 %v88
  %v367 = vunpack.c.h.b16 %v88
  %v368 = vunpack.c.l.b16 %v89
  %v369 = vunpack.c.h.b16 %v89
  %v370 = vpack.c.b16 %v230, %v226
  %v371 = vpack.c.b16 %v231, %v227
  %v372 = vpack.c.b16 %v232, %v228
  %v373 = vpack.c.b16 %v233, %v229
  %v374 = vpack.c.b16 %v238, %v234
  %v375 = vpack.c.b16 %v239, %v235
  %v376 = vpack.c.b16 %v240, %v236
  %v377 = vpack.c.b16 %v241, %v237
  %v378 = vpack.c.b16 %v246, %v242
  %v379 = vpack.c.b16 %v247, %v243
  %v380 = vpack.c.b16 %v248, %v244
  %v381 = vpack.c.b16 %v249, %v245
  %v382 = vpack.c.b16 %v254, %v250
  %v383 = vpack.c.b16 %v255, %v251
  %v384 = vpack.c.b16 %v256, %v252
  %v385 = vpack.c.b16 %v257, %v253
  %v386 = vpack.c.b16 %v262, %v258
  %v387 = vpack.c.b16 %v263, %v259
  %v388 = vpack.c.b16 %v264, %v260
  %v389 = vpack.c.b16 %v265, %v261
  %v390 = vpack.c.b16 %v270, %v266
  %v391 = vpack.c.b16 %v271, %v267
  %v392 = vpack.c.b16 %v272, %v268
  %v393 = vpack.c.b16 %v273, %v269
  %v394 = vpack.c.b16 %v278, %v274
  %v395 = vpack.c.b16 %v279, %v275
  %v396 = vpack.c.b16 %v280, %v276
  %v397 = vpack.c.b16 %v281, %v277
  %v398 = vpack.c.b16 %v286, %v282
  %v399 = vpack.c.b16 %v287, %v283
  %v400 = vpack.c.b16 %v288, %v284
  %v401 = vpack.c.b16 %v289, %v285
  %v402 = vpack.c.b16 %v294, %v290
  %v403 = vpack.c.b16 %v295, %v291
  %v404 = vpack.c.b16 %v296, %v292
  %v405 = vpack.c.b16 %v297, %v293
  %v406 = vpack.c.b16 %v302, %v298
  %v407 = vpack.c.b16 %v303, %v299
  %v408 = vpack.c.b16 %v304, %v300
  %v409 = vpack.c.b16 %v305, %v301
  %v410 = vpack.c.b16 %v310, %v306
  %v411 = vpack.c.b16 %v311, %v307
  %v412 = vpack.c.b16 %v312, %v308
  %v413 = vpack.c.b16 %v313, %v309
  %v414 = vpack.c.b16 %v318, %v314
  %v415 = vpack.c.b16 %v319, %v315
  %v416 = vpack.c.b16 %v320, %v316
  %v417 = vpack.c.b16 %v321, %v317
  %v418 = vpack.c.b16 %v326, %v322
  %v419 = vpack.c.b16 %v327, %v323
  %v420 = vpack.c.b16 %v328, %v324
  %v421 = vpack.c.b16 %v329, %v325
  %v422 = vpack.c.b16 %v334, %v330
  %v423 = vpack.c.b16 %v335, %v331
  %v424 = vpack.c.b16 %v336, %v332
  %v425 = vpack.c.b16 %v337, %v333
  %v426 = vpack.c.b16 %v342, %v338
  %v427 = vpack.c.b16 %v343, %v339
  %v428 = vpack.c.b16 %v344, %v340
  %v429 = vpack.c.b16 %v345, %v341
  %v430 = vpack.c.b16 %v350, %v346
  %v431 = vpack.c.b16 %v351, %v347
  %v432 = vpack.c.b16 %v352, %v348
  %v433 = vpack.c.b16 %v353, %v349
  %v434 = vpack.c.b16 %v358, %v354
  %v435 = vpack.c.b16 %v359, %v355
  %v436 = vpack.c.b16 %v360, %v356
  %v437 = vpack.c.b16 %v361, %v357
  %v438 = vpack.c.b16 %v366, %v362
  %v439 = vpack.c.b16 %v367, %v363
  %v440 = vpack.c.b16 %v368, %v364
  %v441 = vpack.c.b16 %v369, %v365
  %v578 = vunpack.c.l.b16 %v90
  %v579 = vunpack.c.l.b16 %v91
  %v580 = vunpack.c.l.b16 %v92
  %v581 = vunpack.c.l.b16 %v93
  %v582 = vunpack.c.l.b16 %v94
  %v583 = vunpack.c.l.b16 %v95
  %v584 = vunpack.c.l.b16 %v96
  %v585 = vunpack.c.l.b16 %v97
  %v586 = vunpack.c.l.b16 %v98
  %v587 = vunpack.c.l.b16 %v99
  %v588 = vunpack.c.l.b16 %v100
  %v589 = vunpack.c.l.b16 %v101
  %v590 = vunpack.c.l.b16 %v102
  %v591 = vunpack.c.l.b16 %v103
  %v592 = vunpack.c.l.b16 %v104
  %v593 = vunpack.c.l.b16 %v105
  %v594 = vunpack.c.l.b16 %v106
  %v595 = vunpack.c.l.b16 %v107
  %v596 = vunpack.c.l.b16 %v108
  %v597 = vunpack.c.l.b16 %v109
  %v598 = vunpack.c.l.b16 %v110
  %v599 = vunpack.c.l.b16 %v111
  %v600 = vunpack.c.l.b16 %v112
  %v601 = vunpack.c.l.b16 %v113
  %v602 = vunpack.c.l.b16 %v114
  %v603 = vunpack.c.l.b16 %v115
  %v604 = vunpack.c.l.b16 %v116
  %v605 = vunpack.c.l.b16 %v117
  %v606 = vunpack.c.l.b16 %v118
  %v607 = vunpack.c.l.b16 %v119
  %v608 = vunpack.c.l.b16 %v120
  %v609 = vunpack.c.l.b16 %v121
  %v610 = vunpack.c.l.b16 %v122
  %v611 = vunpack.c.l.b16 %v123
  %v612 = vunpack.c.l.b16 %v124
  %v613 = vunpack.c.l.b16 %v125
  %v614 = vunpack.c.l.b16 %v126
  %v615 = vunpack.c.l.b16 %v127
  %v616 = vunpack.c.l.b16 %v128
  %v617 = vunpack.c.l.b16 %v129
  %v618 = vunpack.c.l.b16 %v130
  %v619 = vunpack.c.l.b16 %v131
  %v620 = vunpack.c.l.b16 %v132
  %v621 = vunpack.c.l.b16 %v133
  %v622 = vunpack.c.l.b16 %v134
  %v623 = vunpack.c.l.b16 %v135
  %v624 = vunpack.c.l.b16 %v136
  %v625 = vunpack.c.l.b16 %v137
  %v626 = vunpack.c.l.b16 %v138
  %v627 = vunpack.c.l.b16 %v139
  %v628 = vunpack.c.l.b16 %v140
  %v629 = vunpack.c.l.b16 %v141
  %v630 = vunpack.c.l.b16 %v142
  %v631 = vunpack.c.l.b16 %v143
  %v632 = vunpack.c.l.b16 %v144
  %v633 = vunpack.c.l.b16 %v145
  %v634 = vunpack.c.l.b16 %v146
  %v635 = vunpack.c.l.b16 %v147
  %v636 = vunpack.c.l.b16 %v148
  %v637 = vunpack.c.l.b16 %v149
  %v638 = vunpack.c.l.b16 %v150
  %v639 = vunpack.c.l.b16 %v151
  %v640 = vunpack.c.l.b16 %v152
  %v641 = vunpack.c.l.b16 %v153
  %v642 = vpack.c.b16 %v579, %v578
  %v643 = vpack.c.b16 %v581, %v580
  %v644 = vpack.c.b16 %v583, %v582
  %v645 = vpack.c.b16 %v585, %v584
  %v646 = vpack.c.b16 %v587, %v586
  %v647 = vpack.c.b16 %v589, %v588
  %v648 = vpack.c.b16 %v591, %v590
  %v649 = vpack.c.b16 %v593, %v592
  %v650 = vpack.c.b16 %v595, %v594
  %v651 = vpack.c.b16 %v597, %v596
  %v652 = vpack.c.b16 %v599, %v598
  %v653 = vpack.c.b16 %v601, %v600
  %v654 = vpack.c.b16 %v603, %v602
  %v655 = vpack.c.b16 %v605, %v604
  %v656 = vpack.c.b16 %v607, %v606
  %v657 = vpack.c.b16 %v609, %v608
  %v658 = vpack.c.b16 %v611, %v610
  %v659 = vpack.c.b16 %v613, %v612
  %v660 = vpack.c.b16 %v615, %v614
  %v661 = vpack.c.b16 %v617, %v616
  %v662 = vpack.c.b16 %v619, %v618
  %v663 = vpack.c.b16 %v621, %v620
  %v664 = vpack.c.b16 %v623, %v622
  %v665 = vpack.c.b16 %v625, %v624
  %v666 = vpack.c.b16 %v627, %v626
  %v667 = vpack.c.b16 %v629, %v628
  %v668 = vpack.c.b16 %v631, %v630
  %v669 = vpack.c.b16 %v633, %v632
  %v670 = vpack.c.b16 %v635, %v634
  %v671 = vpack.c.b16 %v637, %v636
  %v672 = vpack.c.b16 %v639, %v638
  %v673 = vpack.c.b16 %v641, %v640
  %706 = vmatpush.bf16.msra.mxu0 %v649
  %707 = vmatpush.bf16.msra.mxu0 %v648
  %708 = vmatpush.bf16.msra.mxu0 %v647
  %709 = vmatpush.bf16.msra.mxu0 %v646
  %710 = vmatpush.bf16.msra.mxu0 %v645
  %711 = vmatpush.bf16.msra.mxu0 %v644
  %712 = vmatpush.bf16.msra.mxu0 %v643
  %713 = vmatpush.bf16.msra.mxu0 %v642
  %714 = vmatmul.bf16.gmra.mxu0 %v370
  %v715 = vpop.f32.mrf.mxu0
  %v716 = vadd.f32 0.0, %v715
  %v717 = vpop.f32.mrf.mxu0
  %v718 = vadd.f32 0.0, %v717
  %719 = vmatmul.bf16.gmra.mxu0 %v374
  %v720 = vpop.f32.mrf.mxu0
  %v721 = vadd.f32 0.0, %v720
  %v722 = vpop.f32.mrf.mxu0
  %v723 = vadd.f32 0.0, %v722
  %724 = vmatmul.bf16.gmra.mxu0 %v378
  %v725 = vpop.f32.mrf.mxu0
  %v726 = vadd.f32 0.0, %v725
  %v727 = vpop.f32.mrf.mxu0
  %v728 = vadd.f32 0.0, %v727
  %729 = vmatmul.bf16.gmra.mxu0 %v382
  %v730 = vpop.f32.mrf.mxu0
  %v731 = vadd.f32 0.0, %v730
  %v732 = vpop.f32.mrf.mxu0
  %v733 = vadd.f32 0.0, %v732
  %734 = vmatmul.bf16.gmra.mxu0 %v386
  %v735 = vpop.f32.mrf.mxu0
  %v736 = vadd.f32 0.0, %v735
  %v737 = vpop.f32.mrf.mxu0
  %v738 = vadd.f32 0.0, %v737
  %739 = vmatmul.bf16.gmra.mxu0 %v390
  %v740 = vpop.f32.mrf.mxu0
  %v741 = vadd.f32 0.0, %v740
  %v742 = vpop.f32.mrf.mxu0
  %v743 = vadd.f32 0.0, %v742
  %744 = vmatmul.bf16.gmra.mxu0 %v394
  %v745 = vpop.f32.mrf.mxu0
  %v746 = vadd.f32 0.0, %v745
  %v747 = vpop.f32.mrf.mxu0
  %v748 = vadd.f32 0.0, %v747
  %749 = vmatmul.bf16.gmra.mxu0 %v398
  %v750 = vpop.f32.mrf.mxu0
  %v751 = vadd.f32 0.0, %v750
  %v752 = vpop.f32.mrf.mxu0
  %v753 = vadd.f32 0.0, %v752
  %754 = vmatmul.bf16.gmra.mxu0 %v402
  %v755 = vpop.f32.mrf.mxu0
  %v756 = vadd.f32 0.0, %v755
  %v757 = vpop.f32.mrf.mxu0
  %v758 = vadd.f32 0.0, %v757
  %759 = vmatmul.bf16.gmra.mxu0 %v406
  %v760 = vpop.f32.mrf.mxu0
  %v761 = vadd.f32 0.0, %v760
  %v762 = vpop.f32.mrf.mxu0
  %v763 = vadd.f32 0.0, %v762
  %764 = vmatmul.bf16.gmra.mxu0 %v410
  %v765 = vpop.f32.mrf.mxu0
  %v766 = vadd.f32 0.0, %v765
  %v767 = vpop.f32.mrf.mxu0
  %v768 = vadd.f32 0.0, %v767
  %769 = vmatmul.bf16.gmra.mxu0 %v414
  %v770 = vpop.f32.mrf.mxu0
  %v771 = vadd.f32 0.0, %v770
  %v772 = vpop.f32.mrf.mxu0
  %v773 = vadd.f32 0.0, %v772
  %774 = vmatmul.bf16.gmra.mxu0 %v418
  %v775 = vpop.f32.mrf.mxu0
  %v776 = vadd.f32 0.0, %v775
  %v777 = vpop.f32.mrf.mxu0
  %v778 = vadd.f32 0.0, %v777
  %779 = vmatmul.bf16.gmra.mxu0 %v422
  %v780 = vpop.f32.mrf.mxu0
  %v781 = vadd.f32 0.0, %v780
  %v782 = vpop.f32.mrf.mxu0
  %v783 = vadd.f32 0.0, %v782
  %784 = vmatmul.bf16.gmra.mxu0 %v426
  %v785 = vpop.f32.mrf.mxu0
  %v786 = vadd.f32 0.0, %v785
  %v787 = vpop.f32.mrf.mxu0
  %v788 = vadd.f32 0.0, %v787
  %789 = vmatmul.bf16.gmra.mxu0 %v430
  %v790 = vpop.f32.mrf.mxu0
  %v791 = vadd.f32 0.0, %v790
  %v792 = vpop.f32.mrf.mxu0
  %v793 = vadd.f32 0.0, %v792
  %794 = vmatmul.bf16.gmra.mxu0 %v434
  %v795 = vpop.f32.mrf.mxu0
  %v796 = vadd.f32 0.0, %v795
  %v797 = vpop.f32.mrf.mxu0
  %v798 = vadd.f32 0.0, %v797
  %799 = vmatmul.bf16.gmra.mxu0 %v438
  %v800 = vpop.f32.mrf.mxu0
  %v801 = vadd.f32 0.0, %v800
  %v802 = vpop.f32.mrf.mxu0
  %v803 = vadd.f32 0.0, %v802
  %804 = vdwg.mxu0
  %805 = vmatpush.bf16.msra.mxu0 %v657
  %806 = vmatpush.bf16.msra.mxu0 %v656
  %807 = vmatpush.bf16.msra.mxu0 %v655
  %808 = vmatpush.bf16.msra.mxu0 %v654
  %809 = vmatpush.bf16.msra.mxu0 %v653
  %810 = vmatpush.bf16.msra.mxu0 %v652
  %811 = vmatpush.bf16.msra.mxu0 %v651
  %812 = vmatpush.bf16.msra.mxu0 %v650
  %813 = vmatmul.bf16.gmra.mxu0 %v371
  %v814 = vpop.f32.mrf.mxu0
  %v815 = vadd.f32 %v716, %v814
  %v816 = vpop.f32.mrf.mxu0
  %v817 = vadd.f32 %v718, %v816
  %818 = vmatmul.bf16.gmra.mxu0 %v375
  %v819 = vpop.f32.mrf.mxu0
  %v820 = vadd.f32 %v721, %v819
  %v821 = vpop.f32.mrf.mxu0
  %v822 = vadd.f32 %v723, %v821
  %823 = vmatmul.bf16.gmra.mxu0 %v379
  %v824 = vpop.f32.mrf.mxu0
  %v825 = vadd.f32 %v726, %v824
  %v826 = vpop.f32.mrf.mxu0
  %v827 = vadd.f32 %v728, %v826
  %828 = vmatmul.bf16.gmra.mxu0 %v383
  %v829 = vpop.f32.mrf.mxu0
  %v830 = vadd.f32 %v731, %v829
  %v831 = vpop.f32.mrf.mxu0
  %v832 = vadd.f32 %v733, %v831
  %833 = vmatmul.bf16.gmra.mxu0 %v387
  %v834 = vpop.f32.mrf.mxu0
  %v835 = vadd.f32 %v736, %v834
  %v836 = vpop.f32.mrf.mxu0
  %v837 = vadd.f32 %v738, %v836
  %838 = vmatmul.bf16.gmra.mxu0 %v391
  %v839 = vpop.f32.mrf.mxu0
  %v840 = vadd.f32 %v741, %v839
  %v841 = vpop.f32.mrf.mxu0
  %v842 = vadd.f32 %v743, %v841
  %843 = vmatmul.bf16.gmra.mxu0 %v395
  %v844 = vpop.f32.mrf.mxu0
  %v845 = vadd.f32 %v746, %v844
  %v846 = vpop.f32.mrf.mxu0
  %v847 = vadd.f32 %v748, %v846
  %848 = vmatmul.bf16.gmra.mxu0 %v399
  %v849 = vpop.f32.mrf.mxu0
  %v850 = vadd.f32 %v751, %v849
  %v851 = vpop.f32.mrf.mxu0
  %v852 = vadd.f32 %v753, %v851
  %853 = vmatmul.bf16.gmra.mxu0 %v403
  %v854 = vpop.f32.mrf.mxu0
  %v855 = vadd.f32 %v756, %v854
  %v856 = vpop.f32.mrf.mxu0
  %v857 = vadd.f32 %v758, %v856
  %858 = vmatmul.bf16.gmra.mxu0 %v407
  %v859 = vpop.f32.mrf.mxu0
  %v860 = vadd.f32 %v761, %v859
  %v861 = vpop.f32.mrf.mxu0
  %v862 = vadd.f32 %v763, %v861
  %863 = vmatmul.bf16.gmra.mxu0 %v411
  %v864 = vpop.f32.mrf.mxu0
  %v865 = vadd.f32 %v766, %v864
  %v866 = vpop.f32.mrf.mxu0
  %v867 = vadd.f32 %v768, %v866
  %868 = vmatmul.bf16.gmra.mxu0 %v415
  %v869 = vpop.f32.mrf.mxu0
  %v870 = vadd.f32 %v771, %v869
  %v871 = vpop.f32.mrf.mxu0
  %v872 = vadd.f32 %v773, %v871
  %873 = vmatmul.bf16.gmra.mxu0 %v419
  %v874 = vpop.f32.mrf.mxu0
  %v875 = vadd.f32 %v776, %v874
  %v876 = vpop.f32.mrf.mxu0
  %v877 = vadd.f32 %v778, %v876
  %878 = vmatmul.bf16.gmra.mxu0 %v423
  %v879 = vpop.f32.mrf.mxu0
  %v880 = vadd.f32 %v781, %v879
  %v881 = vpop.f32.mrf.mxu0
  %v882 = vadd.f32 %v783, %v881
  %883 = vmatmul.bf16.gmra.mxu0 %v427
  %v884 = vpop.f32.mrf.mxu0
  %v885 = vadd.f32 %v786, %v884
  %v886 = vpop.f32.mrf.mxu0
  %v887 = vadd.f32 %v788, %v886
  %888 = vmatmul.bf16.gmra.mxu0 %v431
  %v889 = vpop.f32.mrf.mxu0
  %v890 = vadd.f32 %v791, %v889
  %v891 = vpop.f32.mrf.mxu0
  %v892 = vadd.f32 %v793, %v891
  %893 = vmatmul.bf16.gmra.mxu0 %v435
  %v894 = vpop.f32.mrf.mxu0
  %v895 = vadd.f32 %v796, %v894
  %v896 = vpop.f32.mrf.mxu0
  %v897 = vadd.f32 %v798, %v896
  %898 = vmatmul.bf16.gmra.mxu0 %v439
  %v899 = vpop.f32.mrf.mxu0
  %v900 = vadd.f32 %v801, %v899
  %v901 = vpop.f32.mrf.mxu0
  %v902 = vadd.f32 %v803, %v901
  %903 = vdwg.mxu0
  %904 = vmatpush.bf16.msra.mxu0 %v665
  %905 = vmatpush.bf16.msra.mxu0 %v664
  %906 = vmatpush.bf16.msra.mxu0 %v663
  %907 = vmatpush.bf16.msra.mxu0 %v662
  %908 = vmatpush.bf16.msra.mxu0 %v661
  %909 = vmatpush.bf16.msra.mxu0 %v660
  %910 = vmatpush.bf16.msra.mxu0 %v659
  %911 = vmatpush.bf16.msra.mxu0 %v658
  %912 = vmatmul.bf16.gmra.mxu0 %v372
  %v913 = vpop.f32.mrf.mxu0
  %v914 = vadd.f32 %v815, %v913
  %v915 = vpop.f32.mrf.mxu0
  %v916 = vadd.f32 %v817, %v915
  %917 = vmatmul.bf16.gmra.mxu0 %v376
  %v918 = vpop.f32.mrf.mxu0
  %v919 = vadd.f32 %v820, %v918
  %v920 = vpop.f32.mrf.mxu0
  %v921 = vadd.f32 %v822, %v920
  %922 = vmatmul.bf16.gmra.mxu0 %v380
  %v923 = vpop.f32.mrf.mxu0
  %v924 = vadd.f32 %v825, %v923
  %v925 = vpop.f32.mrf.mxu0
  %v926 = vadd.f32 %v827, %v925
  %927 = vmatmul.bf16.gmra.mxu0 %v384
  %v928 = vpop.f32.mrf.mxu0
  %v929 = vadd.f32 %v830, %v928
  %v930 = vpop.f32.mrf.mxu0
  %v931 = vadd.f32 %v832, %v930
  %932 = vmatmul.bf16.gmra.mxu0 %v388
  %v933 = vpop.f32.mrf.mxu0
  %v934 = vadd.f32 %v835, %v933
  %v935 = vpop.f32.mrf.mxu0
  %v936 = vadd.f32 %v837, %v935
  %937 = vmatmul.bf16.gmra.mxu0 %v392
  %v938 = vpop.f32.mrf.mxu0
  %v939 = vadd.f32 %v840, %v938
  %v940 = vpop.f32.mrf.mxu0
  %v941 = vadd.f32 %v842, %v940
  %942 = vmatmul.bf16.gmra.mxu0 %v396
  %v943 = vpop.f32.mrf.mxu0
  %v944 = vadd.f32 %v845, %v943
  %v945 = vpop.f32.mrf.mxu0
  %v946 = vadd.f32 %v847, %v945
  %947 = vmatmul.bf16.gmra.mxu0 %v400
  %v948 = vpop.f32.mrf.mxu0
  %v949 = vadd.f32 %v850, %v948
  %v950 = vpop.f32.mrf.mxu0
  %v951 = vadd.f32 %v852, %v950
  %952 = vmatmul.bf16.gmra.mxu0 %v404
  %v953 = vpop.f32.mrf.mxu0
  %v954 = vadd.f32 %v855, %v953
  %v955 = vpop.f32.mrf.mxu0
  %v956 = vadd.f32 %v857, %v955
  %957 = vmatmul.bf16.gmra.mxu0 %v408
  %v958 = vpop.f32.mrf.mxu0
  %v959 = vadd.f32 %v860, %v958
  %v960 = vpop.f32.mrf.mxu0
  %v961 = vadd.f32 %v862, %v960
  %962 = vmatmul.bf16.gmra.mxu0 %v412
  %v963 = vpop.f32.mrf.mxu0
  %v964 = vadd.f32 %v865, %v963
  %v965 = vpop.f32.mrf.mxu0
  %v966 = vadd.f32 %v867, %v965
  %967 = vmatmul.bf16.gmra.mxu0 %v416
  %v968 = vpop.f32.mrf.mxu0
  %v969 = vadd.f32 %v870, %v968
  %v970 = vpop.f32.mrf.mxu0
  %v971 = vadd.f32 %v872, %v970
  %972 = vmatmul.bf16.gmra.mxu0 %v420
  %v973 = vpop.f32.mrf.mxu0
  %v974 = vadd.f32 %v875, %v973
  %v975 = vpop.f32.mrf.mxu0
  %v976 = vadd.f32 %v877, %v975
  %977 = vmatmul.bf16.gmra.mxu0 %v424
  %v978 = vpop.f32.mrf.mxu0
  %v979 = vadd.f32 %v880, %v978
  %v980 = vpop.f32.mrf.mxu0
  %v981 = vadd.f32 %v882, %v980
  %982 = vmatmul.bf16.gmra.mxu0 %v428
  %v983 = vpop.f32.mrf.mxu0
  %v984 = vadd.f32 %v885, %v983
  %v985 = vpop.f32.mrf.mxu0
  %v986 = vadd.f32 %v887, %v985
  %987 = vmatmul.bf16.gmra.mxu0 %v432
  %v988 = vpop.f32.mrf.mxu0
  %v989 = vadd.f32 %v890, %v988
  %v990 = vpop.f32.mrf.mxu0
  %v991 = vadd.f32 %v892, %v990
  %992 = vmatmul.bf16.gmra.mxu0 %v436
  %v993 = vpop.f32.mrf.mxu0
  %v994 = vadd.f32 %v895, %v993
  %v995 = vpop.f32.mrf.mxu0
  %v996 = vadd.f32 %v897, %v995
  %997 = vmatmul.bf16.gmra.mxu0 %v440
  %v998 = vpop.f32.mrf.mxu0
  %v999 = vadd.f32 %v900, %v998
  %v1000 = vpop.f32.mrf.mxu0
  %v1001 = vadd.f32 %v902, %v1000
  %1002 = vdwg.mxu0
  %1003 = vmatpush.bf16.msra.mxu0 %v673
  %1004 = vmatpush.bf16.msra.mxu0 %v672
  %1005 = vmatpush.bf16.msra.mxu0 %v671
  %1006 = vmatpush.bf16.msra.mxu0 %v670
  %1007 = vmatpush.bf16.msra.mxu0 %v669
  %1008 = vmatpush.bf16.msra.mxu0 %v668
  %1009 = vmatpush.bf16.msra.mxu0 %v667
  %1010 = vmatpush.bf16.msra.mxu0 %v666
  %1011 = vmatmul.bf16.gmra.mxu0 %v373
  %v1012 = vpop.f32.mrf.mxu0
  %v1013 = vadd.f32 %v914, %v1012
  %v1014 = vpop.f32.mrf.mxu0
  %v1015 = vadd.f32 %v916, %v1014
  %1016 = vmatmul.bf16.gmra.mxu0 %v377
  %v1017 = vpop.f32.mrf.mxu0
  %v1018 = vadd.f32 %v919, %v1017
  %v1019 = vpop.f32.mrf.mxu0
  %v1020 = vadd.f32 %v921, %v1019
  %1021 = vmatmul.bf16.gmra.mxu0 %v381
  %v1022 = vpop.f32.mrf.mxu0
  %v1023 = vadd.f32 %v924, %v1022
  %v1024 = vpop.f32.mrf.mxu0
  %v1025 = vadd.f32 %v926, %v1024
  %1026 = vmatmul.bf16.gmra.mxu0 %v385
  %v1027 = vpop.f32.mrf.mxu0
  %v1028 = vadd.f32 %v929, %v1027
  %v1029 = vpop.f32.mrf.mxu0
  %v1030 = vadd.f32 %v931, %v1029
  %1031 = vmatmul.bf16.gmra.mxu0 %v389
  %v1032 = vpop.f32.mrf.mxu0
  %v1033 = vadd.f32 %v934, %v1032
  %v1034 = vpop.f32.mrf.mxu0
  %v1035 = vadd.f32 %v936, %v1034
  %1036 = vmatmul.bf16.gmra.mxu0 %v393
  %v1037 = vpop.f32.mrf.mxu0
  %v1038 = vadd.f32 %v939, %v1037
  %v1039 = vpop.f32.mrf.mxu0
  %v1040 = vadd.f32 %v941, %v1039
  %1041 = vmatmul.bf16.gmra.mxu0 %v397
  %v1042 = vpop.f32.mrf.mxu0
  %v1043 = vadd.f32 %v944, %v1042
  %v1044 = vpop.f32.mrf.mxu0
  %v1045 = vadd.f32 %v946, %v1044
  %1046 = vmatmul.bf16.gmra.mxu0 %v401
  %v1047 = vpop.f32.mrf.mxu0
  %v1048 = vadd.f32 %v949, %v1047
  %v1049 = vpop.f32.mrf.mxu0
  %v1050 = vadd.f32 %v951, %v1049
  %1051 = vmatmul.bf16.gmra.mxu0 %v405
  %v1052 = vpop.f32.mrf.mxu0
  %v1053 = vadd.f32 %v954, %v1052
  %v1054 = vpop.f32.mrf.mxu0
  %v1055 = vadd.f32 %v956, %v1054
  %1056 = vmatmul.bf16.gmra.mxu0 %v409
  %v1057 = vpop.f32.mrf.mxu0
  %v1058 = vadd.f32 %v959, %v1057
  %v1059 = vpop.f32.mrf.mxu0
  %v1060 = vadd.f32 %v961, %v1059
  %1061 = vmatmul.bf16.gmra.mxu0 %v413
  %v1062 = vpop.f32.mrf.mxu0
  %v1063 = vadd.f32 %v964, %v1062
  %v1064 = vpop.f32.mrf.mxu0
  %v1065 = vadd.f32 %v966, %v1064
  %1066 = vmatmul.bf16.gmra.mxu0 %v417
  %v1067 = vpop.f32.mrf.mxu0
  %v1068 = vadd.f32 %v969, %v1067
  %v1069 = vpop.f32.mrf.mxu0
  %v1070 = vadd.f32 %v971, %v1069
  %1071 = vmatmul.bf16.gmra.mxu0 %v421
  %v1072 = vpop.f32.mrf.mxu0
  %v1073 = vadd.f32 %v974, %v1072
  %v1074 = vpop.f32.mrf.mxu0
  %v1075 = vadd.f32 %v976, %v1074
  %1076 = vmatmul.bf16.gmra.mxu0 %v425
  %v1077 = vpop.f32.mrf.mxu0
  %v1078 = vadd.f32 %v979, %v1077
  %v1079 = vpop.f32.mrf.mxu0
  %v1080 = vadd.f32 %v981, %v1079
  %1081 = vmatmul.bf16.gmra.mxu0 %v429
  %v1082 = vpop.f32.mrf.mxu0
  %v1083 = vadd.f32 %v984, %v1082
  %v1084 = vpop.f32.mrf.mxu0
  %v1085 = vadd.f32 %v986, %v1084
  %1086 = vmatmul.bf16.gmra.mxu0 %v433
  %v1087 = vpop.f32.mrf.mxu0
  %v1088 = vadd.f32 %v989, %v1087
  %v1089 = vpop.f32.mrf.mxu0
  %v1090 = vadd.f32 %v991, %v1089
  %1091 = vmatmul.bf16.gmra.mxu0 %v437
  %v1092 = vpop.f32.mrf.mxu0
  %v1093 = vadd.f32 %v994, %v1092
  %v1094 = vpop.f32.mrf.mxu0
  %v1095 = vadd.f32 %v996, %v1094
  %1096 = vmatmul.bf16.gmra.mxu0 %v441
  %v1097 = vpop.f32.mrf.mxu0
  %v1098 = vadd.f32 %v999, %v1097
  %v1099 = vpop.f32.mrf.mxu0
  %v1100 = vadd.f32 %v1001, %v1099
  %1101 = vdwg.mxu0
  %1102 = vst [vmem:[%s2] sm:$0xff] %v1013
  %1103 = vst [vmem:[%s2 + $0x8] sm:$0xff] %v1015
  %1104 = vst [vmem:[%s2 + $0x10] sm:$0xff] %v1018
  %1105 = vst [vmem:[%s2 + $0x18] sm:$0xff] %v1020
  %1106 = vst [vmem:[%s2 + $0x20] sm:$0xff] %v1023
  %1107 = vst [vmem:[%s2 + $0x28] sm:$0xff] %v1025
  %1108 = vst [vmem:[%s2 + $0x30] sm:$0xff] %v1028
  %1109 = vst [vmem:[%s2 + $0x38] sm:$0xff] %v1030
  %1110 = vst [vmem:[%s2 + $0x40] sm:$0xff] %v1033
  %1111 = vst [vmem:[%s2 + $0x48] sm:$0xff] %v1035
  %1112 = vst [vmem:[%s2 + $0x50] sm:$0xff] %v1038
  %1113 = vst [vmem:[%s2 + $0x58] sm:$0xff] %v1040
  %1114 = vst [vmem:[%s2 + $0x60] sm:$0xff] %v1043
  %1115 = vst [vmem:[%s2 + $0x68] sm:$0xff] %v1045
  %1116 = vst [vmem:[%s2 + $0x70] sm:$0xff] %v1048
  %1117 = vst [vmem:[%s2 + $0x78] sm:$0xff] %v1050
  %1118 = vst [vmem:[%s2 + $0x80] sm:$0xff] %v1053
  %1119 = vst [vmem:[%s2 + $0x88] sm:$0xff] %v1055
  %1120 = vst [vmem:[%s2 + $0x90] sm:$0xff] %v1058
  %1121 = vst [vmem:[%s2 + $0x98] sm:$0xff] %v1060
  %1122 = vst [vmem:[%s2 + $0xa0] sm:$0xff] %v1063
  %1123 = vst [vmem:[%s2 + $0xa8] sm:$0xff] %v1065
  %1124 = vst [vmem:[%s2 + $0xb0] sm:$0xff] %v1068
  %1125 = vst [vmem:[%s2 + $0xb8] sm:$0xff] %v1070
  %1126 = vst [vmem:[%s2 + $0xc0] sm:$0xff] %v1073
  %1127 = vst [vmem:[%s2 + $0xc8] sm:$0xff] %v1075
  %1128 = vst [vmem:[%s2 + $0xd0] sm:$0xff] %v1078
  %1129 = vst [vmem:[%s2 + $0xd8] sm:$0xff] %v1080
  %1130 = vst [vmem:[%s2 + $0xe0] sm:$0xff] %v1083
  %1131 = vst [vmem:[%s2 + $0xe8] sm:$0xff] %v1085
  %1132 = vst [vmem:[%s2 + $0xf0] sm:$0xff] %v1088
  %1133 = vst [vmem:[%s2 + $0xf8] sm:$0xff] %v1090
  %1134 = vst [vmem:[%s2 + $0x100] sm:$0xff] %v1093
  %1135 = vst [vmem:[%s2 + $0x108] sm:$0xff] %v1095
  %1136 = vst [vmem:[%s2 + $0x110] sm:$0xff] %v1098
  %1137 = vst [vmem:[%s2 + $0x118] sm:$0xff] %v1100
  %v1138 = vld [vmem:[%s3] sm:$0x1]
  %v1139 = vadd.f32 %v1013, %v1015
  %v1140 = vadd.f32 %v1139, %v1018
  %v1141 = vadd.f32 %v1140, %v1020
  %v1142 = vadd.f32 %v1141, %v1023
  %v1143 = vadd.f32 %v1142, %v1025
  %v1144 = vadd.f32 %v1143, %v1028
  %v1145 = vadd.f32 %v1144, %v1030
  %v1146 = vadd.f32 %v1145, %v1033
  %v1147 = vadd.f32 %v1146, %v1035
  %v1148 = vadd.f32 %v1147, %v1038
  %v1149 = vadd.f32 %v1148, %v1040
  %v1150 = vadd.f32 %v1149, %v1043
  %v1151 = vadd.f32 %v1150, %v1045
  %v1152 = vadd.f32 %v1151, %v1048
  %v1153 = vadd.f32 %v1152, %v1050
  %v1154 = vadd.f32 %v1153, %v1053
  %v1155 = vadd.f32 %v1154, %v1055
  %v1156 = vadd.f32 %v1155, %v1058
  %v1157 = vadd.f32 %v1156, %v1060
  %v1158 = vadd.f32 %v1157, %v1063
  %v1159 = vadd.f32 %v1158, %v1065
  %v1160 = vadd.f32 %v1159, %v1068
  %v1161 = vadd.f32 %v1160, %v1070
  %v1162 = vadd.f32 %v1161, %v1073
  %v1163 = vadd.f32 %v1162, %v1075
  %v1164 = vadd.f32 %v1163, %v1078
  %v1165 = vadd.f32 %v1164, %v1080
  %v1166 = vadd.f32 %v1165, %v1083
  %v1167 = vadd.f32 %v1166, %v1085
  %v1168 = vadd.f32 %v1167, %v1088
  %v1169 = vadd.f32 %v1168, %v1090
  %v1170 = vadd.f32 %v1169, %v1093
  %v1171 = vadd.f32 %v1170, %v1095
  %v1172 = vadd.f32 %v1171, %v1098
  %v1173 = vadd.f32 %v1172, %v1100
  %v1174 = vrot.slane %v1173, 4
  %v1175 = vadd.f32 %v1173, %v1174
  %v1176 = vrot.slane %v1175, 2
  %v1177 = vadd.f32 %v1175, %v1176
  %v1178 = vrot.slane %v1177, 1
  %v1179 = vadd.f32 %v1177, %v1178
  %v1180 = vadd.f32 %v1138, %v1179
  %1181 = vst [vmem:[%s3] sm:$0x1] %v1180
  %v1182 = vld [vmem:[%s3 + $0x1] sm:$0x1]
  %v1183 = vmul.f32 %v1013, %v1013
  %v1184 = vmul.f32 %v1015, %v1015
  %v1185 = vmul.f32 %v1018, %v1018
  %v1186 = vmul.f32 %v1020, %v1020
  %v1187 = vmul.f32 %v1023, %v1023
  %v1188 = vmul.f32 %v1025, %v1025
  %v1189 = vmul.f32 %v1028, %v1028
  %v1190 = vmul.f32 %v1030, %v1030
  %v1191 = vmul.f32 %v1033, %v1033
  %v1192 = vmul.f32 %v1035, %v1035
  %v1193 = vmul.f32 %v1038, %v1038
  %v1194 = vmul.f32 %v1040, %v1040
  %v1195 = vmul.f32 %v1043, %v1043
  %v1196 = vmul.f32 %v1045, %v1045
  %v1197 = vmul.f32 %v1048, %v1048
  %v1198 = vmul.f32 %v1050, %v1050
  %v1199 = vmul.f32 %v1053, %v1053
  %v1200 = vmul.f32 %v1055, %v1055
  %v1201 = vmul.f32 %v1058, %v1058
  %v1202 = vmul.f32 %v1060, %v1060
  %v1203 = vmul.f32 %v1063, %v1063
  %v1204 = vmul.f32 %v1065, %v1065
  %v1205 = vmul.f32 %v1068, %v1068
  %v1206 = vmul.f32 %v1070, %v1070
  %v1207 = vmul.f32 %v1073, %v1073
  %v1208 = vmul.f32 %v1075, %v1075
  %v1209 = vmul.f32 %v1078, %v1078
  %v1210 = vmul.f32 %v1080, %v1080
  %v1211 = vmul.f32 %v1083, %v1083
  %v1212 = vmul.f32 %v1085, %v1085
  %v1213 = vmul.f32 %v1088, %v1088
  %v1214 = vmul.f32 %v1090, %v1090
  %v1215 = vmul.f32 %v1093, %v1093
  %v1216 = vmul.f32 %v1095, %v1095
  %v1217 = vmul.f32 %v1098, %v1098
  %v1218 = vmul.f32 %v1100, %v1100
  %v1219 = vadd.f32 %v1183, %v1184
  %v1220 = vadd.f32 %v1219, %v1185
  %v1221 = vadd.f32 %v1220, %v1186
  %v1222 = vadd.f32 %v1221, %v1187
  %v1223 = vadd.f32 %v1222, %v1188
  %v1224 = vadd.f32 %v1223, %v1189
  %v1225 = vadd.f32 %v1224, %v1190
  %v1226 = vadd.f32 %v1225, %v1191
  %v1227 = vadd.f32 %v1226, %v1192
  %v1228 = vadd.f32 %v1227, %v1193
  %v1229 = vadd.f32 %v1228, %v1194
  %v1230 = vadd.f32 %v1229, %v1195
  %v1231 = vadd.f32 %v1230, %v1196
  %v1232 = vadd.f32 %v1231, %v1197
  %v1233 = vadd.f32 %v1232, %v1198
  %v1234 = vadd.f32 %v1233, %v1199
  %v1235 = vadd.f32 %v1234, %v1200
  %v1236 = vadd.f32 %v1235, %v1201
  %v1237 = vadd.f32 %v1236, %v1202
  %v1238 = vadd.f32 %v1237, %v1203
  %v1239 = vadd.f32 %v1238, %v1204
  %v1240 = vadd.f32 %v1239, %v1205
  %v1241 = vadd.f32 %v1240, %v1206
  %v1242 = vadd.f32 %v1241, %v1207
  %v1243 = vadd.f32 %v1242, %v1208
  %v1244 = vadd.f32 %v1243, %v1209
  %v1245 = vadd.f32 %v1244, %v1210
  %v1246 = vadd.f32 %v1245, %v1211
  %v1247 = vadd.f32 %v1246, %v1212
  %v1248 = vadd.f32 %v1247, %v1213
  %v1249 = vadd.f32 %v1248, %v1214
  %v1250 = vadd.f32 %v1249, %v1215
  %v1251 = vadd.f32 %v1250, %v1216
  %v1252 = vadd.f32 %v1251, %v1217
  %v1253 = vadd.f32 %v1252, %v1218
  %v1254 = vrot.slane %v1253, 4
  %v1255 = vadd.f32 %v1253, %v1254
  %v1256 = vrot.slane %v1255, 2
  %v1257 = vadd.f32 %v1255, %v1256
  %v1258 = vrot.slane %v1257, 1
  %v1259 = vadd.f32 %v1257, %v1258
  %v1260 = vadd.f32 %v1182, %v1259
  %1261 = vst [vmem:[%s3 + $0x1] sm:$0x1] %v1260
  // Predicated region
  $region14: #{_lambda_.11} parent=0 // pred_check
    _
  $region15: #{_lambda_.11} parent=0 // pred_check_branch
    %1263 = sbr.rel (0) target = $region17
  $region16: #{_lambda_.11} parent=0 // pred_region
    _
  $region17: #{_lambda_.11} parent=0 // pred_fallthru
    _
  // Predicated region
  $region18: #{_lambda_.11} parent=0 // pred_check
    _
  $region19: #{_lambda_.11} parent=0 // pred_check_branch
    %1265 = sbr.rel (0) target = $region21
  $region20: #{_lambda_.11} parent=0 // pred_region
    _
  $region21: #{_lambda_.11} parent=0 // pred_fallthru
    _
  // Predicated region
  $region22: #{_lambda_.11} parent=0 // pred_check
    _
  $region23: #{_lambda_.11} parent=0 // pred_check_branch
    %1267 = sbr.rel (0) target = $region25
  $region24: #{_lambda_.11} parent=0 // pred_region
    _
  $region25: #{_lambda_.11} parent=0 // pred_fallthru
    _
  // Predicated region
  $region26: #{_lambda_.11} parent=0 // pred_check
    _
  $region27: #{_lambda_.11} parent=0 // pred_check_branch
    %1269 = sbr.rel (0) target = $region29
  $region28: #{_lambda_.11} parent=0 // pred_region
    _
  $region29: #{_lambda_.11} parent=0 // pred_fallthru
    _

// kernel: _lambda_.12
$region0: #{_lambda_.12}
  #allocation0 [shape = 'u32[]', space=smem, size = 0x4, offset = 0x4, fixed_abs, tag = 'smem constant byte address 0x4 - core index']
  #allocation1 [shape = 'u32[72,128]{1,0:T(1,128)}', space=vmem, size = 0x9000, scoped, tag = 'internal scratch']
  %s0 = inlined_call_operand.vmem [shape: f32[288,128], index: 0, kind: input, shape index: {}]
  %s1 = inlined_call_operand.vmem [shape: f32[2,128], index: 1, kind: input, shape index: {}]
  %s2 = inlined_call_operand.vmem [shape: bf16[288,128], index: 2, kind: output, shape index: {}]
  %s3 = sld [smem:[#allocation0]]
  $region18: #{_lambda_.12} parent=0
    _
  %s5 = ssub.s32 1, %s3
  %s6 = scalar_select 0, %s5, %s3
  // Predicated region
  $region2: #{_lambda_.12} parent=0 // pred_check
    _
  $region3: #{_lambda_.12} parent=0 // pred_check_branch
    %8 = sbr.rel (0) target = $region5
  $region4: #{_lambda_.12} parent=0 // pred_region
    _
  $region5: #{_lambda_.12} parent=0 // pred_fallthru
    _
  // Predicated region
  $region6: #{_lambda_.12} parent=0 // pred_check
    _
  $region7: #{_lambda_.12} parent=0 // pred_check_branch
    %10 = sbr.rel (0) target = $region9
  $region8: #{_lambda_.12} parent=0 // pred_region
    _
  $region9: #{_lambda_.12} parent=0 // pred_fallthru
    _
  %v11 = vld [vmem:[%s0] sm:$0xff]
  %v12 = vld [vmem:[%s0 + $0x8] sm:$0xff]
  %v13 = vld [vmem:[%s0 + $0x10] sm:$0xff]
  %v14 = vld [vmem:[%s0 + $0x18] sm:$0xff]
  %v15 = vld [vmem:[%s0 + $0x20] sm:$0xff]
  %v16 = vld [vmem:[%s0 + $0x28] sm:$0xff]
  %v17 = vld [vmem:[%s0 + $0x30] sm:$0xff]
  %v18 = vld [vmem:[%s0 + $0x38] sm:$0xff]
  %v19 = vld [vmem:[%s0 + $0x40] sm:$0xff]
  %v20 = vld [vmem:[%s0 + $0x48] sm:$0xff]
  %v21 = vld [vmem:[%s0 + $0x50] sm:$0xff]
  %v22 = vld [vmem:[%s0 + $0x58] sm:$0xff]
  %v23 = vld [vmem:[%s0 + $0x60] sm:$0xff]
  %v24 = vld [vmem:[%s0 + $0x68] sm:$0xff]
  %v25 = vld [vmem:[%s0 + $0x70] sm:$0xff]
  %v26 = vld [vmem:[%s0 + $0x78] sm:$0xff]
  %v27 = vld [vmem:[%s0 + $0x80] sm:$0xff]
  %v28 = vld [vmem:[%s0 + $0x88] sm:$0xff]
  %v29 = vld [vmem:[%s0 + $0x90] sm:$0xff]
  %v30 = vld [vmem:[%s0 + $0x98] sm:$0xff]
  %v31 = vld [vmem:[%s0 + $0xa0] sm:$0xff]
  %v32 = vld [vmem:[%s0 + $0xa8] sm:$0xff]
  %v33 = vld [vmem:[%s0 + $0xb0] sm:$0xff]
  %v34 = vld [vmem:[%s0 + $0xb8] sm:$0xff]
  %v35 = vld [vmem:[%s0 + $0xc0] sm:$0xff]
  %v36 = vld [vmem:[%s0 + $0xc8] sm:$0xff]
  %v37 = vld [vmem:[%s0 + $0xd0] sm:$0xff]
  %v38 = vld [vmem:[%s0 + $0xd8] sm:$0xff]
  %v39 = vld [vmem:[%s0 + $0xe0] sm:$0xff]
  %v40 = vld [vmem:[%s0 + $0xe8] sm:$0xff]
  %v41 = vld [vmem:[%s0 + $0xf0] sm:$0xff]
  %v42 = vld [vmem:[%s0 + $0xf8] sm:$0xff]
  %v43 = vld [vmem:[%s0 + $0x100] sm:$0xff]
  %v44 = vld [vmem:[%s0 + $0x108] sm:$0xff]
  %v45 = vld [vmem:[%s0 + $0x110] sm:$0xff]
  %v46 = vld [vmem:[%s0 + $0x118] sm:$0xff]
  %v47 = vld [vmem:[%s1] sm:$0x1]
  %v48 = vperm.slane %v47, 0
  %v49 = vmul.f32 %v11, %v48
  %v50 = vmul.f32 %v12, %v48
  %v51 = vmul.f32 %v13, %v48
  %v52 = vmul.f32 %v14, %v48
  %v53 = vmul.f32 %v15, %v48
  %v54 = vmul.f32 %v16, %v48
  %v55 = vmul.f32 %v17, %v48
  %v56 = vmul.f32 %v18, %v48
  %v57 = vmul.f32 %v19, %v48
  %v58 = vmul.f32 %v20, %v48
  %v59 = vmul.f32 %v21, %v48
  %v60 = vmul.f32 %v22, %v48
  %v61 = vmul.f32 %v23, %v48
  %v62 = vmul.f32 %v24, %v48
  %v63 = vmul.f32 %v25, %v48
  %v64 = vmul.f32 %v26, %v48
  %v65 = vmul.f32 %v27, %v48
  %v66 = vmul.f32 %v28, %v48
  %v67 = vmul.f32 %v29, %v48
  %v68 = vmul.f32 %v30, %v48
  %v69 = vmul.f32 %v31, %v48
  %v70 = vmul.f32 %v32, %v48
  %v71 = vmul.f32 %v33, %v48
  %v72 = vmul.f32 %v34, %v48
  %v73 = vmul.f32 %v35, %v48
  %v74 = vmul.f32 %v36, %v48
  %v75 = vmul.f32 %v37, %v48
  %v76 = vmul.f32 %v38, %v48
  %v77 = vmul.f32 %v39, %v48
  %v78 = vmul.f32 %v40, %v48
  %v79 = vmul.f32 %v41, %v48
  %v80 = vmul.f32 %v42, %v48
  %v81 = vmul.f32 %v43, %v48
  %v82 = vmul.f32 %v44, %v48
  %v83 = vmul.f32 %v45, %v48
  %v84 = vmul.f32 %v46, %v48
  %v85 = vld [vmem:[%s1 + $0x1] sm:$0x1]
  %v86 = vperm.slane %v85, 0
  %v87 = vadd.f32 %v49, %v86
  %v88 = vadd.f32 %v50, %v86
  %v89 = vadd.f32 %v51, %v86
  %v90 = vadd.f32 %v52, %v86
  %v91 = vadd.f32 %v53, %v86
  %v92 = vadd.f32 %v54, %v86
  %v93 = vadd.f32 %v55, %v86
  %v94 = vadd.f32 %v56, %v86
  %v95 = vadd.f32 %v57, %v86
  %v96 = vadd.f32 %v58, %v86
  %v97 = vadd.f32 %v59, %v86
  %v98 = vadd.f32 %v60, %v86
  %v99 = vadd.f32 %v61, %v86
  %v100 = vadd.f32 %v62, %v86
  %v101 = vadd.f32 %v63, %v86
  %v102 = vadd.f32 %v64, %v86
  %v103 = vadd.f32 %v65, %v86
  %v104 = vadd.f32 %v66, %v86
  %v105 = vadd.f32 %v67, %v86
  %v106 = vadd.f32 %v68, %v86
  %v107 = vadd.f32 %v69, %v86
  %v108 = vadd.f32 %v70, %v86
  %v109 = vadd.f32 %v71, %v86
  %v110 = vadd.f32 %v72, %v86
  %v111 = vadd.f32 %v73, %v86
  %v112 = vadd.f32 %v74, %v86
  %v113 = vadd.f32 %v75, %v86
  %v114 = vadd.f32 %v76, %v86
  %v115 = vadd.f32 %v77, %v86
  %v116 = vadd.f32 %v78, %v86
  %v117 = vadd.f32 %v79, %v86
  %v118 = vadd.f32 %v80, %v86
  %v119 = vadd.f32 %v81, %v86
  %v120 = vadd.f32 %v82, %v86
  %v121 = vadd.f32 %v83, %v86
  %v122 = vadd.f32 %v84, %v86
  %v123 = vmul.f32 %v87, 0.2
  %v124 = vmul.f32 %v88, 0.2
  %v125 = vmul.f32 %v89, 0.2
  %v126 = vmul.f32 %v90, 0.2
  %v127 = vmul.f32 %v91, 0.2
  %v128 = vmul.f32 %v92, 0.2
  %v129 = vmul.f32 %v93, 0.2
  %v130 = vmul.f32 %v94, 0.2
  %v131 = vmul.f32 %v95, 0.2
  %v132 = vmul.f32 %v96, 0.2
  %v133 = vmul.f32 %v97, 0.2
  %v134 = vmul.f32 %v98, 0.2
  %v135 = vmul.f32 %v99, 0.2
  %v136 = vmul.f32 %v100, 0.2
  %v137 = vmul.f32 %v101, 0.2
  %v138 = vmul.f32 %v102, 0.2
  %v139 = vmul.f32 %v103, 0.2
  %v140 = vmul.f32 %v104, 0.2
  %v141 = vmul.f32 %v105, 0.2
  %v142 = vmul.f32 %v106, 0.2
  %v143 = vmul.f32 %v107, 0.2
  %v144 = vmul.f32 %v108, 0.2
  %v145 = vmul.f32 %v109, 0.2
  %v146 = vmul.f32 %v110, 0.2
  %v147 = vmul.f32 %v111, 0.2
  %v148 = vmul.f32 %v112, 0.2
  %v149 = vmul.f32 %v113, 0.2
  %v150 = vmul.f32 %v114, 0.2
  %v151 = vmul.f32 %v115, 0.2
  %v152 = vmul.f32 %v116, 0.2
  %v153 = vmul.f32 %v117, 0.2
  %v154 = vmul.f32 %v118, 0.2
  %v155 = vmul.f32 %v119, 0.2
  %v156 = vmul.f32 %v120, 0.2
  %v157 = vmul.f32 %v121, 0.2
  %v158 = vmul.f32 %v122, 0.2
  %v159 = vmax.f32 %v87, %v123
  %v160 = vmax.f32 %v88, %v124
  %v161 = vmax.f32 %v89, %v125
  %v162 = vmax.f32 %v90, %v126
  %v163 = vmax.f32 %v91, %v127
  %v164 = vmax.f32 %v92, %v128
  %v165 = vmax.f32 %v93, %v129
  %v166 = vmax.f32 %v94, %v130
  %v167 = vmax.f32 %v95, %v131
  %v168 = vmax.f32 %v96, %v132
  %v169 = vmax.f32 %v97, %v133
  %v170 = vmax.f32 %v98, %v134
  %v171 = vmax.f32 %v99, %v135
  %v172 = vmax.f32 %v100, %v136
  %v173 = vmax.f32 %v101, %v137
  %v174 = vmax.f32 %v102, %v138
  %v175 = vmax.f32 %v103, %v139
  %v176 = vmax.f32 %v104, %v140
  %v177 = vmax.f32 %v105, %v141
  %v178 = vmax.f32 %v106, %v142
  %v179 = vmax.f32 %v107, %v143
  %v180 = vmax.f32 %v108, %v144
  %v181 = vmax.f32 %v109, %v145
  %v182 = vmax.f32 %v110, %v146
  %v183 = vmax.f32 %v111, %v147
  %v184 = vmax.f32 %v112, %v148
  %v185 = vmax.f32 %v113, %v149
  %v186 = vmax.f32 %v114, %v150
  %v187 = vmax.f32 %v115, %v151
  %v188 = vmax.f32 %v116, %v152
  %v189 = vmax.f32 %v117, %v153
  %v190 = vmax.f32 %v118, %v154
  %v191 = vmax.f32 %v119, %v155
  %v192 = vmax.f32 %v120, %v156
  %v193 = vmax.f32 %v121, %v157
  %v194 = vmax.f32 %v122, %v158
  %v195 = vpack.c.bf16 %v159, %v159
  %v196 = vpack.c.bf16 %v160, %v160
  %v197 = vpack.c.bf16 %v161, %v161
  %v198 = vpack.c.bf16 %v162, %v162
  %v199 = vpack.c.bf16 %v163, %v163
  %v200 = vpack.c.bf16 %v164, %v164
  %v201 = vpack.c.bf16 %v165, %v165
  %v202 = vpack.c.bf16 %v166, %v166
  %v203 = vpack.c.bf16 %v167, %v167
  %v204 = vpack.c.bf16 %v168, %v168
  %v205 = vpack.c.bf16 %v169, %v169
  %v206 = vpack.c.bf16 %v170, %v170
  %v207 = vpack.c.bf16 %v171, %v171
  %v208 = vpack.c.bf16 %v172, %v172
  %v209 = vpack.c.bf16 %v173, %v173
  %v210 = vpack.c.bf16 %v174, %v174
  %v211 = vpack.c.bf16 %v175, %v175
  %v212 = vpack.c.bf16 %v176, %v176
  %v213 = vpack.c.bf16 %v177, %v177
  %v214 = vpack.c.bf16 %v178, %v178
  %v215 = vpack.c.bf16 %v179, %v179
  %v216 = vpack.c.bf16 %v180, %v180
  %v217 = vpack.c.bf16 %v181, %v181
  %v218 = vpack.c.bf16 %v182, %v182
  %v219 = vpack.c.bf16 %v183, %v183
  %v220 = vpack.c.bf16 %v184, %v184
  %v221 = vpack.c.bf16 %v185, %v185
  %v222 = vpack.c.bf16 %v186, %v186
  %v223 = vpack.c.bf16 %v187, %v187
  %v224 = vpack.c.bf16 %v188, %v188
  %v225 = vpack.c.bf16 %v189, %v189
  %v226 = vpack.c.bf16 %v190, %v190
  %v227 = vpack.c.bf16 %v191, %v191
  %v228 = vpack.c.bf16 %v192, %v192
  %v229 = vpack.c.bf16 %v193, %v193
  %v230 = vpack.c.bf16 %v194, %v194
  %231 = vst [vmem:[%s2] sm:$0xf] %v195
  %232 = vst [vmem:[%s2 + $0x4] sm:$0xf] %v196
  %233 = vst [vmem:[%s2 + $0x8] sm:$0xf] %v197
  %234 = vst [vmem:[%s2 + $0xc] sm:$0xf] %v198
  %235 = vst [vmem:[%s2 + $0x10] sm:$0xf] %v199
  %236 = vst [vmem:[%s2 + $0x14] sm:$0xf] %v200
  %237 = vst [vmem:[%s2 + $0x18] sm:$0xf] %v201
  %238 = vst [vmem:[%s2 + $0x1c] sm:$0xf] %v202
  %239 = vst [vmem:[%s2 + $0x20] sm:$0xf] %v203
  %240 = vst [vmem:[%s2 + $0x24] sm:$0xf] %v204
  %241 = vst [vmem:[%s2 + $0x28] sm:$0xf] %v205
  %242 = vst [vmem:[%s2 + $0x2c] sm:$0xf] %v206
  %243 = vst [vmem:[%s2 + $0x30] sm:$0xf] %v207
  %244 = vst [vmem:[%s2 + $0x34] sm:$0xf] %v208
  %245 = vst [vmem:[%s2 + $0x38] sm:$0xf] %v209
  %246 = vst [vmem:[%s2 + $0x3c] sm:$0xf] %v210
  %247 = vst [vmem:[%s2 + $0x40] sm:$0xf] %v211
  %248 = vst [vmem:[%s2 + $0x44] sm:$0xf] %v212
  %249 = vst [vmem:[%s2 + $0x48] sm:$0xf] %v213
  %250 = vst [vmem:[%s2 + $0x4c] sm:$0xf] %v214
  %251 = vst [vmem:[%s2 + $0x50] sm:$0xf] %v215
  %252 = vst [vmem:[%s2 + $0x54] sm:$0xf] %v216
  %253 = vst [vmem:[%s2 + $0x58] sm:$0xf] %v217
  %254 = vst [vmem:[%s2 + $0x5c] sm:$0xf] %v218
  %255 = vst [vmem:[%s2 + $0x60] sm:$0xf] %v219
  %256 = vst [vmem:[%s2 + $0x64] sm:$0xf] %v220
  %257 = vst [vmem:[%s2 + $0x68] sm:$0xf] %v221
  %258 = vst [vmem:[%s2 + $0x6c] sm:$0xf] %v222
  %259 = vst [vmem:[%s2 + $0x70] sm:$0xf] %v223
  %260 = vst [vmem:[%s2 + $0x74] sm:$0xf] %v224
  %261 = vst [vmem:[%s2 + $0x78] sm:$0xf] %v225
  %262 = vst [vmem:[%s2 + $0x7c] sm:$0xf] %v226
  %263 = vst [vmem:[%s2 + $0x80] sm:$0xf] %v227
  %264 = vst [vmem:[%s2 + $0x84] sm:$0xf] %v228
  %265 = vst [vmem:[%s2 + $0x88] sm:$0xf] %v229
  %266 = vst [vmem:[%s2 + $0x8c] sm:$0xf] %v230
  // Predicated region
  $region10: #{_lambda_.12} parent=0 // pred_check
    _
  $region11: #{_lambda_.12} parent=0 // pred_check_branch
    %268 = sbr.rel (0) target = $region13
  $region12: #{_lambda_.12} parent=0 // pred_region
    _
  $region13: #{_lambda_.12} parent=0 // pred_fallthru
    _
  // Predicated region
  $region14: #{_lambda_.12} parent=0 // pred_check
    _
  $region15: #{_lambda_.12} parent=0 // pred_check_branch
    %270 = sbr.rel (0) target = $region17
  $region16: #{_lambda_.12} parent=0 // pred_region
    _
  $region17: #{_lambda_.12} parent=0 // pred_fallthru
    _

// kernel: _lambda_.14
$region0: #{_lambda_.14}
  #allocation0 [shape = 'u32[]', space=smem, size = 0x4, offset = 0x4, fixed_abs, tag = 'smem constant byte address 0x4 - core index']
  #allocation1 [shape = 'u32[72,128]{1,0:T(1,128)}', space=vmem, size = 0x9000, scoped, tag = 'internal scratch']
  %s0 = inlined_call_operand.vmem [shape: f32[248,128], index: 0, kind: input, shape index: {}]
  %s1 = inlined_call_operand.vmem [shape: f32[2,128], index: 1, kind: input, shape index: {}]
  %s2 = inlined_call_operand.vmem [shape: bf16[248,128], index: 2, kind: output, shape index: {}]
  %s3 = sld [smem:[#allocation0]]
  $region18: #{_lambda_.14} parent=0
    _
  %s5 = ssub.s32 1, %s3
  %s6 = scalar_select 0, %s5, %s3
  // Predicated region
  $region2: #{_lambda_.14} parent=0 // pred_check
    _
  $region3: #{_lambda_.14} parent=0 // pred_check_branch
    %8 = sbr.rel (0) target = $region5
  $region4: #{_lambda_.14} parent=0 // pred_region
    _
  $region5: #{_lambda_.14} parent=0 // pred_fallthru
    _
  // Predicated region
  $region6: #{_lambda_.14} parent=0 // pred_check
    _
  $region7: #{_lambda_.14} parent=0 // pred_check_branch
    %10 = sbr.rel (0) target = $region9
  $region8: #{_lambda_.14} parent=0 // pred_region
    _
  $region9: #{_lambda_.14} parent=0 // pred_fallthru
    _
  %v11 = vld [vmem:[%s0] sm:$0xff]
  %v12 = vld [vmem:[%s0 + $0x8] sm:$0xff]
  %v13 = vld [vmem:[%s0 + $0x10] sm:$0xff]
  %v14 = vld [vmem:[%s0 + $0x18] sm:$0xff]
  %v15 = vld [vmem:[%s0 + $0x20] sm:$0xff]
  %v16 = vld [vmem:[%s0 + $0x28] sm:$0xff]
  %v17 = vld [vmem:[%s0 + $0x30] sm:$0xff]
  %v18 = vld [vmem:[%s0 + $0x38] sm:$0xff]
  %v19 = vld [vmem:[%s0 + $0x40] sm:$0xff]
  %v20 = vld [vmem:[%s0 + $0x48] sm:$0xff]
  %v21 = vld [vmem:[%s0 + $0x50] sm:$0xff]
  %v22 = vld [vmem:[%s0 + $0x58] sm:$0xff]
  %v23 = vld [vmem:[%s0 + $0x60] sm:$0xff]
  %v24 = vld [vmem:[%s0 + $0x68] sm:$0xff]
  %v25 = vld [vmem:[%s0 + $0x70] sm:$0xff]
  %v26 = vld [vmem:[%s0 + $0x78] sm:$0xff]
  %v27 = vld [vmem:[%s0 + $0x80] sm:$0xff]
  %v28 = vld [vmem:[%s0 + $0x88] sm:$0xff]
  %v29 = vld [vmem:[%s0 + $0x90] sm:$0xff]
  %v30 = vld [vmem:[%s0 + $0x98] sm:$0xff]
  %v31 = vld [vmem:[%s0 + $0xa0] sm:$0xff]
  %v32 = vld [vmem:[%s0 + $0xa8] sm:$0xff]
  %v33 = vld [vmem:[%s0 + $0xb0] sm:$0xff]
  %v34 = vld [vmem:[%s0 + $0xb8] sm:$0xff]
  %v35 = vld [vmem:[%s0 + $0xc0] sm:$0xff]
  %v36 = vld [vmem:[%s0 + $0xc8] sm:$0xff]
  %v37 = vld [vmem:[%s0 + $0xd0] sm:$0xff]
  %v38 = vld [vmem:[%s0 + $0xd8] sm:$0xff]
  %v39 = vld [vmem:[%s0 + $0xe0] sm:$0xff]
  %v40 = vld [vmem:[%s0 + $0xe8] sm:$0xff]
  %v41 = vld [vmem:[%s0 + $0xf0] sm:$0xff]
  %v42 = vld [vmem:[%s1] sm:$0x1]
  %v43 = vperm.slane %v42, 0
  %v44 = vmul.f32 %v11, %v43
  %v45 = vmul.f32 %v12, %v43
  %v46 = vmul.f32 %v13, %v43
  %v47 = vmul.f32 %v14, %v43
  %v48 = vmul.f32 %v15, %v43
  %v49 = vmul.f32 %v16, %v43
  %v50 = vmul.f32 %v17, %v43
  %v51 = vmul.f32 %v18, %v43
  %v52 = vmul.f32 %v19, %v43
  %v53 = vmul.f32 %v20, %v43
  %v54 = vmul.f32 %v21, %v43
  %v55 = vmul.f32 %v22, %v43
  %v56 = vmul.f32 %v23, %v43
  %v57 = vmul.f32 %v24, %v43
  %v58 = vmul.f32 %v25, %v43
  %v59 = vmul.f32 %v26, %v43
  %v60 = vmul.f32 %v27, %v43
  %v61 = vmul.f32 %v28, %v43
  %v62 = vmul.f32 %v29, %v43
  %v63 = vmul.f32 %v30, %v43
  %v64 = vmul.f32 %v31, %v43
  %v65 = vmul.f32 %v32, %v43
  %v66 = vmul.f32 %v33, %v43
  %v67 = vmul.f32 %v34, %v43
  %v68 = vmul.f32 %v35, %v43
  %v69 = vmul.f32 %v36, %v43
  %v70 = vmul.f32 %v37, %v43
  %v71 = vmul.f32 %v38, %v43
  %v72 = vmul.f32 %v39, %v43
  %v73 = vmul.f32 %v40, %v43
  %v74 = vmul.f32 %v41, %v43
  %v75 = vld [vmem:[%s1 + $0x1] sm:$0x1]
  %v76 = vperm.slane %v75, 0
  %v77 = vadd.f32 %v44, %v76
  %v78 = vadd.f32 %v45, %v76
  %v79 = vadd.f32 %v46, %v76
  %v80 = vadd.f32 %v47, %v76
  %v81 = vadd.f32 %v48, %v76
  %v82 = vadd.f32 %v49, %v76
  %v83 = vadd.f32 %v50, %v76
  %v84 = vadd.f32 %v51, %v76
  %v85 = vadd.f32 %v52, %v76
  %v86 = vadd.f32 %v53, %v76
  %v87 = vadd.f32 %v54, %v76
  %v88 = vadd.f32 %v55, %v76
  %v89 = vadd.f32 %v56, %v76
  %v90 = vadd.f32 %v57, %v76
  %v91 = vadd.f32 %v58, %v76
  %v92 = vadd.f32 %v59, %v76
  %v93 = vadd.f32 %v60, %v76
  %v94 = vadd.f32 %v61, %v76
  %v95 = vadd.f32 %v62, %v76
  %v96 = vadd.f32 %v63, %v76
  %v97 = vadd.f32 %v64, %v76
  %v98 = vadd.f32 %v65, %v76
  %v99 = vadd.f32 %v66, %v76
  %v100 = vadd.f32 %v67, %v76
  %v101 = vadd.f32 %v68, %v76
  %v102 = vadd.f32 %v69, %v76
  %v103 = vadd.f32 %v70, %v76
  %v104 = vadd.f32 %v71, %v76
  %v105 = vadd.f32 %v72, %v76
  %v106 = vadd.f32 %v73, %v76
  %v107 = vadd.f32 %v74, %v76
  %v108 = vmul.f32 %v77, 0.2
  %v109 = vmul.f32 %v78, 0.2
  %v110 = vmul.f32 %v79, 0.2
  %v111 = vmul.f32 %v80, 0.2
  %v112 = vmul.f32 %v81, 0.2
  %v113 = vmul.f32 %v82, 0.2
  %v114 = vmul.f32 %v83, 0.2
  %v115 = vmul.f32 %v84, 0.2
  %v116 = vmul.f32 %v85, 0.2
  %v117 = vmul.f32 %v86, 0.2
  %v118 = vmul.f32 %v87, 0.2
  %v119 = vmul.f32 %v88, 0.2
  %v120 = vmul.f32 %v89, 0.2
  %v121 = vmul.f32 %v90, 0.2
  %v122 = vmul.f32 %v91, 0.2
  %v123 = vmul.f32 %v92, 0.2
  %v124 = vmul.f32 %v93, 0.2
  %v125 = vmul.f32 %v94, 0.2
  %v126 = vmul.f32 %v95, 0.2
  %v127 = vmul.f32 %v96, 0.2
  %v128 = vmul.f32 %v97, 0.2
  %v129 = vmul.f32 %v98, 0.2
  %v130 = vmul.f32 %v99, 0.2
  %v131 = vmul.f32 %v100, 0.2
  %v132 = vmul.f32 %v101, 0.2
  %v133 = vmul.f32 %v102, 0.2
  %v134 = vmul.f32 %v103, 0.2
  %v135 = vmul.f32 %v104, 0.2
  %v136 = vmul.f32 %v105, 0.2
  %v137 = vmul.f32 %v106, 0.2
  %v138 = vmul.f32 %v107, 0.2
  %v139 = vmax.f32 %v77, %v108
  %v140 = vmax.f32 %v78, %v109
  %v141 = vmax.f32 %v79, %v110
  %v142 = vmax.f32 %v80, %v111
  %v143 = vmax.f32 %v81, %v112
  %v144 = vmax.f32 %v82, %v113
  %v145 = vmax.f32 %v83, %v114
  %v146 = vmax.f32 %v84, %v115
  %v147 = vmax.f32 %v85, %v116
  %v148 = vmax.f32 %v86, %v117
  %v149 = vmax.f32 %v87, %v118
  %v150 = vmax.f32 %v88, %v119
  %v151 = vmax.f32 %v89, %v120
  %v152 = vmax.f32 %v90, %v121
  %v153 = vmax.f32 %v91, %v122
  %v154 = vmax.f32 %v92, %v123
  %v155 = vmax.f32 %v93, %v124
  %v156 = vmax.f32 %v94, %v125
  %v157 = vmax.f32 %v95, %v126
  %v158 = vmax.f32 %v96, %v127
  %v159 = vmax.f32 %v97, %v128
  %v160 = vmax.f32 %v98, %v129
  %v161 = vmax.f32 %v99, %v130
  %v162 = vmax.f32 %v100, %v131
  %v163 = vmax.f32 %v101, %v132
  %v164 = vmax.f32 %v102, %v133
  %v165 = vmax.f32 %v103, %v134
  %v166 = vmax.f32 %v104, %v135
  %v167 = vmax.f32 %v105, %v136
  %v168 = vmax.f32 %v106, %v137
  %v169 = vmax.f32 %v107, %v138
  %v170 = vpack.c.bf16 %v139, %v139
  %v171 = vpack.c.bf16 %v140, %v140
  %v172 = vpack.c.bf16 %v141, %v141
  %v173 = vpack.c.bf16 %v142, %v142
  %v174 = vpack.c.bf16 %v143, %v143
  %v175 = vpack.c.bf16 %v144, %v144
  %v176 = vpack.c.bf16 %v145, %v145
  %v177 = vpack.c.bf16 %v146, %v146
  %v178 = vpack.c.bf16 %v147, %v147
  %v179 = vpack.c.bf16 %v148, %v148
  %v180 = vpack.c.bf16 %v149, %v149
  %v181 = vpack.c.bf16 %v150, %v150
  %v182 = vpack.c.bf16 %v151, %v151
  %v183 = vpack.c.bf16 %v152, %v152
  %v184 = vpack.c.bf16 %v153, %v153
  %v185 = vpack.c.bf16 %v154, %v154
  %v186 = vpack.c.bf16 %v155, %v155
  %v187 = vpack.c.bf16 %v156, %v156
  %v188 = vpack.c.bf16 %v157, %v157
  %v189 = vpack.c.bf16 %v158, %v158
  %v190 = vpack.c.bf16 %v159, %v159
  %v191 = vpack.c.bf16 %v160, %v160
  %v192 = vpack.c.bf16 %v161, %v161
  %v193 = vpack.c.bf16 %v162, %v162
  %v194 = vpack.c.bf16 %v163, %v163
  %v195 = vpack.c.bf16 %v164, %v164
  %v196 = vpack.c.bf16 %v165, %v165
  %v197 = vpack.c.bf16 %v166, %v166
  %v198 = vpack.c.bf16 %v167, %v167
  %v199 = vpack.c.bf16 %v168, %v168
  %v200 = vpack.c.bf16 %v169, %v169
  %201 = vst [vmem:[%s2] sm:$0xf] %v170
  %202 = vst [vmem:[%s2 + $0x4] sm:$0xf] %v171
  %203 = vst [vmem:[%s2 + $0x8] sm:$0xf] %v172
  %204 = vst [vmem:[%s2 + $0xc] sm:$0xf] %v173
  %205 = vst [vmem:[%s2 + $0x10] sm:$0xf] %v174
  %206 = vst [vmem:[%s2 + $0x14] sm:$0xf] %v175
  %207 = vst [vmem:[%s2 + $0x18] sm:$0xf] %v176
  %208 = vst [vmem:[%s2 + $0x1c] sm:$0xf] %v177
  %209 = vst [vmem:[%s2 + $0x20] sm:$0xf] %v178
  %210 = vst [vmem:[%s2 + $0x24] sm:$0xf] %v179
  %211 = vst [vmem:[%s2 + $0x28] sm:$0xf] %v180
  %212 = vst [vmem:[%s2 + $0x2c] sm:$0xf] %v181
  %213 = vst [vmem:[%s2 + $0x30] sm:$0xf] %v182
  %214 = vst [vmem:[%s2 + $0x34] sm:$0xf] %v183
  %215 = vst [vmem:[%s2 + $0x38] sm:$0xf] %v184
  %216 = vst [vmem:[%s2 + $0x3c] sm:$0xf] %v185
  %217 = vst [vmem:[%s2 + $0x40] sm:$0xf] %v186
  %218 = vst [vmem:[%s2 + $0x44] sm:$0xf] %v187
  %219 = vst [vmem:[%s2 + $0x48] sm:$0xf] %v188
  %220 = vst [vmem:[%s2 + $0x4c] sm:$0xf] %v189
  %221 = vst [vmem:[%s2 + $0x50] sm:$0xf] %v190
  %222 = vst [vmem:[%s2 + $0x54] sm:$0xf] %v191
  %223 = vst [vmem:[%s2 + $0x58] sm:$0xf] %v192
  %224 = vst [vmem:[%s2 + $0x5c] sm:$0xf] %v193
  %225 = vst [vmem:[%s2 + $0x60] sm:$0xf] %v194
  %226 = vst [vmem:[%s2 + $0x64] sm:$0xf] %v195
  %227 = vst [vmem:[%s2 + $0x68] sm:$0xf] %v196
  %228 = vst [vmem:[%s2 + $0x6c] sm:$0xf] %v197
  %229 = vst [vmem:[%s2 + $0x70] sm:$0xf] %v198
  %230 = vst [vmem:[%s2 + $0x74] sm:$0xf] %v199
  %231 = vst [vmem:[%s2 + $0x78] sm:$0xf] %v200
  // Predicated region
  $region10: #{_lambda_.14} parent=0 // pred_check
    _
  $region11: #{_lambda_.14} parent=0 // pred_check_branch
    %233 = sbr.rel (0) target = $region13
  $region12: #{_lambda_.14} parent=0 // pred_region
    _
  $region13: #{_lambda_.14} parent=0 // pred_fallthru
    _
  // Predicated region
  $region14: #{_lambda_.14} parent=0 // pred_check
    _
  $region15: #{_lambda_.14} parent=0 // pred_check_branch
    %235 = sbr.rel (0) target = $region17
  $region16: #{_lambda_.14} parent=0 // pred_region
    _
  $region17: #{_lambda_.14} parent=0 // pred_fallthru
    _

// kernel: _lambda_.13
$region0: #{_lambda_.13}
  #allocation0 [shape = 'u32[]', space=smem, size = 0x4, offset = 0x4, fixed_abs, tag = 'smem constant byte address 0x4 - core index']
  #allocation1 [shape = 'u32[72,128]{1,0:T(1,128)}', space=vmem, size = 0x9000, scoped, tag = 'internal scratch']
  %s0 = inlined_call_operand.vmem [shape: bf16[248,1024], index: 0, kind: input, shape index: {}]
  %s1 = inlined_call_operand.vmem [shape: bf16[1024,128], index: 1, kind: input, shape index: {}]
  %s2 = inlined_call_operand.vmem [shape: f32[248,128], index: 2, kind: output, shape index: {0}]
  %s3 = inlined_call_operand.vmem [shape: f32[2,128], index: 3, kind: output, shape index: {1}]
  %4 = xla_tuple %s2, %s3
  %s5 = sld [smem:[#allocation0]]
  $region30: #{_lambda_.13} parent=0
    _
  %s7 = ssub.s32 1, %s5
  %s8 = scalar_select 0, %s7, %s5
  // Predicated region
  $region2: #{_lambda_.13} parent=0 // pred_check
    _
  $region3: #{_lambda_.13} parent=0 // pred_check_branch
    %10 = sbr.rel (0) target = $region5
  $region4: #{_lambda_.13} parent=0 // pred_region
    _
  $region5: #{_lambda_.13} parent=0 // pred_fallthru
    _
  // Predicated region
  $region6: #{_lambda_.13} parent=0 // pred_check
    _
  $region7: #{_lambda_.13} parent=0 // pred_check_branch
    %12 = sbr.rel (0) target = $region9
  $region8: #{_lambda_.13} parent=0 // pred_region
    _
  $region9: #{_lambda_.13} parent=0 // pred_fallthru
    _
  %p13 = scmp.eq.s32.totalorder 0, 0
  // Predicated region
  $region10: #{_lambda_.13} parent=0 // pred_check
    %p14 = pneg %p13
  $region11: #{_lambda_.13} parent=0 // pred_check_branch
    %16 = sbr.rel (%p14) target = $region13
  $region12: #{_lambda_.13} parent=0 // pred_region
    %17 = vst [vmem:[%s3] sm:$0x3] 0.0
  $region13: #{_lambda_.13} parent=0 // pred_fallthru
    _
  %v18 = vld [vmem:[%s0] sm:$0xff]
  %v19 = vld [vmem:[%s0 + $0x8] sm:$0xff]
  %v20 = vld [vmem:[%s0 + $0x10] sm:$0xff]
  %v21 = vld [vmem:[%s0 + $0x18] sm:$0xff]
  %v22 = vld [vmem:[%s0 + $0x20] sm:$0xff]
  %v23 = vld [vmem:[%s0 + $0x28] sm:$0xff]
  %v24 = vld [vmem:[%s0 + $0x30] sm:$0xff]
  %v25 = vld [vmem:[%s0 + $0x38] sm:$0xff]
  %v26 = vld [vmem:[%s0 + $0x40] sm:$0xff]
  %v27 = vld [vmem:[%s0 + $0x48] sm:$0xff]
  %v28 = vld [vmem:[%s0 + $0x50] sm:$0xff]
  %v29 = vld [vmem:[%s0 + $0x58] sm:$0xff]
  %v30 = vld [vmem:[%s0 + $0x60] sm:$0xff]
  %v31 = vld [vmem:[%s0 + $0x68] sm:$0xff]
  %v32 = vld [vmem:[%s0 + $0x70] sm:$0xff]
  %v33 = vld [vmem:[%s0 + $0x78] sm:$0xff]
  %v34 = vld [vmem:[%s0 + $0x80] sm:$0xff]
  %v35 = vld [vmem:[%s0 + $0x88] sm:$0xff]
  %v36 = vld [vmem:[%s0 + $0x90] sm:$0xff]
  %v37 = vld [vmem:[%s0 + $0x98] sm:$0xff]
  %v38 = vld [vmem:[%s0 + $0xa0] sm:$0xff]
  %v39 = vld [vmem:[%s0 + $0xa8] sm:$0xff]
  %v40 = vld [vmem:[%s0 + $0xb0] sm:$0xff]
  %v41 = vld [vmem:[%s0 + $0xb8] sm:$0xff]
  %v42 = vld [vmem:[%s0 + $0xc0] sm:$0xff]
  %v43 = vld [vmem:[%s0 + $0xc8] sm:$0xff]
  %v44 = vld [vmem:[%s0 + $0xd0] sm:$0xff]
  %v45 = vld [vmem:[%s0 + $0xd8] sm:$0xff]
  %v46 = vld [vmem:[%s0 + $0xe0] sm:$0xff]
  %v47 = vld [vmem:[%s0 + $0xe8] sm:$0xff]
  %v48 = vld [vmem:[%s0 + $0xf0] sm:$0xff]
  %v49 = vld [vmem:[%s0 + $0xf8] sm:$0xff]
  %v50 = vld [vmem:[%s0 + $0x100] sm:$0xff]
  %v51 = vld [vmem:[%s0 + $0x108] sm:$0xff]
  %v52 = vld [vmem:[%s0 + $0x110] sm:$0xff]
  %v53 = vld [vmem:[%s0 + $0x118] sm:$0xff]
  %v54 = vld [vmem:[%s0 + $0x120] sm:$0xff]
  %v55 = vld [vmem:[%s0 + $0x128] sm:$0xff]
  %v56 = vld [vmem:[%s0 + $0x130] sm:$0xff]
  %v57 = vld [vmem:[%s0 + $0x138] sm:$0xff]
  %v58 = vld [vmem:[%s0 + $0x140] sm:$0xff]
  %v59 = vld [vmem:[%s0 + $0x148] sm:$0xff]
  %v60 = vld [vmem:[%s0 + $0x150] sm:$0xff]
  %v61 = vld [vmem:[%s0 + $0x158] sm:$0xff]
  %v62 = vld [vmem:[%s0 + $0x160] sm:$0xff]
  %v63 = vld [vmem:[%s0 + $0x168] sm:$0xff]
  %v64 = vld [vmem:[%s0 + $0x170] sm:$0xff]
  %v65 = vld [vmem:[%s0 + $0x178] sm:$0xff]
  %v66 = vld [vmem:[%s0 + $0x180] sm:$0xff]
  %v67 = vld [vmem:[%s0 + $0x188] sm:$0xff]
  %v68 = vld [vmem:[%s0 + $0x190] sm:$0xff]
  %v69 = vld [vmem:[%s0 + $0x198] sm:$0xff]
  %v70 = vld [vmem:[%s0 + $0x1a0] sm:$0xff]
  %v71 = vld [vmem:[%s0 + $0x1a8] sm:$0xff]
  %v72 = vld [vmem:[%s0 + $0x1b0] sm:$0xff]
  %v73 = vld [vmem:[%s0 + $0x1b8] sm:$0xff]
  %v74 = vld [vmem:[%s0 + $0x1c0] sm:$0xff]
  %v75 = vld [vmem:[%s0 + $0x1c8] sm:$0xff]
  %v76 = vld [vmem:[%s0 + $0x1d0] sm:$0xff]
  %v77 = vld [vmem:[%s0 + $0x1d8] sm:$0xff]
  %v78 = vld [vmem:[%s0 + $0x1e0] sm:$0xff]
  %v79 = vld [vmem:[%s0 + $0x1e8] sm:$0xff]
  %v80 = vld [vmem:[%s0 + $0x1f0] sm:$0xff]
  %v81 = vld [vmem:[%s0 + $0x1f8] sm:$0xff]
  %v82 = vld [vmem:[%s0 + $0x200] sm:$0xff]
  %v83 = vld [vmem:[%s0 + $0x208] sm:$0xff]
  %v84 = vld [vmem:[%s0 + $0x210] sm:$0xff]
  %v85 = vld [vmem:[%s0 + $0x218] sm:$0xff]
  %v86 = vld [vmem:[%s0 + $0x220] sm:$0xff]
  %v87 = vld [vmem:[%s0 + $0x228] sm:$0xff]
  %v88 = vld [vmem:[%s0 + $0x230] sm:$0xff]
  %v89 = vld [vmem:[%s0 + $0x238] sm:$0xff]
  %v90 = vld [vmem:[%s0 + $0x240] sm:$0xff]
  %v91 = vld [vmem:[%s0 + $0x248] sm:$0xff]
  %v92 = vld [vmem:[%s0 + $0x250] sm:$0xff]
  %v93 = vld [vmem:[%s0 + $0x258] sm:$0xff]
  %v94 = vld [vmem:[%s0 + $0x260] sm:$0xff]
  %v95 = vld [vmem:[%s0 + $0x268] sm:$0xff]
  %v96 = vld [vmem:[%s0 + $0x270] sm:$0xff]
  %v97 = vld [vmem:[%s0 + $0x278] sm:$0xff]
  %v98 = vld [vmem:[%s0 + $0x280] sm:$0xff]
  %v99 = vld [vmem:[%s0 + $0x288] sm:$0xff]
  %v100 = vld [vmem:[%s0 + $0x290] sm:$0xff]
  %v101 = vld [vmem:[%s0 + $0x298] sm:$0xff]
  %v102 = vld [vmem:[%s0 + $0x2a0] sm:$0xff]
  %v103 = vld [vmem:[%s0 + $0x2a8] sm:$0xff]
  %v104 = vld [vmem:[%s0 + $0x2b0] sm:$0xff]
  %v105 = vld [vmem:[%s0 + $0x2b8] sm:$0xff]
  %v106 = vld [vmem:[%s0 + $0x2c0] sm:$0xff]
  %v107 = vld [vmem:[%s0 + $0x2c8] sm:$0xff]
  %v108 = vld [vmem:[%s0 + $0x2d0] sm:$0xff]
  %v109 = vld [vmem:[%s0 + $0x2d8] sm:$0xff]
  %v110 = vld [vmem:[%s0 + $0x2e0] sm:$0xff]
  %v111 = vld [vmem:[%s0 + $0x2e8] sm:$0xff]
  %v112 = vld [vmem:[%s0 + $0x2f0] sm:$0xff]
  %v113 = vld [vmem:[%s0 + $0x2f8] sm:$0xff]
  %v114 = vld [vmem:[%s0 + $0x300] sm:$0xff]
  %v115 = vld [vmem:[%s0 + $0x308] sm:$0xff]
  %v116 = vld [vmem:[%s0 + $0x310] sm:$0xff]
  %v117 = vld [vmem:[%s0 + $0x318] sm:$0xff]
  %v118 = vld [vmem:[%s0 + $0x320] sm:$0xff]
  %v119 = vld [vmem:[%s0 + $0x328] sm:$0xff]
  %v120 = vld [vmem:[%s0 + $0x330] sm:$0xff]
  %v121 = vld [vmem:[%s0 + $0x338] sm:$0xff]
  %v122 = vld [vmem:[%s0 + $0x340] sm:$0xff]
  %v123 = vld [vmem:[%s0 + $0x348] sm:$0xff]
  %v124 = vld [vmem:[%s0 + $0x350] sm:$0xff]
  %v125 = vld [vmem:[%s0 + $0x358] sm:$0xff]
  %v126 = vld [vmem:[%s0 + $0x360] sm:$0xff]
  %v127 = vld [vmem:[%s0 + $0x368] sm:$0xff]
  %v128 = vld [vmem:[%s0 + $0x370] sm:$0xff]
  %v129 = vld [vmem:[%s0 + $0x378] sm:$0xff]
  %v130 = vld [vmem:[%s0 + $0x380] sm:$0xff]
  %v131 = vld [vmem:[%s0 + $0x388] sm:$0xff]
  %v132 = vld [vmem:[%s0 + $0x390] sm:$0xff]
  %v133 = vld [vmem:[%s0 + $0x398] sm:$0xff]
  %v134 = vld [vmem:[%s0 + $0x3a0] sm:$0xff]
  %v135 = vld [vmem:[%s0 + $0x3a8] sm:$0xff]
  %v136 = vld [vmem:[%s0 + $0x3b0] sm:$0xff]
  %v137 = vld [vmem:[%s0 + $0x3b8] sm:$0xff]
  %v138 = vld [vmem:[%s0 + $0x3c0] sm:$0xff]
  %v139 = vld [vmem:[%s0 + $0x3c8] sm:$0xff]
  %v140 = vld [vmem:[%s0 + $0x3d0] sm:$0xff]
  %v141 = vld [vmem:[%s0 + $0x3d8] sm:$0xff]
  %v142 = vld [vmem:[%s1] sm:$0xf]
  %v143 = vld [vmem:[%s1 + $0x4] sm:$0xf]
  %v144 = vld [vmem:[%s1 + $0x8] sm:$0xf]
  %v145 = vld [vmem:[%s1 + $0xc] sm:$0xf]
  %v146 = vld [vmem:[%s1 + $0x10] sm:$0xf]
  %v147 = vld [vmem:[%s1 + $0x14] sm:$0xf]
  %v148 = vld [vmem:[%s1 + $0x18] sm:$0xf]
  %v149 = vld [vmem:[%s1 + $0x1c] sm:$0xf]
  %v150 = vld [vmem:[%s1 + $0x20] sm:$0xf]
  %v151 = vld [vmem:[%s1 + $0x24] sm:$0xf]
  %v152 = vld [vmem:[%s1 + $0x28] sm:$0xf]
  %v153 = vld [vmem:[%s1 + $0x2c] sm:$0xf]
  %v154 = vld [vmem:[%s1 + $0x30] sm:$0xf]
  %v155 = vld [vmem:[%s1 + $0x34] sm:$0xf]
  %v156 = vld [vmem:[%s1 + $0x38] sm:$0xf]
  %v157 = vld [vmem:[%s1 + $0x3c] sm:$0xf]
  %v158 = vld [vmem:[%s1 + $0x40] sm:$0xf]
  %v159 = vld [vmem:[%s1 + $0x44] sm:$0xf]
  %v160 = vld [vmem:[%s1 + $0x48] sm:$0xf]
  %v161 = vld [vmem:[%s1 + $0x4c] sm:$0xf]
  %v162 = vld [vmem:[%s1 + $0x50] sm:$0xf]
  %v163 = vld [vmem:[%s1 + $0x54] sm:$0xf]
  %v164 = vld [vmem:[%s1 + $0x58] sm:$0xf]
  %v165 = vld [vmem:[%s1 + $0x5c] sm:$0xf]
  %v166 = vld [vmem:[%s1 + $0x60] sm:$0xf]
  %v167 = vld [vmem:[%s1 + $0x64] sm:$0xf]
  %v168 = vld [vmem:[%s1 + $0x68] sm:$0xf]
  %v169 = vld [vmem:[%s1 + $0x6c] sm:$0xf]
  %v170 = vld [vmem:[%s1 + $0x70] sm:$0xf]
  %v171 = vld [vmem:[%s1 + $0x74] sm:$0xf]
  %v172 = vld [vmem:[%s1 + $0x78] sm:$0xf]
  %v173 = vld [vmem:[%s1 + $0x7c] sm:$0xf]
  %v174 = vld [vmem:[%s1 + $0x80] sm:$0xf]
  %v175 = vld [vmem:[%s1 + $0x84] sm:$0xf]
  %v176 = vld [vmem:[%s1 + $0x88] sm:$0xf]
  %v177 = vld [vmem:[%s1 + $0x8c] sm:$0xf]
  %v178 = vld [vmem:[%s1 + $0x90] sm:$0xf]
  %v179 = vld [vmem:[%s1 + $0x94] sm:$0xf]
  %v180 = vld [vmem:[%s1 + $0x98] sm:$0xf]
  %v181 = vld [vmem:[%s1 + $0x9c] sm:$0xf]
  %v182 = vld [vmem:[%s1 + $0xa0] sm:$0xf]
  %v183 = vld [vmem:[%s1 + $0xa4] sm:$0xf]
  %v184 = vld [vmem:[%s1 + $0xa8] sm:$0xf]
  %v185 = vld [vmem:[%s1 + $0xac] sm:$0xf]
  %v186 = vld [vmem:[%s1 + $0xb0] sm:$0xf]
  %v187 = vld [vmem:[%s1 + $0xb4] sm:$0xf]
  %v188 = vld [vmem:[%s1 + $0xb8] sm:$0xf]
  %v189 = vld [vmem:[%s1 + $0xbc] sm:$0xf]
  %v190 = vld [vmem:[%s1 + $0xc0] sm:$0xf]
  %v191 = vld [vmem:[%s1 + $0xc4] sm:$0xf]
  %v192 = vld [vmem:[%s1 + $0xc8] sm:$0xf]
  %v193 = vld [vmem:[%s1 + $0xcc] sm:$0xf]
  %v194 = vld [vmem:[%s1 + $0xd0] sm:$0xf]
  %v195 = vld [vmem:[%s1 + $0xd4] sm:$0xf]
  %v196 = vld [vmem:[%s1 + $0xd8] sm:$0xf]
  %v197 = vld [vmem:[%s1 + $0xdc] sm:$0xf]
  %v198 = vld [vmem:[%s1 + $0xe0] sm:$0xf]
  %v199 = vld [vmem:[%s1 + $0xe4] sm:$0xf]
  %v200 = vld [vmem:[%s1 + $0xe8] sm:$0xf]
  %v201 = vld [vmem:[%s1 + $0xec] sm:$0xf]
  %v202 = vld [vmem:[%s1 + $0xf0] sm:$0xf]
  %v203 = vld [vmem:[%s1 + $0xf4] sm:$0xf]
  %v204 = vld [vmem:[%s1 + $0xf8] sm:$0xf]
  %v205 = vld [vmem:[%s1 + $0xfc] sm:$0xf]
  %v206 = vld [vmem:[%s1 + $0x100] sm:$0xf]
  %v207 = vld [vmem:[%s1 + $0x104] sm:$0xf]
  %v208 = vld [vmem:[%s1 + $0x108] sm:$0xf]
  %v209 = vld [vmem:[%s1 + $0x10c] sm:$0xf]
  %v210 = vld [vmem:[%s1 + $0x110] sm:$0xf]
  %v211 = vld [vmem:[%s1 + $0x114] sm:$0xf]
  %v212 = vld [vmem:[%s1 + $0x118] sm:$0xf]
  %v213 = vld [vmem:[%s1 + $0x11c] sm:$0xf]
  %v214 = vld [vmem:[%s1 + $0x120] sm:$0xf]
  %v215 = vld [vmem:[%s1 + $0x124] sm:$0xf]
  %v216 = vld [vmem:[%s1 + $0x128] sm:$0xf]
  %v217 = vld [vmem:[%s1 + $0x12c] sm:$0xf]
  %v218 = vld [vmem:[%s1 + $0x130] sm:$0xf]
  %v219 = vld [vmem:[%s1 + $0x134] sm:$0xf]
  %v220 = vld [vmem:[%s1 + $0x138] sm:$0xf]
  %v221 = vld [vmem:[%s1 + $0x13c] sm:$0xf]
  %v222 = vld [vmem:[%s1 + $0x140] sm:$0xf]
  %v223 = vld [vmem:[%s1 + $0x144] sm:$0xf]
  %v224 = vld [vmem:[%s1 + $0x148] sm:$0xf]
  %v225 = vld [vmem:[%s1 + $0x14c] sm:$0xf]
  %v226 = vld [vmem:[%s1 + $0x150] sm:$0xf]
  %v227 = vld [vmem:[%s1 + $0x154] sm:$0xf]
  %v228 = vld [vmem:[%s1 + $0x158] sm:$0xf]
  %v229 = vld [vmem:[%s1 + $0x15c] sm:$0xf]
  %v230 = vld [vmem:[%s1 + $0x160] sm:$0xf]
  %v231 = vld [vmem:[%s1 + $0x164] sm:$0xf]
  %v232 = vld [vmem:[%s1 + $0x168] sm:$0xf]
  %v233 = vld [vmem:[%s1 + $0x16c] sm:$0xf]
  %v234 = vld [vmem:[%s1 + $0x170] sm:$0xf]
  %v235 = vld [vmem:[%s1 + $0x174] sm:$0xf]
  %v236 = vld [vmem:[%s1 + $0x178] sm:$0xf]
  %v237 = vld [vmem:[%s1 + $0x17c] sm:$0xf]
  %v238 = vld [vmem:[%s1 + $0x180] sm:$0xf]
  %v239 = vld [vmem:[%s1 + $0x184] sm:$0xf]
  %v240 = vld [vmem:[%s1 + $0x188] sm:$0xf]
  %v241 = vld [vmem:[%s1 + $0x18c] sm:$0xf]
  %v242 = vld [vmem:[%s1 + $0x190] sm:$0xf]
  %v243 = vld [vmem:[%s1 + $0x194] sm:$0xf]
  %v244 = vld [vmem:[%s1 + $0x198] sm:$0xf]
  %v245 = vld [vmem:[%s1 + $0x19c] sm:$0xf]
  %v246 = vld [vmem:[%s1 + $0x1a0] sm:$0xf]
  %v247 = vld [vmem:[%s1 + $0x1a4] sm:$0xf]
  %v248 = vld [vmem:[%s1 + $0x1a8] sm:$0xf]
  %v249 = vld [vmem:[%s1 + $0x1ac] sm:$0xf]
  %v250 = vld [vmem:[%s1 + $0x1b0] sm:$0xf]
  %v251 = vld [vmem:[%s1 + $0x1b4] sm:$0xf]
  %v252 = vld [vmem:[%s1 + $0x1b8] sm:$0xf]
  %v253 = vld [vmem:[%s1 + $0x1bc] sm:$0xf]
  %v254 = vld [vmem:[%s1 + $0x1c0] sm:$0xf]
  %v255 = vld [vmem:[%s1 + $0x1c4] sm:$0xf]
  %v256 = vld [vmem:[%s1 + $0x1c8] sm:$0xf]
  %v257 = vld [vmem:[%s1 + $0x1cc] sm:$0xf]
  %v258 = vld [vmem:[%s1 + $0x1d0] sm:$0xf]
  %v259 = vld [vmem:[%s1 + $0x1d4] sm:$0xf]
  %v260 = vld [vmem:[%s1 + $0x1d8] sm:$0xf]
  %v261 = vld [vmem:[%s1 + $0x1dc] sm:$0xf]
  %v262 = vld [vmem:[%s1 + $0x1e0] sm:$0xf]
  %v263 = vld [vmem:[%s1 + $0x1e4] sm:$0xf]
  %v264 = vld [vmem:[%s1 + $0x1e8] sm:$0xf]
  %v265 = vld [vmem:[%s1 + $0x1ec] sm:$0xf]
  %v266 = vld [vmem:[%s1 + $0x1f0] sm:$0xf]
  %v267 = vld [vmem:[%s1 + $0x1f4] sm:$0xf]
  %v268 = vld [vmem:[%s1 + $0x1f8] sm:$0xf]
  %v269 = vld [vmem:[%s1 + $0x1fc] sm:$0xf]
  %v394 = vunpack.c.l.b16 %v18
  %v395 = vunpack.c.h.b16 %v18
  %v396 = vunpack.c.l.b16 %v19
  %v397 = vunpack.c.h.b16 %v19
  %v398 = vunpack.c.l.b16 %v20
  %v399 = vunpack.c.h.b16 %v20
  %v400 = vunpack.c.l.b16 %v21
  %v401 = vunpack.c.h.b16 %v21
  %v402 = vunpack.c.l.b16 %v22
  %v403 = vunpack.c.h.b16 %v22
  %v404 = vunpack.c.l.b16 %v23
  %v405 = vunpack.c.h.b16 %v23
  %v406 = vunpack.c.l.b16 %v24
  %v407 = vunpack.c.h.b16 %v24
  %v408 = vunpack.c.l.b16 %v25
  %v409 = vunpack.c.h.b16 %v25
  %v410 = vunpack.c.l.b16 %v26
  %v411 = vunpack.c.h.b16 %v26
  %v412 = vunpack.c.l.b16 %v27
  %v413 = vunpack.c.h.b16 %v27
  %v414 = vunpack.c.l.b16 %v28
  %v415 = vunpack.c.h.b16 %v28
  %v416 = vunpack.c.l.b16 %v29
  %v417 = vunpack.c.h.b16 %v29
  %v418 = vunpack.c.l.b16 %v30
  %v419 = vunpack.c.h.b16 %v30
  %v420 = vunpack.c.l.b16 %v31
  %v421 = vunpack.c.h.b16 %v31
  %v422 = vunpack.c.l.b16 %v32
  %v423 = vunpack.c.h.b16 %v32
  %v424 = vunpack.c.l.b16 %v33
  %v425 = vunpack.c.h.b16 %v33
  %v426 = vunpack.c.l.b16 %v34
  %v427 = vunpack.c.h.b16 %v34
  %v428 = vunpack.c.l.b16 %v35
  %v429 = vunpack.c.h.b16 %v35
  %v430 = vunpack.c.l.b16 %v36
  %v431 = vunpack.c.h.b16 %v36
  %v432 = vunpack.c.l.b16 %v37
  %v433 = vunpack.c.h.b16 %v37
  %v434 = vunpack.c.l.b16 %v38
  %v435 = vunpack.c.h.b16 %v38
  %v436 = vunpack.c.l.b16 %v39
  %v437 = vunpack.c.h.b16 %v39
  %v438 = vunpack.c.l.b16 %v40
  %v439 = vunpack.c.h.b16 %v40
  %v440 = vunpack.c.l.b16 %v41
  %v441 = vunpack.c.h.b16 %v41
  %v442 = vunpack.c.l.b16 %v42
  %v443 = vunpack.c.h.b16 %v42
  %v444 = vunpack.c.l.b16 %v43
  %v445 = vunpack.c.h.b16 %v43
  %v446 = vunpack.c.l.b16 %v44
  %v447 = vunpack.c.h.b16 %v44
  %v448 = vunpack.c.l.b16 %v45
  %v449 = vunpack.c.h.b16 %v45
  %v450 = vunpack.c.l.b16 %v46
  %v451 = vunpack.c.h.b16 %v46
  %v452 = vunpack.c.l.b16 %v47
  %v453 = vunpack.c.h.b16 %v47
  %v454 = vunpack.c.l.b16 %v48
  %v455 = vunpack.c.h.b16 %v48
  %v456 = vunpack.c.l.b16 %v49
  %v457 = vunpack.c.h.b16 %v49
  %v458 = vunpack.c.l.b16 %v50
  %v459 = vunpack.c.h.b16 %v50
  %v460 = vunpack.c.l.b16 %v51
  %v461 = vunpack.c.h.b16 %v51
  %v462 = vunpack.c.l.b16 %v52
  %v463 = vunpack.c.h.b16 %v52
  %v464 = vunpack.c.l.b16 %v53
  %v465 = vunpack.c.h.b16 %v53
  %v466 = vunpack.c.l.b16 %v54
  %v467 = vunpack.c.h.b16 %v54
  %v468 = vunpack.c.l.b16 %v55
  %v469 = vunpack.c.h.b16 %v55
  %v470 = vunpack.c.l.b16 %v56
  %v471 = vunpack.c.h.b16 %v56
  %v472 = vunpack.c.l.b16 %v57
  %v473 = vunpack.c.h.b16 %v57
  %v474 = vunpack.c.l.b16 %v58
  %v475 = vunpack.c.h.b16 %v58
  %v476 = vunpack.c.l.b16 %v59
  %v477 = vunpack.c.h.b16 %v59
  %v478 = vunpack.c.l.b16 %v60
  %v479 = vunpack.c.h.b16 %v60
  %v480 = vunpack.c.l.b16 %v61
  %v481 = vunpack.c.h.b16 %v61
  %v482 = vunpack.c.l.b16 %v62
  %v483 = vunpack.c.h.b16 %v62
  %v484 = vunpack.c.l.b16 %v63
  %v485 = vunpack.c.h.b16 %v63
  %v486 = vunpack.c.l.b16 %v64
  %v487 = vunpack.c.h.b16 %v64
  %v488 = vunpack.c.l.b16 %v65
  %v489 = vunpack.c.h.b16 %v65
  %v490 = vunpack.c.l.b16 %v66
  %v491 = vunpack.c.h.b16 %v66
  %v492 = vunpack.c.l.b16 %v67
  %v493 = vunpack.c.h.b16 %v67
  %v494 = vunpack.c.l.b16 %v68
  %v495 = vunpack.c.h.b16 %v68
  %v496 = vunpack.c.l.b16 %v69
  %v497 = vunpack.c.h.b16 %v69
  %v498 = vunpack.c.l.b16 %v70
  %v499 = vunpack.c.h.b16 %v70
  %v500 = vunpack.c.l.b16 %v71
  %v501 = vunpack.c.h.b16 %v71
  %v502 = vunpack.c.l.b16 %v72
  %v503 = vunpack.c.h.b16 %v72
  %v504 = vunpack.c.l.b16 %v73
  %v505 = vunpack.c.h.b16 %v73
  %v506 = vunpack.c.l.b16 %v74
  %v507 = vunpack.c.h.b16 %v74
  %v508 = vunpack.c.l.b16 %v75
  %v509 = vunpack.c.h.b16 %v75
  %v510 = vunpack.c.l.b16 %v76
  %v511 = vunpack.c.h.b16 %v76
  %v512 = vunpack.c.l.b16 %v77
  %v513 = vunpack.c.h.b16 %v77
  %v514 = vunpack.c.l.b16 %v78
  %v515 = vunpack.c.h.b16 %v78
  %v516 = vunpack.c.l.b16 %v79
  %v517 = vunpack.c.h.b16 %v79
  %v518 = vunpack.c.l.b16 %v80
  %v519 = vunpack.c.h.b16 %v80
  %v520 = vunpack.c.l.b16 %v81
  %v521 = vunpack.c.h.b16 %v81
  %v522 = vunpack.c.l.b16 %v82
  %v523 = vunpack.c.h.b16 %v82
  %v524 = vunpack.c.l.b16 %v83
  %v525 = vunpack.c.h.b16 %v83
  %v526 = vunpack.c.l.b16 %v84
  %v527 = vunpack.c.h.b16 %v84
  %v528 = vunpack.c.l.b16 %v85
  %v529 = vunpack.c.h.b16 %v85
  %v530 = vunpack.c.l.b16 %v86
  %v531 = vunpack.c.h.b16 %v86
  %v532 = vunpack.c.l.b16 %v87
  %v533 = vunpack.c.h.b16 %v87
  %v534 = vunpack.c.l.b16 %v88
  %v535 = vunpack.c.h.b16 %v88
  %v536 = vunpack.c.l.b16 %v89
  %v537 = vunpack.c.h.b16 %v89
  %v538 = vunpack.c.l.b16 %v90
  %v539 = vunpack.c.h.b16 %v90
  %v540 = vunpack.c.l.b16 %v91
  %v541 = vunpack.c.h.b16 %v91
  %v542 = vunpack.c.l.b16 %v92
  %v543 = vunpack.c.h.b16 %v92
  %v544 = vunpack.c.l.b16 %v93
  %v545 = vunpack.c.h.b16 %v93
  %v546 = vunpack.c.l.b16 %v94
  %v547 = vunpack.c.h.b16 %v94
  %v548 = vunpack.c.l.b16 %v95
  %v549 = vunpack.c.h.b16 %v95
  %v550 = vunpack.c.l.b16 %v96
  %v551 = vunpack.c.h.b16 %v96
  %v552 = vunpack.c.l.b16 %v97
  %v553 = vunpack.c.h.b16 %v97
  %v554 = vunpack.c.l.b16 %v98
  %v555 = vunpack.c.h.b16 %v98
  %v556 = vunpack.c.l.b16 %v99
  %v557 = vunpack.c.h.b16 %v99
  %v558 = vunpack.c.l.b16 %v100
  %v559 = vunpack.c.h.b16 %v100
  %v560 = vunpack.c.l.b16 %v101
  %v561 = vunpack.c.h.b16 %v101
  %v562 = vunpack.c.l.b16 %v102
  %v563 = vunpack.c.h.b16 %v102
  %v564 = vunpack.c.l.b16 %v103
  %v565 = vunpack.c.h.b16 %v103
  %v566 = vunpack.c.l.b16 %v104
  %v567 = vunpack.c.h.b16 %v104
  %v568 = vunpack.c.l.b16 %v105
  %v569 = vunpack.c.h.b16 %v105
  %v570 = vunpack.c.l.b16 %v106
  %v571 = vunpack.c.h.b16 %v106
  %v572 = vunpack.c.l.b16 %v107
  %v573 = vunpack.c.h.b16 %v107
  %v574 = vunpack.c.l.b16 %v108
  %v575 = vunpack.c.h.b16 %v108
  %v576 = vunpack.c.l.b16 %v109
  %v577 = vunpack.c.h.b16 %v109
  %v578 = vunpack.c.l.b16 %v110
  %v579 = vunpack.c.h.b16 %v110
  %v580 = vunpack.c.l.b16 %v111
  %v581 = vunpack.c.h.b16 %v111
  %v582 = vunpack.c.l.b16 %v112
  %v583 = vunpack.c.h.b16 %v112
  %v584 = vunpack.c.l.b16 %v113
  %v585 = vunpack.c.h.b16 %v113
  %v586 = vunpack.c.l.b16 %v114
  %v587 = vunpack.c.h.b16 %v114
  %v588 = vunpack.c.l.b16 %v115
  %v589 = vunpack.c.h.b16 %v115
  %v590 = vunpack.c.l.b16 %v116
  %v591 = vunpack.c.h.b16 %v116
  %v592 = vunpack.c.l.b16 %v117
  %v593 = vunpack.c.h.b16 %v117
  %v594 = vunpack.c.l.b16 %v118
  %v595 = vunpack.c.h.b16 %v118
  %v596 = vunpack.c.l.b16 %v119
  %v597 = vunpack.c.h.b16 %v119
  %v598 = vunpack.c.l.b16 %v120
  %v599 = vunpack.c.h.b16 %v120
  %v600 = vunpack.c.l.b16 %v121
  %v601 = vunpack.c.h.b16 %v121
  %v602 = vunpack.c.l.b16 %v122
  %v603 = vunpack.c.h.b16 %v122
  %v604 = vunpack.c.l.b16 %v123
  %v605 = vunpack.c.h.b16 %v123
  %v606 = vunpack.c.l.b16 %v124
  %v607 = vunpack.c.h.b16 %v124
  %v608 = vunpack.c.l.b16 %v125
  %v609 = vunpack.c.h.b16 %v125
  %v610 = vunpack.c.l.b16 %v126
  %v611 = vunpack.c.h.b16 %v126
  %v612 = vunpack.c.l.b16 %v127
  %v613 = vunpack.c.h.b16 %v127
  %v614 = vunpack.c.l.b16 %v128
  %v615 = vunpack.c.h.b16 %v128
  %v616 = vunpack.c.l.b16 %v129
  %v617 = vunpack.c.h.b16 %v129
  %v618 = vunpack.c.l.b16 %v130
  %v619 = vunpack.c.h.b16 %v130
  %v620 = vunpack.c.l.b16 %v131
  %v621 = vunpack.c.h.b16 %v131
  %v622 = vunpack.c.l.b16 %v132
  %v623 = vunpack.c.h.b16 %v132
  %v624 = vunpack.c.l.b16 %v133
  %v625 = vunpack.c.h.b16 %v133
  %v626 = vunpack.c.l.b16 %v134
  %v627 = vunpack.c.h.b16 %v134
  %v628 = vunpack.c.l.b16 %v135
  %v629 = vunpack.c.h.b16 %v135
  %v630 = vunpack.c.l.b16 %v136
  %v631 = vunpack.c.h.b16 %v136
  %v632 = vunpack.c.l.b16 %v137
  %v633 = vunpack.c.h.b16 %v137
  %v634 = vunpack.c.l.b16 %v138
  %v635 = vunpack.c.h.b16 %v138
  %v636 = vunpack.c.l.b16 %v139
  %v637 = vunpack.c.h.b16 %v139
  %v638 = vunpack.c.l.b16 %v140
  %v639 = vunpack.c.h.b16 %v140
  %v640 = vunpack.c.l.b16 %v141
  %v641 = vunpack.c.h.b16 %v141
  %v642 = vpack.c.b16 %v402, %v394
  %v643 = vpack.c.b16 %v403, %v395
  %v644 = vpack.c.b16 %v404, %v396
  %v645 = vpack.c.b16 %v405, %v397
  %v646 = vpack.c.b16 %v406, %v398
  %v647 = vpack.c.b16 %v407, %v399
  %v648 = vpack.c.b16 %v408, %v400
  %v649 = vpack.c.b16 %v409, %v401
  %v650 = vpack.c.b16 %v418, %v410
  %v651 = vpack.c.b16 %v419, %v411
  %v652 = vpack.c.b16 %v420, %v412
  %v653 = vpack.c.b16 %v421, %v413
  %v654 = vpack.c.b16 %v422, %v414
  %v655 = vpack.c.b16 %v423, %v415
  %v656 = vpack.c.b16 %v424, %v416
  %v657 = vpack.c.b16 %v425, %v417
  %v658 = vpack.c.b16 %v434, %v426
  %v659 = vpack.c.b16 %v435, %v427
  %v660 = vpack.c.b16 %v436, %v428
  %v661 = vpack.c.b16 %v437, %v429
  %v662 = vpack.c.b16 %v438, %v430
  %v663 = vpack.c.b16 %v439, %v431
  %v664 = vpack.c.b16 %v440, %v432
  %v665 = vpack.c.b16 %v441, %v433
  %v666 = vpack.c.b16 %v450, %v442
  %v667 = vpack.c.b16 %v451, %v443
  %v668 = vpack.c.b16 %v452, %v444
  %v669 = vpack.c.b16 %v453, %v445
  %v670 = vpack.c.b16 %v454, %v446
  %v671 = vpack.c.b16 %v455, %v447
  %v672 = vpack.c.b16 %v456, %v448
  %v673 = vpack.c.b16 %v457, %v449
  %v674 = vpack.c.b16 %v466, %v458
  %v675 = vpack.c.b16 %v467, %v459
  %v676 = vpack.c.b16 %v468, %v460
  %v677 = vpack.c.b16 %v469, %v461
  %v678 = vpack.c.b16 %v470, %v462
  %v679 = vpack.c.b16 %v471, %v463
  %v680 = vpack.c.b16 %v472, %v464
  %v681 = vpack.c.b16 %v473, %v465
  %v682 = vpack.c.b16 %v482, %v474
  %v683 = vpack.c.b16 %v483, %v475
  %v684 = vpack.c.b16 %v484, %v476
  %v685 = vpack.c.b16 %v485, %v477
  %v686 = vpack.c.b16 %v486, %v478
  %v687 = vpack.c.b16 %v487, %v479
  %v688 = vpack.c.b16 %v488, %v480
  %v689 = vpack.c.b16 %v489, %v481
  %v690 = vpack.c.b16 %v498, %v490
  %v691 = vpack.c.b16 %v499, %v491
  %v692 = vpack.c.b16 %v500, %v492
  %v693 = vpack.c.b16 %v501, %v493
  %v694 = vpack.c.b16 %v502, %v494
  %v695 = vpack.c.b16 %v503, %v495
  %v696 = vpack.c.b16 %v504, %v496
  %v697 = vpack.c.b16 %v505, %v497
  %v698 = vpack.c.b16 %v514, %v506
  %v699 = vpack.c.b16 %v515, %v507
  %v700 = vpack.c.b16 %v516, %v508
  %v701 = vpack.c.b16 %v517, %v509
  %v702 = vpack.c.b16 %v518, %v510
  %v703 = vpack.c.b16 %v519, %v511
  %v704 = vpack.c.b16 %v520, %v512
  %v705 = vpack.c.b16 %v521, %v513
  %v706 = vpack.c.b16 %v530, %v522
  %v707 = vpack.c.b16 %v531, %v523
  %v708 = vpack.c.b16 %v532, %v524
  %v709 = vpack.c.b16 %v533, %v525
  %v710 = vpack.c.b16 %v534, %v526
  %v711 = vpack.c.b16 %v535, %v527
  %v712 = vpack.c.b16 %v536, %v528
  %v713 = vpack.c.b16 %v537, %v529
  %v714 = vpack.c.b16 %v546, %v538
  %v715 = vpack.c.b16 %v547, %v539
  %v716 = vpack.c.b16 %v548, %v540
  %v717 = vpack.c.b16 %v549, %v541
  %v718 = vpack.c.b16 %v550, %v542
  %v719 = vpack.c.b16 %v551, %v543
  %v720 = vpack.c.b16 %v552, %v544
  %v721 = vpack.c.b16 %v553, %v545
  %v722 = vpack.c.b16 %v562, %v554
  %v723 = vpack.c.b16 %v563, %v555
  %v724 = vpack.c.b16 %v564, %v556
  %v725 = vpack.c.b16 %v565, %v557
  %v726 = vpack.c.b16 %v566, %v558
  %v727 = vpack.c.b16 %v567, %v559
  %v728 = vpack.c.b16 %v568, %v560
  %v729 = vpack.c.b16 %v569, %v561
  %v730 = vpack.c.b16 %v578, %v570
  %v731 = vpack.c.b16 %v579, %v571
  %v732 = vpack.c.b16 %v580, %v572
  %v733 = vpack.c.b16 %v581, %v573
  %v734 = vpack.c.b16 %v582, %v574
  %v735 = vpack.c.b16 %v583, %v575
  %v736 = vpack.c.b16 %v584, %v576
  %v737 = vpack.c.b16 %v585, %v577
  %v738 = vpack.c.b16 %v594, %v586
  %v739 = vpack.c.b16 %v595, %v587
  %v740 = vpack.c.b16 %v596, %v588
  %v741 = vpack.c.b16 %v597, %v589
  %v742 = vpack.c.b16 %v598, %v590
  %v743 = vpack.c.b16 %v599, %v591
  %v744 = vpack.c.b16 %v600, %v592
  %v745 = vpack.c.b16 %v601, %v593
  %v746 = vpack.c.b16 %v610, %v602
  %v747 = vpack.c.b16 %v611, %v603
  %v748 = vpack.c.b16 %v612, %v604
  %v749 = vpack.c.b16 %v613, %v605
  %v750 = vpack.c.b16 %v614, %v606
  %v751 = vpack.c.b16 %v615, %v607
  %v752 = vpack.c.b16 %v616, %v608
  %v753 = vpack.c.b16 %v617, %v609
  %v754 = vpack.c.b16 %v626, %v618
  %v755 = vpack.c.b16 %v627, %v619
  %v756 = vpack.c.b16 %v628, %v620
  %v757 = vpack.c.b16 %v629, %v621
  %v758 = vpack.c.b16 %v630, %v622
  %v759 = vpack.c.b16 %v631, %v623
  %v760 = vpack.c.b16 %v632, %v624
  %v761 = vpack.c.b16 %v633, %v625
  %v762 = vpack.c.b16 %v634, %v634
  %v763 = vpack.c.b16 %v635, %v635
  %v764 = vpack.c.b16 %v636, %v636
  %v765 = vpack.c.b16 %v637, %v637
  %v766 = vpack.c.b16 %v638, %v638
  %v767 = vpack.c.b16 %v639, %v639
  %v768 = vpack.c.b16 %v640, %v640
  %v769 = vpack.c.b16 %v641, %v641
  %v1026 = vunpack.c.l.b16 %v142
  %v1027 = vunpack.c.l.b16 %v143
  %v1028 = vunpack.c.l.b16 %v144
  %v1029 = vunpack.c.l.b16 %v145
  %v1030 = vunpack.c.l.b16 %v146
  %v1031 = vunpack.c.l.b16 %v147
  %v1032 = vunpack.c.l.b16 %v148
  %v1033 = vunpack.c.l.b16 %v149
  %v1034 = vunpack.c.l.b16 %v150
  %v1035 = vunpack.c.l.b16 %v151
  %v1036 = vunpack.c.l.b16 %v152
  %v1037 = vunpack.c.l.b16 %v153
  %v1038 = vunpack.c.l.b16 %v154
  %v1039 = vunpack.c.l.b16 %v155
  %v1040 = vunpack.c.l.b16 %v156
  %v1041 = vunpack.c.l.b16 %v157
  %v1042 = vunpack.c.l.b16 %v158
  %v1043 = vunpack.c.l.b16 %v159
  %v1044 = vunpack.c.l.b16 %v160
  %v1045 = vunpack.c.l.b16 %v161
  %v1046 = vunpack.c.l.b16 %v162
  %v1047 = vunpack.c.l.b16 %v163
  %v1048 = vunpack.c.l.b16 %v164
  %v1049 = vunpack.c.l.b16 %v165
  %v1050 = vunpack.c.l.b16 %v166
  %v1051 = vunpack.c.l.b16 %v167
  %v1052 = vunpack.c.l.b16 %v168
  %v1053 = vunpack.c.l.b16 %v169
  %v1054 = vunpack.c.l.b16 %v170
  %v1055 = vunpack.c.l.b16 %v171
  %v1056 = vunpack.c.l.b16 %v172
  %v1057 = vunpack.c.l.b16 %v173
  %v1058 = vunpack.c.l.b16 %v174
  %v1059 = vunpack.c.l.b16 %v175
  %v1060 = vunpack.c.l.b16 %v176
  %v1061 = vunpack.c.l.b16 %v177
  %v1062 = vunpack.c.l.b16 %v178
  %v1063 = vunpack.c.l.b16 %v179
  %v1064 = vunpack.c.l.b16 %v180
  %v1065 = vunpack.c.l.b16 %v181
  %v1066 = vunpack.c.l.b16 %v182
  %v1067 = vunpack.c.l.b16 %v183
  %v1068 = vunpack.c.l.b16 %v184
  %v1069 = vunpack.c.l.b16 %v185
  %v1070 = vunpack.c.l.b16 %v186
  %v1071 = vunpack.c.l.b16 %v187
  %v1072 = vunpack.c.l.b16 %v188
  %v1073 = vunpack.c.l.b16 %v189
  %v1074 = vunpack.c.l.b16 %v190
  %v1075 = vunpack.c.l.b16 %v191
  %v1076 = vunpack.c.l.b16 %v192
  %v1077 = vunpack.c.l.b16 %v193
  %v1078 = vunpack.c.l.b16 %v194
  %v1079 = vunpack.c.l.b16 %v195
  %v1080 = vunpack.c.l.b16 %v196
  %v1081 = vunpack.c.l.b16 %v197
  %v1082 = vunpack.c.l.b16 %v198
  %v1083 = vunpack.c.l.b16 %v199
  %v1084 = vunpack.c.l.b16 %v200
  %v1085 = vunpack.c.l.b16 %v201
  %v1086 = vunpack.c.l.b16 %v202
  %v1087 = vunpack.c.l.b16 %v203
  %v1088 = vunpack.c.l.b16 %v204
  %v1089 = vunpack.c.l.b16 %v205
  %v1090 = vunpack.c.l.b16 %v206
  %v1091 = vunpack.c.l.b16 %v207
  %v1092 = vunpack.c.l.b16 %v208
  %v1093 = vunpack.c.l.b16 %v209
  %v1094 = vunpack.c.l.b16 %v210
  %v1095 = vunpack.c.l.b16 %v211
  %v1096 = vunpack.c.l.b16 %v212
  %v1097 = vunpack.c.l.b16 %v213
  %v1098 = vunpack.c.l.b16 %v214
  %v1099 = vunpack.c.l.b16 %v215
  %v1100 = vunpack.c.l.b16 %v216
  %v1101 = vunpack.c.l.b16 %v217
  %v1102 = vunpack.c.l.b16 %v218
  %v1103 = vunpack.c.l.b16 %v219
  %v1104 = vunpack.c.l.b16 %v220
  %v1105 = vunpack.c.l.b16 %v221
  %v1106 = vunpack.c.l.b16 %v222
  %v1107 = vunpack.c.l.b16 %v223
  %v1108 = vunpack.c.l.b16 %v224
  %v1109 = vunpack.c.l.b16 %v225
  %v1110 = vunpack.c.l.b16 %v226
  %v1111 = vunpack.c.l.b16 %v227
  %v1112 = vunpack.c.l.b16 %v228
  %v1113 = vunpack.c.l.b16 %v229
  %v1114 = vunpack.c.l.b16 %v230
  %v1115 = vunpack.c.l.b16 %v231
  %v1116 = vunpack.c.l.b16 %v232
  %v1117 = vunpack.c.l.b16 %v233
  %v1118 = vunpack.c.l.b16 %v234
  %v1119 = vunpack.c.l.b16 %v235
  %v1120 = vunpack.c.l.b16 %v236
  %v1121 = vunpack.c.l.b16 %v237
  %v1122 = vunpack.c.l.b16 %v238
  %v1123 = vunpack.c.l.b16 %v239
  %v1124 = vunpack.c.l.b16 %v240
  %v1125 = vunpack.c.l.b16 %v241
  %v1126 = vunpack.c.l.b16 %v242
  %v1127 = vunpack.c.l.b16 %v243
  %v1128 = vunpack.c.l.b16 %v244
  %v1129 = vunpack.c.l.b16 %v245
  %v1130 = vunpack.c.l.b16 %v246
  %v1131 = vunpack.c.l.b16 %v247
  %v1132 = vunpack.c.l.b16 %v248
  %v1133 = vunpack.c.l.b16 %v249
  %v1134 = vunpack.c.l.b16 %v250
  %v1135 = vunpack.c.l.b16 %v251
  %v1136 = vunpack.c.l.b16 %v252
  %v1137 = vunpack.c.l.b16 %v253
  %v1138 = vunpack.c.l.b16 %v254
  %v1139 = vunpack.c.l.b16 %v255
  %v1140 = vunpack.c.l.b16 %v256
  %v1141 = vunpack.c.l.b16 %v257
  %v1142 = vunpack.c.l.b16 %v258
  %v1143 = vunpack.c.l.b16 %v259
  %v1144 = vunpack.c.l.b16 %v260
  %v1145 = vunpack.c.l.b16 %v261
  %v1146 = vunpack.c.l.b16 %v262
  %v1147 = vunpack.c.l.b16 %v263
  %v1148 = vunpack.c.l.b16 %v264
  %v1149 = vunpack.c.l.b16 %v265
  %v1150 = vunpack.c.l.b16 %v266
  %v1151 = vunpack.c.l.b16 %v267
  %v1152 = vunpack.c.l.b16 %v268
  %v1153 = vunpack.c.l.b16 %v269
  %v1154 = vpack.c.b16 %v1027, %v1026
  %v1155 = vpack.c.b16 %v1029, %v1028
  %v1156 = vpack.c.b16 %v1031, %v1030
  %v1157 = vpack.c.b16 %v1033, %v1032
  %v1158 = vpack.c.b16 %v1035, %v1034
  %v1159 = vpack.c.b16 %v1037, %v1036
  %v1160 = vpack.c.b16 %v1039, %v1038
  %v1161 = vpack.c.b16 %v1041, %v1040
  %v1162 = vpack.c.b16 %v1043, %v1042
  %v1163 = vpack.c.b16 %v1045, %v1044
  %v1164 = vpack.c.b16 %v1047, %v1046
  %v1165 = vpack.c.b16 %v1049, %v1048
  %v1166 = vpack.c.b16 %v1051, %v1050
  %v1167 = vpack.c.b16 %v1053, %v1052
  %v1168 = vpack.c.b16 %v1055, %v1054
  %v1169 = vpack.c.b16 %v1057, %v1056
  %v1170 = vpack.c.b16 %v1059, %v1058
  %v1171 = vpack.c.b16 %v1061, %v1060
  %v1172 = vpack.c.b16 %v1063, %v1062
  %v1173 = vpack.c.b16 %v1065, %v1064
  %v1174 = vpack.c.b16 %v1067, %v1066
  %v1175 = vpack.c.b16 %v1069, %v1068
  %v1176 = vpack.c.b16 %v1071, %v1070
  %v1177 = vpack.c.b16 %v1073, %v1072
  %v1178 = vpack.c.b16 %v1075, %v1074
  %v1179 = vpack.c.b16 %v1077, %v1076
  %v1180 = vpack.c.b16 %v1079, %v1078
  %v1181 = vpack.c.b16 %v1081, %v1080
  %v1182 = vpack.c.b16 %v1083, %v1082
  %v1183 = vpack.c.b16 %v1085, %v1084
  %v1184 = vpack.c.b16 %v1087, %v1086
  %v1185 = vpack.c.b16 %v1089, %v1088
  %v1186 = vpack.c.b16 %v1091, %v1090
  %v1187 = vpack.c.b16 %v1093, %v1092
  %v1188 = vpack.c.b16 %v1095, %v1094
  %v1189 = vpack.c.b16 %v1097, %v1096
  %v1190 = vpack.c.b16 %v1099, %v1098
  %v1191 = vpack.c.b16 %v1101, %v1100
  %v1192 = vpack.c.b16 %v1103, %v1102
  %v1193 = vpack.c.b16 %v1105, %v1104
  %v1194 = vpack.c.b16 %v1107, %v1106
  %v1195 = vpack.c.b16 %v1109, %v1108
  %v1196 = vpack.c.b16 %v1111, %v1110
  %v1197 = vpack.c.b16 %v1113, %v1112
  %v1198 = vpack.c.b16 %v1115, %v1114
  %v1199 = vpack.c.b16 %v1117, %v1116
  %v1200 = vpack.c.b16 %v1119, %v1118
  %v1201 = vpack.c.b16 %v1121, %v1120
  %v1202 = vpack.c.b16 %v1123, %v1122
  %v1203 = vpack.c.b16 %v1125, %v1124
  %v1204 = vpack.c.b16 %v1127, %v1126
  %v1205 = vpack.c.b16 %v1129, %v1128
  %v1206 = vpack.c.b16 %v1131, %v1130
  %v1207 = vpack.c.b16 %v1133, %v1132
  %v1208 = vpack.c.b16 %v1135, %v1134
  %v1209 = vpack.c.b16 %v1137, %v1136
  %v1210 = vpack.c.b16 %v1139, %v1138
  %v1211 = vpack.c.b16 %v1141, %v1140
  %v1212 = vpack.c.b16 %v1143, %v1142
  %v1213 = vpack.c.b16 %v1145, %v1144
  %v1214 = vpack.c.b16 %v1147, %v1146
  %v1215 = vpack.c.b16 %v1149, %v1148
  %v1216 = vpack.c.b16 %v1151, %v1150
  %v1217 = vpack.c.b16 %v1153, %v1152
  %1282 = vmatpush.bf16.msra.mxu0 %v1161
  %1283 = vmatpush.bf16.msra.mxu0 %v1160
  %1284 = vmatpush.bf16.msra.mxu0 %v1159
  %1285 = vmatpush.bf16.msra.mxu0 %v1158
  %1286 = vmatpush.bf16.msra.mxu0 %v1157
  %1287 = vmatpush.bf16.msra.mxu0 %v1156
  %1288 = vmatpush.bf16.msra.mxu0 %v1155
  %1289 = vmatpush.bf16.msra.mxu0 %v1154
  %1290 = vmatmul.bf16.gmra.mxu0 %v642
  %v1291 = vpop.f32.mrf.mxu0
  %v1292 = vadd.f32 0.0, %v1291
  %v1293 = vpop.f32.mrf.mxu0
  %v1294 = vadd.f32 0.0, %v1293
  %1295 = vmatmul.bf16.gmra.mxu0 %v650
  %v1296 = vpop.f32.mrf.mxu0
  %v1297 = vadd.f32 0.0, %v1296
  %v1298 = vpop.f32.mrf.mxu0
  %v1299 = vadd.f32 0.0, %v1298
  %1300 = vmatmul.bf16.gmra.mxu0 %v658
  %v1301 = vpop.f32.mrf.mxu0
  %v1302 = vadd.f32 0.0, %v1301
  %v1303 = vpop.f32.mrf.mxu0
  %v1304 = vadd.f32 0.0, %v1303
  %1305 = vmatmul.bf16.gmra.mxu0 %v666
  %v1306 = vpop.f32.mrf.mxu0
  %v1307 = vadd.f32 0.0, %v1306
  %v1308 = vpop.f32.mrf.mxu0
  %v1309 = vadd.f32 0.0, %v1308
  %1310 = vmatmul.bf16.gmra.mxu0 %v674
  %v1311 = vpop.f32.mrf.mxu0
  %v1312 = vadd.f32 0.0, %v1311
  %v1313 = vpop.f32.mrf.mxu0
  %v1314 = vadd.f32 0.0, %v1313
  %1315 = vmatmul.bf16.gmra.mxu0 %v682
  %v1316 = vpop.f32.mrf.mxu0
  %v1317 = vadd.f32 0.0, %v1316
  %v1318 = vpop.f32.mrf.mxu0
  %v1319 = vadd.f32 0.0, %v1318
  %1320 = vmatmul.bf16.gmra.mxu0 %v690
  %v1321 = vpop.f32.mrf.mxu0
  %v1322 = vadd.f32 0.0, %v1321
  %v1323 = vpop.f32.mrf.mxu0
  %v1324 = vadd.f32 0.0, %v1323
  %1325 = vmatmul.bf16.gmra.mxu0 %v698
  %v1326 = vpop.f32.mrf.mxu0
  %v1327 = vadd.f32 0.0, %v1326
  %v1328 = vpop.f32.mrf.mxu0
  %v1329 = vadd.f32 0.0, %v1328
  %1330 = vmatmul.bf16.gmra.mxu0 %v706
  %v1331 = vpop.f32.mrf.mxu0
  %v1332 = vadd.f32 0.0, %v1331
  %v1333 = vpop.f32.mrf.mxu0
  %v1334 = vadd.f32 0.0, %v1333
  %1335 = vmatmul.bf16.gmra.mxu0 %v714
  %v1336 = vpop.f32.mrf.mxu0
  %v1337 = vadd.f32 0.0, %v1336
  %v1338 = vpop.f32.mrf.mxu0
  %v1339 = vadd.f32 0.0, %v1338
  %1340 = vmatmul.bf16.gmra.mxu0 %v722
  %v1341 = vpop.f32.mrf.mxu0
  %v1342 = vadd.f32 0.0, %v1341
  %v1343 = vpop.f32.mrf.mxu0
  %v1344 = vadd.f32 0.0, %v1343
  %1345 = vmatmul.bf16.gmra.mxu0 %v730
  %v1346 = vpop.f32.mrf.mxu0
  %v1347 = vadd.f32 0.0, %v1346
  %v1348 = vpop.f32.mrf.mxu0
  %v1349 = vadd.f32 0.0, %v1348
  %1350 = vmatmul.bf16.gmra.mxu0 %v738
  %v1351 = vpop.f32.mrf.mxu0
  %v1352 = vadd.f32 0.0, %v1351
  %v1353 = vpop.f32.mrf.mxu0
  %v1354 = vadd.f32 0.0, %v1353
  %1355 = vmatmul.bf16.gmra.mxu0 %v746
  %v1356 = vpop.f32.mrf.mxu0
  %v1357 = vadd.f32 0.0, %v1356
  %v1358 = vpop.f32.mrf.mxu0
  %v1359 = vadd.f32 0.0, %v1358
  %1360 = vmatmul.bf16.gmra.mxu0 %v754
  %v1361 = vpop.f32.mrf.mxu0
  %v1362 = vadd.f32 0.0, %v1361
  %v1363 = vpop.f32.mrf.mxu0
  %v1364 = vadd.f32 0.0, %v1363
  %1365 = vmatmul.bf16.gmra.mxu0 %v762
  %v1366 = vpop.f32.mrf.mxu0
  %v1367 = vadd.f32 0.0, %v1366
  %v1368 = vpop.f32.mrf.mxu0
  %1369 = vdwg.mxu0
  %1370 = vmatpush.bf16.msra.mxu0 %v1169
  %1371 = vmatpush.bf16.msra.mxu0 %v1168
  %1372 = vmatpush.bf16.msra.mxu0 %v1167
  %1373 = vmatpush.bf16.msra.mxu0 %v1166
  %1374 = vmatpush.bf16.msra.mxu0 %v1165
  %1375 = vmatpush.bf16.msra.mxu0 %v1164
  %1376 = vmatpush.bf16.msra.mxu0 %v1163
  %1377 = vmatpush.bf16.msra.mxu0 %v1162
  %1378 = vmatmul.bf16.gmra.mxu0 %v643
  %v1379 = vpop.f32.mrf.mxu0
  %v1380 = vadd.f32 %v1292, %v1379
  %v1381 = vpop.f32.mrf.mxu0
  %v1382 = vadd.f32 %v1294, %v1381
  %1383 = vmatmul.bf16.gmra.mxu0 %v651
  %v1384 = vpop.f32.mrf.mxu0
  %v1385 = vadd.f32 %v1297, %v1384
  %v1386 = vpop.f32.mrf.mxu0
  %v1387 = vadd.f32 %v1299, %v1386
  %1388 = vmatmul.bf16.gmra.mxu0 %v659
  %v1389 = vpop.f32.mrf.mxu0
  %v1390 = vadd.f32 %v1302, %v1389
  %v1391 = vpop.f32.mrf.mxu0
  %v1392 = vadd.f32 %v1304, %v1391
  %1393 = vmatmul.bf16.gmra.mxu0 %v667
  %v1394 = vpop.f32.mrf.mxu0
  %v1395 = vadd.f32 %v1307, %v1394
  %v1396 = vpop.f32.mrf.mxu0
  %v1397 = vadd.f32 %v1309, %v1396
  %1398 = vmatmul.bf16.gmra.mxu0 %v675
  %v1399 = vpop.f32.mrf.mxu0
  %v1400 = vadd.f32 %v1312, %v1399
  %v1401 = vpop.f32.mrf.mxu0
  %v1402 = vadd.f32 %v1314, %v1401
  %1403 = vmatmul.bf16.gmra.mxu0 %v683
  %v1404 = vpop.f32.mrf.mxu0
  %v1405 = vadd.f32 %v1317, %v1404
  %v1406 = vpop.f32.mrf.mxu0
  %v1407 = vadd.f32 %v1319, %v1406
  %1408 = vmatmul.bf16.gmra.mxu0 %v691
  %v1409 = vpop.f32.mrf.mxu0
  %v1410 = vadd.f32 %v1322, %v1409
  %v1411 = vpop.f32.mrf.mxu0
  %v1412 = vadd.f32 %v1324, %v1411
  %1413 = vmatmul.bf16.gmra.mxu0 %v699
  %v1414 = vpop.f32.mrf.mxu0
  %v1415 = vadd.f32 %v1327, %v1414
  %v1416 = vpop.f32.mrf.mxu0
  %v1417 = vadd.f32 %v1329, %v1416
  %1418 = vmatmul.bf16.gmra.mxu0 %v707
  %v1419 = vpop.f32.mrf.mxu0
  %v1420 = vadd.f32 %v1332, %v1419
  %v1421 = vpop.f32.mrf.mxu0
  %v1422 = vadd.f32 %v1334, %v1421
  %1423 = vmatmul.bf16.gmra.mxu0 %v715
  %v1424 = vpop.f32.mrf.mxu0
  %v1425 = vadd.f32 %v1337, %v1424
  %v1426 = vpop.f32.mrf.mxu0
  %v1427 = vadd.f32 %v1339, %v1426
  %1428 = vmatmul.bf16.gmra.mxu0 %v723
  %v1429 = vpop.f32.mrf.mxu0
  %v1430 = vadd.f32 %v1342, %v1429
  %v1431 = vpop.f32.mrf.mxu0
  %v1432 = vadd.f32 %v1344, %v1431
  %1433 = vmatmul.bf16.gmra.mxu0 %v731
  %v1434 = vpop.f32.mrf.mxu0
  %v1435 = vadd.f32 %v1347, %v1434
  %v1436 = vpop.f32.mrf.mxu0
  %v1437 = vadd.f32 %v1349, %v1436
  %1438 = vmatmul.bf16.gmra.mxu0 %v739
  %v1439 = vpop.f32.mrf.mxu0
  %v1440 = vadd.f32 %v1352, %v1439
  %v1441 = vpop.f32.mrf.mxu0
  %v1442 = vadd.f32 %v1354, %v1441
  %1443 = vmatmul.bf16.gmra.mxu0 %v747
  %v1444 = vpop.f32.mrf.mxu0
  %v1445 = vadd.f32 %v1357, %v1444
  %v1446 = vpop.f32.mrf.mxu0
  %v1447 = vadd.f32 %v1359, %v1446
  %1448 = vmatmul.bf16.gmra.mxu0 %v755
  %v1449 = vpop.f32.mrf.mxu0
  %v1450 = vadd.f32 %v1362, %v1449
  %v1451 = vpop.f32.mrf.mxu0
  %v1452 = vadd.f32 %v1364, %v1451
  %1453 = vmatmul.bf16.gmra.mxu0 %v763
  %v1454 = vpop.f32.mrf.mxu0
  %v1455 = vadd.f32 %v1367, %v1454
  %v1456 = vpop.f32.mrf.mxu0
  %1457 = vdwg.mxu0
  %1458 = vmatpush.bf16.msra.mxu0 %v1177
  %1459 = vmatpush.bf16.msra.mxu0 %v1176
  %1460 = vmatpush.bf16.msra.mxu0 %v1175
  %1461 = vmatpush.bf16.msra.mxu0 %v1174
  %1462 = vmatpush.bf16.msra.mxu0 %v1173
  %1463 = vmatpush.bf16.msra.mxu0 %v1172
  %1464 = vmatpush.bf16.msra.mxu0 %v1171
  %1465 = vmatpush.bf16.msra.mxu0 %v1170
  %1466 = vmatmul.bf16.gmra.mxu0 %v644
  %v1467 = vpop.f32.mrf.mxu0
  %v1468 = vadd.f32 %v1380, %v1467
  %v1469 = vpop.f32.mrf.mxu0
  %v1470 = vadd.f32 %v1382, %v1469
  %1471 = vmatmul.bf16.gmra.mxu0 %v652
  %v1472 = vpop.f32.mrf.mxu0
  %v1473 = vadd.f32 %v1385, %v1472
  %v1474 = vpop.f32.mrf.mxu0
  %v1475 = vadd.f32 %v1387, %v1474
  %1476 = vmatmul.bf16.gmra.mxu0 %v660
  %v1477 = vpop.f32.mrf.mxu0
  %v1478 = vadd.f32 %v1390, %v1477
  %v1479 = vpop.f32.mrf.mxu0
  %v1480 = vadd.f32 %v1392, %v1479
  %1481 = vmatmul.bf16.gmra.mxu0 %v668
  %v1482 = vpop.f32.mrf.mxu0
  %v1483 = vadd.f32 %v1395, %v1482
  %v1484 = vpop.f32.mrf.mxu0
  %v1485 = vadd.f32 %v1397, %v1484
  %1486 = vmatmul.bf16.gmra.mxu0 %v676
  %v1487 = vpop.f32.mrf.mxu0
  %v1488 = vadd.f32 %v1400, %v1487
  %v1489 = vpop.f32.mrf.mxu0
  %v1490 = vadd.f32 %v1402, %v1489
  %1491 = vmatmul.bf16.gmra.mxu0 %v684
  %v1492 = vpop.f32.mrf.mxu0
  %v1493 = vadd.f32 %v1405, %v1492
  %v1494 = vpop.f32.mrf.mxu0
  %v1495 = vadd.f32 %v1407, %v1494
  %1496 = vmatmul.bf16.gmra.mxu0 %v692
  %v1497 = vpop.f32.mrf.mxu0
  %v1498 = vadd.f32 %v1410, %v1497
  %v1499 = vpop.f32.mrf.mxu0
  %v1500 = vadd.f32 %v1412, %v1499
  %1501 = vmatmul.bf16.gmra.mxu0 %v700
  %v1502 = vpop.f32.mrf.mxu0
  %v1503 = vadd.f32 %v1415, %v1502
  %v1504 = vpop.f32.mrf.mxu0
  %v1505 = vadd.f32 %v1417, %v1504
  %1506 = vmatmul.bf16.gmra.mxu0 %v708
  %v1507 = vpop.f32.mrf.mxu0
  %v1508 = vadd.f32 %v1420, %v1507
  %v1509 = vpop.f32.mrf.mxu0
  %v1510 = vadd.f32 %v1422, %v1509
  %1511 = vmatmul.bf16.gmra.mxu0 %v716
  %v1512 = vpop.f32.mrf.mxu0
  %v1513 = vadd.f32 %v1425, %v1512
  %v1514 = vpop.f32.mrf.mxu0
  %v1515 = vadd.f32 %v1427, %v1514
  %1516 = vmatmul.bf16.gmra.mxu0 %v724
  %v1517 = vpop.f32.mrf.mxu0
  %v1518 = vadd.f32 %v1430, %v1517
  %v1519 = vpop.f32.mrf.mxu0
  %v1520 = vadd.f32 %v1432, %v1519
  %1521 = vmatmul.bf16.gmra.mxu0 %v732
  %v1522 = vpop.f32.mrf.mxu0
  %v1523 = vadd.f32 %v1435, %v1522
  %v1524 = vpop.f32.mrf.mxu0
  %v1525 = vadd.f32 %v1437, %v1524
  %1526 = vmatmul.bf16.gmra.mxu0 %v740
  %v1527 = vpop.f32.mrf.mxu0
  %v1528 = vadd.f32 %v1440, %v1527
  %v1529 = vpop.f32.mrf.mxu0
  %v1530 = vadd.f32 %v1442, %v1529
  %1531 = vmatmul.bf16.gmra.mxu0 %v748
  %v1532 = vpop.f32.mrf.mxu0
  %v1533 = vadd.f32 %v1445, %v1532
  %v1534 = vpop.f32.mrf.mxu0
  %v1535 = vadd.f32 %v1447, %v1534
  %1536 = vmatmul.bf16.gmra.mxu0 %v756
  %v1537 = vpop.f32.mrf.mxu0
  %v1538 = vadd.f32 %v1450, %v1537
  %v1539 = vpop.f32.mrf.mxu0
  %v1540 = vadd.f32 %v1452, %v1539
  %1541 = vmatmul.bf16.gmra.mxu0 %v764
  %v1542 = vpop.f32.mrf.mxu0
  %v1543 = vadd.f32 %v1455, %v1542
  %v1544 = vpop.f32.mrf.mxu0
  %1545 = vdwg.mxu0
  %1546 = vmatpush.bf16.msra.mxu0 %v1185
  %1547 = vmatpush.bf16.msra.mxu0 %v1184
  %1548 = vmatpush.bf16.msra.mxu0 %v1183
  %1549 = vmatpush.bf16.msra.mxu0 %v1182
  %1550 = vmatpush.bf16.msra.mxu0 %v1181
  %1551 = vmatpush.bf16.msra.mxu0 %v1180
  %1552 = vmatpush.bf16.msra.mxu0 %v1179
  %1553 = vmatpush.bf16.msra.mxu0 %v1178
  %1554 = vmatmul.bf16.gmra.mxu0 %v645
  %v1555 = vpop.f32.mrf.mxu0
  %v1556 = vadd.f32 %v1468, %v1555
  %v1557 = vpop.f32.mrf.mxu0
  %v1558 = vadd.f32 %v1470, %v1557
  %1559 = vmatmul.bf16.gmra.mxu0 %v653
  %v1560 = vpop.f32.mrf.mxu0
  %v1561 = vadd.f32 %v1473, %v1560
  %v1562 = vpop.f32.mrf.mxu0
  %v1563 = vadd.f32 %v1475, %v1562
  %1564 = vmatmul.bf16.gmra.mxu0 %v661
  %v1565 = vpop.f32.mrf.mxu0
  %v1566 = vadd.f32 %v1478, %v1565
  %v1567 = vpop.f32.mrf.mxu0
  %v1568 = vadd.f32 %v1480, %v1567
  %1569 = vmatmul.bf16.gmra.mxu0 %v669
  %v1570 = vpop.f32.mrf.mxu0
  %v1571 = vadd.f32 %v1483, %v1570
  %v1572 = vpop.f32.mrf.mxu0
  %v1573 = vadd.f32 %v1485, %v1572
  %1574 = vmatmul.bf16.gmra.mxu0 %v677
  %v1575 = vpop.f32.mrf.mxu0
  %v1576 = vadd.f32 %v1488, %v1575
  %v1577 = vpop.f32.mrf.mxu0
  %v1578 = vadd.f32 %v1490, %v1577
  %1579 = vmatmul.bf16.gmra.mxu0 %v685
  %v1580 = vpop.f32.mrf.mxu0
  %v1581 = vadd.f32 %v1493, %v1580
  %v1582 = vpop.f32.mrf.mxu0
  %v1583 = vadd.f32 %v1495, %v1582
  %1584 = vmatmul.bf16.gmra.mxu0 %v693
  %v1585 = vpop.f32.mrf.mxu0
  %v1586 = vadd.f32 %v1498, %v1585
  %v1587 = vpop.f32.mrf.mxu0
  %v1588 = vadd.f32 %v1500, %v1587
  %1589 = vmatmul.bf16.gmra.mxu0 %v701
  %v1590 = vpop.f32.mrf.mxu0
  %v1591 = vadd.f32 %v1503, %v1590
  %v1592 = vpop.f32.mrf.mxu0
  %v1593 = vadd.f32 %v1505, %v1592
  %1594 = vmatmul.bf16.gmra.mxu0 %v709
  %v1595 = vpop.f32.mrf.mxu0
  %v1596 = vadd.f32 %v1508, %v1595
  %v1597 = vpop.f32.mrf.mxu0
  %v1598 = vadd.f32 %v1510, %v1597
  %1599 = vmatmul.bf16.gmra.mxu0 %v717
  %v1600 = vpop.f32.mrf.mxu0
  %v1601 = vadd.f32 %v1513, %v1600
  %v1602 = vpop.f32.mrf.mxu0
  %v1603 = vadd.f32 %v1515, %v1602
  %1604 = vmatmul.bf16.gmra.mxu0 %v725
  %v1605 = vpop.f32.mrf.mxu0
  %v1606 = vadd.f32 %v1518, %v1605
  %v1607 = vpop.f32.mrf.mxu0
  %v1608 = vadd.f32 %v1520, %v1607
  %1609 = vmatmul.bf16.gmra.mxu0 %v733
  %v1610 = vpop.f32.mrf.mxu0
  %v1611 = vadd.f32 %v1523, %v1610
  %v1612 = vpop.f32.mrf.mxu0
  %v1613 = vadd.f32 %v1525, %v1612
  %1614 = vmatmul.bf16.gmra.mxu0 %v741
  %v1615 = vpop.f32.mrf.mxu0
  %v1616 = vadd.f32 %v1528, %v1615
  %v1617 = vpop.f32.mrf.mxu0
  %v1618 = vadd.f32 %v1530, %v1617
  %1619 = vmatmul.bf16.gmra.mxu0 %v749
  %v1620 = vpop.f32.mrf.mxu0
  %v1621 = vadd.f32 %v1533, %v1620
  %v1622 = vpop.f32.mrf.mxu0
  %v1623 = vadd.f32 %v1535, %v1622
  %1624 = vmatmul.bf16.gmra.mxu0 %v757
  %v1625 = vpop.f32.mrf.mxu0
  %v1626 = vadd.f32 %v1538, %v1625
  %v1627 = vpop.f32.mrf.mxu0
  %v1628 = vadd.f32 %v1540, %v1627
  %1629 = vmatmul.bf16.gmra.mxu0 %v765
  %v1630 = vpop.f32.mrf.mxu0
  %v1631 = vadd.f32 %v1543, %v1630
  %v1632 = vpop.f32.mrf.mxu0
  %1633 = vdwg.mxu0
  %1634 = vmatpush.bf16.msra.mxu0 %v1193
  %1635 = vmatpush.bf16.msra.mxu0 %v1192
  %1636 = vmatpush.bf16.msra.mxu0 %v1191
  %1637 = vmatpush.bf16.msra.mxu0 %v1190
  %1638 = vmatpush.bf16.msra.mxu0 %v1189
  %1639 = vmatpush.bf16.msra.mxu0 %v1188
  %1640 = vmatpush.bf16.msra.mxu0 %v1187
  %1641 = vmatpush.bf16.msra.mxu0 %v1186
  %1642 = vmatmul.bf16.gmra.mxu0 %v646
  %v1643 = vpop.f32.mrf.mxu0
  %v1644 = vadd.f32 %v1556, %v1643
  %v1645 = vpop.f32.mrf.mxu0
  %v1646 = vadd.f32 %v1558, %v1645
  %1647 = vmatmul.bf16.gmra.mxu0 %v654
  %v1648 = vpop.f32.mrf.mxu0
  %v1649 = vadd.f32 %v1561, %v1648
  %v1650 = vpop.f32.mrf.mxu0
  %v1651 = vadd.f32 %v1563, %v1650
  %1652 = vmatmul.bf16.gmra.mxu0 %v662
  %v1653 = vpop.f32.mrf.mxu0
  %v1654 = vadd.f32 %v1566, %v1653
  %v1655 = vpop.f32.mrf.mxu0
  %v1656 = vadd.f32 %v1568, %v1655
  %1657 = vmatmul.bf16.gmra.mxu0 %v670
  %v1658 = vpop.f32.mrf.mxu0
  %v1659 = vadd.f32 %v1571, %v1658
  %v1660 = vpop.f32.mrf.mxu0
  %v1661 = vadd.f32 %v1573, %v1660
  %1662 = vmatmul.bf16.gmra.mxu0 %v678
  %v1663 = vpop.f32.mrf.mxu0
  %v1664 = vadd.f32 %v1576, %v1663
  %v1665 = vpop.f32.mrf.mxu0
  %v1666 = vadd.f32 %v1578, %v1665
  %1667 = vmatmul.bf16.gmra.mxu0 %v686
  %v1668 = vpop.f32.mrf.mxu0
  %v1669 = vadd.f32 %v1581, %v1668
  %v1670 = vpop.f32.mrf.mxu0
  %v1671 = vadd.f32 %v1583, %v1670
  %1672 = vmatmul.bf16.gmra.mxu0 %v694
  %v1673 = vpop.f32.mrf.mxu0
  %v1674 = vadd.f32 %v1586, %v1673
  %v1675 = vpop.f32.mrf.mxu0
  %v1676 = vadd.f32 %v1588, %v1675
  %1677 = vmatmul.bf16.gmra.mxu0 %v702
  %v1678 = vpop.f32.mrf.mxu0
  %v1679 = vadd.f32 %v1591, %v1678
  %v1680 = vpop.f32.mrf.mxu0
  %v1681 = vadd.f32 %v1593, %v1680
  %1682 = vmatmul.bf16.gmra.mxu0 %v710
  %v1683 = vpop.f32.mrf.mxu0
  %v1684 = vadd.f32 %v1596, %v1683
  %v1685 = vpop.f32.mrf.mxu0
  %v1686 = vadd.f32 %v1598, %v1685
  %1687 = vmatmul.bf16.gmra.mxu0 %v718
  %v1688 = vpop.f32.mrf.mxu0
  %v1689 = vadd.f32 %v1601, %v1688
  %v1690 = vpop.f32.mrf.mxu0
  %v1691 = vadd.f32 %v1603, %v1690
  %1692 = vmatmul.bf16.gmra.mxu0 %v726
  %v1693 = vpop.f32.mrf.mxu0
  %v1694 = vadd.f32 %v1606, %v1693
  %v1695 = vpop.f32.mrf.mxu0
  %v1696 = vadd.f32 %v1608, %v1695
  %1697 = vmatmul.bf16.gmra.mxu0 %v734
  %v1698 = vpop.f32.mrf.mxu0
  %v1699 = vadd.f32 %v1611, %v1698
  %v1700 = vpop.f32.mrf.mxu0
  %v1701 = vadd.f32 %v1613, %v1700
  %1702 = vmatmul.bf16.gmra.mxu0 %v742
  %v1703 = vpop.f32.mrf.mxu0
  %v1704 = vadd.f32 %v1616, %v1703
  %v1705 = vpop.f32.mrf.mxu0
  %v1706 = vadd.f32 %v1618, %v1705
  %1707 = vmatmul.bf16.gmra.mxu0 %v750
  %v1708 = vpop.f32.mrf.mxu0
  %v1709 = vadd.f32 %v1621, %v1708
  %v1710 = vpop.f32.mrf.mxu0
  %v1711 = vadd.f32 %v1623, %v1710
  %1712 = vmatmul.bf16.gmra.mxu0 %v758
  %v1713 = vpop.f32.mrf.mxu0
  %v1714 = vadd.f32 %v1626, %v1713
  %v1715 = vpop.f32.mrf.mxu0
  %v1716 = vadd.f32 %v1628, %v1715
  %1717 = vmatmul.bf16.gmra.mxu0 %v766
  %v1718 = vpop.f32.mrf.mxu0
  %v1719 = vadd.f32 %v1631, %v1718
  %v1720 = vpop.f32.mrf.mxu0
  %1721 = vdwg.mxu0
  %1722 = vmatpush.bf16.msra.mxu0 %v1201
  %1723 = vmatpush.bf16.msra.mxu0 %v1200
  %1724 = vmatpush.bf16.msra.mxu0 %v1199
  %1725 = vmatpush.bf16.msra.mxu0 %v1198
  %1726 = vmatpush.bf16.msra.mxu0 %v1197
  %1727 = vmatpush.bf16.msra.mxu0 %v1196
  %1728 = vmatpush.bf16.msra.mxu0 %v1195
  %1729 = vmatpush.bf16.msra.mxu0 %v1194
  %1730 = vmatmul.bf16.gmra.mxu0 %v647
  %v1731 = vpop.f32.mrf.mxu0
  %v1732 = vadd.f32 %v1644, %v1731
  %v1733 = vpop.f32.mrf.mxu0
  %v1734 = vadd.f32 %v1646, %v1733
  %1735 = vmatmul.bf16.gmra.mxu0 %v655
  %v1736 = vpop.f32.mrf.mxu0
  %v1737 = vadd.f32 %v1649, %v1736
  %v1738 = vpop.f32.mrf.mxu0
  %v1739 = vadd.f32 %v1651, %v1738
  %1740 = vmatmul.bf16.gmra.mxu0 %v663
  %v1741 = vpop.f32.mrf.mxu0
  %v1742 = vadd.f32 %v1654, %v1741
  %v1743 = vpop.f32.mrf.mxu0
  %v1744 = vadd.f32 %v1656, %v1743
  %1745 = vmatmul.bf16.gmra.mxu0 %v671
  %v1746 = vpop.f32.mrf.mxu0
  %v1747 = vadd.f32 %v1659, %v1746
  %v1748 = vpop.f32.mrf.mxu0
  %v1749 = vadd.f32 %v1661, %v1748
  %1750 = vmatmul.bf16.gmra.mxu0 %v679
  %v1751 = vpop.f32.mrf.mxu0
  %v1752 = vadd.f32 %v1664, %v1751
  %v1753 = vpop.f32.mrf.mxu0
  %v1754 = vadd.f32 %v1666, %v1753
  %1755 = vmatmul.bf16.gmra.mxu0 %v687
  %v1756 = vpop.f32.mrf.mxu0
  %v1757 = vadd.f32 %v1669, %v1756
  %v1758 = vpop.f32.mrf.mxu0
  %v1759 = vadd.f32 %v1671, %v1758
  %1760 = vmatmul.bf16.gmra.mxu0 %v695
  %v1761 = vpop.f32.mrf.mxu0
  %v1762 = vadd.f32 %v1674, %v1761
  %v1763 = vpop.f32.mrf.mxu0
  %v1764 = vadd.f32 %v1676, %v1763
  %1765 = vmatmul.bf16.gmra.mxu0 %v703
  %v1766 = vpop.f32.mrf.mxu0
  %v1767 = vadd.f32 %v1679, %v1766
  %v1768 = vpop.f32.mrf.mxu0
  %v1769 = vadd.f32 %v1681, %v1768
  %1770 = vmatmul.bf16.gmra.mxu0 %v711
  %v1771 = vpop.f32.mrf.mxu0
  %v1772 = vadd.f32 %v1684, %v1771
  %v1773 = vpop.f32.mrf.mxu0
  %v1774 = vadd.f32 %v1686, %v1773
  %1775 = vmatmul.bf16.gmra.mxu0 %v719
  %v1776 = vpop.f32.mrf.mxu0
  %v1777 = vadd.f32 %v1689, %v1776
  %v1778 = vpop.f32.mrf.mxu0
  %v1779 = vadd.f32 %v1691, %v1778
  %1780 = vmatmul.bf16.gmra.mxu0 %v727
  %v1781 = vpop.f32.mrf.mxu0
  %v1782 = vadd.f32 %v1694, %v1781
  %v1783 = vpop.f32.mrf.mxu0
  %v1784 = vadd.f32 %v1696, %v1783
  %1785 = vmatmul.bf16.gmra.mxu0 %v735
  %v1786 = vpop.f32.mrf.mxu0
  %v1787 = vadd.f32 %v1699, %v1786
  %v1788 = vpop.f32.mrf.mxu0
  %v1789 = vadd.f32 %v1701, %v1788
  %1790 = vmatmul.bf16.gmra.mxu0 %v743
  %v1791 = vpop.f32.mrf.mxu0
  %v1792 = vadd.f32 %v1704, %v1791
  %v1793 = vpop.f32.mrf.mxu0
  %v1794 = vadd.f32 %v1706, %v1793
  %1795 = vmatmul.bf16.gmra.mxu0 %v751
  %v1796 = vpop.f32.mrf.mxu0
  %v1797 = vadd.f32 %v1709, %v1796
  %v1798 = vpop.f32.mrf.mxu0
  %v1799 = vadd.f32 %v1711, %v1798
  %1800 = vmatmul.bf16.gmra.mxu0 %v759
  %v1801 = vpop.f32.mrf.mxu0
  %v1802 = vadd.f32 %v1714, %v1801
  %v1803 = vpop.f32.mrf.mxu0
  %v1804 = vadd.f32 %v1716, %v1803
  %1805 = vmatmul.bf16.gmra.mxu0 %v767
  %v1806 = vpop.f32.mrf.mxu0
  %v1807 = vadd.f32 %v1719, %v1806
  %v1808 = vpop.f32.mrf.mxu0
  %1809 = vdwg.mxu0
  %1810 = vmatpush.bf16.msra.mxu0 %v1209
  %1811 = vmatpush.bf16.msra.mxu0 %v1208
  %1812 = vmatpush.bf16.msra.mxu0 %v1207
  %1813 = vmatpush.bf16.msra.mxu0 %v1206
  %1814 = vmatpush.bf16.msra.mxu0 %v1205
  %1815 = vmatpush.bf16.msra.mxu0 %v1204
  %1816 = vmatpush.bf16.msra.mxu0 %v1203
  %1817 = vmatpush.bf16.msra.mxu0 %v1202
  %1818 = vmatmul.bf16.gmra.mxu0 %v648
  %v1819 = vpop.f32.mrf.mxu0
  %v1820 = vadd.f32 %v1732, %v1819
  %v1821 = vpop.f32.mrf.mxu0
  %v1822 = vadd.f32 %v1734, %v1821
  %1823 = vmatmul.bf16.gmra.mxu0 %v656
  %v1824 = vpop.f32.mrf.mxu0
  %v1825 = vadd.f32 %v1737, %v1824
  %v1826 = vpop.f32.mrf.mxu0
  %v1827 = vadd.f32 %v1739, %v1826
  %1828 = vmatmul.bf16.gmra.mxu0 %v664
  %v1829 = vpop.f32.mrf.mxu0
  %v1830 = vadd.f32 %v1742, %v1829
  %v1831 = vpop.f32.mrf.mxu0
  %v1832 = vadd.f32 %v1744, %v1831
  %1833 = vmatmul.bf16.gmra.mxu0 %v672
  %v1834 = vpop.f32.mrf.mxu0
  %v1835 = vadd.f32 %v1747, %v1834
  %v1836 = vpop.f32.mrf.mxu0
  %v1837 = vadd.f32 %v1749, %v1836
  %1838 = vmatmul.bf16.gmra.mxu0 %v680
  %v1839 = vpop.f32.mrf.mxu0
  %v1840 = vadd.f32 %v1752, %v1839
  %v1841 = vpop.f32.mrf.mxu0
  %v1842 = vadd.f32 %v1754, %v1841
  %1843 = vmatmul.bf16.gmra.mxu0 %v688
  %v1844 = vpop.f32.mrf.mxu0
  %v1845 = vadd.f32 %v1757, %v1844
  %v1846 = vpop.f32.mrf.mxu0
  %v1847 = vadd.f32 %v1759, %v1846
  %1848 = vmatmul.bf16.gmra.mxu0 %v696
  %v1849 = vpop.f32.mrf.mxu0
  %v1850 = vadd.f32 %v1762, %v1849
  %v1851 = vpop.f32.mrf.mxu0
  %v1852 = vadd.f32 %v1764, %v1851
  %1853 = vmatmul.bf16.gmra.mxu0 %v704
  %v1854 = vpop.f32.mrf.mxu0
  %v1855 = vadd.f32 %v1767, %v1854
  %v1856 = vpop.f32.mrf.mxu0
  %v1857 = vadd.f32 %v1769, %v1856
  %1858 = vmatmul.bf16.gmra.mxu0 %v712
  %v1859 = vpop.f32.mrf.mxu0
  %v1860 = vadd.f32 %v1772, %v1859
  %v1861 = vpop.f32.mrf.mxu0
  %v1862 = vadd.f32 %v1774, %v1861
  %1863 = vmatmul.bf16.gmra.mxu0 %v720
  %v1864 = vpop.f32.mrf.mxu0
  %v1865 = vadd.f32 %v1777, %v1864
  %v1866 = vpop.f32.mrf.mxu0
  %v1867 = vadd.f32 %v1779, %v1866
  %1868 = vmatmul.bf16.gmra.mxu0 %v728
  %v1869 = vpop.f32.mrf.mxu0
  %v1870 = vadd.f32 %v1782, %v1869
  %v1871 = vpop.f32.mrf.mxu0
  %v1872 = vadd.f32 %v1784, %v1871
  %1873 = vmatmul.bf16.gmra.mxu0 %v736
  %v1874 = vpop.f32.mrf.mxu0
  %v1875 = vadd.f32 %v1787, %v1874
  %v1876 = vpop.f32.mrf.mxu0
  %v1877 = vadd.f32 %v1789, %v1876
  %1878 = vmatmul.bf16.gmra.mxu0 %v744
  %v1879 = vpop.f32.mrf.mxu0
  %v1880 = vadd.f32 %v1792, %v1879
  %v1881 = vpop.f32.mrf.mxu0
  %v1882 = vadd.f32 %v1794, %v1881
  %1883 = vmatmul.bf16.gmra.mxu0 %v752
  %v1884 = vpop.f32.mrf.mxu0
  %v1885 = vadd.f32 %v1797, %v1884
  %v1886 = vpop.f32.mrf.mxu0
  %v1887 = vadd.f32 %v1799, %v1886
  %1888 = vmatmul.bf16.gmra.mxu0 %v760
  %v1889 = vpop.f32.mrf.mxu0
  %v1890 = vadd.f32 %v1802, %v1889
  %v1891 = vpop.f32.mrf.mxu0
  %v1892 = vadd.f32 %v1804, %v1891
  %1893 = vmatmul.bf16.gmra.mxu0 %v768
  %v1894 = vpop.f32.mrf.mxu0
  %v1895 = vadd.f32 %v1807, %v1894
  %v1896 = vpop.f32.mrf.mxu0
  %1897 = vdwg.mxu0
  %1898 = vmatpush.bf16.msra.mxu0 %v1217
  %1899 = vmatpush.bf16.msra.mxu0 %v1216
  %1900 = vmatpush.bf16.msra.mxu0 %v1215
  %1901 = vmatpush.bf16.msra.mxu0 %v1214
  %1902 = vmatpush.bf16.msra.mxu0 %v1213
  %1903 = vmatpush.bf16.msra.mxu0 %v1212
  %1904 = vmatpush.bf16.msra.mxu0 %v1211
  %1905 = vmatpush.bf16.msra.mxu0 %v1210
  %1906 = vmatmul.bf16.gmra.mxu0 %v649
  %v1907 = vpop.f32.mrf.mxu0
  %v1908 = vadd.f32 %v1820, %v1907
  %v1909 = vpop.f32.mrf.mxu0
  %v1910 = vadd.f32 %v1822, %v1909
  %1911 = vmatmul.bf16.gmra.mxu0 %v657
  %v1912 = vpop.f32.mrf.mxu0
  %v1913 = vadd.f32 %v1825, %v1912
  %v1914 = vpop.f32.mrf.mxu0
  %v1915 = vadd.f32 %v1827, %v1914
  %1916 = vmatmul.bf16.gmra.mxu0 %v665
  %v1917 = vpop.f32.mrf.mxu0
  %v1918 = vadd.f32 %v1830, %v1917
  %v1919 = vpop.f32.mrf.mxu0
  %v1920 = vadd.f32 %v1832, %v1919
  %1921 = vmatmul.bf16.gmra.mxu0 %v673
  %v1922 = vpop.f32.mrf.mxu0
  %v1923 = vadd.f32 %v1835, %v1922
  %v1924 = vpop.f32.mrf.mxu0
  %v1925 = vadd.f32 %v1837, %v1924
  %1926 = vmatmul.bf16.gmra.mxu0 %v681
  %v1927 = vpop.f32.mrf.mxu0
  %v1928 = vadd.f32 %v1840, %v1927
  %v1929 = vpop.f32.mrf.mxu0
  %v1930 = vadd.f32 %v1842, %v1929
  %1931 = vmatmul.bf16.gmra.mxu0 %v689
  %v1932 = vpop.f32.mrf.mxu0
  %v1933 = vadd.f32 %v1845, %v1932
  %v1934 = vpop.f32.mrf.mxu0
  %v1935 = vadd.f32 %v1847, %v1934
  %1936 = vmatmul.bf16.gmra.mxu0 %v697
  %v1937 = vpop.f32.mrf.mxu0
  %v1938 = vadd.f32 %v1850, %v1937
  %v1939 = vpop.f32.mrf.mxu0
  %v1940 = vadd.f32 %v1852, %v1939
  %1941 = vmatmul.bf16.gmra.mxu0 %v705
  %v1942 = vpop.f32.mrf.mxu0
  %v1943 = vadd.f32 %v1855, %v1942
  %v1944 = vpop.f32.mrf.mxu0
  %v1945 = vadd.f32 %v1857, %v1944
  %1946 = vmatmul.bf16.gmra.mxu0 %v713
  %v1947 = vpop.f32.mrf.mxu0
  %v1948 = vadd.f32 %v1860, %v1947
  %v1949 = vpop.f32.mrf.mxu0
  %v1950 = vadd.f32 %v1862, %v1949
  %1951 = vmatmul.bf16.gmra.mxu0 %v721
  %v1952 = vpop.f32.mrf.mxu0
  %v1953 = vadd.f32 %v1865, %v1952
  %v1954 = vpop.f32.mrf.mxu0
  %v1955 = vadd.f32 %v1867, %v1954
  %1956 = vmatmul.bf16.gmra.mxu0 %v729
  %v1957 = vpop.f32.mrf.mxu0
  %v1958 = vadd.f32 %v1870, %v1957
  %v1959 = vpop.f32.mrf.mxu0
  %v1960 = vadd.f32 %v1872, %v1959
  %1961 = vmatmul.bf16.gmra.mxu0 %v737
  %v1962 = vpop.f32.mrf.mxu0
  %v1963 = vadd.f32 %v1875, %v1962
  %v1964 = vpop.f32.mrf.mxu0
  %v1965 = vadd.f32 %v1877, %v1964
  %1966 = vmatmul.bf16.gmra.mxu0 %v745
  %v1967 = vpop.f32.mrf.mxu0
  %v1968 = vadd.f32 %v1880, %v1967
  %v1969 = vpop.f32.mrf.mxu0
  %v1970 = vadd.f32 %v1882, %v1969
  %1971 = vmatmul.bf16.gmra.mxu0 %v753
  %v1972 = vpop.f32.mrf.mxu0
  %v1973 = vadd.f32 %v1885, %v1972
  %v1974 = vpop.f32.mrf.mxu0
  %v1975 = vadd.f32 %v1887, %v1974
  %1976 = vmatmul.bf16.gmra.mxu0 %v761
  %v1977 = vpop.f32.mrf.mxu0
  %v1978 = vadd.f32 %v1890, %v1977
  %v1979 = vpop.f32.mrf.mxu0
  %v1980 = vadd.f32 %v1892, %v1979
  %1981 = vmatmul.bf16.gmra.mxu0 %v769
  %v1982 = vpop.f32.mrf.mxu0
  %v1983 = vadd.f32 %v1895, %v1982
  %v1984 = vpop.f32.mrf.mxu0
  %1985 = vdwg.mxu0
  %1986 = vst [vmem:[%s2] sm:$0xff] %v1908
  %1987 = vst [vmem:[%s2 + $0x8] sm:$0xff] %v1910
  %1988 = vst [vmem:[%s2 + $0x10] sm:$0xff] %v1913
  %1989 = vst [vmem:[%s2 + $0x18] sm:$0xff] %v1915
  %1990 = vst [vmem:[%s2 + $0x20] sm:$0xff] %v1918
  %1991 = vst [vmem:[%s2 + $0x28] sm:$0xff] %v1920
  %1992 = vst [vmem:[%s2 + $0x30] sm:$0xff] %v1923
  %1993 = vst [vmem:[%s2 + $0x38] sm:$0xff] %v1925
  %1994 = vst [vmem:[%s2 + $0x40] sm:$0xff] %v1928
  %1995 = vst [vmem:[%s2 + $0x48] sm:$0xff] %v1930
  %1996 = vst [vmem:[%s2 + $0x50] sm:$0xff] %v1933
  %1997 = vst [vmem:[%s2 + $0x58] sm:$0xff] %v1935
  %1998 = vst [vmem:[%s2 + $0x60] sm:$0xff] %v1938
  %1999 = vst [vmem:[%s2 + $0x68] sm:$0xff] %v1940
  %2000 = vst [vmem:[%s2 + $0x70] sm:$0xff] %v1943
  %2001 = vst [vmem:[%s2 + $0x78] sm:$0xff] %v1945
  %2002 = vst [vmem:[%s2 + $0x80] sm:$0xff] %v1948
  %2003 = vst [vmem:[%s2 + $0x88] sm:$0xff] %v1950
  %2004 = vst [vmem:[%s2 + $0x90] sm:$0xff] %v1953
  %2005 = vst [vmem:[%s2 + $0x98] sm:$0xff] %v1955
  %2006 = vst [vmem:[%s2 + $0xa0] sm:$0xff] %v1958
  %2007 = vst [vmem:[%s2 + $0xa8] sm:$0xff] %v1960
  %2008 = vst [vmem:[%s2 + $0xb0] sm:$0xff] %v1963
  %2009 = vst [vmem:[%s2 + $0xb8] sm:$0xff] %v1965
  %2010 = vst [vmem:[%s2 + $0xc0] sm:$0xff] %v1968
  %2011 = vst [vmem:[%s2 + $0xc8] sm:$0xff] %v1970
  %2012 = vst [vmem:[%s2 + $0xd0] sm:$0xff] %v1973
  %2013 = vst [vmem:[%s2 + $0xd8] sm:$0xff] %v1975
  %2014 = vst [vmem:[%s2 + $0xe0] sm:$0xff] %v1978
  %2015 = vst [vmem:[%s2 + $0xe8] sm:$0xff] %v1980
  %2016 = vst [vmem:[%s2 + $0xf0] sm:$0xff] %v1983
  %v2017 = vld [vmem:[%s3] sm:$0x1]
  %v2018 = vadd.f32 %v1908, %v1910
  %v2019 = vadd.f32 %v2018, %v1913
  %v2020 = vadd.f32 %v2019, %v1915
  %v2021 = vadd.f32 %v2020, %v1918
  %v2022 = vadd.f32 %v2021, %v1920
  %v2023 = vadd.f32 %v2022, %v1923
  %v2024 = vadd.f32 %v2023, %v1925
  %v2025 = vadd.f32 %v2024, %v1928
  %v2026 = vadd.f32 %v2025, %v1930
  %v2027 = vadd.f32 %v2026, %v1933
  %v2028 = vadd.f32 %v2027, %v1935
  %v2029 = vadd.f32 %v2028, %v1938
  %v2030 = vadd.f32 %v2029, %v1940
  %v2031 = vadd.f32 %v2030, %v1943
  %v2032 = vadd.f32 %v2031, %v1945
  %v2033 = vadd.f32 %v2032, %v1948
  %v2034 = vadd.f32 %v2033, %v1950
  %v2035 = vadd.f32 %v2034, %v1953
  %v2036 = vadd.f32 %v2035, %v1955
  %v2037 = vadd.f32 %v2036, %v1958
  %v2038 = vadd.f32 %v2037, %v1960
  %v2039 = vadd.f32 %v2038, %v1963
  %v2040 = vadd.f32 %v2039, %v1965
  %v2041 = vadd.f32 %v2040, %v1968
  %v2042 = vadd.f32 %v2041, %v1970
  %v2043 = vadd.f32 %v2042, %v1973
  %v2044 = vadd.f32 %v2043, %v1975
  %v2045 = vadd.f32 %v2044, %v1978
  %v2046 = vadd.f32 %v2045, %v1980
  %v2047 = vadd.f32 %v2046, %v1983
  %v2048 = vrot.slane %v2047, 4
  %v2049 = vadd.f32 %v2047, %v2048
  %v2050 = vrot.slane %v2049, 2
  %v2051 = vadd.f32 %v2049, %v2050
  %v2052 = vrot.slane %v2051, 1
  %v2053 = vadd.f32 %v2051, %v2052
  %v2054 = vadd.f32 %v2017, %v2053
  %2055 = vst [vmem:[%s3] sm:$0x1] %v2054
  %v2056 = vld [vmem:[%s3 + $0x1] sm:$0x1]
  %v2057 = vmul.f32 %v1908, %v1908
  %v2058 = vmul.f32 %v1910, %v1910
  %v2059 = vmul.f32 %v1913, %v1913
  %v2060 = vmul.f32 %v1915, %v1915
  %v2061 = vmul.f32 %v1918, %v1918
  %v2062 = vmul.f32 %v1920, %v1920
  %v2063 = vmul.f32 %v1923, %v1923
  %v2064 = vmul.f32 %v1925, %v1925
  %v2065 = vmul.f32 %v1928, %v1928
  %v2066 = vmul.f32 %v1930, %v1930
  %v2067 = vmul.f32 %v1933, %v1933
  %v2068 = vmul.f32 %v1935, %v1935
  %v2069 = vmul.f32 %v1938, %v1938
  %v2070 = vmul.f32 %v1940, %v1940
  %v2071 = vmul.f32 %v1943, %v1943
  %v2072 = vmul.f32 %v1945, %v1945
  %v2073 = vmul.f32 %v1948, %v1948
  %v2074 = vmul.f32 %v1950, %v1950
  %v2075 = vmul.f32 %v1953, %v1953
  %v2076 = vmul.f32 %v1955, %v1955
  %v2077 = vmul.f32 %v1958, %v1958
  %v2078 = vmul.f32 %v1960, %v1960
  %v2079 = vmul.f32 %v1963, %v1963
  %v2080 = vmul.f32 %v1965, %v1965
  %v2081 = vmul.f32 %v1968, %v1968
  %v2082 = vmul.f32 %v1970, %v1970
  %v2083 = vmul.f32 %v1973, %v1973
  %v2084 = vmul.f32 %v1975, %v1975
  %v2085 = vmul.f32 %v1978, %v1978
  %v2086 = vmul.f32 %v1980, %v1980
  %v2087 = vmul.f32 %v1983, %v1983
  %v2088 = vadd.f32 %v2057, %v2058
  %v2089 = vadd.f32 %v2088, %v2059
  %v2090 = vadd.f32 %v2089, %v2060
  %v2091 = vadd.f32 %v2090, %v2061
  %v2092 = vadd.f32 %v2091, %v2062
  %v2093 = vadd.f32 %v2092, %v2063
  %v2094 = vadd.f32 %v2093, %v2064
  %v2095 = vadd.f32 %v2094, %v2065
  %v2096 = vadd.f32 %v2095, %v2066
  %v2097 = vadd.f32 %v2096, %v2067
  %v2098 = vadd.f32 %v2097, %v2068
  %v2099 = vadd.f32 %v2098, %v2069
  %v2100 = vadd.f32 %v2099, %v2070
  %v2101 = vadd.f32 %v2100, %v2071
  %v2102 = vadd.f32 %v2101, %v2072
  %v2103 = vadd.f32 %v2102, %v2073
  %v2104 = vadd.f32 %v2103, %v2074
  %v2105 = vadd.f32 %v2104, %v2075
  %v2106 = vadd.f32 %v2105, %v2076
  %v2107 = vadd.f32 %v2106, %v2077
  %v2108 = vadd.f32 %v2107, %v2078
  %v2109 = vadd.f32 %v2108, %v2079
  %v2110 = vadd.f32 %v2109, %v2080
  %v2111 = vadd.f32 %v2110, %v2081
  %v2112 = vadd.f32 %v2111, %v2082
  %v2113 = vadd.f32 %v2112, %v2083
  %v2114 = vadd.f32 %v2113, %v2084
  %v2115 = vadd.f32 %v2114, %v2085
  %v2116 = vadd.f32 %v2115, %v2086
  %v2117 = vadd.f32 %v2116, %v2087
  %v2118 = vrot.slane %v2117, 4
  %v2119 = vadd.f32 %v2117, %v2118
  %v2120 = vrot.slane %v2119, 2
  %v2121 = vadd.f32 %v2119, %v2120
  %v2122 = vrot.slane %v2121, 1
  %v2123 = vadd.f32 %v2121, %v2122
  %v2124 = vadd.f32 %v2056, %v2123
  %2125 = vst [vmem:[%s3 + $0x1] sm:$0x1] %v2124
  // Predicated region
  $region14: #{_lambda_.13} parent=0 // pred_check
    _
  $region15: #{_lambda_.13} parent=0 // pred_check_branch
    %2127 = sbr.rel (0) target = $region17
  $region16: #{_lambda_.13} parent=0 // pred_region
    _
  $region17: #{_lambda_.13} parent=0 // pred_fallthru
    _
  // Predicated region
  $region18: #{_lambda_.13} parent=0 // pred_check
    _
  $region19: #{_lambda_.13} parent=0 // pred_check_branch
    %2129 = sbr.rel (0) target = $region21
  $region20: #{_lambda_.13} parent=0 // pred_region
    _
  $region21: #{_lambda_.13} parent=0 // pred_fallthru
    _
  // Predicated region
  $region22: #{_lambda_.13} parent=0 // pred_check
    _
  $region23: #{_lambda_.13} parent=0 // pred_check_branch
    %2131 = sbr.rel (0) target = $region25
  $region24: #{_lambda_.13} parent=0 // pred_region
    _
  $region25: #{_lambda_.13} parent=0 // pred_fallthru
    _
  // Predicated region
  $region26: #{_lambda_.13} parent=0 // pred_check
    _
  $region27: #{_lambda_.13} parent=0 // pred_check_branch
    %2133 = sbr.rel (0) target = $region29
  $region28: #{_lambda_.13} parent=0 // pred_region
    _
  $region29: #{_lambda_.13} parent=0 // pred_fallthru
    _

// kernel: _lambda_.15
$region0: #{_lambda_.15}
  #allocation0 [shape = 'u32[]', space=smem, size = 0x4, offset = 0x4, fixed_abs, tag = 'smem constant byte address 0x4 - core index']
  #allocation1 [shape = 'u32[72,128]{1,0:T(1,128)}', space=vmem, size = 0x9000, scoped, tag = 'internal scratch']
  %s0 = inlined_call_operand.vmem [shape: bf16[200,2048], index: 0, kind: input, shape index: {}]
  %s1 = inlined_call_operand.vmem [shape: bf16[2048,128], index: 1, kind: input, shape index: {}]
  %s2 = inlined_call_operand.vmem [shape: f32[2,128], index: 2, kind: input, shape index: {}]
  %s3 = inlined_call_operand.vmem [shape: f32[200,128], index: 3, kind: output, shape index: {}]
  %s4 = sld [smem:[#allocation0]]
  $region22: #{_lambda_.15} parent=0
    _
  %s6 = ssub.s32 1, %s4
  %s7 = scalar_select 0, %s6, %s4
  // Predicated region
  $region2: #{_lambda_.15} parent=0 // pred_check
    _
  $region3: #{_lambda_.15} parent=0 // pred_check_branch
    %9 = sbr.rel (0) target = $region5
  $region4: #{_lambda_.15} parent=0 // pred_region
    _
  $region5: #{_lambda_.15} parent=0 // pred_fallthru
    _
  // Predicated region
  $region6: #{_lambda_.15} parent=0 // pred_check
    _
  $region7: #{_lambda_.15} parent=0 // pred_check_branch
    %11 = sbr.rel (0) target = $region9
  $region8: #{_lambda_.15} parent=0 // pred_region
    _
  $region9: #{_lambda_.15} parent=0 // pred_fallthru
    _
  // Predicated region
  $region10: #{_lambda_.15} parent=0 // pred_check
    _
  $region11: #{_lambda_.15} parent=0 // pred_check_branch
    %13 = sbr.rel (0) target = $region13
  $region12: #{_lambda_.15} parent=0 // pred_region
    _
  $region13: #{_lambda_.15} parent=0 // pred_fallthru
    _
  %v14 = vld [vmem:[%s0] sm:$0xff]
  %v15 = vld [vmem:[%s0 + $0x8] sm:$0xff]
  %v16 = vld [vmem:[%s0 + $0x10] sm:$0xff]
  %v17 = vld [vmem:[%s0 + $0x18] sm:$0xff]
  %v18 = vld [vmem:[%s0 + $0x20] sm:$0xff]
  %v19 = vld [vmem:[%s0 + $0x28] sm:$0xff]
  %v20 = vld [vmem:[%s0 + $0x30] sm:$0xff]
  %v21 = vld [vmem:[%s0 + $0x38] sm:$0xff]
  %v22 = vld [vmem:[%s0 + $0x40] sm:$0xff]
  %v23 = vld [vmem:[%s0 + $0x48] sm:$0xff]
  %v24 = vld [vmem:[%s0 + $0x50] sm:$0xff]
  %v25 = vld [vmem:[%s0 + $0x58] sm:$0xff]
  %v26 = vld [vmem:[%s0 + $0x60] sm:$0xff]
  %v27 = vld [vmem:[%s0 + $0x68] sm:$0xff]
  %v28 = vld [vmem:[%s0 + $0x70] sm:$0xff]
  %v29 = vld [vmem:[%s0 + $0x78] sm:$0xff]
  %v30 = vld [vmem:[%s0 + $0x80] sm:$0xff]
  %v31 = vld [vmem:[%s0 + $0x88] sm:$0xff]
  %v32 = vld [vmem:[%s0 + $0x90] sm:$0xff]
  %v33 = vld [vmem:[%s0 + $0x98] sm:$0xff]
  %v34 = vld [vmem:[%s0 + $0xa0] sm:$0xff]
  %v35 = vld [vmem:[%s0 + $0xa8] sm:$0xff]
  %v36 = vld [vmem:[%s0 + $0xb0] sm:$0xff]
  %v37 = vld [vmem:[%s0 + $0xb8] sm:$0xff]
  %v38 = vld [vmem:[%s0 + $0xc0] sm:$0xff]
  %v39 = vld [vmem:[%s0 + $0xc8] sm:$0xff]
  %v40 = vld [vmem:[%s0 + $0xd0] sm:$0xff]
  %v41 = vld [vmem:[%s0 + $0xd8] sm:$0xff]
  %v42 = vld [vmem:[%s0 + $0xe0] sm:$0xff]
  %v43 = vld [vmem:[%s0 + $0xe8] sm:$0xff]
  %v44 = vld [vmem:[%s0 + $0xf0] sm:$0xff]
  %v45 = vld [vmem:[%s0 + $0xf8] sm:$0xff]
  %v46 = vld [vmem:[%s0 + $0x100] sm:$0xff]
  %v47 = vld [vmem:[%s0 + $0x108] sm:$0xff]
  %v48 = vld [vmem:[%s0 + $0x110] sm:$0xff]
  %v49 = vld [vmem:[%s0 + $0x118] sm:$0xff]
  %v50 = vld [vmem:[%s0 + $0x120] sm:$0xff]
  %v51 = vld [vmem:[%s0 + $0x128] sm:$0xff]
  %v52 = vld [vmem:[%s0 + $0x130] sm:$0xff]
  %v53 = vld [vmem:[%s0 + $0x138] sm:$0xff]
  %v54 = vld [vmem:[%s0 + $0x140] sm:$0xff]
  %v55 = vld [vmem:[%s0 + $0x148] sm:$0xff]
  %v56 = vld [vmem:[%s0 + $0x150] sm:$0xff]
  %v57 = vld [vmem:[%s0 + $0x158] sm:$0xff]
  %v58 = vld [vmem:[%s0 + $0x160] sm:$0xff]
  %v59 = vld [vmem:[%s0 + $0x168] sm:$0xff]
  %v60 = vld [vmem:[%s0 + $0x170] sm:$0xff]
  %v61 = vld [vmem:[%s0 + $0x178] sm:$0xff]
  %v62 = vld [vmem:[%s0 + $0x180] sm:$0xff]
  %v63 = vld [vmem:[%s0 + $0x188] sm:$0xff]
  %v64 = vld [vmem:[%s0 + $0x190] sm:$0xff]
  %v65 = vld [vmem:[%s0 + $0x198] sm:$0xff]
  %v66 = vld [vmem:[%s0 + $0x1a0] sm:$0xff]
  %v67 = vld [vmem:[%s0 + $0x1a8] sm:$0xff]
  %v68 = vld [vmem:[%s0 + $0x1b0] sm:$0xff]
  %v69 = vld [vmem:[%s0 + $0x1b8] sm:$0xff]
  %v70 = vld [vmem:[%s0 + $0x1c0] sm:$0xff]
  %v71 = vld [vmem:[%s0 + $0x1c8] sm:$0xff]
  %v72 = vld [vmem:[%s0 + $0x1d0] sm:$0xff]
  %v73 = vld [vmem:[%s0 + $0x1d8] sm:$0xff]
  %v74 = vld [vmem:[%s0 + $0x1e0] sm:$0xff]
  %v75 = vld [vmem:[%s0 + $0x1e8] sm:$0xff]
  %v76 = vld [vmem:[%s0 + $0x1f0] sm:$0xff]
  %v77 = vld [vmem:[%s0 + $0x1f8] sm:$0xff]
  %v78 = vld [vmem:[%s0 + $0x200] sm:$0xff]
  %v79 = vld [vmem:[%s0 + $0x208] sm:$0xff]
  %v80 = vld [vmem:[%s0 + $0x210] sm:$0xff]
  %v81 = vld [vmem:[%s0 + $0x218] sm:$0xff]
  %v82 = vld [vmem:[%s0 + $0x220] sm:$0xff]
  %v83 = vld [vmem:[%s0 + $0x228] sm:$0xff]
  %v84 = vld [vmem:[%s0 + $0x230] sm:$0xff]
  %v85 = vld [vmem:[%s0 + $0x238] sm:$0xff]
  %v86 = vld [vmem:[%s0 + $0x240] sm:$0xff]
  %v87 = vld [vmem:[%s0 + $0x248] sm:$0xff]
  %v88 = vld [vmem:[%s0 + $0x250] sm:$0xff]
  %v89 = vld [vmem:[%s0 + $0x258] sm:$0xff]
  %v90 = vld [vmem:[%s0 + $0x260] sm:$0xff]
  %v91 = vld [vmem:[%s0 + $0x268] sm:$0xff]
  %v92 = vld [vmem:[%s0 + $0x270] sm:$0xff]
  %v93 = vld [vmem:[%s0 + $0x278] sm:$0xff]
  %v94 = vld [vmem:[%s0 + $0x280] sm:$0xff]
  %v95 = vld [vmem:[%s0 + $0x288] sm:$0xff]
  %v96 = vld [vmem:[%s0 + $0x290] sm:$0xff]
  %v97 = vld [vmem:[%s0 + $0x298] sm:$0xff]
  %v98 = vld [vmem:[%s0 + $0x2a0] sm:$0xff]
  %v99 = vld [vmem:[%s0 + $0x2a8] sm:$0xff]
  %v100 = vld [vmem:[%s0 + $0x2b0] sm:$0xff]
  %v101 = vld [vmem:[%s0 + $0x2b8] sm:$0xff]
  %v102 = vld [vmem:[%s0 + $0x2c0] sm:$0xff]
  %v103 = vld [vmem:[%s0 + $0x2c8] sm:$0xff]
  %v104 = vld [vmem:[%s0 + $0x2d0] sm:$0xff]
  %v105 = vld [vmem:[%s0 + $0x2d8] sm:$0xff]
  %v106 = vld [vmem:[%s0 + $0x2e0] sm:$0xff]
  %v107 = vld [vmem:[%s0 + $0x2e8] sm:$0xff]
  %v108 = vld [vmem:[%s0 + $0x2f0] sm:$0xff]
  %v109 = vld [vmem:[%s0 + $0x2f8] sm:$0xff]
  %v110 = vld [vmem:[%s0 + $0x300] sm:$0xff]
  %v111 = vld [vmem:[%s0 + $0x308] sm:$0xff]
  %v112 = vld [vmem:[%s0 + $0x310] sm:$0xff]
  %v113 = vld [vmem:[%s0 + $0x318] sm:$0xff]
  %v114 = vld [vmem:[%s0 + $0x320] sm:$0xff]
  %v115 = vld [vmem:[%s0 + $0x328] sm:$0xff]
  %v116 = vld [vmem:[%s0 + $0x330] sm:$0xff]
  %v117 = vld [vmem:[%s0 + $0x338] sm:$0xff]
  %v118 = vld [vmem:[%s0 + $0x340] sm:$0xff]
  %v119 = vld [vmem:[%s0 + $0x348] sm:$0xff]
  %v120 = vld [vmem:[%s0 + $0x350] sm:$0xff]
  %v121 = vld [vmem:[%s0 + $0x358] sm:$0xff]
  %v122 = vld [vmem:[%s0 + $0x360] sm:$0xff]
  %v123 = vld [vmem:[%s0 + $0x368] sm:$0xff]
  %v124 = vld [vmem:[%s0 + $0x370] sm:$0xff]
  %v125 = vld [vmem:[%s0 + $0x378] sm:$0xff]
  %v126 = vld [vmem:[%s0 + $0x380] sm:$0xff]
  %v127 = vld [vmem:[%s0 + $0x388] sm:$0xff]
  %v128 = vld [vmem:[%s0 + $0x390] sm:$0xff]
  %v129 = vld [vmem:[%s0 + $0x398] sm:$0xff]
  %v130 = vld [vmem:[%s0 + $0x3a0] sm:$0xff]
  %v131 = vld [vmem:[%s0 + $0x3a8] sm:$0xff]
  %v132 = vld [vmem:[%s0 + $0x3b0] sm:$0xff]
  %v133 = vld [vmem:[%s0 + $0x3b8] sm:$0xff]
  %v134 = vld [vmem:[%s0 + $0x3c0] sm:$0xff]
  %v135 = vld [vmem:[%s0 + $0x3c8] sm:$0xff]
  %v136 = vld [vmem:[%s0 + $0x3d0] sm:$0xff]
  %v137 = vld [vmem:[%s0 + $0x3d8] sm:$0xff]
  %v138 = vld [vmem:[%s0 + $0x3e0] sm:$0xff]
  %v139 = vld [vmem:[%s0 + $0x3e8] sm:$0xff]
  %v140 = vld [vmem:[%s0 + $0x3f0] sm:$0xff]
  %v141 = vld [vmem:[%s0 + $0x3f8] sm:$0xff]
  %v142 = vld [vmem:[%s0 + $0x400] sm:$0xff]
  %v143 = vld [vmem:[%s0 + $0x408] sm:$0xff]
  %v144 = vld [vmem:[%s0 + $0x410] sm:$0xff]
  %v145 = vld [vmem:[%s0 + $0x418] sm:$0xff]
  %v146 = vld [vmem:[%s0 + $0x420] sm:$0xff]
  %v147 = vld [vmem:[%s0 + $0x428] sm:$0xff]
  %v148 = vld [vmem:[%s0 + $0x430] sm:$0xff]
  %v149 = vld [vmem:[%s0 + $0x438] sm:$0xff]
  %v150 = vld [vmem:[%s0 + $0x440] sm:$0xff]
  %v151 = vld [vmem:[%s0 + $0x448] sm:$0xff]
  %v152 = vld [vmem:[%s0 + $0x450] sm:$0xff]
  %v153 = vld [vmem:[%s0 + $0x458] sm:$0xff]
  %v154 = vld [vmem:[%s0 + $0x460] sm:$0xff]
  %v155 = vld [vmem:[%s0 + $0x468] sm:$0xff]
  %v156 = vld [vmem:[%s0 + $0x470] sm:$0xff]
  %v157 = vld [vmem:[%s0 + $0x478] sm:$0xff]
  %v158 = vld [vmem:[%s0 + $0x480] sm:$0xff]
  %v159 = vld [vmem:[%s0 + $0x488] sm:$0xff]
  %v160 = vld [vmem:[%s0 + $0x490] sm:$0xff]
  %v161 = vld [vmem:[%s0 + $0x498] sm:$0xff]
  %v162 = vld [vmem:[%s0 + $0x4a0] sm:$0xff]
  %v163 = vld [vmem:[%s0 + $0x4a8] sm:$0xff]
  %v164 = vld [vmem:[%s0 + $0x4b0] sm:$0xff]
  %v165 = vld [vmem:[%s0 + $0x4b8] sm:$0xff]
  %v166 = vld [vmem:[%s0 + $0x4c0] sm:$0xff]
  %v167 = vld [vmem:[%s0 + $0x4c8] sm:$0xff]
  %v168 = vld [vmem:[%s0 + $0x4d0] sm:$0xff]
  %v169 = vld [vmem:[%s0 + $0x4d8] sm:$0xff]
  %v170 = vld [vmem:[%s0 + $0x4e0] sm:$0xff]
  %v171 = vld [vmem:[%s0 + $0x4e8] sm:$0xff]
  %v172 = vld [vmem:[%s0 + $0x4f0] sm:$0xff]
  %v173 = vld [vmem:[%s0 + $0x4f8] sm:$0xff]
  %v174 = vld [vmem:[%s0 + $0x500] sm:$0xff]
  %v175 = vld [vmem:[%s0 + $0x508] sm:$0xff]
  %v176 = vld [vmem:[%s0 + $0x510] sm:$0xff]
  %v177 = vld [vmem:[%s0 + $0x518] sm:$0xff]
  %v178 = vld [vmem:[%s0 + $0x520] sm:$0xff]
  %v179 = vld [vmem:[%s0 + $0x528] sm:$0xff]
  %v180 = vld [vmem:[%s0 + $0x530] sm:$0xff]
  %v181 = vld [vmem:[%s0 + $0x538] sm:$0xff]
  %v182 = vld [vmem:[%s0 + $0x540] sm:$0xff]
  %v183 = vld [vmem:[%s0 + $0x548] sm:$0xff]
  %v184 = vld [vmem:[%s0 + $0x550] sm:$0xff]
  %v185 = vld [vmem:[%s0 + $0x558] sm:$0xff]
  %v186 = vld [vmem:[%s0 + $0x560] sm:$0xff]
  %v187 = vld [vmem:[%s0 + $0x568] sm:$0xff]
  %v188 = vld [vmem:[%s0 + $0x570] sm:$0xff]
  %v189 = vld [vmem:[%s0 + $0x578] sm:$0xff]
  %v190 = vld [vmem:[%s0 + $0x580] sm:$0xff]
  %v191 = vld [vmem:[%s0 + $0x588] sm:$0xff]
  %v192 = vld [vmem:[%s0 + $0x590] sm:$0xff]
  %v193 = vld [vmem:[%s0 + $0x598] sm:$0xff]
  %v194 = vld [vmem:[%s0 + $0x5a0] sm:$0xff]
  %v195 = vld [vmem:[%s0 + $0x5a8] sm:$0xff]
  %v196 = vld [vmem:[%s0 + $0x5b0] sm:$0xff]
  %v197 = vld [vmem:[%s0 + $0x5b8] sm:$0xff]
  %v198 = vld [vmem:[%s0 + $0x5c0] sm:$0xff]
  %v199 = vld [vmem:[%s0 + $0x5c8] sm:$0xff]
  %v200 = vld [vmem:[%s0 + $0x5d0] sm:$0xff]
  %v201 = vld [vmem:[%s0 + $0x5d8] sm:$0xff]
  %v202 = vld [vmem:[%s0 + $0x5e0] sm:$0xff]
  %v203 = vld [vmem:[%s0 + $0x5e8] sm:$0xff]
  %v204 = vld [vmem:[%s0 + $0x5f0] sm:$0xff]
  %v205 = vld [vmem:[%s0 + $0x5f8] sm:$0xff]
  %v206 = vld [vmem:[%s0 + $0x600] sm:$0xff]
  %v207 = vld [vmem:[%s0 + $0x608] sm:$0xff]
  %v208 = vld [vmem:[%s0 + $0x610] sm:$0xff]
  %v209 = vld [vmem:[%s0 + $0x618] sm:$0xff]
  %v210 = vld [vmem:[%s0 + $0x620] sm:$0xff]
  %v211 = vld [vmem:[%s0 + $0x628] sm:$0xff]
  %v212 = vld [vmem:[%s0 + $0x630] sm:$0xff]
  %v213 = vld [vmem:[%s0 + $0x638] sm:$0xff]
  %v214 = vld [vmem:[%s1] sm:$0xf]
  %v215 = vld [vmem:[%s1 + $0x4] sm:$0xf]
  %v216 = vld [vmem:[%s1 + $0x8] sm:$0xf]
  %v217 = vld [vmem:[%s1 + $0xc] sm:$0xf]
  %v218 = vld [vmem:[%s1 + $0x10] sm:$0xf]
  %v219 = vld [vmem:[%s1 + $0x14] sm:$0xf]
  %v220 = vld [vmem:[%s1 + $0x18] sm:$0xf]
  %v221 = vld [vmem:[%s1 + $0x1c] sm:$0xf]
  %v222 = vld [vmem:[%s1 + $0x20] sm:$0xf]
  %v223 = vld [vmem:[%s1 + $0x24] sm:$0xf]
  %v224 = vld [vmem:[%s1 + $0x28] sm:$0xf]
  %v225 = vld [vmem:[%s1 + $0x2c] sm:$0xf]
  %v226 = vld [vmem:[%s1 + $0x30] sm:$0xf]
  %v227 = vld [vmem:[%s1 + $0x34] sm:$0xf]
  %v228 = vld [vmem:[%s1 + $0x38] sm:$0xf]
  %v229 = vld [vmem:[%s1 + $0x3c] sm:$0xf]
  %v230 = vld [vmem:[%s1 + $0x40] sm:$0xf]
  %v231 = vld [vmem:[%s1 + $0x44] sm:$0xf]
  %v232 = vld [vmem:[%s1 + $0x48] sm:$0xf]
  %v233 = vld [vmem:[%s1 + $0x4c] sm:$0xf]
  %v234 = vld [vmem:[%s1 + $0x50] sm:$0xf]
  %v235 = vld [vmem:[%s1 + $0x54] sm:$0xf]
  %v236 = vld [vmem:[%s1 + $0x58] sm:$0xf]
  %v237 = vld [vmem:[%s1 + $0x5c] sm:$0xf]
  %v238 = vld [vmem:[%s1 + $0x60] sm:$0xf]
  %v239 = vld [vmem:[%s1 + $0x64] sm:$0xf]
  %v240 = vld [vmem:[%s1 + $0x68] sm:$0xf]
  %v241 = vld [vmem:[%s1 + $0x6c] sm:$0xf]
  %v242 = vld [vmem:[%s1 + $0x70] sm:$0xf]
  %v243 = vld [vmem:[%s1 + $0x74] sm:$0xf]
  %v244 = vld [vmem:[%s1 + $0x78] sm:$0xf]
  %v245 = vld [vmem:[%s1 + $0x7c] sm:$0xf]
  %v246 = vld [vmem:[%s1 + $0x80] sm:$0xf]
  %v247 = vld [vmem:[%s1 + $0x84] sm:$0xf]
  %v248 = vld [vmem:[%s1 + $0x88] sm:$0xf]
  %v249 = vld [vmem:[%s1 + $0x8c] sm:$0xf]
  %v250 = vld [vmem:[%s1 + $0x90] sm:$0xf]
  %v251 = vld [vmem:[%s1 + $0x94] sm:$0xf]
  %v252 = vld [vmem:[%s1 + $0x98] sm:$0xf]
  %v253 = vld [vmem:[%s1 + $0x9c] sm:$0xf]
  %v254 = vld [vmem:[%s1 + $0xa0] sm:$0xf]
  %v255 = vld [vmem:[%s1 + $0xa4] sm:$0xf]
  %v256 = vld [vmem:[%s1 + $0xa8] sm:$0xf]
  %v257 = vld [vmem:[%s1 + $0xac] sm:$0xf]
  %v258 = vld [vmem:[%s1 + $0xb0] sm:$0xf]
  %v259 = vld [vmem:[%s1 + $0xb4] sm:$0xf]
  %v260 = vld [vmem:[%s1 + $0xb8] sm:$0xf]
  %v261 = vld [vmem:[%s1 + $0xbc] sm:$0xf]
  %v262 = vld [vmem:[%s1 + $0xc0] sm:$0xf]
  %v263 = vld [vmem:[%s1 + $0xc4] sm:$0xf]
  %v264 = vld [vmem:[%s1 + $0xc8] sm:$0xf]
  %v265 = vld [vmem:[%s1 + $0xcc] sm:$0xf]
  %v266 = vld [vmem:[%s1 + $0xd0] sm:$0xf]
  %v267 = vld [vmem:[%s1 + $0xd4] sm:$0xf]
  %v268 = vld [vmem:[%s1 + $0xd8] sm:$0xf]
  %v269 = vld [vmem:[%s1 + $0xdc] sm:$0xf]
  %v270 = vld [vmem:[%s1 + $0xe0] sm:$0xf]
  %v271 = vld [vmem:[%s1 + $0xe4] sm:$0xf]
  %v272 = vld [vmem:[%s1 + $0xe8] sm:$0xf]
  %v273 = vld [vmem:[%s1 + $0xec] sm:$0xf]
  %v274 = vld [vmem:[%s1 + $0xf0] sm:$0xf]
  %v275 = vld [vmem:[%s1 + $0xf4] sm:$0xf]
  %v276 = vld [vmem:[%s1 + $0xf8] sm:$0xf]
  %v277 = vld [vmem:[%s1 + $0xfc] sm:$0xf]
  %v278 = vld [vmem:[%s1 + $0x100] sm:$0xf]
  %v279 = vld [vmem:[%s1 + $0x104] sm:$0xf]
  %v280 = vld [vmem:[%s1 + $0x108] sm:$0xf]
  %v281 = vld [vmem:[%s1 + $0x10c] sm:$0xf]
  %v282 = vld [vmem:[%s1 + $0x110] sm:$0xf]
  %v283 = vld [vmem:[%s1 + $0x114] sm:$0xf]
  %v284 = vld [vmem:[%s1 + $0x118] sm:$0xf]
  %v285 = vld [vmem:[%s1 + $0x11c] sm:$0xf]
  %v286 = vld [vmem:[%s1 + $0x120] sm:$0xf]
  %v287 = vld [vmem:[%s1 + $0x124] sm:$0xf]
  %v288 = vld [vmem:[%s1 + $0x128] sm:$0xf]
  %v289 = vld [vmem:[%s1 + $0x12c] sm:$0xf]
  %v290 = vld [vmem:[%s1 + $0x130] sm:$0xf]
  %v291 = vld [vmem:[%s1 + $0x134] sm:$0xf]
  %v292 = vld [vmem:[%s1 + $0x138] sm:$0xf]
  %v293 = vld [vmem:[%s1 + $0x13c] sm:$0xf]
  %v294 = vld [vmem:[%s1 + $0x140] sm:$0xf]
  %v295 = vld [vmem:[%s1 + $0x144] sm:$0xf]
  %v296 = vld [vmem:[%s1 + $0x148] sm:$0xf]
  %v297 = vld [vmem:[%s1 + $0x14c] sm:$0xf]
  %v298 = vld [vmem:[%s1 + $0x150] sm:$0xf]
  %v299 = vld [vmem:[%s1 + $0x154] sm:$0xf]
  %v300 = vld [vmem:[%s1 + $0x158] sm:$0xf]
  %v301 = vld [vmem:[%s1 + $0x15c] sm:$0xf]
  %v302 = vld [vmem:[%s1 + $0x160] sm:$0xf]
  %v303 = vld [vmem:[%s1 + $0x164] sm:$0xf]
  %v304 = vld [vmem:[%s1 + $0x168] sm:$0xf]
  %v305 = vld [vmem:[%s1 + $0x16c] sm:$0xf]
  %v306 = vld [vmem:[%s1 + $0x170] sm:$0xf]
  %v307 = vld [vmem:[%s1 + $0x174] sm:$0xf]
  %v308 = vld [vmem:[%s1 + $0x178] sm:$0xf]
  %v309 = vld [vmem:[%s1 + $0x17c] sm:$0xf]
  %v310 = vld [vmem:[%s1 + $0x180] sm:$0xf]
  %v311 = vld [vmem:[%s1 + $0x184] sm:$0xf]
  %v312 = vld [vmem:[%s1 + $0x188] sm:$0xf]
  %v313 = vld [vmem:[%s1 + $0x18c] sm:$0xf]
  %v314 = vld [vmem:[%s1 + $0x190] sm:$0xf]
  %v315 = vld [vmem:[%s1 + $0x194] sm:$0xf]
  %v316 = vld [vmem:[%s1 + $0x198] sm:$0xf]
  %v317 = vld [vmem:[%s1 + $0x19c] sm:$0xf]
  %v318 = vld [vmem:[%s1 + $0x1a0] sm:$0xf]
  %v319 = vld [vmem:[%s1 + $0x1a4] sm:$0xf]
  %v320 = vld [vmem:[%s1 + $0x1a8] sm:$0xf]
  %v321 = vld [vmem:[%s1 + $0x1ac] sm:$0xf]
  %v322 = vld [vmem:[%s1 + $0x1b0] sm:$0xf]
  %v323 = vld [vmem:[%s1 + $0x1b4] sm:$0xf]
  %v324 = vld [vmem:[%s1 + $0x1b8] sm:$0xf]
  %v325 = vld [vmem:[%s1 + $0x1bc] sm:$0xf]
  %v326 = vld [vmem:[%s1 + $0x1c0] sm:$0xf]
  %v327 = vld [vmem:[%s1 + $0x1c4] sm:$0xf]
  %v328 = vld [vmem:[%s1 + $0x1c8] sm:$0xf]
  %v329 = vld [vmem:[%s1 + $0x1cc] sm:$0xf]
  %v330 = vld [vmem:[%s1 + $0x1d0] sm:$0xf]
  %v331 = vld [vmem:[%s1 + $0x1d4] sm:$0xf]
  %v332 = vld [vmem:[%s1 + $0x1d8] sm:$0xf]
  %v333 = vld [vmem:[%s1 + $0x1dc] sm:$0xf]
  %v334 = vld [vmem:[%s1 + $0x1e0] sm:$0xf]
  %v335 = vld [vmem:[%s1 + $0x1e4] sm:$0xf]
  %v336 = vld [vmem:[%s1 + $0x1e8] sm:$0xf]
  %v337 = vld [vmem:[%s1 + $0x1ec] sm:$0xf]
  %v338 = vld [vmem:[%s1 + $0x1f0] sm:$0xf]
  %v339 = vld [vmem:[%s1 + $0x1f4] sm:$0xf]
  %v340 = vld [vmem:[%s1 + $0x1f8] sm:$0xf]
  %v341 = vld [vmem:[%s1 + $0x1fc] sm:$0xf]
  %v342 = vld [vmem:[%s1 + $0x200] sm:$0xf]
  %v343 = vld [vmem:[%s1 + $0x204] sm:$0xf]
  %v344 = vld [vmem:[%s1 + $0x208] sm:$0xf]
  %v345 = vld [vmem:[%s1 + $0x20c] sm:$0xf]
  %v346 = vld [vmem:[%s1 + $0x210] sm:$0xf]
  %v347 = vld [vmem:[%s1 + $0x214] sm:$0xf]
  %v348 = vld [vmem:[%s1 + $0x218] sm:$0xf]
  %v349 = vld [vmem:[%s1 + $0x21c] sm:$0xf]
  %v350 = vld [vmem:[%s1 + $0x220] sm:$0xf]
  %v351 = vld [vmem:[%s1 + $0x224] sm:$0xf]
  %v352 = vld [vmem:[%s1 + $0x228] sm:$0xf]
  %v353 = vld [vmem:[%s1 + $0x22c] sm:$0xf]
  %v354 = vld [vmem:[%s1 + $0x230] sm:$0xf]
  %v355 = vld [vmem:[%s1 + $0x234] sm:$0xf]
  %v356 = vld [vmem:[%s1 + $0x238] sm:$0xf]
  %v357 = vld [vmem:[%s1 + $0x23c] sm:$0xf]
  %v358 = vld [vmem:[%s1 + $0x240] sm:$0xf]
  %v359 = vld [vmem:[%s1 + $0x244] sm:$0xf]
  %v360 = vld [vmem:[%s1 + $0x248] sm:$0xf]
  %v361 = vld [vmem:[%s1 + $0x24c] sm:$0xf]
  %v362 = vld [vmem:[%s1 + $0x250] sm:$0xf]
  %v363 = vld [vmem:[%s1 + $0x254] sm:$0xf]
  %v364 = vld [vmem:[%s1 + $0x258] sm:$0xf]
  %v365 = vld [vmem:[%s1 + $0x25c] sm:$0xf]
  %v366 = vld [vmem:[%s1 + $0x260] sm:$0xf]
  %v367 = vld [vmem:[%s1 + $0x264] sm:$0xf]
  %v368 = vld [vmem:[%s1 + $0x268] sm:$0xf]
  %v369 = vld [vmem:[%s1 + $0x26c] sm:$0xf]
  %v370 = vld [vmem:[%s1 + $0x270] sm:$0xf]
  %v371 = vld [vmem:[%s1 + $0x274] sm:$0xf]
  %v372 = vld [vmem:[%s1 + $0x278] sm:$0xf]
  %v373 = vld [vmem:[%s1 + $0x27c] sm:$0xf]
  %v374 = vld [vmem:[%s1 + $0x280] sm:$0xf]
  %v375 = vld [vmem:[%s1 + $0x284] sm:$0xf]
  %v376 = vld [vmem:[%s1 + $0x288] sm:$0xf]
  %v377 = vld [vmem:[%s1 + $0x28c] sm:$0xf]
  %v378 = vld [vmem:[%s1 + $0x290] sm:$0xf]
  %v379 = vld [vmem:[%s1 + $0x294] sm:$0xf]
  %v380 = vld [vmem:[%s1 + $0x298] sm:$0xf]
  %v381 = vld [vmem:[%s1 + $0x29c] sm:$0xf]
  %v382 = vld [vmem:[%s1 + $0x2a0] sm:$0xf]
  %v383 = vld [vmem:[%s1 + $0x2a4] sm:$0xf]
  %v384 = vld [vmem:[%s1 + $0x2a8] sm:$0xf]
  %v385 = vld [vmem:[%s1 + $0x2ac] sm:$0xf]
  %v386 = vld [vmem:[%s1 + $0x2b0] sm:$0xf]
  %v387 = vld [vmem:[%s1 + $0x2b4] sm:$0xf]
  %v388 = vld [vmem:[%s1 + $0x2b8] sm:$0xf]
  %v389 = vld [vmem:[%s1 + $0x2bc] sm:$0xf]
  %v390 = vld [vmem:[%s1 + $0x2c0] sm:$0xf]
  %v391 = vld [vmem:[%s1 + $0x2c4] sm:$0xf]
  %v392 = vld [vmem:[%s1 + $0x2c8] sm:$0xf]
  %v393 = vld [vmem:[%s1 + $0x2cc] sm:$0xf]
  %v394 = vld [vmem:[%s1 + $0x2d0] sm:$0xf]
  %v395 = vld [vmem:[%s1 + $0x2d4] sm:$0xf]
  %v396 = vld [vmem:[%s1 + $0x2d8] sm:$0xf]
  %v397 = vld [vmem:[%s1 + $0x2dc] sm:$0xf]
  %v398 = vld [vmem:[%s1 + $0x2e0] sm:$0xf]
  %v399 = vld [vmem:[%s1 + $0x2e4] sm:$0xf]
  %v400 = vld [vmem:[%s1 + $0x2e8] sm:$0xf]
  %v401 = vld [vmem:[%s1 + $0x2ec] sm:$0xf]
  %v402 = vld [vmem:[%s1 + $0x2f0] sm:$0xf]
  %v403 = vld [vmem:[%s1 + $0x2f4] sm:$0xf]
  %v404 = vld [vmem:[%s1 + $0x2f8] sm:$0xf]
  %v405 = vld [vmem:[%s1 + $0x2fc] sm:$0xf]
  %v406 = vld [vmem:[%s1 + $0x300] sm:$0xf]
  %v407 = vld [vmem:[%s1 + $0x304] sm:$0xf]
  %v408 = vld [vmem:[%s1 + $0x308] sm:$0xf]
  %v409 = vld [vmem:[%s1 + $0x30c] sm:$0xf]
  %v410 = vld [vmem:[%s1 + $0x310] sm:$0xf]
  %v411 = vld [vmem:[%s1 + $0x314] sm:$0xf]
  %v412 = vld [vmem:[%s1 + $0x318] sm:$0xf]
  %v413 = vld [vmem:[%s1 + $0x31c] sm:$0xf]
  %v414 = vld [vmem:[%s1 + $0x320] sm:$0xf]
  %v415 = vld [vmem:[%s1 + $0x324] sm:$0xf]
  %v416 = vld [vmem:[%s1 + $0x328] sm:$0xf]
  %v417 = vld [vmem:[%s1 + $0x32c] sm:$0xf]
  %v418 = vld [vmem:[%s1 + $0x330] sm:$0xf]
  %v419 = vld [vmem:[%s1 + $0x334] sm:$0xf]
  %v420 = vld [vmem:[%s1 + $0x338] sm:$0xf]
  %v421 = vld [vmem:[%s1 + $0x33c] sm:$0xf]
  %v422 = vld [vmem:[%s1 + $0x340] sm:$0xf]
  %v423 = vld [vmem:[%s1 + $0x344] sm:$0xf]
  %v424 = vld [vmem:[%s1 + $0x348] sm:$0xf]
  %v425 = vld [vmem:[%s1 + $0x34c] sm:$0xf]
  %v426 = vld [vmem:[%s1 + $0x350] sm:$0xf]
  %v427 = vld [vmem:[%s1 + $0x354] sm:$0xf]
  %v428 = vld [vmem:[%s1 + $0x358] sm:$0xf]
  %v429 = vld [vmem:[%s1 + $0x35c] sm:$0xf]
  %v430 = vld [vmem:[%s1 + $0x360] sm:$0xf]
  %v431 = vld [vmem:[%s1 + $0x364] sm:$0xf]
  %v432 = vld [vmem:[%s1 + $0x368] sm:$0xf]
  %v433 = vld [vmem:[%s1 + $0x36c] sm:$0xf]
  %v434 = vld [vmem:[%s1 + $0x370] sm:$0xf]
  %v435 = vld [vmem:[%s1 + $0x374] sm:$0xf]
  %v436 = vld [vmem:[%s1 + $0x378] sm:$0xf]
  %v437 = vld [vmem:[%s1 + $0x37c] sm:$0xf]
  %v438 = vld [vmem:[%s1 + $0x380] sm:$0xf]
  %v439 = vld [vmem:[%s1 + $0x384] sm:$0xf]
  %v440 = vld [vmem:[%s1 + $0x388] sm:$0xf]
  %v441 = vld [vmem:[%s1 + $0x38c] sm:$0xf]
  %v442 = vld [vmem:[%s1 + $0x390] sm:$0xf]
  %v443 = vld [vmem:[%s1 + $0x394] sm:$0xf]
  %v444 = vld [vmem:[%s1 + $0x398] sm:$0xf]
  %v445 = vld [vmem:[%s1 + $0x39c] sm:$0xf]
  %v446 = vld [vmem:[%s1 + $0x3a0] sm:$0xf]
  %v447 = vld [vmem:[%s1 + $0x3a4] sm:$0xf]
  %v448 = vld [vmem:[%s1 + $0x3a8] sm:$0xf]
  %v449 = vld [vmem:[%s1 + $0x3ac] sm:$0xf]
  %v450 = vld [vmem:[%s1 + $0x3b0] sm:$0xf]
  %v451 = vld [vmem:[%s1 + $0x3b4] sm:$0xf]
  %v452 = vld [vmem:[%s1 + $0x3b8] sm:$0xf]
  %v453 = vld [vmem:[%s1 + $0x3bc] sm:$0xf]
  %v454 = vld [vmem:[%s1 + $0x3c0] sm:$0xf]
  %v455 = vld [vmem:[%s1 + $0x3c4] sm:$0xf]
  %v456 = vld [vmem:[%s1 + $0x3c8] sm:$0xf]
  %v457 = vld [vmem:[%s1 + $0x3cc] sm:$0xf]
  %v458 = vld [vmem:[%s1 + $0x3d0] sm:$0xf]
  %v459 = vld [vmem:[%s1 + $0x3d4] sm:$0xf]
  %v460 = vld [vmem:[%s1 + $0x3d8] sm:$0xf]
  %v461 = vld [vmem:[%s1 + $0x3dc] sm:$0xf]
  %v462 = vld [vmem:[%s1 + $0x3e0] sm:$0xf]
  %v463 = vld [vmem:[%s1 + $0x3e4] sm:$0xf]
  %v464 = vld [vmem:[%s1 + $0x3e8] sm:$0xf]
  %v465 = vld [vmem:[%s1 + $0x3ec] sm:$0xf]
  %v466 = vld [vmem:[%s1 + $0x3f0] sm:$0xf]
  %v467 = vld [vmem:[%s1 + $0x3f4] sm:$0xf]
  %v468 = vld [vmem:[%s1 + $0x3f8] sm:$0xf]
  %v469 = vld [vmem:[%s1 + $0x3fc] sm:$0xf]
  %v670 = vunpack.c.l.b16 %v14
  %v671 = vunpack.c.h.b16 %v14
  %v672 = vunpack.c.l.b16 %v15
  %v673 = vunpack.c.h.b16 %v15
  %v674 = vunpack.c.l.b16 %v16
  %v675 = vunpack.c.h.b16 %v16
  %v676 = vunpack.c.l.b16 %v17
  %v677 = vunpack.c.h.b16 %v17
  %v678 = vunpack.c.l.b16 %v18
  %v679 = vunpack.c.h.b16 %v18
  %v680 = vunpack.c.l.b16 %v19
  %v681 = vunpack.c.h.b16 %v19
  %v682 = vunpack.c.l.b16 %v20
  %v683 = vunpack.c.h.b16 %v20
  %v684 = vunpack.c.l.b16 %v21
  %v685 = vunpack.c.h.b16 %v21
  %v686 = vunpack.c.l.b16 %v22
  %v687 = vunpack.c.h.b16 %v22
  %v688 = vunpack.c.l.b16 %v23
  %v689 = vunpack.c.h.b16 %v23
  %v690 = vunpack.c.l.b16 %v24
  %v691 = vunpack.c.h.b16 %v24
  %v692 = vunpack.c.l.b16 %v25
  %v693 = vunpack.c.h.b16 %v25
  %v694 = vunpack.c.l.b16 %v26
  %v695 = vunpack.c.h.b16 %v26
  %v696 = vunpack.c.l.b16 %v27
  %v697 = vunpack.c.h.b16 %v27
  %v698 = vunpack.c.l.b16 %v28
  %v699 = vunpack.c.h.b16 %v28
  %v700 = vunpack.c.l.b16 %v29
  %v701 = vunpack.c.h.b16 %v29
  %v702 = vunpack.c.l.b16 %v30
  %v703 = vunpack.c.h.b16 %v30
  %v704 = vunpack.c.l.b16 %v31
  %v705 = vunpack.c.h.b16 %v31
  %v706 = vunpack.c.l.b16 %v32
  %v707 = vunpack.c.h.b16 %v32
  %v708 = vunpack.c.l.b16 %v33
  %v709 = vunpack.c.h.b16 %v33
  %v710 = vunpack.c.l.b16 %v34
  %v711 = vunpack.c.h.b16 %v34
  %v712 = vunpack.c.l.b16 %v35
  %v713 = vunpack.c.h.b16 %v35
  %v714 = vunpack.c.l.b16 %v36
  %v715 = vunpack.c.h.b16 %v36
  %v716 = vunpack.c.l.b16 %v37
  %v717 = vunpack.c.h.b16 %v37
  %v718 = vunpack.c.l.b16 %v38
  %v719 = vunpack.c.h.b16 %v38
  %v720 = vunpack.c.l.b16 %v39
  %v721 = vunpack.c.h.b16 %v39
  %v722 = vunpack.c.l.b16 %v40
  %v723 = vunpack.c.h.b16 %v40
  %v724 = vunpack.c.l.b16 %v41
  %v725 = vunpack.c.h.b16 %v41
  %v726 = vunpack.c.l.b16 %v42
  %v727 = vunpack.c.h.b16 %v42
  %v728 = vunpack.c.l.b16 %v43
  %v729 = vunpack.c.h.b16 %v43
  %v730 = vunpack.c.l.b16 %v44
  %v731 = vunpack.c.h.b16 %v44
  %v732 = vunpack.c.l.b16 %v45
  %v733 = vunpack.c.h.b16 %v45
  %v734 = vunpack.c.l.b16 %v46
  %v735 = vunpack.c.h.b16 %v46
  %v736 = vunpack.c.l.b16 %v47
  %v737 = vunpack.c.h.b16 %v47
  %v738 = vunpack.c.l.b16 %v48
  %v739 = vunpack.c.h.b16 %v48
  %v740 = vunpack.c.l.b16 %v49
  %v741 = vunpack.c.h.b16 %v49
  %v742 = vunpack.c.l.b16 %v50
  %v743 = vunpack.c.h.b16 %v50
  %v744 = vunpack.c.l.b16 %v51
  %v745 = vunpack.c.h.b16 %v51
  %v746 = vunpack.c.l.b16 %v52
  %v747 = vunpack.c.h.b16 %v52
  %v748 = vunpack.c.l.b16 %v53
  %v749 = vunpack.c.h.b16 %v53
  %v750 = vunpack.c.l.b16 %v54
  %v751 = vunpack.c.h.b16 %v54
  %v752 = vunpack.c.l.b16 %v55
  %v753 = vunpack.c.h.b16 %v55
  %v754 = vunpack.c.l.b16 %v56
  %v755 = vunpack.c.h.b16 %v56
  %v756 = vunpack.c.l.b16 %v57
  %v757 = vunpack.c.h.b16 %v57
  %v758 = vunpack.c.l.b16 %v58
  %v759 = vunpack.c.h.b16 %v58
  %v760 = vunpack.c.l.b16 %v59
  %v761 = vunpack.c.h.b16 %v59
  %v762 = vunpack.c.l.b16 %v60
  %v763 = vunpack.c.h.b16 %v60
  %v764 = vunpack.c.l.b16 %v61
  %v765 = vunpack.c.h.b16 %v61
  %v766 = vunpack.c.l.b16 %v62
  %v767 = vunpack.c.h.b16 %v62
  %v768 = vunpack.c.l.b16 %v63
  %v769 = vunpack.c.h.b16 %v63
  %v770 = vunpack.c.l.b16 %v64
  %v771 = vunpack.c.h.b16 %v64
  %v772 = vunpack.c.l.b16 %v65
  %v773 = vunpack.c.h.b16 %v65
  %v774 = vunpack.c.l.b16 %v66
  %v775 = vunpack.c.h.b16 %v66
  %v776 = vunpack.c.l.b16 %v67
  %v777 = vunpack.c.h.b16 %v67
  %v778 = vunpack.c.l.b16 %v68
  %v779 = vunpack.c.h.b16 %v68
  %v780 = vunpack.c.l.b16 %v69
  %v781 = vunpack.c.h.b16 %v69
  %v782 = vunpack.c.l.b16 %v70
  %v783 = vunpack.c.h.b16 %v70
  %v784 = vunpack.c.l.b16 %v71
  %v785 = vunpack.c.h.b16 %v71
  %v786 = vunpack.c.l.b16 %v72
  %v787 = vunpack.c.h.b16 %v72
  %v788 = vunpack.c.l.b16 %v73
  %v789 = vunpack.c.h.b16 %v73
  %v790 = vunpack.c.l.b16 %v74
  %v791 = vunpack.c.h.b16 %v74
  %v792 = vunpack.c.l.b16 %v75
  %v793 = vunpack.c.h.b16 %v75
  %v794 = vunpack.c.l.b16 %v76
  %v795 = vunpack.c.h.b16 %v76
  %v796 = vunpack.c.l.b16 %v77
  %v797 = vunpack.c.h.b16 %v77
  %v798 = vunpack.c.l.b16 %v78
  %v799 = vunpack.c.h.b16 %v78
  %v800 = vunpack.c.l.b16 %v79
  %v801 = vunpack.c.h.b16 %v79
  %v802 = vunpack.c.l.b16 %v80
  %v803 = vunpack.c.h.b16 %v80
  %v804 = vunpack.c.l.b16 %v81
  %v805 = vunpack.c.h.b16 %v81
  %v806 = vunpack.c.l.b16 %v82
  %v807 = vunpack.c.h.b16 %v82
  %v808 = vunpack.c.l.b16 %v83
  %v809 = vunpack.c.h.b16 %v83
  %v810 = vunpack.c.l.b16 %v84
  %v811 = vunpack.c.h.b16 %v84
  %v812 = vunpack.c.l.b16 %v85
  %v813 = vunpack.c.h.b16 %v85
  %v814 = vunpack.c.l.b16 %v86
  %v815 = vunpack.c.h.b16 %v86
  %v816 = vunpack.c.l.b16 %v87
  %v817 = vunpack.c.h.b16 %v87
  %v818 = vunpack.c.l.b16 %v88
  %v819 = vunpack.c.h.b16 %v88
  %v820 = vunpack.c.l.b16 %v89
  %v821 = vunpack.c.h.b16 %v89
  %v822 = vunpack.c.l.b16 %v90
  %v823 = vunpack.c.h.b16 %v90
  %v824 = vunpack.c.l.b16 %v91
  %v825 = vunpack.c.h.b16 %v91
  %v826 = vunpack.c.l.b16 %v92
  %v827 = vunpack.c.h.b16 %v92
  %v828 = vunpack.c.l.b16 %v93
  %v829 = vunpack.c.h.b16 %v93
  %v830 = vunpack.c.l.b16 %v94
  %v831 = vunpack.c.h.b16 %v94
  %v832 = vunpack.c.l.b16 %v95
  %v833 = vunpack.c.h.b16 %v95
  %v834 = vunpack.c.l.b16 %v96
  %v835 = vunpack.c.h.b16 %v96
  %v836 = vunpack.c.l.b16 %v97
  %v837 = vunpack.c.h.b16 %v97
  %v838 = vunpack.c.l.b16 %v98
  %v839 = vunpack.c.h.b16 %v98
  %v840 = vunpack.c.l.b16 %v99
  %v841 = vunpack.c.h.b16 %v99
  %v842 = vunpack.c.l.b16 %v100
  %v843 = vunpack.c.h.b16 %v100
  %v844 = vunpack.c.l.b16 %v101
  %v845 = vunpack.c.h.b16 %v101
  %v846 = vunpack.c.l.b16 %v102
  %v847 = vunpack.c.h.b16 %v102
  %v848 = vunpack.c.l.b16 %v103
  %v849 = vunpack.c.h.b16 %v103
  %v850 = vunpack.c.l.b16 %v104
  %v851 = vunpack.c.h.b16 %v104
  %v852 = vunpack.c.l.b16 %v105
  %v853 = vunpack.c.h.b16 %v105
  %v854 = vunpack.c.l.b16 %v106
  %v855 = vunpack.c.h.b16 %v106
  %v856 = vunpack.c.l.b16 %v107
  %v857 = vunpack.c.h.b16 %v107
  %v858 = vunpack.c.l.b16 %v108
  %v859 = vunpack.c.h.b16 %v108
  %v860 = vunpack.c.l.b16 %v109
  %v861 = vunpack.c.h.b16 %v109
  %v862 = vunpack.c.l.b16 %v110
  %v863 = vunpack.c.h.b16 %v110
  %v864 = vunpack.c.l.b16 %v111
  %v865 = vunpack.c.h.b16 %v111
  %v866 = vunpack.c.l.b16 %v112
  %v867 = vunpack.c.h.b16 %v112
  %v868 = vunpack.c.l.b16 %v113
  %v869 = vunpack.c.h.b16 %v113
  %v870 = vunpack.c.l.b16 %v114
  %v871 = vunpack.c.h.b16 %v114
  %v872 = vunpack.c.l.b16 %v115
  %v873 = vunpack.c.h.b16 %v115
  %v874 = vunpack.c.l.b16 %v116
  %v875 = vunpack.c.h.b16 %v116
  %v876 = vunpack.c.l.b16 %v117
  %v877 = vunpack.c.h.b16 %v117
  %v878 = vunpack.c.l.b16 %v118
  %v879 = vunpack.c.h.b16 %v118
  %v880 = vunpack.c.l.b16 %v119
  %v881 = vunpack.c.h.b16 %v119
  %v882 = vunpack.c.l.b16 %v120
  %v883 = vunpack.c.h.b16 %v120
  %v884 = vunpack.c.l.b16 %v121
  %v885 = vunpack.c.h.b16 %v121
  %v886 = vunpack.c.l.b16 %v122
  %v887 = vunpack.c.h.b16 %v122
  %v888 = vunpack.c.l.b16 %v123
  %v889 = vunpack.c.h.b16 %v123
  %v890 = vunpack.c.l.b16 %v124
  %v891 = vunpack.c.h.b16 %v124
  %v892 = vunpack.c.l.b16 %v125
  %v893 = vunpack.c.h.b16 %v125
  %v894 = vunpack.c.l.b16 %v126
  %v895 = vunpack.c.h.b16 %v126
  %v896 = vunpack.c.l.b16 %v127
  %v897 = vunpack.c.h.b16 %v127
  %v898 = vunpack.c.l.b16 %v128
  %v899 = vunpack.c.h.b16 %v128
  %v900 = vunpack.c.l.b16 %v129
  %v901 = vunpack.c.h.b16 %v129
  %v902 = vunpack.c.l.b16 %v130
  %v903 = vunpack.c.h.b16 %v130
  %v904 = vunpack.c.l.b16 %v131
  %v905 = vunpack.c.h.b16 %v131
  %v906 = vunpack.c.l.b16 %v132
  %v907 = vunpack.c.h.b16 %v132
  %v908 = vunpack.c.l.b16 %v133
  %v909 = vunpack.c.h.b16 %v133
  %v910 = vunpack.c.l.b16 %v134
  %v911 = vunpack.c.h.b16 %v134
  %v912 = vunpack.c.l.b16 %v135
  %v913 = vunpack.c.h.b16 %v135
  %v914 = vunpack.c.l.b16 %v136
  %v915 = vunpack.c.h.b16 %v136
  %v916 = vunpack.c.l.b16 %v137
  %v917 = vunpack.c.h.b16 %v137
  %v918 = vunpack.c.l.b16 %v138
  %v919 = vunpack.c.h.b16 %v138
  %v920 = vunpack.c.l.b16 %v139
  %v921 = vunpack.c.h.b16 %v139
  %v922 = vunpack.c.l.b16 %v140
  %v923 = vunpack.c.h.b16 %v140
  %v924 = vunpack.c.l.b16 %v141
  %v925 = vunpack.c.h.b16 %v141
  %v926 = vunpack.c.l.b16 %v142
  %v927 = vunpack.c.h.b16 %v142
  %v928 = vunpack.c.l.b16 %v143
  %v929 = vunpack.c.h.b16 %v143
  %v930 = vunpack.c.l.b16 %v144
  %v931 = vunpack.c.h.b16 %v144
  %v932 = vunpack.c.l.b16 %v145
  %v933 = vunpack.c.h.b16 %v145
  %v934 = vunpack.c.l.b16 %v146
  %v935 = vunpack.c.h.b16 %v146
  %v936 = vunpack.c.l.b16 %v147
  %v937 = vunpack.c.h.b16 %v147
  %v938 = vunpack.c.l.b16 %v148
  %v939 = vunpack.c.h.b16 %v148
  %v940 = vunpack.c.l.b16 %v149
  %v941 = vunpack.c.h.b16 %v149
  %v942 = vunpack.c.l.b16 %v150
  %v943 = vunpack.c.h.b16 %v150
  %v944 = vunpack.c.l.b16 %v151
  %v945 = vunpack.c.h.b16 %v151
  %v946 = vunpack.c.l.b16 %v152
  %v947 = vunpack.c.h.b16 %v152
  %v948 = vunpack.c.l.b16 %v153
  %v949 = vunpack.c.h.b16 %v153
  %v950 = vunpack.c.l.b16 %v154
  %v951 = vunpack.c.h.b16 %v154
  %v952 = vunpack.c.l.b16 %v155
  %v953 = vunpack.c.h.b16 %v155
  %v954 = vunpack.c.l.b16 %v156
  %v955 = vunpack.c.h.b16 %v156
  %v956 = vunpack.c.l.b16 %v157
  %v957 = vunpack.c.h.b16 %v157
  %v958 = vunpack.c.l.b16 %v158
  %v959 = vunpack.c.h.b16 %v158
  %v960 = vunpack.c.l.b16 %v159
  %v961 = vunpack.c.h.b16 %v159
  %v962 = vunpack.c.l.b16 %v160
  %v963 = vunpack.c.h.b16 %v160
  %v964 = vunpack.c.l.b16 %v161
  %v965 = vunpack.c.h.b16 %v161
  %v966 = vunpack.c.l.b16 %v162
  %v967 = vunpack.c.h.b16 %v162
  %v968 = vunpack.c.l.b16 %v163
  %v969 = vunpack.c.h.b16 %v163
  %v970 = vunpack.c.l.b16 %v164
  %v971 = vunpack.c.h.b16 %v164
  %v972 = vunpack.c.l.b16 %v165
  %v973 = vunpack.c.h.b16 %v165
  %v974 = vunpack.c.l.b16 %v166
  %v975 = vunpack.c.h.b16 %v166
  %v976 = vunpack.c.l.b16 %v167
  %v977 = vunpack.c.h.b16 %v167
  %v978 = vunpack.c.l.b16 %v168
  %v979 = vunpack.c.h.b16 %v168
  %v980 = vunpack.c.l.b16 %v169
  %v981 = vunpack.c.h.b16 %v169
  %v982 = vunpack.c.l.b16 %v170
  %v983 = vunpack.c.h.b16 %v170
  %v984 = vunpack.c.l.b16 %v171
  %v985 = vunpack.c.h.b16 %v171
  %v986 = vunpack.c.l.b16 %v172
  %v987 = vunpack.c.h.b16 %v172
  %v988 = vunpack.c.l.b16 %v173
  %v989 = vunpack.c.h.b16 %v173
  %v990 = vunpack.c.l.b16 %v174
  %v991 = vunpack.c.h.b16 %v174
  %v992 = vunpack.c.l.b16 %v175
  %v993 = vunpack.c.h.b16 %v175
  %v994 = vunpack.c.l.b16 %v176
  %v995 = vunpack.c.h.b16 %v176
  %v996 = vunpack.c.l.b16 %v177
  %v997 = vunpack.c.h.b16 %v177
  %v998 = vunpack.c.l.b16 %v178
  %v999 = vunpack.c.h.b16 %v178
  %v1000 = vunpack.c.l.b16 %v179
  %v1001 = vunpack.c.h.b16 %v179
  %v1002 = vunpack.c.l.b16 %v180
  %v1003 = vunpack.c.h.b16 %v180
  %v1004 = vunpack.c.l.b16 %v181
  %v1005 = vunpack.c.h.b16 %v181
  %v1006 = vunpack.c.l.b16 %v182
  %v1007 = vunpack.c.h.b16 %v182
  %v1008 = vunpack.c.l.b16 %v183
  %v1009 = vunpack.c.h.b16 %v183
  %v1010 = vunpack.c.l.b16 %v184
  %v1011 = vunpack.c.h.b16 %v184
  %v1012 = vunpack.c.l.b16 %v185
  %v1013 = vunpack.c.h.b16 %v185
  %v1014 = vunpack.c.l.b16 %v186
  %v1015 = vunpack.c.h.b16 %v186
  %v1016 = vunpack.c.l.b16 %v187
  %v1017 = vunpack.c.h.b16 %v187
  %v1018 = vunpack.c.l.b16 %v188
  %v1019 = vunpack.c.h.b16 %v188
  %v1020 = vunpack.c.l.b16 %v189
  %v1021 = vunpack.c.h.b16 %v189
  %v1022 = vunpack.c.l.b16 %v190
  %v1023 = vunpack.c.h.b16 %v190
  %v1024 = vunpack.c.l.b16 %v191
  %v1025 = vunpack.c.h.b16 %v191
  %v1026 = vunpack.c.l.b16 %v192
  %v1027 = vunpack.c.h.b16 %v192
  %v1028 = vunpack.c.l.b16 %v193
  %v1029 = vunpack.c.h.b16 %v193
  %v1030 = vunpack.c.l.b16 %v194
  %v1031 = vunpack.c.h.b16 %v194
  %v1032 = vunpack.c.l.b16 %v195
  %v1033 = vunpack.c.h.b16 %v195
  %v1034 = vunpack.c.l.b16 %v196
  %v1035 = vunpack.c.h.b16 %v196
  %v1036 = vunpack.c.l.b16 %v197
  %v1037 = vunpack.c.h.b16 %v197
  %v1038 = vunpack.c.l.b16 %v198
  %v1039 = vunpack.c.h.b16 %v198
  %v1040 = vunpack.c.l.b16 %v199
  %v1041 = vunpack.c.h.b16 %v199
  %v1042 = vunpack.c.l.b16 %v200
  %v1043 = vunpack.c.h.b16 %v200
  %v1044 = vunpack.c.l.b16 %v201
  %v1045 = vunpack.c.h.b16 %v201
  %v1046 = vunpack.c.l.b16 %v202
  %v1047 = vunpack.c.h.b16 %v202
  %v1048 = vunpack.c.l.b16 %v203
  %v1049 = vunpack.c.h.b16 %v203
  %v1050 = vunpack.c.l.b16 %v204
  %v1051 = vunpack.c.h.b16 %v204
  %v1052 = vunpack.c.l.b16 %v205
  %v1053 = vunpack.c.h.b16 %v205
  %v1054 = vunpack.c.l.b16 %v206
  %v1055 = vunpack.c.h.b16 %v206
  %v1056 = vunpack.c.l.b16 %v207
  %v1057 = vunpack.c.h.b16 %v207
  %v1058 = vunpack.c.l.b16 %v208
  %v1059 = vunpack.c.h.b16 %v208
  %v1060 = vunpack.c.l.b16 %v209
  %v1061 = vunpack.c.h.b16 %v209
  %v1062 = vunpack.c.l.b16 %v210
  %v1063 = vunpack.c.h.b16 %v210
  %v1064 = vunpack.c.l.b16 %v211
  %v1065 = vunpack.c.h.b16 %v211
  %v1066 = vunpack.c.l.b16 %v212
  %v1067 = vunpack.c.h.b16 %v212
  %v1068 = vunpack.c.l.b16 %v213
  %v1069 = vunpack.c.h.b16 %v213
  %v1070 = vpack.c.b16 %v686, %v670
  %v1071 = vpack.c.b16 %v687, %v671
  %v1072 = vpack.c.b16 %v688, %v672
  %v1073 = vpack.c.b16 %v689, %v673
  %v1074 = vpack.c.b16 %v690, %v674
  %v1075 = vpack.c.b16 %v691, %v675
  %v1076 = vpack.c.b16 %v692, %v676
  %v1077 = vpack.c.b16 %v693, %v677
  %v1078 = vpack.c.b16 %v694, %v678
  %v1079 = vpack.c.b16 %v695, %v679
  %v1080 = vpack.c.b16 %v696, %v680
  %v1081 = vpack.c.b16 %v697, %v681
  %v1082 = vpack.c.b16 %v698, %v682
  %v1083 = vpack.c.b16 %v699, %v683
  %v1084 = vpack.c.b16 %v700, %v684
  %v1085 = vpack.c.b16 %v701, %v685
  %v1086 = vpack.c.b16 %v718, %v702
  %v1087 = vpack.c.b16 %v719, %v703
  %v1088 = vpack.c.b16 %v720, %v704
  %v1089 = vpack.c.b16 %v721, %v705
  %v1090 = vpack.c.b16 %v722, %v706
  %v1091 = vpack.c.b16 %v723, %v707
  %v1092 = vpack.c.b16 %v724, %v708
  %v1093 = vpack.c.b16 %v725, %v709
  %v1094 = vpack.c.b16 %v726, %v710
  %v1095 = vpack.c.b16 %v727, %v711
  %v1096 = vpack.c.b16 %v728, %v712
  %v1097 = vpack.c.b16 %v729, %v713
  %v1098 = vpack.c.b16 %v730, %v714
  %v1099 = vpack.c.b16 %v731, %v715
  %v1100 = vpack.c.b16 %v732, %v716
  %v1101 = vpack.c.b16 %v733, %v717
  %v1102 = vpack.c.b16 %v750, %v734
  %v1103 = vpack.c.b16 %v751, %v735
  %v1104 = vpack.c.b16 %v752, %v736
  %v1105 = vpack.c.b16 %v753, %v737
  %v1106 = vpack.c.b16 %v754, %v738
  %v1107 = vpack.c.b16 %v755, %v739
  %v1108 = vpack.c.b16 %v756, %v740
  %v1109 = vpack.c.b16 %v757, %v741
  %v1110 = vpack.c.b16 %v758, %v742
  %v1111 = vpack.c.b16 %v759, %v743
  %v1112 = vpack.c.b16 %v760, %v744
  %v1113 = vpack.c.b16 %v761, %v745
  %v1114 = vpack.c.b16 %v762, %v746
  %v1115 = vpack.c.b16 %v763, %v747
  %v1116 = vpack.c.b16 %v764, %v748
  %v1117 = vpack.c.b16 %v765, %v749
  %v1118 = vpack.c.b16 %v782, %v766
  %v1119 = vpack.c.b16 %v783, %v767
  %v1120 = vpack.c.b16 %v784, %v768
  %v1121 = vpack.c.b16 %v785, %v769
  %v1122 = vpack.c.b16 %v786, %v770
  %v1123 = vpack.c.b16 %v787, %v771
  %v1124 = vpack.c.b16 %v788, %v772
  %v1125 = vpack.c.b16 %v789, %v773
  %v1126 = vpack.c.b16 %v790, %v774
  %v1127 = vpack.c.b16 %v791, %v775
  %v1128 = vpack.c.b16 %v792, %v776
  %v1129 = vpack.c.b16 %v793, %v777
  %v1130 = vpack.c.b16 %v794, %v778
  %v1131 = vpack.c.b16 %v795, %v779
  %v1132 = vpack.c.b16 %v796, %v780
  %v1133 = vpack.c.b16 %v797, %v781
  %v1134 = vpack.c.b16 %v814, %v798
  %v1135 = vpack.c.b16 %v815, %v799
  %v1136 = vpack.c.b16 %v816, %v800
  %v1137 = vpack.c.b16 %v817, %v801
  %v1138 = vpack.c.b16 %v818, %v802
  %v1139 = vpack.c.b16 %v819, %v803
  %v1140 = vpack.c.b16 %v820, %v804
  %v1141 = vpack.c.b16 %v821, %v805
  %v1142 = vpack.c.b16 %v822, %v806
  %v1143 = vpack.c.b16 %v823, %v807
  %v1144 = vpack.c.b16 %v824, %v808
  %v1145 = vpack.c.b16 %v825, %v809
  %v1146 = vpack.c.b16 %v826, %v810
  %v1147 = vpack.c.b16 %v827, %v811
  %v1148 = vpack.c.b16 %v828, %v812
  %v1149 = vpack.c.b16 %v829, %v813
  %v1150 = vpack.c.b16 %v846, %v830
  %v1151 = vpack.c.b16 %v847, %v831
  %v1152 = vpack.c.b16 %v848, %v832
  %v1153 = vpack.c.b16 %v849, %v833
  %v1154 = vpack.c.b16 %v850, %v834
  %v1155 = vpack.c.b16 %v851, %v835
  %v1156 = vpack.c.b16 %v852, %v836
  %v1157 = vpack.c.b16 %v853, %v837
  %v1158 = vpack.c.b16 %v854, %v838
  %v1159 = vpack.c.b16 %v855, %v839
  %v1160 = vpack.c.b16 %v856, %v840
  %v1161 = vpack.c.b16 %v857, %v841
  %v1162 = vpack.c.b16 %v858, %v842
  %v1163 = vpack.c.b16 %v859, %v843
  %v1164 = vpack.c.b16 %v860, %v844
  %v1165 = vpack.c.b16 %v861, %v845
  %v1166 = vpack.c.b16 %v878, %v862
  %v1167 = vpack.c.b16 %v879, %v863
  %v1168 = vpack.c.b16 %v880, %v864
  %v1169 = vpack.c.b16 %v881, %v865
  %v1170 = vpack.c.b16 %v882, %v866
  %v1171 = vpack.c.b16 %v883, %v867
  %v1172 = vpack.c.b16 %v884, %v868
  %v1173 = vpack.c.b16 %v885, %v869
  %v1174 = vpack.c.b16 %v886, %v870
  %v1175 = vpack.c.b16 %v887, %v871
  %v1176 = vpack.c.b16 %v888, %v872
  %v1177 = vpack.c.b16 %v889, %v873
  %v1178 = vpack.c.b16 %v890, %v874
  %v1179 = vpack.c.b16 %v891, %v875
  %v1180 = vpack.c.b16 %v892, %v876
  %v1181 = vpack.c.b16 %v893, %v877
  %v1182 = vpack.c.b16 %v910, %v894
  %v1183 = vpack.c.b16 %v911, %v895
  %v1184 = vpack.c.b16 %v912, %v896
  %v1185 = vpack.c.b16 %v913, %v897
  %v1186 = vpack.c.b16 %v914, %v898
  %v1187 = vpack.c.b16 %v915, %v899
  %v1188 = vpack.c.b16 %v916, %v900
  %v1189 = vpack.c.b16 %v917, %v901
  %v1190 = vpack.c.b16 %v918, %v902
  %v1191 = vpack.c.b16 %v919, %v903
  %v1192 = vpack.c.b16 %v920, %v904
  %v1193 = vpack.c.b16 %v921, %v905
  %v1194 = vpack.c.b16 %v922, %v906
  %v1195 = vpack.c.b16 %v923, %v907
  %v1196 = vpack.c.b16 %v924, %v908
  %v1197 = vpack.c.b16 %v925, %v909
  %v1198 = vpack.c.b16 %v942, %v926
  %v1199 = vpack.c.b16 %v943, %v927
  %v1200 = vpack.c.b16 %v944, %v928
  %v1201 = vpack.c.b16 %v945, %v929
  %v1202 = vpack.c.b16 %v946, %v930
  %v1203 = vpack.c.b16 %v947, %v931
  %v1204 = vpack.c.b16 %v948, %v932
  %v1205 = vpack.c.b16 %v949, %v933
  %v1206 = vpack.c.b16 %v950, %v934
  %v1207 = vpack.c.b16 %v951, %v935
  %v1208 = vpack.c.b16 %v952, %v936
  %v1209 = vpack.c.b16 %v953, %v937
  %v1210 = vpack.c.b16 %v954, %v938
  %v1211 = vpack.c.b16 %v955, %v939
  %v1212 = vpack.c.b16 %v956, %v940
  %v1213 = vpack.c.b16 %v957, %v941
  %v1214 = vpack.c.b16 %v974, %v958
  %v1215 = vpack.c.b16 %v975, %v959
  %v1216 = vpack.c.b16 %v976, %v960
  %v1217 = vpack.c.b16 %v977, %v961
  %v1218 = vpack.c.b16 %v978, %v962
  %v1219 = vpack.c.b16 %v979, %v963
  %v1220 = vpack.c.b16 %v980, %v964
  %v1221 = vpack.c.b16 %v981, %v965
  %v1222 = vpack.c.b16 %v982, %v966
  %v1223 = vpack.c.b16 %v983, %v967
  %v1224 = vpack.c.b16 %v984, %v968
  %v1225 = vpack.c.b16 %v985, %v969
  %v1226 = vpack.c.b16 %v986, %v970
  %v1227 = vpack.c.b16 %v987, %v971
  %v1228 = vpack.c.b16 %v988, %v972
  %v1229 = vpack.c.b16 %v989, %v973
  %v1230 = vpack.c.b16 %v1006, %v990
  %v1231 = vpack.c.b16 %v1007, %v991
  %v1232 = vpack.c.b16 %v1008, %v992
  %v1233 = vpack.c.b16 %v1009, %v993
  %v1234 = vpack.c.b16 %v1010, %v994
  %v1235 = vpack.c.b16 %v1011, %v995
  %v1236 = vpack.c.b16 %v1012, %v996
  %v1237 = vpack.c.b16 %v1013, %v997
  %v1238 = vpack.c.b16 %v1014, %v998
  %v1239 = vpack.c.b16 %v1015, %v999
  %v1240 = vpack.c.b16 %v1016, %v1000
  %v1241 = vpack.c.b16 %v1017, %v1001
  %v1242 = vpack.c.b16 %v1018, %v1002
  %v1243 = vpack.c.b16 %v1019, %v1003
  %v1244 = vpack.c.b16 %v1020, %v1004
  %v1245 = vpack.c.b16 %v1021, %v1005
  %v1246 = vpack.c.b16 %v1038, %v1022
  %v1247 = vpack.c.b16 %v1039, %v1023
  %v1248 = vpack.c.b16 %v1040, %v1024
  %v1249 = vpack.c.b16 %v1041, %v1025
  %v1250 = vpack.c.b16 %v1042, %v1026
  %v1251 = vpack.c.b16 %v1043, %v1027
  %v1252 = vpack.c.b16 %v1044, %v1028
  %v1253 = vpack.c.b16 %v1045, %v1029
  %v1254 = vpack.c.b16 %v1046, %v1030
  %v1255 = vpack.c.b16 %v1047, %v1031
  %v1256 = vpack.c.b16 %v1048, %v1032
  %v1257 = vpack.c.b16 %v1049, %v1033
  %v1258 = vpack.c.b16 %v1050, %v1034
  %v1259 = vpack.c.b16 %v1051, %v1035
  %v1260 = vpack.c.b16 %v1052, %v1036
  %v1261 = vpack.c.b16 %v1053, %v1037
  %v1262 = vpack.c.b16 %v1054, %v1054
  %v1263 = vpack.c.b16 %v1055, %v1055
  %v1264 = vpack.c.b16 %v1056, %v1056
  %v1265 = vpack.c.b16 %v1057, %v1057
  %v1266 = vpack.c.b16 %v1058, %v1058
  %v1267 = vpack.c.b16 %v1059, %v1059
  %v1268 = vpack.c.b16 %v1060, %v1060
  %v1269 = vpack.c.b16 %v1061, %v1061
  %v1270 = vpack.c.b16 %v1062, %v1062
  %v1271 = vpack.c.b16 %v1063, %v1063
  %v1272 = vpack.c.b16 %v1064, %v1064
  %v1273 = vpack.c.b16 %v1065, %v1065
  %v1274 = vpack.c.b16 %v1066, %v1066
  %v1275 = vpack.c.b16 %v1067, %v1067
  %v1276 = vpack.c.b16 %v1068, %v1068
  %v1277 = vpack.c.b16 %v1069, %v1069
  %v1742 = vunpack.c.l.b16 %v214
  %v1743 = vunpack.c.l.b16 %v215
  %v1744 = vunpack.c.l.b16 %v216
  %v1745 = vunpack.c.l.b16 %v217
  %v1746 = vunpack.c.l.b16 %v218
  %v1747 = vunpack.c.l.b16 %v219
  %v1748 = vunpack.c.l.b16 %v220
  %v1749 = vunpack.c.l.b16 %v221
  %v1750 = vunpack.c.l.b16 %v222
  %v1751 = vunpack.c.l.b16 %v223
  %v1752 = vunpack.c.l.b16 %v224
  %v1753 = vunpack.c.l.b16 %v225
  %v1754 = vunpack.c.l.b16 %v226
  %v1755 = vunpack.c.l.b16 %v227
  %v1756 = vunpack.c.l.b16 %v228
  %v1757 = vunpack.c.l.b16 %v229
  %v1758 = vunpack.c.l.b16 %v230
  %v1759 = vunpack.c.l.b16 %v231
  %v1760 = vunpack.c.l.b16 %v232
  %v1761 = vunpack.c.l.b16 %v233
  %v1762 = vunpack.c.l.b16 %v234
  %v1763 = vunpack.c.l.b16 %v235
  %v1764 = vunpack.c.l.b16 %v236
  %v1765 = vunpack.c.l.b16 %v237
  %v1766 = vunpack.c.l.b16 %v238
  %v1767 = vunpack.c.l.b16 %v239
  %v1768 = vunpack.c.l.b16 %v240
  %v1769 = vunpack.c.l.b16 %v241
  %v1770 = vunpack.c.l.b16 %v242
  %v1771 = vunpack.c.l.b16 %v243
  %v1772 = vunpack.c.l.b16 %v244
  %v1773 = vunpack.c.l.b16 %v245
  %v1774 = vunpack.c.l.b16 %v246
  %v1775 = vunpack.c.l.b16 %v247
  %v1776 = vunpack.c.l.b16 %v248
  %v1777 = vunpack.c.l.b16 %v249
  %v1778 = vunpack.c.l.b16 %v250
  %v1779 = vunpack.c.l.b16 %v251
  %v1780 = vunpack.c.l.b16 %v252
  %v1781 = vunpack.c.l.b16 %v253
  %v1782 = vunpack.c.l.b16 %v254
  %v1783 = vunpack.c.l.b16 %v255
  %v1784 = vunpack.c.l.b16 %v256
  %v1785 = vunpack.c.l.b16 %v257
  %v1786 = vunpack.c.l.b16 %v258
  %v1787 = vunpack.c.l.b16 %v259
  %v1788 = vunpack.c.l.b16 %v260
  %v1789 = vunpack.c.l.b16 %v261
  %v1790 = vunpack.c.l.b16 %v262
  %v1791 = vunpack.c.l.b16 %v263
  %v1792 = vunpack.c.l.b16 %v264
  %v1793 = vunpack.c.l.b16 %v265
  %v1794 = vunpack.c.l.b16 %v266
  %v1795 = vunpack.c.l.b16 %v267
  %v1796 = vunpack.c.l.b16 %v268
  %v1797 = vunpack.c.l.b16 %v269
  %v1798 = vunpack.c.l.b16 %v270
  %v1799 = vunpack.c.l.b16 %v271
  %v1800 = vunpack.c.l.b16 %v272
  %v1801 = vunpack.c.l.b16 %v273
  %v1802 = vunpack.c.l.b16 %v274
  %v1803 = vunpack.c.l.b16 %v275
  %v1804 = vunpack.c.l.b16 %v276
  %v1805 = vunpack.c.l.b16 %v277
  %v1806 = vunpack.c.l.b16 %v278
  %v1807 = vunpack.c.l.b16 %v279
  %v1808 = vunpack.c.l.b16 %v280
  %v1809 = vunpack.c.l.b16 %v281
  %v1810 = vunpack.c.l.b16 %v282
  %v1811 = vunpack.c.l.b16 %v283
  %v1812 = vunpack.c.l.b16 %v284
  %v1813 = vunpack.c.l.b16 %v285
  %v1814 = vunpack.c.l.b16 %v286
  %v1815 = vunpack.c.l.b16 %v287
  %v1816 = vunpack.c.l.b16 %v288
  %v1817 = vunpack.c.l.b16 %v289
  %v1818 = vunpack.c.l.b16 %v290
  %v1819 = vunpack.c.l.b16 %v291
  %v1820 = vunpack.c.l.b16 %v292
  %v1821 = vunpack.c.l.b16 %v293
  %v1822 = vunpack.c.l.b16 %v294
  %v1823 = vunpack.c.l.b16 %v295
  %v1824 = vunpack.c.l.b16 %v296
  %v1825 = vunpack.c.l.b16 %v297
  %v1826 = vunpack.c.l.b16 %v298
  %v1827 = vunpack.c.l.b16 %v299
  %v1828 = vunpack.c.l.b16 %v300
  %v1829 = vunpack.c.l.b16 %v301
  %v1830 = vunpack.c.l.b16 %v302
  %v1831 = vunpack.c.l.b16 %v303
  %v1832 = vunpack.c.l.b16 %v304
  %v1833 = vunpack.c.l.b16 %v305
  %v1834 = vunpack.c.l.b16 %v306
  %v1835 = vunpack.c.l.b16 %v307
  %v1836 = vunpack.c.l.b16 %v308
  %v1837 = vunpack.c.l.b16 %v309
  %v1838 = vunpack.c.l.b16 %v310
  %v1839 = vunpack.c.l.b16 %v311
  %v1840 = vunpack.c.l.b16 %v312
  %v1841 = vunpack.c.l.b16 %v313
  %v1842 = vunpack.c.l.b16 %v314
  %v1843 = vunpack.c.l.b16 %v315
  %v1844 = vunpack.c.l.b16 %v316
  %v1845 = vunpack.c.l.b16 %v317
  %v1846 = vunpack.c.l.b16 %v318
  %v1847 = vunpack.c.l.b16 %v319
  %v1848 = vunpack.c.l.b16 %v320
  %v1849 = vunpack.c.l.b16 %v321
  %v1850 = vunpack.c.l.b16 %v322
  %v1851 = vunpack.c.l.b16 %v323
  %v1852 = vunpack.c.l.b16 %v324
  %v1853 = vunpack.c.l.b16 %v325
  %v1854 = vunpack.c.l.b16 %v326
  %v1855 = vunpack.c.l.b16 %v327
  %v1856 = vunpack.c.l.b16 %v328
  %v1857 = vunpack.c.l.b16 %v329
  %v1858 = vunpack.c.l.b16 %v330
  %v1859 = vunpack.c.l.b16 %v331
  %v1860 = vunpack.c.l.b16 %v332
  %v1861 = vunpack.c.l.b16 %v333
  %v1862 = vunpack.c.l.b16 %v334
  %v1863 = vunpack.c.l.b16 %v335
  %v1864 = vunpack.c.l.b16 %v336
  %v1865 = vunpack.c.l.b16 %v337
  %v1866 = vunpack.c.l.b16 %v338
  %v1867 = vunpack.c.l.b16 %v339
  %v1868 = vunpack.c.l.b16 %v340
  %v1869 = vunpack.c.l.b16 %v341
  %v1870 = vunpack.c.l.b16 %v342
  %v1871 = vunpack.c.l.b16 %v343
  %v1872 = vunpack.c.l.b16 %v344
  %v1873 = vunpack.c.l.b16 %v345
  %v1874 = vunpack.c.l.b16 %v346
  %v1875 = vunpack.c.l.b16 %v347
  %v1876 = vunpack.c.l.b16 %v348
  %v1877 = vunpack.c.l.b16 %v349
  %v1878 = vunpack.c.l.b16 %v350
  %v1879 = vunpack.c.l.b16 %v351
  %v1880 = vunpack.c.l.b16 %v352
  %v1881 = vunpack.c.l.b16 %v353
  %v1882 = vunpack.c.l.b16 %v354
  %v1883 = vunpack.c.l.b16 %v355
  %v1884 = vunpack.c.l.b16 %v356
  %v1885 = vunpack.c.l.b16 %v357
  %v1886 = vunpack.c.l.b16 %v358
  %v1887 = vunpack.c.l.b16 %v359
  %v1888 = vunpack.c.l.b16 %v360
  %v1889 = vunpack.c.l.b16 %v361
  %v1890 = vunpack.c.l.b16 %v362
  %v1891 = vunpack.c.l.b16 %v363
  %v1892 = vunpack.c.l.b16 %v364
  %v1893 = vunpack.c.l.b16 %v365
  %v1894 = vunpack.c.l.b16 %v366
  %v1895 = vunpack.c.l.b16 %v367
  %v1896 = vunpack.c.l.b16 %v368
  %v1897 = vunpack.c.l.b16 %v369
  %v1898 = vunpack.c.l.b16 %v370
  %v1899 = vunpack.c.l.b16 %v371
  %v1900 = vunpack.c.l.b16 %v372
  %v1901 = vunpack.c.l.b16 %v373
  %v1902 = vunpack.c.l.b16 %v374
  %v1903 = vunpack.c.l.b16 %v375
  %v1904 = vunpack.c.l.b16 %v376
  %v1905 = vunpack.c.l.b16 %v377
  %v1906 = vunpack.c.l.b16 %v378
  %v1907 = vunpack.c.l.b16 %v379
  %v1908 = vunpack.c.l.b16 %v380
  %v1909 = vunpack.c.l.b16 %v381
  %v1910 = vunpack.c.l.b16 %v382
  %v1911 = vunpack.c.l.b16 %v383
  %v1912 = vunpack.c.l.b16 %v384
  %v1913 = vunpack.c.l.b16 %v385
  %v1914 = vunpack.c.l.b16 %v386
  %v1915 = vunpack.c.l.b16 %v387
  %v1916 = vunpack.c.l.b16 %v388
  %v1917 = vunpack.c.l.b16 %v389
  %v1918 = vunpack.c.l.b16 %v390
  %v1919 = vunpack.c.l.b16 %v391
  %v1920 = vunpack.c.l.b16 %v392
  %v1921 = vunpack.c.l.b16 %v393
  %v1922 = vunpack.c.l.b16 %v394
  %v1923 = vunpack.c.l.b16 %v395
  %v1924 = vunpack.c.l.b16 %v396
  %v1925 = vunpack.c.l.b16 %v397
  %v1926 = vunpack.c.l.b16 %v398
  %v1927 = vunpack.c.l.b16 %v399
  %v1928 = vunpack.c.l.b16 %v400
  %v1929 = vunpack.c.l.b16 %v401
  %v1930 = vunpack.c.l.b16 %v402
  %v1931 = vunpack.c.l.b16 %v403
  %v1932 = vunpack.c.l.b16 %v404
  %v1933 = vunpack.c.l.b16 %v405
  %v1934 = vunpack.c.l.b16 %v406
  %v1935 = vunpack.c.l.b16 %v407
  %v1936 = vunpack.c.l.b16 %v408
  %v1937 = vunpack.c.l.b16 %v409
  %v1938 = vunpack.c.l.b16 %v410
  %v1939 = vunpack.c.l.b16 %v411
  %v1940 = vunpack.c.l.b16 %v412
  %v1941 = vunpack.c.l.b16 %v413
  %v1942 = vunpack.c.l.b16 %v414
  %v1943 = vunpack.c.l.b16 %v415
  %v1944 = vunpack.c.l.b16 %v416
  %v1945 = vunpack.c.l.b16 %v417
  %v1946 = vunpack.c.l.b16 %v418
  %v1947 = vunpack.c.l.b16 %v419
  %v1948 = vunpack.c.l.b16 %v420
  %v1949 = vunpack.c.l.b16 %v421
  %v1950 = vunpack.c.l.b16 %v422
  %v1951 = vunpack.c.l.b16 %v423
  %v1952 = vunpack.c.l.b16 %v424
  %v1953 = vunpack.c.l.b16 %v425
  %v1954 = vunpack.c.l.b16 %v426
  %v1955 = vunpack.c.l.b16 %v427
  %v1956 = vunpack.c.l.b16 %v428
  %v1957 = vunpack.c.l.b16 %v429
  %v1958 = vunpack.c.l.b16 %v430
  %v1959 = vunpack.c.l.b16 %v431
  %v1960 = vunpack.c.l.b16 %v432
  %v1961 = vunpack.c.l.b16 %v433
  %v1962 = vunpack.c.l.b16 %v434
  %v1963 = vunpack.c.l.b16 %v435
  %v1964 = vunpack.c.l.b16 %v436
  %v1965 = vunpack.c.l.b16 %v437
  %v1966 = vunpack.c.l.b16 %v438
  %v1967 = vunpack.c.l.b16 %v439
  %v1968 = vunpack.c.l.b16 %v440
  %v1969 = vunpack.c.l.b16 %v441
  %v1970 = vunpack.c.l.b16 %v442
  %v1971 = vunpack.c.l.b16 %v443
  %v1972 = vunpack.c.l.b16 %v444
  %v1973 = vunpack.c.l.b16 %v445
  %v1974 = vunpack.c.l.b16 %v446
  %v1975 = vunpack.c.l.b16 %v447
  %v1976 = vunpack.c.l.b16 %v448
  %v1977 = vunpack.c.l.b16 %v449
  %v1978 = vunpack.c.l.b16 %v450
  %v1979 = vunpack.c.l.b16 %v451
  %v1980 = vunpack.c.l.b16 %v452
  %v1981 = vunpack.c.l.b16 %v453
  %v1982 = vunpack.c.l.b16 %v454
  %v1983 = vunpack.c.l.b16 %v455
  %v1984 = vunpack.c.l.b16 %v456
  %v1985 = vunpack.c.l.b16 %v457
  %v1986 = vunpack.c.l.b16 %v458
  %v1987 = vunpack.c.l.b16 %v459
  %v1988 = vunpack.c.l.b16 %v460
  %v1989 = vunpack.c.l.b16 %v461
  %v1990 = vunpack.c.l.b16 %v462
  %v1991 = vunpack.c.l.b16 %v463
  %v1992 = vunpack.c.l.b16 %v464
  %v1993 = vunpack.c.l.b16 %v465
  %v1994 = vunpack.c.l.b16 %v466
  %v1995 = vunpack.c.l.b16 %v467
  %v1996 = vunpack.c.l.b16 %v468
  %v1997 = vunpack.c.l.b16 %v469
  %v1998 = vpack.c.b16 %v1743, %v1742
  %v1999 = vpack.c.b16 %v1745, %v1744
  %v2000 = vpack.c.b16 %v1747, %v1746
  %v2001 = vpack.c.b16 %v1749, %v1748
  %v2002 = vpack.c.b16 %v1751, %v1750
  %v2003 = vpack.c.b16 %v1753, %v1752
  %v2004 = vpack.c.b16 %v1755, %v1754
  %v2005 = vpack.c.b16 %v1757, %v1756
  %v2006 = vpack.c.b16 %v1759, %v1758
  %v2007 = vpack.c.b16 %v1761, %v1760
  %v2008 = vpack.c.b16 %v1763, %v1762
  %v2009 = vpack.c.b16 %v1765, %v1764
  %v2010 = vpack.c.b16 %v1767, %v1766
  %v2011 = vpack.c.b16 %v1769, %v1768
  %v2012 = vpack.c.b16 %v1771, %v1770
  %v2013 = vpack.c.b16 %v1773, %v1772
  %v2014 = vpack.c.b16 %v1775, %v1774
  %v2015 = vpack.c.b16 %v1777, %v1776
  %v2016 = vpack.c.b16 %v1779, %v1778
  %v2017 = vpack.c.b16 %v1781, %v1780
  %v2018 = vpack.c.b16 %v1783, %v1782
  %v2019 = vpack.c.b16 %v1785, %v1784
  %v2020 = vpack.c.b16 %v1787, %v1786
  %v2021 = vpack.c.b16 %v1789, %v1788
  %v2022 = vpack.c.b16 %v1791, %v1790
  %v2023 = vpack.c.b16 %v1793, %v1792
  %v2024 = vpack.c.b16 %v1795, %v1794
  %v2025 = vpack.c.b16 %v1797, %v1796
  %v2026 = vpack.c.b16 %v1799, %v1798
  %v2027 = vpack.c.b16 %v1801, %v1800
  %v2028 = vpack.c.b16 %v1803, %v1802
  %v2029 = vpack.c.b16 %v1805, %v1804
  %v2030 = vpack.c.b16 %v1807, %v1806
  %v2031 = vpack.c.b16 %v1809, %v1808
  %v2032 = vpack.c.b16 %v1811, %v1810
  %v2033 = vpack.c.b16 %v1813, %v1812
  %v2034 = vpack.c.b16 %v1815, %v1814
  %v2035 = vpack.c.b16 %v1817, %v1816
  %v2036 = vpack.c.b16 %v1819, %v1818
  %v2037 = vpack.c.b16 %v1821, %v1820
  %v2038 = vpack.c.b16 %v1823, %v1822
  %v2039 = vpack.c.b16 %v1825, %v1824
  %v2040 = vpack.c.b16 %v1827, %v1826
  %v2041 = vpack.c.b16 %v1829, %v1828
  %v2042 = vpack.c.b16 %v1831, %v1830
  %v2043 = vpack.c.b16 %v1833, %v1832
  %v2044 = vpack.c.b16 %v1835, %v1834
  %v2045 = vpack.c.b16 %v1837, %v1836
  %v2046 = vpack.c.b16 %v1839, %v1838
  %v2047 = vpack.c.b16 %v1841, %v1840
  %v2048 = vpack.c.b16 %v1843, %v1842
  %v2049 = vpack.c.b16 %v1845, %v1844
  %v2050 = vpack.c.b16 %v1847, %v1846
  %v2051 = vpack.c.b16 %v1849, %v1848
  %v2052 = vpack.c.b16 %v1851, %v1850
  %v2053 = vpack.c.b16 %v1853, %v1852
  %v2054 = vpack.c.b16 %v1855, %v1854
  %v2055 = vpack.c.b16 %v1857, %v1856
  %v2056 = vpack.c.b16 %v1859, %v1858
  %v2057 = vpack.c.b16 %v1861, %v1860
  %v2058 = vpack.c.b16 %v1863, %v1862
  %v2059 = vpack.c.b16 %v1865, %v1864
  %v2060 = vpack.c.b16 %v1867, %v1866
  %v2061 = vpack.c.b16 %v1869, %v1868
  %v2062 = vpack.c.b16 %v1871, %v1870
  %v2063 = vpack.c.b16 %v1873, %v1872
  %v2064 = vpack.c.b16 %v1875, %v1874
  %v2065 = vpack.c.b16 %v1877, %v1876
  %v2066 = vpack.c.b16 %v1879, %v1878
  %v2067 = vpack.c.b16 %v1881, %v1880
  %v2068 = vpack.c.b16 %v1883, %v1882
  %v2069 = vpack.c.b16 %v1885, %v1884
  %v2070 = vpack.c.b16 %v1887, %v1886
  %v2071 = vpack.c.b16 %v1889, %v1888
  %v2072 = vpack.c.b16 %v1891, %v1890
  %v2073 = vpack.c.b16 %v1893, %v1892
  %v2074 = vpack.c.b16 %v1895, %v1894
  %v2075 = vpack.c.b16 %v1897, %v1896
  %v2076 = vpack.c.b16 %v1899, %v1898
  %v2077 = vpack.c.b16 %v1901, %v1900
  %v2078 = vpack.c.b16 %v1903, %v1902
  %v2079 = vpack.c.b16 %v1905, %v1904
  %v2080 = vpack.c.b16 %v1907, %v1906
  %v2081 = vpack.c.b16 %v1909, %v1908
  %v2082 = vpack.c.b16 %v1911, %v1910
  %v2083 = vpack.c.b16 %v1913, %v1912
  %v2084 = vpack.c.b16 %v1915, %v1914
  %v2085 = vpack.c.b16 %v1917, %v1916
  %v2086 = vpack.c.b16 %v1919, %v1918
  %v2087 = vpack.c.b16 %v1921, %v1920
  %v2088 = vpack.c.b16 %v1923, %v1922
  %v2089 = vpack.c.b16 %v1925, %v1924
  %v2090 = vpack.c.b16 %v1927, %v1926
  %v2091 = vpack.c.b16 %v1929, %v1928
  %v2092 = vpack.c.b16 %v1931, %v1930
  %v2093 = vpack.c.b16 %v1933, %v1932
  %v2094 = vpack.c.b16 %v1935, %v1934
  %v2095 = vpack.c.b16 %v1937, %v1936
  %v2096 = vpack.c.b16 %v1939, %v1938
  %v2097 = vpack.c.b16 %v1941, %v1940
  %v2098 = vpack.c.b16 %v1943, %v1942
  %v2099 = vpack.c.b16 %v1945, %v1944
  %v2100 = vpack.c.b16 %v1947, %v1946
  %v2101 = vpack.c.b16 %v1949, %v1948
  %v2102 = vpack.c.b16 %v1951, %v1950
  %v2103 = vpack.c.b16 %v1953, %v1952
  %v2104 = vpack.c.b16 %v1955, %v1954
  %v2105 = vpack.c.b16 %v1957, %v1956
  %v2106 = vpack.c.b16 %v1959, %v1958
  %v2107 = vpack.c.b16 %v1961, %v1960
  %v2108 = vpack.c.b16 %v1963, %v1962
  %v2109 = vpack.c.b16 %v1965, %v1964
  %v2110 = vpack.c.b16 %v1967, %v1966
  %v2111 = vpack.c.b16 %v1969, %v1968
  %v2112 = vpack.c.b16 %v1971, %v1970
  %v2113 = vpack.c.b16 %v1973, %v1972
  %v2114 = vpack.c.b16 %v1975, %v1974
  %v2115 = vpack.c.b16 %v1977, %v1976
  %v2116 = vpack.c.b16 %v1979, %v1978
  %v2117 = vpack.c.b16 %v1981, %v1980
  %v2118 = vpack.c.b16 %v1983, %v1982
  %v2119 = vpack.c.b16 %v1985, %v1984
  %v2120 = vpack.c.b16 %v1987, %v1986
  %v2121 = vpack.c.b16 %v1989, %v1988
  %v2122 = vpack.c.b16 %v1991, %v1990
  %v2123 = vpack.c.b16 %v1993, %v1992
  %v2124 = vpack.c.b16 %v1995, %v1994
  %v2125 = vpack.c.b16 %v1997, %v1996
  %2254 = vmatpush.bf16.msra.mxu0 %v2005
  %2255 = vmatpush.bf16.msra.mxu0 %v2004
  %2256 = vmatpush.bf16.msra.mxu0 %v2003
  %2257 = vmatpush.bf16.msra.mxu0 %v2002
  %2258 = vmatpush.bf16.msra.mxu0 %v2001
  %2259 = vmatpush.bf16.msra.mxu0 %v2000
  %2260 = vmatpush.bf16.msra.mxu0 %v1999
  %2261 = vmatpush.bf16.msra.mxu0 %v1998
  %2262 = vmatmul.bf16.gmra.mxu0 %v1070
  %v2263 = vpop.f32.mrf.mxu0
  %v2264 = vadd.f32 0.0, %v2263
  %v2265 = vpop.f32.mrf.mxu0
  %v2266 = vadd.f32 0.0, %v2265
  %2267 = vmatmul.bf16.gmra.mxu0 %v1086
  %v2268 = vpop.f32.mrf.mxu0
  %v2269 = vadd.f32 0.0, %v2268
  %v2270 = vpop.f32.mrf.mxu0
  %v2271 = vadd.f32 0.0, %v2270
  %2272 = vmatmul.bf16.gmra.mxu0 %v1102
  %v2273 = vpop.f32.mrf.mxu0
  %v2274 = vadd.f32 0.0, %v2273
  %v2275 = vpop.f32.mrf.mxu0
  %v2276 = vadd.f32 0.0, %v2275
  %2277 = vmatmul.bf16.gmra.mxu0 %v1118
  %v2278 = vpop.f32.mrf.mxu0
  %v2279 = vadd.f32 0.0, %v2278
  %v2280 = vpop.f32.mrf.mxu0
  %v2281 = vadd.f32 0.0, %v2280
  %2282 = vmatmul.bf16.gmra.mxu0 %v1134
  %v2283 = vpop.f32.mrf.mxu0
  %v2284 = vadd.f32 0.0, %v2283
  %v2285 = vpop.f32.mrf.mxu0
  %v2286 = vadd.f32 0.0, %v2285
  %2287 = vmatmul.bf16.gmra.mxu0 %v1150
  %v2288 = vpop.f32.mrf.mxu0
  %v2289 = vadd.f32 0.0, %v2288
  %v2290 = vpop.f32.mrf.mxu0
  %v2291 = vadd.f32 0.0, %v2290
  %2292 = vmatmul.bf16.gmra.mxu0 %v1166
  %v2293 = vpop.f32.mrf.mxu0
  %v2294 = vadd.f32 0.0, %v2293
  %v2295 = vpop.f32.mrf.mxu0
  %v2296 = vadd.f32 0.0, %v2295
  %2297 = vmatmul.bf16.gmra.mxu0 %v1182
  %v2298 = vpop.f32.mrf.mxu0
  %v2299 = vadd.f32 0.0, %v2298
  %v2300 = vpop.f32.mrf.mxu0
  %v2301 = vadd.f32 0.0, %v2300
  %2302 = vmatmul.bf16.gmra.mxu0 %v1198
  %v2303 = vpop.f32.mrf.mxu0
  %v2304 = vadd.f32 0.0, %v2303
  %v2305 = vpop.f32.mrf.mxu0
  %v2306 = vadd.f32 0.0, %v2305
  %2307 = vmatmul.bf16.gmra.mxu0 %v1214
  %v2308 = vpop.f32.mrf.mxu0
  %v2309 = vadd.f32 0.0, %v2308
  %v2310 = vpop.f32.mrf.mxu0
  %v2311 = vadd.f32 0.0, %v2310
  %2312 = vmatmul.bf16.gmra.mxu0 %v1230
  %v2313 = vpop.f32.mrf.mxu0
  %v2314 = vadd.f32 0.0, %v2313
  %v2315 = vpop.f32.mrf.mxu0
  %v2316 = vadd.f32 0.0, %v2315
  %2317 = vmatmul.bf16.gmra.mxu0 %v1246
  %v2318 = vpop.f32.mrf.mxu0
  %v2319 = vadd.f32 0.0, %v2318
  %v2320 = vpop.f32.mrf.mxu0
  %v2321 = vadd.f32 0.0, %v2320
  %2322 = vmatmul.bf16.gmra.mxu0 %v1262
  %v2323 = vpop.f32.mrf.mxu0
  %v2324 = vadd.f32 0.0, %v2323
  %v2325 = vpop.f32.mrf.mxu0
  %2326 = vdwg.mxu0
  %2327 = vmatpush.bf16.msra.mxu0 %v2013
  %2328 = vmatpush.bf16.msra.mxu0 %v2012
  %2329 = vmatpush.bf16.msra.mxu0 %v2011
  %2330 = vmatpush.bf16.msra.mxu0 %v2010
  %2331 = vmatpush.bf16.msra.mxu0 %v2009
  %2332 = vmatpush.bf16.msra.mxu0 %v2008
  %2333 = vmatpush.bf16.msra.mxu0 %v2007
  %2334 = vmatpush.bf16.msra.mxu0 %v2006
  %2335 = vmatmul.bf16.gmra.mxu0 %v1071
  %v2336 = vpop.f32.mrf.mxu0
  %v2337 = vadd.f32 %v2264, %v2336
  %v2338 = vpop.f32.mrf.mxu0
  %v2339 = vadd.f32 %v2266, %v2338
  %2340 = vmatmul.bf16.gmra.mxu0 %v1087
  %v2341 = vpop.f32.mrf.mxu0
  %v2342 = vadd.f32 %v2269, %v2341
  %v2343 = vpop.f32.mrf.mxu0
  %v2344 = vadd.f32 %v2271, %v2343
  %2345 = vmatmul.bf16.gmra.mxu0 %v1103
  %v2346 = vpop.f32.mrf.mxu0
  %v2347 = vadd.f32 %v2274, %v2346
  %v2348 = vpop.f32.mrf.mxu0
  %v2349 = vadd.f32 %v2276, %v2348
  %2350 = vmatmul.bf16.gmra.mxu0 %v1119
  %v2351 = vpop.f32.mrf.mxu0
  %v2352 = vadd.f32 %v2279, %v2351
  %v2353 = vpop.f32.mrf.mxu0
  %v2354 = vadd.f32 %v2281, %v2353
  %2355 = vmatmul.bf16.gmra.mxu0 %v1135
  %v2356 = vpop.f32.mrf.mxu0
  %v2357 = vadd.f32 %v2284, %v2356
  %v2358 = vpop.f32.mrf.mxu0
  %v2359 = vadd.f32 %v2286, %v2358
  %2360 = vmatmul.bf16.gmra.mxu0 %v1151
  %v2361 = vpop.f32.mrf.mxu0
  %v2362 = vadd.f32 %v2289, %v2361
  %v2363 = vpop.f32.mrf.mxu0
  %v2364 = vadd.f32 %v2291, %v2363
  %2365 = vmatmul.bf16.gmra.mxu0 %v1167
  %v2366 = vpop.f32.mrf.mxu0
  %v2367 = vadd.f32 %v2294, %v2366
  %v2368 = vpop.f32.mrf.mxu0
  %v2369 = vadd.f32 %v2296, %v2368
  %2370 = vmatmul.bf16.gmra.mxu0 %v1183
  %v2371 = vpop.f32.mrf.mxu0
  %v2372 = vadd.f32 %v2299, %v2371
  %v2373 = vpop.f32.mrf.mxu0
  %v2374 = vadd.f32 %v2301, %v2373
  %2375 = vmatmul.bf16.gmra.mxu0 %v1199
  %v2376 = vpop.f32.mrf.mxu0
  %v2377 = vadd.f32 %v2304, %v2376
  %v2378 = vpop.f32.mrf.mxu0
  %v2379 = vadd.f32 %v2306, %v2378
  %2380 = vmatmul.bf16.gmra.mxu0 %v1215
  %v2381 = vpop.f32.mrf.mxu0
  %v2382 = vadd.f32 %v2309, %v2381
  %v2383 = vpop.f32.mrf.mxu0
  %v2384 = vadd.f32 %v2311, %v2383
  %2385 = vmatmul.bf16.gmra.mxu0 %v1231
  %v2386 = vpop.f32.mrf.mxu0
  %v2387 = vadd.f32 %v2314, %v2386
  %v2388 = vpop.f32.mrf.mxu0
  %v2389 = vadd.f32 %v2316, %v2388
  %2390 = vmatmul.bf16.gmra.mxu0 %v1247
  %v2391 = vpop.f32.mrf.mxu0
  %v2392 = vadd.f32 %v2319, %v2391
  %v2393 = vpop.f32.mrf.mxu0
  %v2394 = vadd.f32 %v2321, %v2393
  %2395 = vmatmul.bf16.gmra.mxu0 %v1263
  %v2396 = vpop.f32.mrf.mxu0
  %v2397 = vadd.f32 %v2324, %v2396
  %v2398 = vpop.f32.mrf.mxu0
  %2399 = vdwg.mxu0
  %2400 = vmatpush.bf16.msra.mxu0 %v2021
  %2401 = vmatpush.bf16.msra.mxu0 %v2020
  %2402 = vmatpush.bf16.msra.mxu0 %v2019
  %2403 = vmatpush.bf16.msra.mxu0 %v2018
  %2404 = vmatpush.bf16.msra.mxu0 %v2017
  %2405 = vmatpush.bf16.msra.mxu0 %v2016
  %2406 = vmatpush.bf16.msra.mxu0 %v2015
  %2407 = vmatpush.bf16.msra.mxu0 %v2014
  %2408 = vmatmul.bf16.gmra.mxu0 %v1072
  %v2409 = vpop.f32.mrf.mxu0
  %v2410 = vadd.f32 %v2337, %v2409
  %v2411 = vpop.f32.mrf.mxu0
  %v2412 = vadd.f32 %v2339, %v2411
  %2413 = vmatmul.bf16.gmra.mxu0 %v1088
  %v2414 = vpop.f32.mrf.mxu0
  %v2415 = vadd.f32 %v2342, %v2414
  %v2416 = vpop.f32.mrf.mxu0
  %v2417 = vadd.f32 %v2344, %v2416
  %2418 = vmatmul.bf16.gmra.mxu0 %v1104
  %v2419 = vpop.f32.mrf.mxu0
  %v2420 = vadd.f32 %v2347, %v2419
  %v2421 = vpop.f32.mrf.mxu0
  %v2422 = vadd.f32 %v2349, %v2421
  %2423 = vmatmul.bf16.gmra.mxu0 %v1120
  %v2424 = vpop.f32.mrf.mxu0
  %v2425 = vadd.f32 %v2352, %v2424
  %v2426 = vpop.f32.mrf.mxu0
  %v2427 = vadd.f32 %v2354, %v2426
  %2428 = vmatmul.bf16.gmra.mxu0 %v1136
  %v2429 = vpop.f32.mrf.mxu0
  %v2430 = vadd.f32 %v2357, %v2429
  %v2431 = vpop.f32.mrf.mxu0
  %v2432 = vadd.f32 %v2359, %v2431
  %2433 = vmatmul.bf16.gmra.mxu0 %v1152
  %v2434 = vpop.f32.mrf.mxu0
  %v2435 = vadd.f32 %v2362, %v2434
  %v2436 = vpop.f32.mrf.mxu0
  %v2437 = vadd.f32 %v2364, %v2436
  %2438 = vmatmul.bf16.gmra.mxu0 %v1168
  %v2439 = vpop.f32.mrf.mxu0
  %v2440 = vadd.f32 %v2367, %v2439
  %v2441 = vpop.f32.mrf.mxu0
  %v2442 = vadd.f32 %v2369, %v2441
  %2443 = vmatmul.bf16.gmra.mxu0 %v1184
  %v2444 = vpop.f32.mrf.mxu0
  %v2445 = vadd.f32 %v2372, %v2444
  %v2446 = vpop.f32.mrf.mxu0
  %v2447 = vadd.f32 %v2374, %v2446
  %2448 = vmatmul.bf16.gmra.mxu0 %v1200
  %v2449 = vpop.f32.mrf.mxu0
  %v2450 = vadd.f32 %v2377, %v2449
  %v2451 = vpop.f32.mrf.mxu0
  %v2452 = vadd.f32 %v2379, %v2451
  %2453 = vmatmul.bf16.gmra.mxu0 %v1216
  %v2454 = vpop.f32.mrf.mxu0
  %v2455 = vadd.f32 %v2382, %v2454
  %v2456 = vpop.f32.mrf.mxu0
  %v2457 = vadd.f32 %v2384, %v2456
  %2458 = vmatmul.bf16.gmra.mxu0 %v1232
  %v2459 = vpop.f32.mrf.mxu0
  %v2460 = vadd.f32 %v2387, %v2459
  %v2461 = vpop.f32.mrf.mxu0
  %v2462 = vadd.f32 %v2389, %v2461
  %2463 = vmatmul.bf16.gmra.mxu0 %v1248
  %v2464 = vpop.f32.mrf.mxu0
  %v2465 = vadd.f32 %v2392, %v2464
  %v2466 = vpop.f32.mrf.mxu0
  %v2467 = vadd.f32 %v2394, %v2466
  %2468 = vmatmul.bf16.gmra.mxu0 %v1264
  %v2469 = vpop.f32.mrf.mxu0
  %v2470 = vadd.f32 %v2397, %v2469
  %v2471 = vpop.f32.mrf.mxu0
  %2472 = vdwg.mxu0
  %2473 = vmatpush.bf16.msra.mxu0 %v2029
  %2474 = vmatpush.bf16.msra.mxu0 %v2028
  %2475 = vmatpush.bf16.msra.mxu0 %v2027
  %2476 = vmatpush.bf16.msra.mxu0 %v2026
  %2477 = vmatpush.bf16.msra.mxu0 %v2025
  %2478 = vmatpush.bf16.msra.mxu0 %v2024
  %2479 = vmatpush.bf16.msra.mxu0 %v2023
  %2480 = vmatpush.bf16.msra.mxu0 %v2022
  %2481 = vmatmul.bf16.gmra.mxu0 %v1073
  %v2482 = vpop.f32.mrf.mxu0
  %v2483 = vadd.f32 %v2410, %v2482
  %v2484 = vpop.f32.mrf.mxu0
  %v2485 = vadd.f32 %v2412, %v2484
  %2486 = vmatmul.bf16.gmra.mxu0 %v1089
  %v2487 = vpop.f32.mrf.mxu0
  %v2488 = vadd.f32 %v2415, %v2487
  %v2489 = vpop.f32.mrf.mxu0
  %v2490 = vadd.f32 %v2417, %v2489
  %2491 = vmatmul.bf16.gmra.mxu0 %v1105
  %v2492 = vpop.f32.mrf.mxu0
  %v2493 = vadd.f32 %v2420, %v2492
  %v2494 = vpop.f32.mrf.mxu0
  %v2495 = vadd.f32 %v2422, %v2494
  %2496 = vmatmul.bf16.gmra.mxu0 %v1121
  %v2497 = vpop.f32.mrf.mxu0
  %v2498 = vadd.f32 %v2425, %v2497
  %v2499 = vpop.f32.mrf.mxu0
  %v2500 = vadd.f32 %v2427, %v2499
  %2501 = vmatmul.bf16.gmra.mxu0 %v1137
  %v2502 = vpop.f32.mrf.mxu0
  %v2503 = vadd.f32 %v2430, %v2502
  %v2504 = vpop.f32.mrf.mxu0
  %v2505 = vadd.f32 %v2432, %v2504
  %2506 = vmatmul.bf16.gmra.mxu0 %v1153
  %v2507 = vpop.f32.mrf.mxu0
  %v2508 = vadd.f32 %v2435, %v2507
  %v2509 = vpop.f32.mrf.mxu0
  %v2510 = vadd.f32 %v2437, %v2509
  %2511 = vmatmul.bf16.gmra.mxu0 %v1169
  %v2512 = vpop.f32.mrf.mxu0
  %v2513 = vadd.f32 %v2440, %v2512
  %v2514 = vpop.f32.mrf.mxu0
  %v2515 = vadd.f32 %v2442, %v2514
  %2516 = vmatmul.bf16.gmra.mxu0 %v1185
  %v2517 = vpop.f32.mrf.mxu0
  %v2518 = vadd.f32 %v2445, %v2517
  %v2519 = vpop.f32.mrf.mxu0
  %v2520 = vadd.f32 %v2447, %v2519
  %2521 = vmatmul.bf16.gmra.mxu0 %v1201
  %v2522 = vpop.f32.mrf.mxu0
  %v2523 = vadd.f32 %v2450, %v2522
  %v2524 = vpop.f32.mrf.mxu0
  %v2525 = vadd.f32 %v2452, %v2524
  %2526 = vmatmul.bf16.gmra.mxu0 %v1217
  %v2527 = vpop.f32.mrf.mxu0
  %v2528 = vadd.f32 %v2455, %v2527
  %v2529 = vpop.f32.mrf.mxu0
  %v2530 = vadd.f32 %v2457, %v2529
  %2531 = vmatmul.bf16.gmra.mxu0 %v1233
  %v2532 = vpop.f32.mrf.mxu0
  %v2533 = vadd.f32 %v2460, %v2532
  %v2534 = vpop.f32.mrf.mxu0
  %v2535 = vadd.f32 %v2462, %v2534
  %2536 = vmatmul.bf16.gmra.mxu0 %v1249
  %v2537 = vpop.f32.mrf.mxu0
  %v2538 = vadd.f32 %v2465, %v2537
  %v2539 = vpop.f32.mrf.mxu0
  %v2540 = vadd.f32 %v2467, %v2539
  %2541 = vmatmul.bf16.gmra.mxu0 %v1265
  %v2542 = vpop.f32.mrf.mxu0
  %v2543 = vadd.f32 %v2470, %v2542
  %v2544 = vpop.f32.mrf.mxu0
  %2545 = vdwg.mxu0
  %2546 = vmatpush.bf16.msra.mxu0 %v2037
  %2547 = vmatpush.bf16.msra.mxu0 %v2036
  %2548 = vmatpush.bf16.msra.mxu0 %v2035
  %2549 = vmatpush.bf16.msra.mxu0 %v2034
  %2550 = vmatpush.bf16.msra.mxu0 %v2033
  %2551 = vmatpush.bf16.msra.mxu0 %v2032
  %2552 = vmatpush.bf16.msra.mxu0 %v2031
  %2553 = vmatpush.bf16.msra.mxu0 %v2030
  %2554 = vmatmul.bf16.gmra.mxu0 %v1074
  %v2555 = vpop.f32.mrf.mxu0
  %v2556 = vadd.f32 %v2483, %v2555
  %v2557 = vpop.f32.mrf.mxu0
  %v2558 = vadd.f32 %v2485, %v2557
  %2559 = vmatmul.bf16.gmra.mxu0 %v1090
  %v2560 = vpop.f32.mrf.mxu0
  %v2561 = vadd.f32 %v2488, %v2560
  %v2562 = vpop.f32.mrf.mxu0
  %v2563 = vadd.f32 %v2490, %v2562
  %2564 = vmatmul.bf16.gmra.mxu0 %v1106
  %v2565 = vpop.f32.mrf.mxu0
  %v2566 = vadd.f32 %v2493, %v2565
  %v2567 = vpop.f32.mrf.mxu0
  %v2568 = vadd.f32 %v2495, %v2567
  %2569 = vmatmul.bf16.gmra.mxu0 %v1122
  %v2570 = vpop.f32.mrf.mxu0
  %v2571 = vadd.f32 %v2498, %v2570
  %v2572 = vpop.f32.mrf.mxu0
  %v2573 = vadd.f32 %v2500, %v2572
  %2574 = vmatmul.bf16.gmra.mxu0 %v1138
  %v2575 = vpop.f32.mrf.mxu0
  %v2576 = vadd.f32 %v2503, %v2575
  %v2577 = vpop.f32.mrf.mxu0
  %v2578 = vadd.f32 %v2505, %v2577
  %2579 = vmatmul.bf16.gmra.mxu0 %v1154
  %v2580 = vpop.f32.mrf.mxu0
  %v2581 = vadd.f32 %v2508, %v2580
  %v2582 = vpop.f32.mrf.mxu0
  %v2583 = vadd.f32 %v2510, %v2582
  %2584 = vmatmul.bf16.gmra.mxu0 %v1170
  %v2585 = vpop.f32.mrf.mxu0
  %v2586 = vadd.f32 %v2513, %v2585
  %v2587 = vpop.f32.mrf.mxu0
  %v2588 = vadd.f32 %v2515, %v2587
  %2589 = vmatmul.bf16.gmra.mxu0 %v1186
  %v2590 = vpop.f32.mrf.mxu0
  %v2591 = vadd.f32 %v2518, %v2590
  %v2592 = vpop.f32.mrf.mxu0
  %v2593 = vadd.f32 %v2520, %v2592
  %2594 = vmatmul.bf16.gmra.mxu0 %v1202
  %v2595 = vpop.f32.mrf.mxu0
  %v2596 = vadd.f32 %v2523, %v2595
  %v2597 = vpop.f32.mrf.mxu0
  %v2598 = vadd.f32 %v2525, %v2597
  %2599 = vmatmul.bf16.gmra.mxu0 %v1218
  %v2600 = vpop.f32.mrf.mxu0
  %v2601 = vadd.f32 %v2528, %v2600
  %v2602 = vpop.f32.mrf.mxu0
  %v2603 = vadd.f32 %v2530, %v2602
  %2604 = vmatmul.bf16.gmra.mxu0 %v1234
  %v2605 = vpop.f32.mrf.mxu0
  %v2606 = vadd.f32 %v2533, %v2605
  %v2607 = vpop.f32.mrf.mxu0
  %v2608 = vadd.f32 %v2535, %v2607
  %2609 = vmatmul.bf16.gmra.mxu0 %v1250
  %v2610 = vpop.f32.mrf.mxu0
  %v2611 = vadd.f32 %v2538, %v2610
  %v2612 = vpop.f32.mrf.mxu0
  %v2613 = vadd.f32 %v2540, %v2612
  %2614 = vmatmul.bf16.gmra.mxu0 %v1266
  %v2615 = vpop.f32.mrf.mxu0
  %v2616 = vadd.f32 %v2543, %v2615
  %v2617 = vpop.f32.mrf.mxu0
  %2618 = vdwg.mxu0
  %2619 = vmatpush.bf16.msra.mxu0 %v2045
  %2620 = vmatpush.bf16.msra.mxu0 %v2044
  %2621 = vmatpush.bf16.msra.mxu0 %v2043
  %2622 = vmatpush.bf16.msra.mxu0 %v2042
  %2623 = vmatpush.bf16.msra.mxu0 %v2041
  %2624 = vmatpush.bf16.msra.mxu0 %v2040
  %2625 = vmatpush.bf16.msra.mxu0 %v2039
  %2626 = vmatpush.bf16.msra.mxu0 %v2038
  %2627 = vmatmul.bf16.gmra.mxu0 %v1075
  %v2628 = vpop.f32.mrf.mxu0
  %v2629 = vadd.f32 %v2556, %v2628
  %v2630 = vpop.f32.mrf.mxu0
  %v2631 = vadd.f32 %v2558, %v2630
  %2632 = vmatmul.bf16.gmra.mxu0 %v1091
  %v2633 = vpop.f32.mrf.mxu0
  %v2634 = vadd.f32 %v2561, %v2633
  %v2635 = vpop.f32.mrf.mxu0
  %v2636 = vadd.f32 %v2563, %v2635
  %2637 = vmatmul.bf16.gmra.mxu0 %v1107
  %v2638 = vpop.f32.mrf.mxu0
  %v2639 = vadd.f32 %v2566, %v2638
  %v2640 = vpop.f32.mrf.mxu0
  %v2641 = vadd.f32 %v2568, %v2640
  %2642 = vmatmul.bf16.gmra.mxu0 %v1123
  %v2643 = vpop.f32.mrf.mxu0
  %v2644 = vadd.f32 %v2571, %v2643
  %v2645 = vpop.f32.mrf.mxu0
  %v2646 = vadd.f32 %v2573, %v2645
  %2647 = vmatmul.bf16.gmra.mxu0 %v1139
  %v2648 = vpop.f32.mrf.mxu0
  %v2649 = vadd.f32 %v2576, %v2648
  %v2650 = vpop.f32.mrf.mxu0
  %v2651 = vadd.f32 %v2578, %v2650
  %2652 = vmatmul.bf16.gmra.mxu0 %v1155
  %v2653 = vpop.f32.mrf.mxu0
  %v2654 = vadd.f32 %v2581, %v2653
  %v2655 = vpop.f32.mrf.mxu0
  %v2656 = vadd.f32 %v2583, %v2655
  %2657 = vmatmul.bf16.gmra.mxu0 %v1171
  %v2658 = vpop.f32.mrf.mxu0
  %v2659 = vadd.f32 %v2586, %v2658
  %v2660 = vpop.f32.mrf.mxu0
  %v2661 = vadd.f32 %v2588, %v2660
  %2662 = vmatmul.bf16.gmra.mxu0 %v1187
  %v2663 = vpop.f32.mrf.mxu0
  %v2664 = vadd.f32 %v2591, %v2663
  %v2665 = vpop.f32.mrf.mxu0
  %v2666 = vadd.f32 %v2593, %v2665
  %2667 = vmatmul.bf16.gmra.mxu0 %v1203
  %v2668 = vpop.f32.mrf.mxu0
  %v2669 = vadd.f32 %v2596, %v2668
  %v2670 = vpop.f32.mrf.mxu0
  %v2671 = vadd.f32 %v2598, %v2670
  %2672 = vmatmul.bf16.gmra.mxu0 %v1219
  %v2673 = vpop.f32.mrf.mxu0
  %v2674 = vadd.f32 %v2601, %v2673
  %v2675 = vpop.f32.mrf.mxu0
  %v2676 = vadd.f32 %v2603, %v2675
  %2677 = vmatmul.bf16.gmra.mxu0 %v1235
  %v2678 = vpop.f32.mrf.mxu0
  %v2679 = vadd.f32 %v2606, %v2678
  %v2680 = vpop.f32.mrf.mxu0
  %v2681 = vadd.f32 %v2608, %v2680
  %2682 = vmatmul.bf16.gmra.mxu0 %v1251
  %v2683 = vpop.f32.mrf.mxu0
  %v2684 = vadd.f32 %v2611, %v2683
  %v2685 = vpop.f32.mrf.mxu0
  %v2686 = vadd.f32 %v2613, %v2685
  %2687 = vmatmul.bf16.gmra.mxu0 %v1267
  %v2688 = vpop.f32.mrf.mxu0
  %v2689 = vadd.f32 %v2616, %v2688
  %v2690 = vpop.f32.mrf.mxu0
  %2691 = vdwg.mxu0
  %2692 = vmatpush.bf16.msra.mxu0 %v2053
  %2693 = vmatpush.bf16.msra.mxu0 %v2052
  %2694 = vmatpush.bf16.msra.mxu0 %v2051
  %2695 = vmatpush.bf16.msra.mxu0 %v2050
  %2696 = vmatpush.bf16.msra.mxu0 %v2049
  %2697 = vmatpush.bf16.msra.mxu0 %v2048
  %2698 = vmatpush.bf16.msra.mxu0 %v2047
  %2699 = vmatpush.bf16.msra.mxu0 %v2046
  %2700 = vmatmul.bf16.gmra.mxu0 %v1076
  %v2701 = vpop.f32.mrf.mxu0
  %v2702 = vadd.f32 %v2629, %v2701
  %v2703 = vpop.f32.mrf.mxu0
  %v2704 = vadd.f32 %v2631, %v2703
  %2705 = vmatmul.bf16.gmra.mxu0 %v1092
  %v2706 = vpop.f32.mrf.mxu0
  %v2707 = vadd.f32 %v2634, %v2706
  %v2708 = vpop.f32.mrf.mxu0
  %v2709 = vadd.f32 %v2636, %v2708
  %2710 = vmatmul.bf16.gmra.mxu0 %v1108
  %v2711 = vpop.f32.mrf.mxu0
  %v2712 = vadd.f32 %v2639, %v2711
  %v2713 = vpop.f32.mrf.mxu0
  %v2714 = vadd.f32 %v2641, %v2713
  %2715 = vmatmul.bf16.gmra.mxu0 %v1124
  %v2716 = vpop.f32.mrf.mxu0
  %v2717 = vadd.f32 %v2644, %v2716
  %v2718 = vpop.f32.mrf.mxu0
  %v2719 = vadd.f32 %v2646, %v2718
  %2720 = vmatmul.bf16.gmra.mxu0 %v1140
  %v2721 = vpop.f32.mrf.mxu0
  %v2722 = vadd.f32 %v2649, %v2721
  %v2723 = vpop.f32.mrf.mxu0
  %v2724 = vadd.f32 %v2651, %v2723
  %2725 = vmatmul.bf16.gmra.mxu0 %v1156
  %v2726 = vpop.f32.mrf.mxu0
  %v2727 = vadd.f32 %v2654, %v2726
  %v2728 = vpop.f32.mrf.mxu0
  %v2729 = vadd.f32 %v2656, %v2728
  %2730 = vmatmul.bf16.gmra.mxu0 %v1172
  %v2731 = vpop.f32.mrf.mxu0
  %v2732 = vadd.f32 %v2659, %v2731
  %v2733 = vpop.f32.mrf.mxu0
  %v2734 = vadd.f32 %v2661, %v2733
  %2735 = vmatmul.bf16.gmra.mxu0 %v1188
  %v2736 = vpop.f32.mrf.mxu0
  %v2737 = vadd.f32 %v2664, %v2736
  %v2738 = vpop.f32.mrf.mxu0
  %v2739 = vadd.f32 %v2666, %v2738
  %2740 = vmatmul.bf16.gmra.mxu0 %v1204
  %v2741 = vpop.f32.mrf.mxu0
  %v2742 = vadd.f32 %v2669, %v2741
  %v2743 = vpop.f32.mrf.mxu0
  %v2744 = vadd.f32 %v2671, %v2743
  %2745 = vmatmul.bf16.gmra.mxu0 %v1220
  %v2746 = vpop.f32.mrf.mxu0
  %v2747 = vadd.f32 %v2674, %v2746
  %v2748 = vpop.f32.mrf.mxu0
  %v2749 = vadd.f32 %v2676, %v2748
  %2750 = vmatmul.bf16.gmra.mxu0 %v1236
  %v2751 = vpop.f32.mrf.mxu0
  %v2752 = vadd.f32 %v2679, %v2751
  %v2753 = vpop.f32.mrf.mxu0
  %v2754 = vadd.f32 %v2681, %v2753
  %2755 = vmatmul.bf16.gmra.mxu0 %v1252
  %v2756 = vpop.f32.mrf.mxu0
  %v2757 = vadd.f32 %v2684, %v2756
  %v2758 = vpop.f32.mrf.mxu0
  %v2759 = vadd.f32 %v2686, %v2758
  %2760 = vmatmul.bf16.gmra.mxu0 %v1268
  %v2761 = vpop.f32.mrf.mxu0
  %v2762 = vadd.f32 %v2689, %v2761
  %v2763 = vpop.f32.mrf.mxu0
  %2764 = vdwg.mxu0
  %2765 = vmatpush.bf16.msra.mxu0 %v2061
  %2766 = vmatpush.bf16.msra.mxu0 %v2060
  %2767 = vmatpush.bf16.msra.mxu0 %v2059
  %2768 = vmatpush.bf16.msra.mxu0 %v2058
  %2769 = vmatpush.bf16.msra.mxu0 %v2057
  %2770 = vmatpush.bf16.msra.mxu0 %v2056
  %2771 = vmatpush.bf16.msra.mxu0 %v2055
  %2772 = vmatpush.bf16.msra.mxu0 %v2054
  %2773 = vmatmul.bf16.gmra.mxu0 %v1077
  %v2774 = vpop.f32.mrf.mxu0
  %v2775 = vadd.f32 %v2702, %v2774
  %v2776 = vpop.f32.mrf.mxu0
  %v2777 = vadd.f32 %v2704, %v2776
  %2778 = vmatmul.bf16.gmra.mxu0 %v1093
  %v2779 = vpop.f32.mrf.mxu0
  %v2780 = vadd.f32 %v2707, %v2779
  %v2781 = vpop.f32.mrf.mxu0
  %v2782 = vadd.f32 %v2709, %v2781
  %2783 = vmatmul.bf16.gmra.mxu0 %v1109
  %v2784 = vpop.f32.mrf.mxu0
  %v2785 = vadd.f32 %v2712, %v2784
  %v2786 = vpop.f32.mrf.mxu0
  %v2787 = vadd.f32 %v2714, %v2786
  %2788 = vmatmul.bf16.gmra.mxu0 %v1125
  %v2789 = vpop.f32.mrf.mxu0
  %v2790 = vadd.f32 %v2717, %v2789
  %v2791 = vpop.f32.mrf.mxu0
  %v2792 = vadd.f32 %v2719, %v2791
  %2793 = vmatmul.bf16.gmra.mxu0 %v1141
  %v2794 = vpop.f32.mrf.mxu0
  %v2795 = vadd.f32 %v2722, %v2794
  %v2796 = vpop.f32.mrf.mxu0
  %v2797 = vadd.f32 %v2724, %v2796
  %2798 = vmatmul.bf16.gmra.mxu0 %v1157
  %v2799 = vpop.f32.mrf.mxu0
  %v2800 = vadd.f32 %v2727, %v2799
  %v2801 = vpop.f32.mrf.mxu0
  %v2802 = vadd.f32 %v2729, %v2801
  %2803 = vmatmul.bf16.gmra.mxu0 %v1173
  %v2804 = vpop.f32.mrf.mxu0
  %v2805 = vadd.f32 %v2732, %v2804
  %v2806 = vpop.f32.mrf.mxu0
  %v2807 = vadd.f32 %v2734, %v2806
  %2808 = vmatmul.bf16.gmra.mxu0 %v1189
  %v2809 = vpop.f32.mrf.mxu0
  %v2810 = vadd.f32 %v2737, %v2809
  %v2811 = vpop.f32.mrf.mxu0
  %v2812 = vadd.f32 %v2739, %v2811
  %2813 = vmatmul.bf16.gmra.mxu0 %v1205
  %v2814 = vpop.f32.mrf.mxu0
  %v2815 = vadd.f32 %v2742, %v2814
  %v2816 = vpop.f32.mrf.mxu0
  %v2817 = vadd.f32 %v2744, %v2816
  %2818 = vmatmul.bf16.gmra.mxu0 %v1221
  %v2819 = vpop.f32.mrf.mxu0
  %v2820 = vadd.f32 %v2747, %v2819
  %v2821 = vpop.f32.mrf.mxu0
  %v2822 = vadd.f32 %v2749, %v2821
  %2823 = vmatmul.bf16.gmra.mxu0 %v1237
  %v2824 = vpop.f32.mrf.mxu0
  %v2825 = vadd.f32 %v2752, %v2824
  %v2826 = vpop.f32.mrf.mxu0
  %v2827 = vadd.f32 %v2754, %v2826
  %2828 = vmatmul.bf16.gmra.mxu0 %v1253
  %v2829 = vpop.f32.mrf.mxu0
  %v2830 = vadd.f32 %v2757, %v2829
  %v2831 = vpop.f32.mrf.mxu0
  %v2832 = vadd.f32 %v2759, %v2831
  %2833 = vmatmul.bf16.gmra.mxu0 %v1269
  %v2834 = vpop.f32.mrf.mxu0
  %v2835 = vadd.f32 %v2762, %v2834
  %v2836 = vpop.f32.mrf.mxu0
  %2837 = vdwg.mxu0
  %2838 = vmatpush.bf16.msra.mxu0 %v2069
  %2839 = vmatpush.bf16.msra.mxu0 %v2068
  %2840 = vmatpush.bf16.msra.mxu0 %v2067
  %2841 = vmatpush.bf16.msra.mxu0 %v2066
  %2842 = vmatpush.bf16.msra.mxu0 %v2065
  %2843 = vmatpush.bf16.msra.mxu0 %v2064
  %2844 = vmatpush.bf16.msra.mxu0 %v2063
  %2845 = vmatpush.bf16.msra.mxu0 %v2062
  %2846 = vmatmul.bf16.gmra.mxu0 %v1078
  %v2847 = vpop.f32.mrf.mxu0
  %v2848 = vadd.f32 %v2775, %v2847
  %v2849 = vpop.f32.mrf.mxu0
  %v2850 = vadd.f32 %v2777, %v2849
  %2851 = vmatmul.bf16.gmra.mxu0 %v1094
  %v2852 = vpop.f32.mrf.mxu0
  %v2853 = vadd.f32 %v2780, %v2852
  %v2854 = vpop.f32.mrf.mxu0
  %v2855 = vadd.f32 %v2782, %v2854
  %2856 = vmatmul.bf16.gmra.mxu0 %v1110
  %v2857 = vpop.f32.mrf.mxu0
  %v2858 = vadd.f32 %v2785, %v2857
  %v2859 = vpop.f32.mrf.mxu0
  %v2860 = vadd.f32 %v2787, %v2859
  %2861 = vmatmul.bf16.gmra.mxu0 %v1126
  %v2862 = vpop.f32.mrf.mxu0
  %v2863 = vadd.f32 %v2790, %v2862
  %v2864 = vpop.f32.mrf.mxu0
  %v2865 = vadd.f32 %v2792, %v2864
  %2866 = vmatmul.bf16.gmra.mxu0 %v1142
  %v2867 = vpop.f32.mrf.mxu0
  %v2868 = vadd.f32 %v2795, %v2867
  %v2869 = vpop.f32.mrf.mxu0
  %v2870 = vadd.f32 %v2797, %v2869
  %2871 = vmatmul.bf16.gmra.mxu0 %v1158
  %v2872 = vpop.f32.mrf.mxu0
  %v2873 = vadd.f32 %v2800, %v2872
  %v2874 = vpop.f32.mrf.mxu0
  %v2875 = vadd.f32 %v2802, %v2874
  %2876 = vmatmul.bf16.gmra.mxu0 %v1174
  %v2877 = vpop.f32.mrf.mxu0
  %v2878 = vadd.f32 %v2805, %v2877
  %v2879 = vpop.f32.mrf.mxu0
  %v2880 = vadd.f32 %v2807, %v2879
  %2881 = vmatmul.bf16.gmra.mxu0 %v1190
  %v2882 = vpop.f32.mrf.mxu0
  %v2883 = vadd.f32 %v2810, %v2882
  %v2884 = vpop.f32.mrf.mxu0
  %v2885 = vadd.f32 %v2812, %v2884
  %2886 = vmatmul.bf16.gmra.mxu0 %v1206
  %v2887 = vpop.f32.mrf.mxu0
  %v2888 = vadd.f32 %v2815, %v2887
  %v2889 = vpop.f32.mrf.mxu0
  %v2890 = vadd.f32 %v2817, %v2889
  %2891 = vmatmul.bf16.gmra.mxu0 %v1222
  %v2892 = vpop.f32.mrf.mxu0
  %v2893 = vadd.f32 %v2820, %v2892
  %v2894 = vpop.f32.mrf.mxu0
  %v2895 = vadd.f32 %v2822, %v2894
  %2896 = vmatmul.bf16.gmra.mxu0 %v1238
  %v2897 = vpop.f32.mrf.mxu0
  %v2898 = vadd.f32 %v2825, %v2897
  %v2899 = vpop.f32.mrf.mxu0
  %v2900 = vadd.f32 %v2827, %v2899
  %2901 = vmatmul.bf16.gmra.mxu0 %v1254
  %v2902 = vpop.f32.mrf.mxu0
  %v2903 = vadd.f32 %v2830, %v2902
  %v2904 = vpop.f32.mrf.mxu0
  %v2905 = vadd.f32 %v2832, %v2904
  %2906 = vmatmul.bf16.gmra.mxu0 %v1270
  %v2907 = vpop.f32.mrf.mxu0
  %v2908 = vadd.f32 %v2835, %v2907
  %v2909 = vpop.f32.mrf.mxu0
  %2910 = vdwg.mxu0
  %2911 = vmatpush.bf16.msra.mxu0 %v2077
  %2912 = vmatpush.bf16.msra.mxu0 %v2076
  %2913 = vmatpush.bf16.msra.mxu0 %v2075
  %2914 = vmatpush.bf16.msra.mxu0 %v2074
  %2915 = vmatpush.bf16.msra.mxu0 %v2073
  %2916 = vmatpush.bf16.msra.mxu0 %v2072
  %2917 = vmatpush.bf16.msra.mxu0 %v2071
  %2918 = vmatpush.bf16.msra.mxu0 %v2070
  %2919 = vmatmul.bf16.gmra.mxu0 %v1079
  %v2920 = vpop.f32.mrf.mxu0
  %v2921 = vadd.f32 %v2848, %v2920
  %v2922 = vpop.f32.mrf.mxu0
  %v2923 = vadd.f32 %v2850, %v2922
  %2924 = vmatmul.bf16.gmra.mxu0 %v1095
  %v2925 = vpop.f32.mrf.mxu0
  %v2926 = vadd.f32 %v2853, %v2925
  %v2927 = vpop.f32.mrf.mxu0
  %v2928 = vadd.f32 %v2855, %v2927
  %2929 = vmatmul.bf16.gmra.mxu0 %v1111
  %v2930 = vpop.f32.mrf.mxu0
  %v2931 = vadd.f32 %v2858, %v2930
  %v2932 = vpop.f32.mrf.mxu0
  %v2933 = vadd.f32 %v2860, %v2932
  %2934 = vmatmul.bf16.gmra.mxu0 %v1127
  %v2935 = vpop.f32.mrf.mxu0
  %v2936 = vadd.f32 %v2863, %v2935
  %v2937 = vpop.f32.mrf.mxu0
  %v2938 = vadd.f32 %v2865, %v2937
  %2939 = vmatmul.bf16.gmra.mxu0 %v1143
  %v2940 = vpop.f32.mrf.mxu0
  %v2941 = vadd.f32 %v2868, %v2940
  %v2942 = vpop.f32.mrf.mxu0
  %v2943 = vadd.f32 %v2870, %v2942
  %2944 = vmatmul.bf16.gmra.mxu0 %v1159
  %v2945 = vpop.f32.mrf.mxu0
  %v2946 = vadd.f32 %v2873, %v2945
  %v2947 = vpop.f32.mrf.mxu0
  %v2948 = vadd.f32 %v2875, %v2947
  %2949 = vmatmul.bf16.gmra.mxu0 %v1175
  %v2950 = vpop.f32.mrf.mxu0
  %v2951 = vadd.f32 %v2878, %v2950
  %v2952 = vpop.f32.mrf.mxu0
  %v2953 = vadd.f32 %v2880, %v2952
  %2954 = vmatmul.bf16.gmra.mxu0 %v1191
  %v2955 = vpop.f32.mrf.mxu0
  %v2956 = vadd.f32 %v2883, %v2955
  %v2957 = vpop.f32.mrf.mxu0
  %v2958 = vadd.f32 %v2885, %v2957
  %2959 = vmatmul.bf16.gmra.mxu0 %v1207
  %v2960 = vpop.f32.mrf.mxu0
  %v2961 = vadd.f32 %v2888, %v2960
  %v2962 = vpop.f32.mrf.mxu0
  %v2963 = vadd.f32 %v2890, %v2962
  %2964 = vmatmul.bf16.gmra.mxu0 %v1223
  %v2965 = vpop.f32.mrf.mxu0
  %v2966 = vadd.f32 %v2893, %v2965
  %v2967 = vpop.f32.mrf.mxu0
  %v2968 = vadd.f32 %v2895, %v2967
  %2969 = vmatmul.bf16.gmra.mxu0 %v1239
  %v2970 = vpop.f32.mrf.mxu0
  %v2971 = vadd.f32 %v2898, %v2970
  %v2972 = vpop.f32.mrf.mxu0
  %v2973 = vadd.f32 %v2900, %v2972
  %2974 = vmatmul.bf16.gmra.mxu0 %v1255
  %v2975 = vpop.f32.mrf.mxu0
  %v2976 = vadd.f32 %v2903, %v2975
  %v2977 = vpop.f32.mrf.mxu0
  %v2978 = vadd.f32 %v2905, %v2977
  %2979 = vmatmul.bf16.gmra.mxu0 %v1271
  %v2980 = vpop.f32.mrf.mxu0
  %v2981 = vadd.f32 %v2908, %v2980
  %v2982 = vpop.f32.mrf.mxu0
  %2983 = vdwg.mxu0
  %2984 = vmatpush.bf16.msra.mxu0 %v2085
  %2985 = vmatpush.bf16.msra.mxu0 %v2084
  %2986 = vmatpush.bf16.msra.mxu0 %v2083
  %2987 = vmatpush.bf16.msra.mxu0 %v2082
  %2988 = vmatpush.bf16.msra.mxu0 %v2081
  %2989 = vmatpush.bf16.msra.mxu0 %v2080
  %2990 = vmatpush.bf16.msra.mxu0 %v2079
  %2991 = vmatpush.bf16.msra.mxu0 %v2078
  %2992 = vmatmul.bf16.gmra.mxu0 %v1080
  %v2993 = vpop.f32.mrf.mxu0
  %v2994 = vadd.f32 %v2921, %v2993
  %v2995 = vpop.f32.mrf.mxu0
  %v2996 = vadd.f32 %v2923, %v2995
  %2997 = vmatmul.bf16.gmra.mxu0 %v1096
  %v2998 = vpop.f32.mrf.mxu0
  %v2999 = vadd.f32 %v2926, %v2998
  %v3000 = vpop.f32.mrf.mxu0
  %v3001 = vadd.f32 %v2928, %v3000
  %3002 = vmatmul.bf16.gmra.mxu0 %v1112
  %v3003 = vpop.f32.mrf.mxu0
  %v3004 = vadd.f32 %v2931, %v3003
  %v3005 = vpop.f32.mrf.mxu0
  %v3006 = vadd.f32 %v2933, %v3005
  %3007 = vmatmul.bf16.gmra.mxu0 %v1128
  %v3008 = vpop.f32.mrf.mxu0
  %v3009 = vadd.f32 %v2936, %v3008
  %v3010 = vpop.f32.mrf.mxu0
  %v3011 = vadd.f32 %v2938, %v3010
  %3012 = vmatmul.bf16.gmra.mxu0 %v1144
  %v3013 = vpop.f32.mrf.mxu0
  %v3014 = vadd.f32 %v2941, %v3013
  %v3015 = vpop.f32.mrf.mxu0
  %v3016 = vadd.f32 %v2943, %v3015
  %3017 = vmatmul.bf16.gmra.mxu0 %v1160
  %v3018 = vpop.f32.mrf.mxu0
  %v3019 = vadd.f32 %v2946, %v3018
  %v3020 = vpop.f32.mrf.mxu0
  %v3021 = vadd.f32 %v2948, %v3020
  %3022 = vmatmul.bf16.gmra.mxu0 %v1176
  %v3023 = vpop.f32.mrf.mxu0
  %v3024 = vadd.f32 %v2951, %v3023
  %v3025 = vpop.f32.mrf.mxu0
  %v3026 = vadd.f32 %v2953, %v3025
  %3027 = vmatmul.bf16.gmra.mxu0 %v1192
  %v3028 = vpop.f32.mrf.mxu0
  %v3029 = vadd.f32 %v2956, %v3028
  %v3030 = vpop.f32.mrf.mxu0
  %v3031 = vadd.f32 %v2958, %v3030
  %3032 = vmatmul.bf16.gmra.mxu0 %v1208
  %v3033 = vpop.f32.mrf.mxu0
  %v3034 = vadd.f32 %v2961, %v3033
  %v3035 = vpop.f32.mrf.mxu0
  %v3036 = vadd.f32 %v2963, %v3035
  %3037 = vmatmul.bf16.gmra.mxu0 %v1224
  %v3038 = vpop.f32.mrf.mxu0
  %v3039 = vadd.f32 %v2966, %v3038
  %v3040 = vpop.f32.mrf.mxu0
  %v3041 = vadd.f32 %v2968, %v3040
  %3042 = vmatmul.bf16.gmra.mxu0 %v1240
  %v3043 = vpop.f32.mrf.mxu0
  %v3044 = vadd.f32 %v2971, %v3043
  %v3045 = vpop.f32.mrf.mxu0
  %v3046 = vadd.f32 %v2973, %v3045
  %3047 = vmatmul.bf16.gmra.mxu0 %v1256
  %v3048 = vpop.f32.mrf.mxu0
  %v3049 = vadd.f32 %v2976, %v3048
  %v3050 = vpop.f32.mrf.mxu0
  %v3051 = vadd.f32 %v2978, %v3050
  %3052 = vmatmul.bf16.gmra.mxu0 %v1272
  %v3053 = vpop.f32.mrf.mxu0
  %v3054 = vadd.f32 %v2981, %v3053
  %v3055 = vpop.f32.mrf.mxu0
  %3056 = vdwg.mxu0
  %3057 = vmatpush.bf16.msra.mxu0 %v2093
  %3058 = vmatpush.bf16.msra.mxu0 %v2092
  %3059 = vmatpush.bf16.msra.mxu0 %v2091
  %3060 = vmatpush.bf16.msra.mxu0 %v2090
  %3061 = vmatpush.bf16.msra.mxu0 %v2089
  %3062 = vmatpush.bf16.msra.mxu0 %v2088
  %3063 = vmatpush.bf16.msra.mxu0 %v2087
  %3064 = vmatpush.bf16.msra.mxu0 %v2086
  %3065 = vmatmul.bf16.gmra.mxu0 %v1081
  %v3066 = vpop.f32.mrf.mxu0
  %v3067 = vadd.f32 %v2994, %v3066
  %v3068 = vpop.f32.mrf.mxu0
  %v3069 = vadd.f32 %v2996, %v3068
  %3070 = vmatmul.bf16.gmra.mxu0 %v1097
  %v3071 = vpop.f32.mrf.mxu0
  %v3072 = vadd.f32 %v2999, %v3071
  %v3073 = vpop.f32.mrf.mxu0
  %v3074 = vadd.f32 %v3001, %v3073
  %3075 = vmatmul.bf16.gmra.mxu0 %v1113
  %v3076 = vpop.f32.mrf.mxu0
  %v3077 = vadd.f32 %v3004, %v3076
  %v3078 = vpop.f32.mrf.mxu0
  %v3079 = vadd.f32 %v3006, %v3078
  %3080 = vmatmul.bf16.gmra.mxu0 %v1129
  %v3081 = vpop.f32.mrf.mxu0
  %v3082 = vadd.f32 %v3009, %v3081
  %v3083 = vpop.f32.mrf.mxu0
  %v3084 = vadd.f32 %v3011, %v3083
  %3085 = vmatmul.bf16.gmra.mxu0 %v1145
  %v3086 = vpop.f32.mrf.mxu0
  %v3087 = vadd.f32 %v3014, %v3086
  %v3088 = vpop.f32.mrf.mxu0
  %v3089 = vadd.f32 %v3016, %v3088
  %3090 = vmatmul.bf16.gmra.mxu0 %v1161
  %v3091 = vpop.f32.mrf.mxu0
  %v3092 = vadd.f32 %v3019, %v3091
  %v3093 = vpop.f32.mrf.mxu0
  %v3094 = vadd.f32 %v3021, %v3093
  %3095 = vmatmul.bf16.gmra.mxu0 %v1177
  %v3096 = vpop.f32.mrf.mxu0
  %v3097 = vadd.f32 %v3024, %v3096
  %v3098 = vpop.f32.mrf.mxu0
  %v3099 = vadd.f32 %v3026, %v3098
  %3100 = vmatmul.bf16.gmra.mxu0 %v1193
  %v3101 = vpop.f32.mrf.mxu0
  %v3102 = vadd.f32 %v3029, %v3101
  %v3103 = vpop.f32.mrf.mxu0
  %v3104 = vadd.f32 %v3031, %v3103
  %3105 = vmatmul.bf16.gmra.mxu0 %v1209
  %v3106 = vpop.f32.mrf.mxu0
  %v3107 = vadd.f32 %v3034, %v3106
  %v3108 = vpop.f32.mrf.mxu0
  %v3109 = vadd.f32 %v3036, %v3108
  %3110 = vmatmul.bf16.gmra.mxu0 %v1225
  %v3111 = vpop.f32.mrf.mxu0
  %v3112 = vadd.f32 %v3039, %v3111
  %v3113 = vpop.f32.mrf.mxu0
  %v3114 = vadd.f32 %v3041, %v3113
  %3115 = vmatmul.bf16.gmra.mxu0 %v1241
  %v3116 = vpop.f32.mrf.mxu0
  %v3117 = vadd.f32 %v3044, %v3116
  %v3118 = vpop.f32.mrf.mxu0
  %v3119 = vadd.f32 %v3046, %v3118
  %3120 = vmatmul.bf16.gmra.mxu0 %v1257
  %v3121 = vpop.f32.mrf.mxu0
  %v3122 = vadd.f32 %v3049, %v3121
  %v3123 = vpop.f32.mrf.mxu0
  %v3124 = vadd.f32 %v3051, %v3123
  %3125 = vmatmul.bf16.gmra.mxu0 %v1273
  %v3126 = vpop.f32.mrf.mxu0
  %v3127 = vadd.f32 %v3054, %v3126
  %v3128 = vpop.f32.mrf.mxu0
  %3129 = vdwg.mxu0
  %3130 = vmatpush.bf16.msra.mxu0 %v2101
  %3131 = vmatpush.bf16.msra.mxu0 %v2100
  %3132 = vmatpush.bf16.msra.mxu0 %v2099
  %3133 = vmatpush.bf16.msra.mxu0 %v2098
  %3134 = vmatpush.bf16.msra.mxu0 %v2097
  %3135 = vmatpush.bf16.msra.mxu0 %v2096
  %3136 = vmatpush.bf16.msra.mxu0 %v2095
  %3137 = vmatpush.bf16.msra.mxu0 %v2094
  %3138 = vmatmul.bf16.gmra.mxu0 %v1082
  %v3139 = vpop.f32.mrf.mxu0
  %v3140 = vadd.f32 %v3067, %v3139
  %v3141 = vpop.f32.mrf.mxu0
  %v3142 = vadd.f32 %v3069, %v3141
  %3143 = vmatmul.bf16.gmra.mxu0 %v1098
  %v3144 = vpop.f32.mrf.mxu0
  %v3145 = vadd.f32 %v3072, %v3144
  %v3146 = vpop.f32.mrf.mxu0
  %v3147 = vadd.f32 %v3074, %v3146
  %3148 = vmatmul.bf16.gmra.mxu0 %v1114
  %v3149 = vpop.f32.mrf.mxu0
  %v3150 = vadd.f32 %v3077, %v3149
  %v3151 = vpop.f32.mrf.mxu0
  %v3152 = vadd.f32 %v3079, %v3151
  %3153 = vmatmul.bf16.gmra.mxu0 %v1130
  %v3154 = vpop.f32.mrf.mxu0
  %v3155 = vadd.f32 %v3082, %v3154
  %v3156 = vpop.f32.mrf.mxu0
  %v3157 = vadd.f32 %v3084, %v3156
  %3158 = vmatmul.bf16.gmra.mxu0 %v1146
  %v3159 = vpop.f32.mrf.mxu0
  %v3160 = vadd.f32 %v3087, %v3159
  %v3161 = vpop.f32.mrf.mxu0
  %v3162 = vadd.f32 %v3089, %v3161
  %3163 = vmatmul.bf16.gmra.mxu0 %v1162
  %v3164 = vpop.f32.mrf.mxu0
  %v3165 = vadd.f32 %v3092, %v3164
  %v3166 = vpop.f32.mrf.mxu0
  %v3167 = vadd.f32 %v3094, %v3166
  %3168 = vmatmul.bf16.gmra.mxu0 %v1178
  %v3169 = vpop.f32.mrf.mxu0
  %v3170 = vadd.f32 %v3097, %v3169
  %v3171 = vpop.f32.mrf.mxu0
  %v3172 = vadd.f32 %v3099, %v3171
  %3173 = vmatmul.bf16.gmra.mxu0 %v1194
  %v3174 = vpop.f32.mrf.mxu0
  %v3175 = vadd.f32 %v3102, %v3174
  %v3176 = vpop.f32.mrf.mxu0
  %v3177 = vadd.f32 %v3104, %v3176
  %3178 = vmatmul.bf16.gmra.mxu0 %v1210
  %v3179 = vpop.f32.mrf.mxu0
  %v3180 = vadd.f32 %v3107, %v3179
  %v3181 = vpop.f32.mrf.mxu0
  %v3182 = vadd.f32 %v3109, %v3181
  %3183 = vmatmul.bf16.gmra.mxu0 %v1226
  %v3184 = vpop.f32.mrf.mxu0
  %v3185 = vadd.f32 %v3112, %v3184
  %v3186 = vpop.f32.mrf.mxu0
  %v3187 = vadd.f32 %v3114, %v3186
  %3188 = vmatmul.bf16.gmra.mxu0 %v1242
  %v3189 = vpop.f32.mrf.mxu0
  %v3190 = vadd.f32 %v3117, %v3189
  %v3191 = vpop.f32.mrf.mxu0
  %v3192 = vadd.f32 %v3119, %v3191
  %3193 = vmatmul.bf16.gmra.mxu0 %v1258
  %v3194 = vpop.f32.mrf.mxu0
  %v3195 = vadd.f32 %v3122, %v3194
  %v3196 = vpop.f32.mrf.mxu0
  %v3197 = vadd.f32 %v3124, %v3196
  %3198 = vmatmul.bf16.gmra.mxu0 %v1274
  %v3199 = vpop.f32.mrf.mxu0
  %v3200 = vadd.f32 %v3127, %v3199
  %v3201 = vpop.f32.mrf.mxu0
  %3202 = vdwg.mxu0
  %3203 = vmatpush.bf16.msra.mxu0 %v2109
  %3204 = vmatpush.bf16.msra.mxu0 %v2108
  %3205 = vmatpush.bf16.msra.mxu0 %v2107
  %3206 = vmatpush.bf16.msra.mxu0 %v2106
  %3207 = vmatpush.bf16.msra.mxu0 %v2105
  %3208 = vmatpush.bf16.msra.mxu0 %v2104
  %3209 = vmatpush.bf16.msra.mxu0 %v2103
  %3210 = vmatpush.bf16.msra.mxu0 %v2102
  %3211 = vmatmul.bf16.gmra.mxu0 %v1083
  %v3212 = vpop.f32.mrf.mxu0
  %v3213 = vadd.f32 %v3140, %v3212
  %v3214 = vpop.f32.mrf.mxu0
  %v3215 = vadd.f32 %v3142, %v3214
  %3216 = vmatmul.bf16.gmra.mxu0 %v1099
  %v3217 = vpop.f32.mrf.mxu0
  %v3218 = vadd.f32 %v3145, %v3217
  %v3219 = vpop.f32.mrf.mxu0
  %v3220 = vadd.f32 %v3147, %v3219
  %3221 = vmatmul.bf16.gmra.mxu0 %v1115
  %v3222 = vpop.f32.mrf.mxu0
  %v3223 = vadd.f32 %v3150, %v3222
  %v3224 = vpop.f32.mrf.mxu0
  %v3225 = vadd.f32 %v3152, %v3224
  %3226 = vmatmul.bf16.gmra.mxu0 %v1131
  %v3227 = vpop.f32.mrf.mxu0
  %v3228 = vadd.f32 %v3155, %v3227
  %v3229 = vpop.f32.mrf.mxu0
  %v3230 = vadd.f32 %v3157, %v3229
  %3231 = vmatmul.bf16.gmra.mxu0 %v1147
  %v3232 = vpop.f32.mrf.mxu0
  %v3233 = vadd.f32 %v3160, %v3232
  %v3234 = vpop.f32.mrf.mxu0
  %v3235 = vadd.f32 %v3162, %v3234
  %3236 = vmatmul.bf16.gmra.mxu0 %v1163
  %v3237 = vpop.f32.mrf.mxu0
  %v3238 = vadd.f32 %v3165, %v3237
  %v3239 = vpop.f32.mrf.mxu0
  %v3240 = vadd.f32 %v3167, %v3239
  %3241 = vmatmul.bf16.gmra.mxu0 %v1179
  %v3242 = vpop.f32.mrf.mxu0
  %v3243 = vadd.f32 %v3170, %v3242
  %v3244 = vpop.f32.mrf.mxu0
  %v3245 = vadd.f32 %v3172, %v3244
  %3246 = vmatmul.bf16.gmra.mxu0 %v1195
  %v3247 = vpop.f32.mrf.mxu0
  %v3248 = vadd.f32 %v3175, %v3247
  %v3249 = vpop.f32.mrf.mxu0
  %v3250 = vadd.f32 %v3177, %v3249
  %3251 = vmatmul.bf16.gmra.mxu0 %v1211
  %v3252 = vpop.f32.mrf.mxu0
  %v3253 = vadd.f32 %v3180, %v3252
  %v3254 = vpop.f32.mrf.mxu0
  %v3255 = vadd.f32 %v3182, %v3254
  %3256 = vmatmul.bf16.gmra.mxu0 %v1227
  %v3257 = vpop.f32.mrf.mxu0
  %v3258 = vadd.f32 %v3185, %v3257
  %v3259 = vpop.f32.mrf.mxu0
  %v3260 = vadd.f32 %v3187, %v3259
  %3261 = vmatmul.bf16.gmra.mxu0 %v1243
  %v3262 = vpop.f32.mrf.mxu0
  %v3263 = vadd.f32 %v3190, %v3262
  %v3264 = vpop.f32.mrf.mxu0
  %v3265 = vadd.f32 %v3192, %v3264
  %3266 = vmatmul.bf16.gmra.mxu0 %v1259
  %v3267 = vpop.f32.mrf.mxu0
  %v3268 = vadd.f32 %v3195, %v3267
  %v3269 = vpop.f32.mrf.mxu0
  %v3270 = vadd.f32 %v3197, %v3269
  %3271 = vmatmul.bf16.gmra.mxu0 %v1275
  %v3272 = vpop.f32.mrf.mxu0
  %v3273 = vadd.f32 %v3200, %v3272
  %v3274 = vpop.f32.mrf.mxu0
  %3275 = vdwg.mxu0
  %3276 = vmatpush.bf16.msra.mxu0 %v2117
  %3277 = vmatpush.bf16.msra.mxu0 %v2116
  %3278 = vmatpush.bf16.msra.mxu0 %v2115
  %3279 = vmatpush.bf16.msra.mxu0 %v2114
  %3280 = vmatpush.bf16.msra.mxu0 %v2113
  %3281 = vmatpush.bf16.msra.mxu0 %v2112
  %3282 = vmatpush.bf16.msra.mxu0 %v2111
  %3283 = vmatpush.bf16.msra.mxu0 %v2110
  %3284 = vmatmul.bf16.gmra.mxu0 %v1084
  %v3285 = vpop.f32.mrf.mxu0
  %v3286 = vadd.f32 %v3213, %v3285
  %v3287 = vpop.f32.mrf.mxu0
  %v3288 = vadd.f32 %v3215, %v3287
  %3289 = vmatmul.bf16.gmra.mxu0 %v1100
  %v3290 = vpop.f32.mrf.mxu0
  %v3291 = vadd.f32 %v3218, %v3290
  %v3292 = vpop.f32.mrf.mxu0
  %v3293 = vadd.f32 %v3220, %v3292
  %3294 = vmatmul.bf16.gmra.mxu0 %v1116
  %v3295 = vpop.f32.mrf.mxu0
  %v3296 = vadd.f32 %v3223, %v3295
  %v3297 = vpop.f32.mrf.mxu0
  %v3298 = vadd.f32 %v3225, %v3297
  %3299 = vmatmul.bf16.gmra.mxu0 %v1132
  %v3300 = vpop.f32.mrf.mxu0
  %v3301 = vadd.f32 %v3228, %v3300
  %v3302 = vpop.f32.mrf.mxu0
  %v3303 = vadd.f32 %v3230, %v3302
  %3304 = vmatmul.bf16.gmra.mxu0 %v1148
  %v3305 = vpop.f32.mrf.mxu0
  %v3306 = vadd.f32 %v3233, %v3305
  %v3307 = vpop.f32.mrf.mxu0
  %v3308 = vadd.f32 %v3235, %v3307
  %3309 = vmatmul.bf16.gmra.mxu0 %v1164
  %v3310 = vpop.f32.mrf.mxu0
  %v3311 = vadd.f32 %v3238, %v3310
  %v3312 = vpop.f32.mrf.mxu0
  %v3313 = vadd.f32 %v3240, %v3312
  %3314 = vmatmul.bf16.gmra.mxu0 %v1180
  %v3315 = vpop.f32.mrf.mxu0
  %v3316 = vadd.f32 %v3243, %v3315
  %v3317 = vpop.f32.mrf.mxu0
  %v3318 = vadd.f32 %v3245, %v3317
  %3319 = vmatmul.bf16.gmra.mxu0 %v1196
  %v3320 = vpop.f32.mrf.mxu0
  %v3321 = vadd.f32 %v3248, %v3320
  %v3322 = vpop.f32.mrf.mxu0
  %v3323 = vadd.f32 %v3250, %v3322
  %3324 = vmatmul.bf16.gmra.mxu0 %v1212
  %v3325 = vpop.f32.mrf.mxu0
  %v3326 = vadd.f32 %v3253, %v3325
  %v3327 = vpop.f32.mrf.mxu0
  %v3328 = vadd.f32 %v3255, %v3327
  %3329 = vmatmul.bf16.gmra.mxu0 %v1228
  %v3330 = vpop.f32.mrf.mxu0
  %v3331 = vadd.f32 %v3258, %v3330
  %v3332 = vpop.f32.mrf.mxu0
  %v3333 = vadd.f32 %v3260, %v3332
  %3334 = vmatmul.bf16.gmra.mxu0 %v1244
  %v3335 = vpop.f32.mrf.mxu0
  %v3336 = vadd.f32 %v3263, %v3335
  %v3337 = vpop.f32.mrf.mxu0
  %v3338 = vadd.f32 %v3265, %v3337
  %3339 = vmatmul.bf16.gmra.mxu0 %v1260
  %v3340 = vpop.f32.mrf.mxu0
  %v3341 = vadd.f32 %v3268, %v3340
  %v3342 = vpop.f32.mrf.mxu0
  %v3343 = vadd.f32 %v3270, %v3342
  %3344 = vmatmul.bf16.gmra.mxu0 %v1276
  %v3345 = vpop.f32.mrf.mxu0
  %v3346 = vadd.f32 %v3273, %v3345
  %v3347 = vpop.f32.mrf.mxu0
  %3348 = vdwg.mxu0
  %3349 = vmatpush.bf16.msra.mxu0 %v2125
  %3350 = vmatpush.bf16.msra.mxu0 %v2124
  %3351 = vmatpush.bf16.msra.mxu0 %v2123
  %3352 = vmatpush.bf16.msra.mxu0 %v2122
  %3353 = vmatpush.bf16.msra.mxu0 %v2121
  %3354 = vmatpush.bf16.msra.mxu0 %v2120
  %3355 = vmatpush.bf16.msra.mxu0 %v2119
  %3356 = vmatpush.bf16.msra.mxu0 %v2118
  %3357 = vmatmul.bf16.gmra.mxu0 %v1085
  %v3358 = vpop.f32.mrf.mxu0
  %v3359 = vadd.f32 %v3286, %v3358
  %v3360 = vpop.f32.mrf.mxu0
  %v3361 = vadd.f32 %v3288, %v3360
  %3362 = vmatmul.bf16.gmra.mxu0 %v1101
  %v3363 = vpop.f32.mrf.mxu0
  %v3364 = vadd.f32 %v3291, %v3363
  %v3365 = vpop.f32.mrf.mxu0
  %v3366 = vadd.f32 %v3293, %v3365
  %3367 = vmatmul.bf16.gmra.mxu0 %v1117
  %v3368 = vpop.f32.mrf.mxu0
  %v3369 = vadd.f32 %v3296, %v3368
  %v3370 = vpop.f32.mrf.mxu0
  %v3371 = vadd.f32 %v3298, %v3370
  %3372 = vmatmul.bf16.gmra.mxu0 %v1133
  %v3373 = vpop.f32.mrf.mxu0
  %v3374 = vadd.f32 %v3301, %v3373
  %v3375 = vpop.f32.mrf.mxu0
  %v3376 = vadd.f32 %v3303, %v3375
  %3377 = vmatmul.bf16.gmra.mxu0 %v1149
  %v3378 = vpop.f32.mrf.mxu0
  %v3379 = vadd.f32 %v3306, %v3378
  %v3380 = vpop.f32.mrf.mxu0
  %v3381 = vadd.f32 %v3308, %v3380
  %3382 = vmatmul.bf16.gmra.mxu0 %v1165
  %v3383 = vpop.f32.mrf.mxu0
  %v3384 = vadd.f32 %v3311, %v3383
  %v3385 = vpop.f32.mrf.mxu0
  %v3386 = vadd.f32 %v3313, %v3385
  %3387 = vmatmul.bf16.gmra.mxu0 %v1181
  %v3388 = vpop.f32.mrf.mxu0
  %v3389 = vadd.f32 %v3316, %v3388
  %v3390 = vpop.f32.mrf.mxu0
  %v3391 = vadd.f32 %v3318, %v3390
  %3392 = vmatmul.bf16.gmra.mxu0 %v1197
  %v3393 = vpop.f32.mrf.mxu0
  %v3394 = vadd.f32 %v3321, %v3393
  %v3395 = vpop.f32.mrf.mxu0
  %v3396 = vadd.f32 %v3323, %v3395
  %3397 = vmatmul.bf16.gmra.mxu0 %v1213
  %v3398 = vpop.f32.mrf.mxu0
  %v3399 = vadd.f32 %v3326, %v3398
  %v3400 = vpop.f32.mrf.mxu0
  %v3401 = vadd.f32 %v3328, %v3400
  %3402 = vmatmul.bf16.gmra.mxu0 %v1229
  %v3403 = vpop.f32.mrf.mxu0
  %v3404 = vadd.f32 %v3331, %v3403
  %v3405 = vpop.f32.mrf.mxu0
  %v3406 = vadd.f32 %v3333, %v3405
  %3407 = vmatmul.bf16.gmra.mxu0 %v1245
  %v3408 = vpop.f32.mrf.mxu0
  %v3409 = vadd.f32 %v3336, %v3408
  %v3410 = vpop.f32.mrf.mxu0
  %v3411 = vadd.f32 %v3338, %v3410
  %3412 = vmatmul.bf16.gmra.mxu0 %v1261
  %v3413 = vpop.f32.mrf.mxu0
  %v3414 = vadd.f32 %v3341, %v3413
  %v3415 = vpop.f32.mrf.mxu0
  %v3416 = vadd.f32 %v3343, %v3415
  %3417 = vmatmul.bf16.gmra.mxu0 %v1277
  %v3418 = vpop.f32.mrf.mxu0
  %v3419 = vadd.f32 %v3346, %v3418
  %v3420 = vpop.f32.mrf.mxu0
  %3421 = vdwg.mxu0
  %v3422 = vld [vmem:[%s2] sm:$0x1]
  %v3423 = vperm.slane %v3422, 0
  %v3424 = vmul.f32 %v3359, %v3423
  %v3425 = vmul.f32 %v3361, %v3423
  %v3426 = vmul.f32 %v3364, %v3423
  %v3427 = vmul.f32 %v3366, %v3423
  %v3428 = vmul.f32 %v3369, %v3423
  %v3429 = vmul.f32 %v3371, %v3423
  %v3430 = vmul.f32 %v3374, %v3423
  %v3431 = vmul.f32 %v3376, %v3423
  %v3432 = vmul.f32 %v3379, %v3423
  %v3433 = vmul.f32 %v3381, %v3423
  %v3434 = vmul.f32 %v3384, %v3423
  %v3435 = vmul.f32 %v3386, %v3423
  %v3436 = vmul.f32 %v3389, %v3423
  %v3437 = vmul.f32 %v3391, %v3423
  %v3438 = vmul.f32 %v3394, %v3423
  %v3439 = vmul.f32 %v3396, %v3423
  %v3440 = vmul.f32 %v3399, %v3423
  %v3441 = vmul.f32 %v3401, %v3423
  %v3442 = vmul.f32 %v3404, %v3423
  %v3443 = vmul.f32 %v3406, %v3423
  %v3444 = vmul.f32 %v3409, %v3423
  %v3445 = vmul.f32 %v3411, %v3423
  %v3446 = vmul.f32 %v3414, %v3423
  %v3447 = vmul.f32 %v3416, %v3423
  %v3448 = vmul.f32 %v3419, %v3423
  %v3449 = vld [vmem:[%s2 + $0x1] sm:$0x1]
  %v3450 = vperm.slane %v3449, 0
  %v3451 = vadd.f32 %v3424, %v3450
  %v3452 = vadd.f32 %v3425, %v3450
  %v3453 = vadd.f32 %v3426, %v3450
  %v3454 = vadd.f32 %v3427, %v3450
  %v3455 = vadd.f32 %v3428, %v3450
  %v3456 = vadd.f32 %v3429, %v3450
  %v3457 = vadd.f32 %v3430, %v3450
  %v3458 = vadd.f32 %v3431, %v3450
  %v3459 = vadd.f32 %v3432, %v3450
  %v3460 = vadd.f32 %v3433, %v3450
  %v3461 = vadd.f32 %v3434, %v3450
  %v3462 = vadd.f32 %v3435, %v3450
  %v3463 = vadd.f32 %v3436, %v3450
  %v3464 = vadd.f32 %v3437, %v3450
  %v3465 = vadd.f32 %v3438, %v3450
  %v3466 = vadd.f32 %v3439, %v3450
  %v3467 = vadd.f32 %v3440, %v3450
  %v3468 = vadd.f32 %v3441, %v3450
  %v3469 = vadd.f32 %v3442, %v3450
  %v3470 = vadd.f32 %v3443, %v3450
  %v3471 = vadd.f32 %v3444, %v3450
  %v3472 = vadd.f32 %v3445, %v3450
  %v3473 = vadd.f32 %v3446, %v3450
  %v3474 = vadd.f32 %v3447, %v3450
  %v3475 = vadd.f32 %v3448, %v3450
  %3476 = vst [vmem:[%s3] sm:$0xff] %v3451
  %3477 = vst [vmem:[%s3 + $0x8] sm:$0xff] %v3452
  %3478 = vst [vmem:[%s3 + $0x10] sm:$0xff] %v3453
  %3479 = vst [vmem:[%s3 + $0x18] sm:$0xff] %v3454
  %3480 = vst [vmem:[%s3 + $0x20] sm:$0xff] %v3455
  %3481 = vst [vmem:[%s3 + $0x28] sm:$0xff] %v3456
  %3482 = vst [vmem:[%s3 + $0x30] sm:$0xff] %v3457
  %3483 = vst [vmem:[%s3 + $0x38] sm:$0xff] %v3458
  %3484 = vst [vmem:[%s3 + $0x40] sm:$0xff] %v3459
  %3485 = vst [vmem:[%s3 + $0x48] sm:$0xff] %v3460
  %3486 = vst [vmem:[%s3 + $0x50] sm:$0xff] %v3461
  %3487 = vst [vmem:[%s3 + $0x58] sm:$0xff] %v3462
  %3488 = vst [vmem:[%s3 + $0x60] sm:$0xff] %v3463
  %3489 = vst [vmem:[%s3 + $0x68] sm:$0xff] %v3464
  %3490 = vst [vmem:[%s3 + $0x70] sm:$0xff] %v3465
  %3491 = vst [vmem:[%s3 + $0x78] sm:$0xff] %v3466
  %3492 = vst [vmem:[%s3 + $0x80] sm:$0xff] %v3467
  %3493 = vst [vmem:[%s3 + $0x88] sm:$0xff] %v3468
  %3494 = vst [vmem:[%s3 + $0x90] sm:$0xff] %v3469
  %3495 = vst [vmem:[%s3 + $0x98] sm:$0xff] %v3470
  %3496 = vst [vmem:[%s3 + $0xa0] sm:$0xff] %v3471
  %3497 = vst [vmem:[%s3 + $0xa8] sm:$0xff] %v3472
  %3498 = vst [vmem:[%s3 + $0xb0] sm:$0xff] %v3473
  %3499 = vst [vmem:[%s3 + $0xb8] sm:$0xff] %v3474
  %3500 = vst [vmem:[%s3 + $0xc0] sm:$0xff] %v3475
  // Predicated region
  $region14: #{_lambda_.15} parent=0 // pred_check
    _
  $region15: #{_lambda_.15} parent=0 // pred_check_branch
    %3502 = sbr.rel (0) target = $region17
  $region16: #{_lambda_.15} parent=0 // pred_region
    _
  $region17: #{_lambda_.15} parent=0 // pred_fallthru
    _
  // Predicated region
  $region18: #{_lambda_.15} parent=0 // pred_check
    _
  $region19: #{_lambda_.15} parent=0 // pred_check_branch
    %3504 = sbr.rel (0) target = $region21
  $region20: #{_lambda_.15} parent=0 // pred_region
    _
  $region21: #{_lambda_.15} parent=0 // pred_fallthru
    _

</llo_original>
